<compile_context>
chip_gen: v7x
topology: tpu7x:2x2x1
jax: 0.10.0
libtpu: 0.0.40
codegen_flags: <defaults>
</compile_context>

<pallas_src>
import functools

import jax
import jax.numpy as jnp
from jax.experimental import pallas as pl
from jax.experimental.pallas import tpu as pltpu


def _align8(n):
    return ((n + 7) // 8) * 8


# ------------------------------- Pallas kernel -------------------------------

def _residual_g_kernel(*refs, H, W, Cin, Cmid, Cout, has_short_conv):
    if has_short_conv:
        (x_ref, w1_ref, b1_ref, w2_ref, b2_ref, ws_ref, bs_ref,
         o_ref, pb1_ref, pb2_ref) = refs
    else:
        (x_ref, w1_ref, b1_ref, w2_ref, b2_ref,
         o_ref, pb1_ref, pb2_ref) = refs
        ws_ref = bs_ref = None

    HW = H * W
    OFF = _align8(W + 1)          # sublane-aligned start of the image rows

    x = x_ref[...]                # (HW, Cin) f32, row r = pixel (r // W, r % W)

    # Horizontal-tap validity masks (vertical taps are handled by the zero rows
    # of the padded row buffers).
    col = jax.lax.broadcasted_iota(jnp.int32, (HW, 1), 0) % W
    not_left = (col != 0).astype(jnp.float32)        # valid rows for tap dx = -1
    not_right = (col != W - 1).astype(jnp.float32)   # valid rows for tap dx = +1

    def conv3x3(pbuf_ref, w_ref, b_ref, cout):
        """3x3 / pad=1 / stride=1 conv of the image stored (zero-padded) in pbuf_ref.

        pbuf_ref : (OFF + HW + OFF, cin) f32, image occupies rows [OFF, OFF+HW).
        w_ref    : (9, cin, cout) bf16, tap order t = (dy+1)*3 + (dx+1).
        """
        acc = jnp.zeros((HW, cout), jnp.float32)
        for t in range(9):
            dy, dx = t // 3 - 1, t % 3 - 1
            start = OFF + dy * W + dx                       # static slice offset
            a = pbuf_ref[start:start + HW, :]
            if dx == -1:
                a = a * not_left
            elif dx == 1:
                a = a * not_right
            acc = acc + jnp.dot(a.astype(jnp.bfloat16), w_ref[t],
                                preferred_element_type=jnp.float32)
        return acc + b_ref[...]

    # ---- ReLU(x) into zero-padded row buffer, conv1 + bias + ReLU ----
    pb1_ref[...] = jnp.zeros_like(pb1_ref)
    pb1_ref[OFF:OFF + HW, :] = jnp.maximum(x, 0.0)
    h1 = jnp.maximum(conv3x3(pb1_ref, w1_ref, b1_ref, Cmid), 0.0)

    # ---- second padded buffer, conv2 + bias ----
    pb2_ref[...] = jnp.zeros_like(pb2_ref)
    pb2_ref[OFF:OFF + HW, :] = h1
    h2 = conv3x3(pb2_ref, w2_ref, b2_ref, Cout)

    # ---- shortcut: 1x1 quaternion conv of the RAW input, or identity ----
    if has_short_conv:
        s = jnp.dot(x.astype(jnp.bfloat16), ws_ref[...],
                    preferred_element_type=jnp.float32) + bs_ref[...]
    else:
        s = x                      # identity path (requires Cin == Cout)

    o_ref[...] = (h2 + s).astype(o_ref.dtype)   # lane-dense (HW, Cout) store


# ------------------------------ Pallas wrapper --------------------------------

def _full_spec(shape):
    zeros = (0,) * len(shape)
    return pl.BlockSpec(shape, lambda n, _z=zeros: _z)


def residual_g_pallas(x, params):
    """x: (N, Cin, H, W) f32 (PyTorch NCHW).  Returns (N, Cout, H, W) f32."""
    N, Cin, H, W = x.shape
    w1, b1 = params["conv1_w"], params["conv1_b"]
    w2, b2 = params["conv2_w"], params["conv2_b"]
    Cmid = w1.shape[0]
    Cout = w2.shape[0]
    has_short_conv = "short_w" in params
    assert has_short_conv == (Cin != Cout)

    HW = H * W
    OFF = _align8(W + 1)
    PROWS = HW + 2 * OFF

    # channels-last, pixels-as-rows layout for the kernel (lanes = channels)
    x_rows = jnp.transpose(x, (0, 2, 3, 1)).reshape(N, HW, Cin)

    # (Cout, Cin, 3, 3) -> (tap, Cin, Cout) in bf16 for the MXU
    def prep3x3(w):
        co, ci, kh, kw = w.shape
        return jnp.transpose(w, (2, 3, 1, 0)).reshape(kh * kw, ci, co).astype(jnp.bfloat16)

    w1_t = prep3x3(w1)
    w2_t = prep3x3(w2)
    b1_r = b1.reshape(1, Cmid).astype(jnp.float32)
    b2_r = b2.reshape(1, Cout).astype(jnp.float32)

    inputs = [x_rows, w1_t, b1_r, w2_t, b2_r]
    in_specs = [
        pl.BlockSpec((None, HW, Cin), lambda n: (n, 0, 0)),   # batch dim squeezed
        _full_spec(w1_t.shape), _full_spec(b1_r.shape),
        _full_spec(w2_t.shape), _full_spec(b2_r.shape),
    ]
    if has_short_conv:
        ws = params["short_w"][:, :, 0, 0].T.astype(jnp.bfloat16)   # (Cin, Cout)
        bs = params["short_b"].reshape(1, Cout).astype(jnp.float32)
        inputs += [ws, bs]
        in_specs += [_full_spec(ws.shape), _full_spec(bs.shape)]

    kernel = functools.partial(_residual_g_kernel, H=H, W=W, Cin=Cin,
                               Cmid=Cmid, Cout=Cout,
                               has_short_conv=has_short_conv)

    out = pl.pallas_call(
        kernel,
        out_shape=jax.ShapeDtypeStruct((N, HW, Cout), jnp.float32),
        grid=(N,),
        in_specs=in_specs,
        out_specs=pl.BlockSpec((None, HW, Cout), lambda n: (n, 0, 0)),
        scratch_shapes=[pltpu.VMEM((PROWS, Cin), jnp.float32),
                        pltpu.VMEM((PROWS, Cmid), jnp.float32)],
        compiler_params=pltpu.CompilerParams(
            dimension_semantics=("parallel",),
            vmem_limit_bytes=32 * 1024 * 1024),
    )(*inputs)

    return jnp.transpose(out.reshape(N, H, W, Cout), (0, 3, 1, 2))


# ------------------------------ pure-JAX reference ----------------------------

def _conv_ref(x, w, b, pad):
    out = jax.lax.conv_general_dilated(
        x, w, window_strides=(1, 1), padding=((pad, pad), (pad, pad)),
        dimension_numbers=("NCHW", "OIHW", "NCHW"),
        precision=jax.lax.Precision.HIGHEST)
    return out + b.reshape(1, -1, 1, 1)


def residual_g_reference(x, params):
    h = jnp.maximum(x, 0.0)
    h = _conv_ref(h, params["conv1_w"], params["conv1_b"], 1)
    h = jnp.maximum(h, 0.0)
    h = _conv_ref(h, params["conv2_w"], params["conv2_b"], 1)
    if "short_w" in params:
        s = _conv_ref(x, params["short_w"], params["short_b"], 0)
    else:
        s = x
    return h + s


# ------------------------------ parameter init --------------------------------

def make_quaternion_conv_weight(key, cin, cout, k):
    """Full conv weight with Hamilton-product block structure (std 0.02 init)."""
    assert cin % 4 == 0 and cout % 4 == 0
    kr, ki, kj, kk = jax.random.split(key, 4)
    shp = (cout // 4, cin // 4, k, k)
    r = 0.02 * jax.random.normal(kr, shp, jnp.float32)
    i = 0.02 * jax.random.normal(ki, shp, jnp.float32)
    j = 0.02 * jax.random.normal(kj, shp, jnp.float32)
    q = 0.02 * jax.random.normal(kk, shp, jnp.float32)
    row_r = jnp.concatenate([r, -i, -j, -q], axis=1)
    row_i = jnp.concatenate([i, r, -q, j], axis=1)
    row_j = jnp.concatenate([j, q, r, -i], axis=1)
    row_k = jnp.concatenate([q, -j, i, r], axis=1)
    return jnp.concatenate([row_r, row_i, row_j, row_k], axis=0)   # (cout, cin, k, k)


def init_params(key, cin, cout):
    ks = jax.random.split(key, 6)
    p = {
        "conv1_w": make_quaternion_conv_weight(ks[0], cin, cout, 3),
        "conv1_b": 0.01 * jax.random.normal(ks[1], (cout,), jnp.float32),
        "conv2_w": make_quaternion_conv_weight(ks[2], cout, cout, 3),
        "conv2_b": 0.01 * jax.random.normal(ks[3], (cout,), jnp.float32),
    }
    if cin != cout:   # diff_dims -> 1x1 shortcut conv (as in Residual_G)
        p["short_w"] = make_quaternion_conv_weight(ks[4], cin, cout, 1)
        p["short_b"] = 0.01 * jax.random.normal(ks[5], (cout,), jnp.float32)
    return p


# TODO(synk): QBatchNorm (batch_normed=True) and nn.Upsample nearest-2x
#             (up_sampling=True) branches are not implemented; the default
#             Residual_G constructor uses neither.  stride is assumed 1.

if __name__ == "__main__":
    key = jax.random.PRNGKey(0)
    pkey, xkey = jax.random.split(key)
    # quaternion layers need channels % 4 == 0; Cout=128 keeps the output store
    # lane-dense (module default is 256) while staying small.
    N, Cin, Cout, H, W = 2, 8, 128, 16, 16
    params = init_params(pkey, Cin, Cout)
    x = jax.random.normal(xkey, (N, Cin, H, W), jnp.float32)

    fwd = jax.jit(lambda xx: residual_g_pallas(xx, params))
    y = fwd(x)
    jax.block_until_ready(y)

    assert y.shape == (N, Cout, H, W) and y.dtype == jnp.float32
    y_ref = residual_g_reference(x, params)
    err = float(jnp.max(jnp.abs(y - y_ref)))
    assert err < 3e-2, f"max abs err vs reference: {err}"
    print("KERNEL_OK")
</pallas_src>

<mosaic_0001>
module attributes {stable_mosaic.version = 11 : i64} {
  func.func @_residual_g_kernel(%arg0: i32, %arg1: memref<1x256x8xf32, #tpu.memory_space<vmem>>, %arg2: memref<9x8x128xbf16, #tpu.memory_space<vmem>>, %arg3: memref<1x128xf32, #tpu.memory_space<vmem>>, %arg4: memref<9x128x128xbf16, #tpu.memory_space<vmem>>, %arg5: memref<1x128xf32, #tpu.memory_space<vmem>>, %arg6: memref<8x128xbf16, #tpu.memory_space<vmem>>, %arg7: memref<1x128xf32, #tpu.memory_space<vmem>>, %arg8: memref<1x256x128xf32, #tpu.memory_space<vmem>>, %arg9: memref<304x8xf32, #tpu.memory_space<vmem>>, %arg10: memref<304x128xf32, #tpu.memory_space<vmem>>) attributes {dimension_semantics = [#tpu.dimension_semantics<parallel>], iteration_bounds = array<i64: 2>, scalar_prefetch = 0 : i64, scratch_operands = 2 : i64, tpu.core_type = #tpu.core_type<tc>, window_params = [{transform_indices = @transform_0, window_bounds = array<i64: 1, 256, 8>}, {pipeline_mode = #tpu.pipeline_mode<synchronous>, transform_indices = @transform_1, window_bounds = array<i64: 9, 8, 128>}, {pipeline_mode = #tpu.pipeline_mode<synchronous>, transform_indices = @transform_2, window_bounds = array<i64: 1, 128>}, {pipeline_mode = #tpu.pipeline_mode<synchronous>, transform_indices = @transform_3, window_bounds = array<i64: 9, 128, 128>}, {pipeline_mode = #tpu.pipeline_mode<synchronous>, transform_indices = @transform_4, window_bounds = array<i64: 1, 128>}, {pipeline_mode = #tpu.pipeline_mode<synchronous>, transform_indices = @transform_5, window_bounds = array<i64: 8, 128>}, {pipeline_mode = #tpu.pipeline_mode<synchronous>, transform_indices = @transform_6, window_bounds = array<i64: 1, 128>}, {transform_indices = @transform_7, window_bounds = array<i64: 1, 256, 128>}]} {
    %c0 = arith.constant 0 : index
    %c0_0 = arith.constant 0 : index
    %c0_1 = arith.constant 0 : index
    %0 = vector.load %arg1[%c0, %c0_0, %c0_1] : memref<1x256x8xf32, #tpu.memory_space<vmem>>, vector<1x256x8xf32>
    %1 = vector.shape_cast %0 : vector<1x256x8xf32> to vector<256x8xf32>
    %2 = tpu.iota {dimensions = array<i32: 0>} : vector<256x1xi32>
    %c16_i32 = arith.constant 16 : i32
    %c0_i32 = arith.constant 0 : i32
    %3 = arith.cmpi eq, %c16_i32, %c0_i32 : i32
    %c1_i32 = arith.constant 1 : i32
    %4 = arith.select %3, %c1_i32, %c16_i32 : i32
    %5 = vector.broadcast %4 : i32 to vector<256x1xi32>
    %6 = arith.remsi %2, %5 : vector<256x1xi32>
    %c0_i32_2 = arith.constant 0 : i32
    %7 = vector.broadcast %c0_i32_2 : i32 to vector<256x1xi32>
    %8 = arith.cmpi ne, %6, %7 : vector<256x1xi32>
    %c0_i32_3 = arith.constant 0 : i32
    %9 = vector.broadcast %c0_i32_3 : i32 to vector<256x1xi32>
    %10 = arith.cmpi slt, %6, %9 : vector<256x1xi32>
    %c0_i32_4 = arith.constant 0 : i32
    %11 = arith.cmpi slt, %4, %c0_i32_4 : i32
    %12 = vector.broadcast %11 : i1 to vector<256x1xi1>
    %13 = vector.broadcast %12 : vector<256x1xi1> to vector<256x1xi1>
    %14 = arith.xori %10, %13 : vector<256x1xi1>
    %15 = arith.andi %14, %8 : vector<256x1xi1>
    %16 = vector.broadcast %4 : i32 to vector<256x1xi32>
    %17 = arith.addi %6, %16 : vector<256x1xi32>
    %18 = arith.select %15, %17, %6 : vector<256x1xi1>, vector<256x1xi32>
    %c0_i32_5 = arith.constant 0 : i32
    %19 = vector.broadcast %c0_i32_5 : i32 to vector<256x1xi32>
    %20 = arith.cmpi ne, %18, %19 : vector<256x1xi32>
    %21 = arith.extui %20 : vector<256x1xi1> to vector<256x1xi32>
    %22 = arith.sitofp %21 : vector<256x1xi32> to vector<256x1xf32>
    %c15_i32 = arith.constant 15 : i32
    %23 = vector.broadcast %c15_i32 : i32 to vector<256x1xi32>
    %24 = arith.cmpi ne, %18, %23 : vector<256x1xi32>
    %25 = arith.extui %24 : vector<256x1xi1> to vector<256x1xi32>
    %26 = arith.sitofp %25 : vector<256x1xi32> to vector<256x1xf32>
    %cst = arith.constant 0.000000e+00 : f32
    %27 = vector.broadcast %cst : f32 to vector<304x8xf32>
    %c0_6 = arith.constant 0 : index
    %c0_7 = arith.constant 0 : index
    %28 = vector.load %arg9[%c0_6, %c0_7] : memref<304x8xf32, #tpu.memory_space<vmem>>, vector<304x8xf32>
    tpu.vector_store %arg9[%c0_6, %c0_7], %27 {strides = array<i32>} : memref<304x8xf32, #tpu.memory_space<vmem>>, vector<304x8xf32>,
    %cst_8 = arith.constant 0.000000e+00 : f32
    %29 = vector.broadcast %cst_8 : f32 to vector<256x8xf32>
    %30 = arith.maximumf %1, %29 : vector<256x8xf32>
    %c24 = arith.constant 24 : index
    %c0_9 = arith.constant 0 : index
    %31 = vector.load %arg9[%c24, %c0_9] : memref<304x8xf32, #tpu.memory_space<vmem>>, vector<256x8xf32>
    tpu.vector_store %arg9[%c24, %c0_9], %30 {strides = array<i32>} : memref<304x8xf32, #tpu.memory_space<vmem>>, vector<256x8xf32>,
    %cst_10 = arith.constant 0.000000e+00 : f32
    %32 = vector.broadcast %cst_10 : f32 to vector<256x128xf32>
    %c7 = arith.constant 7 : index
    %c0_11 = arith.constant 0 : index
    %33 = vector.load %arg9[%c7, %c0_11] : memref<304x8xf32, #tpu.memory_space<vmem>>, vector<256x8xf32>
    %34 = vector.broadcast %22 : vector<256x1xf32> to vector<256x8xf32>
    %35 = arith.mulf %33, %34 : vector<256x8xf32>
    %36 = arith.truncf %35 : vector<256x8xf32> to vector<256x8xbf16>
    %c0_12 = arith.constant 0 : index
    %c0_13 = arith.constant 0 : index
    %c0_14 = arith.constant 0 : index
    %37 = vector.load %arg2[%c0_12, %c0_13, %c0_14] : memref<9x8x128xbf16, #tpu.memory_space<vmem>>, vector<1x8x128xbf16>
    %38 = vector.shape_cast %37 : vector<1x8x128xbf16> to vector<8x128xbf16>
    %cst_15 = arith.constant dense<0.000000e+00> : vector<256x128xf32>
    %39 = tpu.matmul %36, %38, %cst_15 {dimension_numbers = #tpu.dot_dimension_numbers<[1], [0], [0], [1], [0, 0, 1, 1], [], []>} : vector<256x8xbf16>, vector<8x128xbf16>, vector<256x128xf32> -> vector<256x128xf32>
    %40 = arith.addf %32, %39 : vector<256x128xf32>
    %c8 = arith.constant 8 : index
    %c0_16 = arith.constant 0 : index
    %41 = vector.load %arg9[%c8, %c0_16] : memref<304x8xf32, #tpu.memory_space<vmem>>, vector<256x8xf32>
    %42 = arith.truncf %41 : vector<256x8xf32> to vector<256x8xbf16>
    %c1 = arith.constant 1 : index
    %c0_17 = arith.constant 0 : index
    %c0_18 = arith.constant 0 : index
    %43 = vector.load %arg2[%c1, %c0_17, %c0_18] : memref<9x8x128xbf16, #tpu.memory_space<vmem>>, vector<1x8x128xbf16>
    %44 = vector.shape_cast %43 : vector<1x8x128xbf16> to vector<8x128xbf16>
    %cst_19 = arith.constant dense<0.000000e+00> : vector<256x128xf32>
    %45 = tpu.matmul %42, %44, %cst_19 {dimension_numbers = #tpu.dot_dimension_numbers<[1], [0], [0], [1], [0, 0, 1, 1], [], []>} : vector<256x8xbf16>, vector<8x128xbf16>, vector<256x128xf32> -> vector<256x128xf32>
    %46 = arith.addf %40, %45 : vector<256x128xf32>
    %c9 = arith.constant 9 : index
    %c0_20 = arith.constant 0 : index
    %47 = vector.load %arg9[%c9, %c0_20] : memref<304x8xf32, #tpu.memory_space<vmem>>, vector<256x8xf32>
    %48 = vector.broadcast %26 : vector<256x1xf32> to vector<256x8xf32>
    %49 = arith.mulf %47, %48 : vector<256x8xf32>
    %50 = arith.truncf %49 : vector<256x8xf32> to vector<256x8xbf16>
    %c2 = arith.constant 2 : index
    %c0_21 = arith.constant 0 : index
    %c0_22 = arith.constant 0 : index
    %51 = vector.load %arg2[%c2, %c0_21, %c0_22] : memref<9x8x128xbf16, #tpu.memory_space<vmem>>, vector<1x8x128xbf16>
    %52 = vector.shape_cast %51 : vector<1x8x128xbf16> to vector<8x128xbf16>
    %cst_23 = arith.constant dense<0.000000e+00> : vector<256x128xf32>
    %53 = tpu.matmul %50, %52, %cst_23 {dimension_numbers = #tpu.dot_dimension_numbers<[1], [0], [0], [1], [0, 0, 1, 1], [], []>} : vector<256x8xbf16>, vector<8x128xbf16>, vector<256x128xf32> -> vector<256x128xf32>
    %54 = arith.addf %46, %53 : vector<256x128xf32>
    %c23 = arith.constant 23 : index
    %c0_24 = arith.constant 0 : index
    %55 = vector.load %arg9[%c23, %c0_24] : memref<304x8xf32, #tpu.memory_space<vmem>>, vector<256x8xf32>
    %56 = vector.broadcast %22 : vector<256x1xf32> to vector<256x8xf32>
    %57 = arith.mulf %55, %56 : vector<256x8xf32>
    %58 = arith.truncf %57 : vector<256x8xf32> to vector<256x8xbf16>
    %c3 = arith.constant 3 : index
    %c0_25 = arith.constant 0 : index
    %c0_26 = arith.constant 0 : index
    %59 = vector.load %arg2[%c3, %c0_25, %c0_26] : memref<9x8x128xbf16, #tpu.memory_space<vmem>>, vector<1x8x128xbf16>
    %60 = vector.shape_cast %59 : vector<1x8x128xbf16> to vector<8x128xbf16>
    %cst_27 = arith.constant dense<0.000000e+00> : vector<256x128xf32>
    %61 = tpu.matmul %58, %60, %cst_27 {dimension_numbers = #tpu.dot_dimension_numbers<[1], [0], [0], [1], [0, 0, 1, 1], [], []>} : vector<256x8xbf16>, vector<8x128xbf16>, vector<256x128xf32> -> vector<256x128xf32>
    %62 = arith.addf %54, %61 : vector<256x128xf32>
    %c24_28 = arith.constant 24 : index
    %c0_29 = arith.constant 0 : index
    %63 = vector.load %arg9[%c24_28, %c0_29] : memref<304x8xf32, #tpu.memory_space<vmem>>, vector<256x8xf32>
    %64 = arith.truncf %63 : vector<256x8xf32> to vector<256x8xbf16>
    %c4 = arith.constant 4 : index
    %c0_30 = arith.constant 0 : index
    %c0_31 = arith.constant 0 : index
    %65 = vector.load %arg2[%c4, %c0_30, %c0_31] : memref<9x8x128xbf16, #tpu.memory_space<vmem>>, vector<1x8x128xbf16>
    %66 = vector.shape_cast %65 : vector<1x8x128xbf16> to vector<8x128xbf16>
    %cst_32 = arith.constant dense<0.000000e+00> : vector<256x128xf32>
    %67 = tpu.matmul %64, %66, %cst_32 {dimension_numbers = #tpu.dot_dimension_numbers<[1], [0], [0], [1], [0, 0, 1, 1], [], []>} : vector<256x8xbf16>, vector<8x128xbf16>, vector<256x128xf32> -> vector<256x128xf32>
    %68 = arith.addf %62, %67 : vector<256x128xf32>
    %c25 = arith.constant 25 : index
    %c0_33 = arith.constant 0 : index
    %69 = vector.load %arg9[%c25, %c0_33] : memref<304x8xf32, #tpu.memory_space<vmem>>, vector<256x8xf32>
    %70 = vector.broadcast %26 : vector<256x1xf32> to vector<256x8xf32>
    %71 = arith.mulf %69, %70 : vector<256x8xf32>
    %72 = arith.truncf %71 : vector<256x8xf32> to vector<256x8xbf16>
    %c5 = arith.constant 5 : index
    %c0_34 = arith.constant 0 : index
    %c0_35 = arith.constant 0 : index
    %73 = vector.load %arg2[%c5, %c0_34, %c0_35] : memref<9x8x128xbf16, #tpu.memory_space<vmem>>, vector<1x8x128xbf16>
    %74 = vector.shape_cast %73 : vector<1x8x128xbf16> to vector<8x128xbf16>
    %cst_36 = arith.constant dense<0.000000e+00> : vector<256x128xf32>
    %75 = tpu.matmul %72, %74, %cst_36 {dimension_numbers = #tpu.dot_dimension_numbers<[1], [0], [0], [1], [0, 0, 1, 1], [], []>} : vector<256x8xbf16>, vector<8x128xbf16>, vector<256x128xf32> -> vector<256x128xf32>
    %76 = arith.addf %68, %75 : vector<256x128xf32>
    %c39 = arith.constant 39 : index
    %c0_37 = arith.constant 0 : index
    %77 = vector.load %arg9[%c39, %c0_37] : memref<304x8xf32, #tpu.memory_space<vmem>>, vector<256x8xf32>
    %78 = vector.broadcast %22 : vector<256x1xf32> to vector<256x8xf32>
    %79 = arith.mulf %77, %78 : vector<256x8xf32>
    %80 = arith.truncf %79 : vector<256x8xf32> to vector<256x8xbf16>
    %c6 = arith.constant 6 : index
    %c0_38 = arith.constant 0 : index
    %c0_39 = arith.constant 0 : index
    %81 = vector.load %arg2[%c6, %c0_38, %c0_39] : memref<9x8x128xbf16, #tpu.memory_space<vmem>>, vector<1x8x128xbf16>
    %82 = vector.shape_cast %81 : vector<1x8x128xbf16> to vector<8x128xbf16>
    %cst_40 = arith.constant dense<0.000000e+00> : vector<256x128xf32>
    %83 = tpu.matmul %80, %82, %cst_40 {dimension_numbers = #tpu.dot_dimension_numbers<[1], [0], [0], [1], [0, 0, 1, 1], [], []>} : vector<256x8xbf16>, vector<8x128xbf16>, vector<256x128xf32> -> vector<256x128xf32>
    %84 = arith.addf %76, %83 : vector<256x128xf32>
    %c40 = arith.constant 40 : index
    %c0_41 = arith.constant 0 : index
    %85 = vector.load %arg9[%c40, %c0_41] : memref<304x8xf32, #tpu.memory_space<vmem>>, vector<256x8xf32>
    %86 = arith.truncf %85 : vector<256x8xf32> to vector<256x8xbf16>
    %c7_42 = arith.constant 7 : index
    %c0_43 = arith.constant 0 : index
    %c0_44 = arith.constant 0 : index
    %87 = vector.load %arg2[%c7_42, %c0_43, %c0_44] : memref<9x8x128xbf16, #tpu.memory_space<vmem>>, vector<1x8x128xbf16>
    %88 = vector.shape_cast %87 : vector<1x8x128xbf16> to vector<8x128xbf16>
    %cst_45 = arith.constant dense<0.000000e+00> : vector<256x128xf32>
    %89 = tpu.matmul %86, %88, %cst_45 {dimension_numbers = #tpu.dot_dimension_numbers<[1], [0], [0], [1], [0, 0, 1, 1], [], []>} : vector<256x8xbf16>, vector<8x128xbf16>, vector<256x128xf32> -> vector<256x128xf32>
    %90 = arith.addf %84, %89 : vector<256x128xf32>
    %c41 = arith.constant 41 : index
    %c0_46 = arith.constant 0 : index
    %91 = vector.load %arg9[%c41, %c0_46] : memref<304x8xf32, #tpu.memory_space<vmem>>, vector<256x8xf32>
    %92 = vector.broadcast %26 : vector<256x1xf32> to vector<256x8xf32>
    %93 = arith.mulf %91, %92 : vector<256x8xf32>
    %94 = arith.truncf %93 : vector<256x8xf32> to vector<256x8xbf16>
    %c8_47 = arith.constant 8 : index
    %c0_48 = arith.constant 0 : index
    %c0_49 = arith.constant 0 : index
    %95 = vector.load %arg2[%c8_47, %c0_48, %c0_49] : memref<9x8x128xbf16, #tpu.memory_space<vmem>>, vector<1x8x128xbf16>
    %96 = vector.shape_cast %95 : vector<1x8x128xbf16> to vector<8x128xbf16>
    %cst_50 = arith.constant dense<0.000000e+00> : vector<256x128xf32>
    %97 = tpu.matmul %94, %96, %cst_50 {dimension_numbers = #tpu.dot_dimension_numbers<[1], [0], [0], [1], [0, 0, 1, 1], [], []>} : vector<256x8xbf16>, vector<8x128xbf16>, vector<256x128xf32> -> vector<256x128xf32>
    %98 = arith.addf %90, %97 : vector<256x128xf32>
    %c0_51 = arith.constant 0 : index
    %c0_52 = arith.constant 0 : index
    %99 = vector.load %arg3[%c0_51, %c0_52] : memref<1x128xf32, #tpu.memory_space<vmem>>, vector<1x128xf32>
    %100 = vector.broadcast %99 : vector<1x128xf32> to vector<256x128xf32>
    %101 = arith.addf %98, %100 : vector<256x128xf32>
    %cst_53 = arith.constant 0.000000e+00 : f32
    %102 = vector.broadcast %cst_53 : f32 to vector<256x128xf32>
    %103 = arith.maximumf %101, %102 : vector<256x128xf32>
    %cst_54 = arith.constant 0.000000e+00 : f32
    %104 = vector.broadcast %cst_54 : f32 to vector<304x128xf32>
    %c0_55 = arith.constant 0 : index
    %c0_56 = arith.constant 0 : index
    %105 = vector.load %arg10[%c0_55, %c0_56] : memref<304x128xf32, #tpu.memory_space<vmem>>, vector<304x128xf32>
    tpu.vector_store %arg10[%c0_55, %c0_56], %104 {strides = array<i32>} : memref<304x128xf32, #tpu.memory_space<vmem>>, vector<304x128xf32>,
    %c24_57 = arith.constant 24 : index
    %c0_58 = arith.constant 0 : index
    %106 = vector.load %arg10[%c24_57, %c0_58] : memref<304x128xf32, #tpu.memory_space<vmem>>, vector<256x128xf32>
    tpu.vector_store %arg10[%c24_57, %c0_58], %103 {strides = array<i32>} : memref<304x128xf32, #tpu.memory_space<vmem>>, vector<256x128xf32>,
    %cst_59 = arith.constant 0.000000e+00 : f32
    %107 = vector.broadcast %cst_59 : f32 to vector<256x128xf32>
    %c7_60 = arith.constant 7 : index
    %c0_61 = arith.constant 0 : index
    %108 = vector.load %arg10[%c7_60, %c0_61] : memref<304x128xf32, #tpu.memory_space<vmem>>, vector<256x128xf32>
    %109 = vector.broadcast %22 : vector<256x1xf32> to vector<256x128xf32>
    %110 = arith.mulf %108, %109 : vector<256x128xf32>
    %111 = arith.truncf %110 : vector<256x128xf32> to vector<256x128xbf16>
    %c0_62 = arith.constant 0 : index
    %c0_63 = arith.constant 0 : index
    %c0_64 = arith.constant 0 : index
    %112 = vector.load %arg4[%c0_62, %c0_63, %c0_64] : memref<9x128x128xbf16, #tpu.memory_space<vmem>>, vector<1x128x128xbf16>
    %113 = vector.shape_cast %112 : vector<1x128x128xbf16> to vector<128x128xbf16>
    %cst_65 = arith.constant dense<0.000000e+00> : vector<256x128xf32>
    %114 = tpu.matmul %111, %113, %cst_65 {dimension_numbers = #tpu.dot_dimension_numbers<[1], [0], [0], [1], [0, 0, 1, 1], [], []>} : vector<256x128xbf16>, vector<128x128xbf16>, vector<256x128xf32> -> vector<256x128xf32>
    %115 = arith.addf %107, %114 : vector<256x128xf32>
    %c8_66 = arith.constant 8 : index
    %c0_67 = arith.constant 0 : index
    %116 = vector.load %arg10[%c8_66, %c0_67] : memref<304x128xf32, #tpu.memory_space<vmem>>, vector<256x128xf32>
    %117 = arith.truncf %116 : vector<256x128xf32> to vector<256x128xbf16>
    %c1_68 = arith.constant 1 : index
    %c0_69 = arith.constant 0 : index
    %c0_70 = arith.constant 0 : index
    %118 = vector.load %arg4[%c1_68, %c0_69, %c0_70] : memref<9x128x128xbf16, #tpu.memory_space<vmem>>, vector<1x128x128xbf16>
    %119 = vector.shape_cast %118 : vector<1x128x128xbf16> to vector<128x128xbf16>
    %cst_71 = arith.constant dense<0.000000e+00> : vector<256x128xf32>
    %120 = tpu.matmul %117, %119, %cst_71 {dimension_numbers = #tpu.dot_dimension_numbers<[1], [0], [0], [1], [0, 0, 1, 1], [], []>} : vector<256x128xbf16>, vector<128x128xbf16>, vector<256x128xf32> -> vector<256x128xf32>
    %121 = arith.addf %115, %120 : vector<256x128xf32>
    %c9_72 = arith.constant 9 : index
    %c0_73 = arith.constant 0 : index
    %122 = vector.load %arg10[%c9_72, %c0_73] : memref<304x128xf32, #tpu.memory_space<vmem>>, vector<256x128xf32>
    %123 = vector.broadcast %26 : vector<256x1xf32> to vector<256x128xf32>
    %124 = arith.mulf %122, %123 : vector<256x128xf32>
    %125 = arith.truncf %124 : vector<256x128xf32> to vector<256x128xbf16>
    %c2_74 = arith.constant 2 : index
    %c0_75 = arith.constant 0 : index
    %c0_76 = arith.constant 0 : index
    %126 = vector.load %arg4[%c2_74, %c0_75, %c0_76] : memref<9x128x128xbf16, #tpu.memory_space<vmem>>, vector<1x128x128xbf16>
    %127 = vector.shape_cast %126 : vector<1x128x128xbf16> to vector<128x128xbf16>
    %cst_77 = arith.constant dense<0.000000e+00> : vector<256x128xf32>
    %128 = tpu.matmul %125, %127, %cst_77 {dimension_numbers = #tpu.dot_dimension_numbers<[1], [0], [0], [1], [0, 0, 1, 1], [], []>} : vector<256x128xbf16>, vector<128x128xbf16>, vector<256x128xf32> -> vector<256x128xf32>
    %129 = arith.addf %121, %128 : vector<256x128xf32>
    %c23_78 = arith.constant 23 : index
    %c0_79 = arith.constant 0 : index
    %130 = vector.load %arg10[%c23_78, %c0_79] : memref<304x128xf32, #tpu.memory_space<vmem>>, vector<256x128xf32>
    %131 = vector.broadcast %22 : vector<256x1xf32> to vector<256x128xf32>
    %132 = arith.mulf %130, %131 : vector<256x128xf32>
    %133 = arith.truncf %132 : vector<256x128xf32> to vector<256x128xbf16>
    %c3_80 = arith.constant 3 : index
    %c0_81 = arith.constant 0 : index
    %c0_82 = arith.constant 0 : index
    %134 = vector.load %arg4[%c3_80, %c0_81, %c0_82] : memref<9x128x128xbf16, #tpu.memory_space<vmem>>, vector<1x128x128xbf16>
    %135 = vector.shape_cast %134 : vector<1x128x128xbf16> to vector<128x128xbf16>
    %cst_83 = arith.constant dense<0.000000e+00> : vector<256x128xf32>
    %136 = tpu.matmul %133, %135, %cst_83 {dimension_numbers = #tpu.dot_dimension_numbers<[1], [0], [0], [1], [0, 0, 1, 1], [], []>} : vector<256x128xbf16>, vector<128x128xbf16>, vector<256x128xf32> -> vector<256x128xf32>
    %137 = arith.addf %129, %136 : vector<256x128xf32>
    %c24_84 = arith.constant 24 : index
    %c0_85 = arith.constant 0 : index
    %138 = vector.load %arg10[%c24_84, %c0_85] : memref<304x128xf32, #tpu.memory_space<vmem>>, vector<256x128xf32>
    %139 = arith.truncf %138 : vector<256x128xf32> to vector<256x128xbf16>
    %c4_86 = arith.constant 4 : index
    %c0_87 = arith.constant 0 : index
    %c0_88 = arith.constant 0 : index
    %140 = vector.load %arg4[%c4_86, %c0_87, %c0_88] : memref<9x128x128xbf16, #tpu.memory_space<vmem>>, vector<1x128x128xbf16>
    %141 = vector.shape_cast %140 : vector<1x128x128xbf16> to vector<128x128xbf16>
    %cst_89 = arith.constant dense<0.000000e+00> : vector<256x128xf32>
    %142 = tpu.matmul %139, %141, %cst_89 {dimension_numbers = #tpu.dot_dimension_numbers<[1], [0], [0], [1], [0, 0, 1, 1], [], []>} : vector<256x128xbf16>, vector<128x128xbf16>, vector<256x128xf32> -> vector<256x128xf32>
    %143 = arith.addf %137, %142 : vector<256x128xf32>
    %c25_90 = arith.constant 25 : index
    %c0_91 = arith.constant 0 : index
    %144 = vector.load %arg10[%c25_90, %c0_91] : memref<304x128xf32, #tpu.memory_space<vmem>>, vector<256x128xf32>
    %145 = vector.broadcast %26 : vector<256x1xf32> to vector<256x128xf32>
    %146 = arith.mulf %144, %145 : vector<256x128xf32>
    %147 = arith.truncf %146 : vector<256x128xf32> to vector<256x128xbf16>
    %c5_92 = arith.constant 5 : index
    %c0_93 = arith.constant 0 : index
    %c0_94 = arith.constant 0 : index
    %148 = vector.load %arg4[%c5_92, %c0_93, %c0_94] : memref<9x128x128xbf16, #tpu.memory_space<vmem>>, vector<1x128x128xbf16>
    %149 = vector.shape_cast %148 : vector<1x128x128xbf16> to vector<128x128xbf16>
    %cst_95 = arith.constant dense<0.000000e+00> : vector<256x128xf32>
    %150 = tpu.matmul %147, %149, %cst_95 {dimension_numbers = #tpu.dot_dimension_numbers<[1], [0], [0], [1], [0, 0, 1, 1], [], []>} : vector<256x128xbf16>, vector<128x128xbf16>, vector<256x128xf32> -> vector<256x128xf32>
    %151 = arith.addf %143, %150 : vector<256x128xf32>
    %c39_96 = arith.constant 39 : index
    %c0_97 = arith.constant 0 : index
    %152 = vector.load %arg10[%c39_96, %c0_97] : memref<304x128xf32, #tpu.memory_space<vmem>>, vector<256x128xf32>
    %153 = vector.broadcast %22 : vector<256x1xf32> to vector<256x128xf32>
    %154 = arith.mulf %152, %153 : vector<256x128xf32>
    %155 = arith.truncf %154 : vector<256x128xf32> to vector<256x128xbf16>
    %c6_98 = arith.constant 6 : index
    %c0_99 = arith.constant 0 : index
    %c0_100 = arith.constant 0 : index
    %156 = vector.load %arg4[%c6_98, %c0_99, %c0_100] : memref<9x128x128xbf16, #tpu.memory_space<vmem>>, vector<1x128x128xbf16>
    %157 = vector.shape_cast %156 : vector<1x128x128xbf16> to vector<128x128xbf16>
    %cst_101 = arith.constant dense<0.000000e+00> : vector<256x128xf32>
    %158 = tpu.matmul %155, %157, %cst_101 {dimension_numbers = #tpu.dot_dimension_numbers<[1], [0], [0], [1], [0, 0, 1, 1], [], []>} : vector<256x128xbf16>, vector<128x128xbf16>, vector<256x128xf32> -> vector<256x128xf32>
    %159 = arith.addf %151, %158 : vector<256x128xf32>
    %c40_102 = arith.constant 40 : index
    %c0_103 = arith.constant 0 : index
    %160 = vector.load %arg10[%c40_102, %c0_103] : memref<304x128xf32, #tpu.memory_space<vmem>>, vector<256x128xf32>
    %161 = arith.truncf %160 : vector<256x128xf32> to vector<256x128xbf16>
    %c7_104 = arith.constant 7 : index
    %c0_105 = arith.constant 0 : index
    %c0_106 = arith.constant 0 : index
    %162 = vector.load %arg4[%c7_104, %c0_105, %c0_106] : memref<9x128x128xbf16, #tpu.memory_space<vmem>>, vector<1x128x128xbf16>
    %163 = vector.shape_cast %162 : vector<1x128x128xbf16> to vector<128x128xbf16>
    %cst_107 = arith.constant dense<0.000000e+00> : vector<256x128xf32>
    %164 = tpu.matmul %161, %163, %cst_107 {dimension_numbers = #tpu.dot_dimension_numbers<[1], [0], [0], [1], [0, 0, 1, 1], [], []>} : vector<256x128xbf16>, vector<128x128xbf16>, vector<256x128xf32> -> vector<256x128xf32>
    %165 = arith.addf %159, %164 : vector<256x128xf32>
    %c41_108 = arith.constant 41 : index
    %c0_109 = arith.constant 0 : index
    %166 = vector.load %arg10[%c41_108, %c0_109] : memref<304x128xf32, #tpu.memory_space<vmem>>, vector<256x128xf32>
    %167 = vector.broadcast %26 : vector<256x1xf32> to vector<256x128xf32>
    %168 = arith.mulf %166, %167 : vector<256x128xf32>
    %169 = arith.truncf %168 : vector<256x128xf32> to vector<256x128xbf16>
    %c8_110 = arith.constant 8 : index
    %c0_111 = arith.constant 0 : index
    %c0_112 = arith.constant 0 : index
    %170 = vector.load %arg4[%c8_110, %c0_111, %c0_112] : memref<9x128x128xbf16, #tpu.memory_space<vmem>>, vector<1x128x128xbf16>
    %171 = vector.shape_cast %170 : vector<1x128x128xbf16> to vector<128x128xbf16>
    %cst_113 = arith.constant dense<0.000000e+00> : vector<256x128xf32>
    %172 = tpu.matmul %169, %171, %cst_113 {dimension_numbers = #tpu.dot_dimension_numbers<[1], [0], [0], [1], [0, 0, 1, 1], [], []>} : vector<256x128xbf16>, vector<128x128xbf16>, vector<256x128xf32> -> vector<256x128xf32>
    %173 = arith.addf %165, %172 : vector<256x128xf32>
    %c0_114 = arith.constant 0 : index
    %c0_115 = arith.constant 0 : index
    %174 = vector.load %arg5[%c0_114, %c0_115] : memref<1x128xf32, #tpu.memory_space<vmem>>, vector<1x128xf32>
    %175 = vector.broadcast %174 : vector<1x128xf32> to vector<256x128xf32>
    %176 = arith.addf %173, %175 : vector<256x128xf32>
    %177 = arith.truncf %1 : vector<256x8xf32> to vector<256x8xbf16>
    %c0_116 = arith.constant 0 : index
    %c0_117 = arith.constant 0 : index
    %178 = vector.load %arg6[%c0_116, %c0_117] : memref<8x128xbf16, #tpu.memory_space<vmem>>, vector<8x128xbf16>
    %cst_118 = arith.constant dense<0.000000e+00> : vector<256x128xf32>
    %179 = tpu.matmul %177, %178, %cst_118 {dimension_numbers = #tpu.dot_dimension_numbers<[1], [0], [0], [1], [0, 0, 1, 1], [], []>} : vector<256x8xbf16>, vector<8x128xbf16>, vector<256x128xf32> -> vector<256x128xf32>
    %c0_119 = arith.constant 0 : index
    %c0_120 = arith.constant 0 : index
    %180 = vector.load %arg7[%c0_119, %c0_120] : memref<1x128xf32, #tpu.memory_space<vmem>>, vector<1x128xf32>
    %181 = vector.broadcast %180 : vector<1x128xf32> to vector<256x128xf32>
    %182 = arith.addf %179, %181 : vector<256x128xf32>
    %183 = arith.addf %176, %182 : vector<256x128xf32>
    %c0_121 = arith.constant 0 : index
    %c0_122 = arith.constant 0 : index
    %c0_123 = arith.constant 0 : index
    %184 = vector.load %arg8[%c0_121, %c0_122, %c0_123] : memref<1x256x128xf32, #tpu.memory_space<vmem>>, vector<1x256x128xf32>
    %185 = vector.shape_cast %184 : vector<1x256x128xf32> to vector<256x128xf32>
    %186 = vector.shape_cast %183 : vector<256x128xf32> to vector<1x256x128xf32>
    tpu.vector_store %arg8[%c0_121, %c0_122, %c0_123], %186 {strides = array<i32>} : memref<1x256x128xf32, #tpu.memory_space<vmem>>, vector<1x256x128xf32>,
    return
  }
  func.func @transform_0(%arg0: i32) -> (i32, i32, i32) {
    %c0_i32 = arith.constant 0 : i32
    %c0_i32_0 = arith.constant 0 : i32
    %c0_i32_1 = arith.constant 0 : i32
    return %arg0, %c0_i32, %c0_i32_0 : i32, i32, i32
  }
  func.func @transform_1(%arg0: i32) -> (i32, i32, i32) {
    %c0_i32 = arith.constant 0 : i32
    %c0_i32_0 = arith.constant 0 : i32
    %c0_i32_1 = arith.constant 0 : i32
    %c0_i32_2 = arith.constant 0 : i32
    return %c0_i32, %c0_i32_0, %c0_i32_1 : i32, i32, i32
  }
  func.func @transform_2(%arg0: i32) -> (i32, i32) {
    %c0_i32 = arith.constant 0 : i32
    %c0_i32_0 = arith.constant 0 : i32
    %c0_i32_1 = arith.constant 0 : i32
    return %c0_i32, %c0_i32_0 : i32, i32
  }
  func.func @transform_3(%arg0: i32) -> (i32, i32, i32) {
    %c0_i32 = arith.constant 0 : i32
    %c0_i32_0 = arith.constant 0 : i32
    %c0_i32_1 = arith.constant 0 : i32
    %c0_i32_2 = arith.constant 0 : i32
    return %c0_i32, %c0_i32_0, %c0_i32_1 : i32, i32, i32
  }
  func.func @transform_4(%arg0: i32) -> (i32, i32) {
    %c0_i32 = arith.constant 0 : i32
    %c0_i32_0 = arith.constant 0 : i32
    %c0_i32_1 = arith.constant 0 : i32
    return %c0_i32, %c0_i32_0 : i32, i32
  }
  func.func @transform_5(%arg0: i32) -> (i32, i32) {
    %c0_i32 = arith.constant 0 : i32
    %c0_i32_0 = arith.constant 0 : i32
    %c0_i32_1 = arith.constant 0 : i32
    return %c0_i32, %c0_i32_0 : i32, i32
  }
  func.func @transform_6(%arg0: i32) -> (i32, i32) {
    %c0_i32 = arith.constant 0 : i32
    %c0_i32_0 = arith.constant 0 : i32
    %c0_i32_1 = arith.constant 0 : i32
    return %c0_i32, %c0_i32_0 : i32, i32
  }
  func.func @transform_7(%arg0: i32) -> (i32, i32, i32) {
    %c0_i32 = arith.constant 0 : i32
    %c0_i32_0 = arith.constant 0 : i32
    %c0_i32_1 = arith.constant 0 : i32
    return %arg0, %c0_i32, %c0_i32_0 : i32, i32, i32
  }
}

</mosaic_0001>

<llo_original>
// kernel: _lambda_.1
$region0: #{_lambda_.1}
  #allocation0 [shape = 'u32[]', space=smem, size = 0x4, offset = 0x4, fixed_abs, tag = 'smem constant byte address 0x4 - core index']
  #allocation1 [shape = 'u32[144,128]{1,0:T(1,128)}', space=vmem, size = 0x12000, scoped, tag = 'internal scratch']
  #allocation2 [shape = 'f32[304,8]{1,0:T(8,128)}', space=vmem, size = 0x26000, scoped, tag = 'scratch operand']
  #allocation3 [shape = 'f32[304,128]{1,0:T(8,128)}', space=vmem, size = 0x26000, scoped, tag = 'scratch operand']
  %s0 = inlined_call_operand.vmem [shape: f32[2,256,8], index: 0, kind: input, shape index: {}]
  %s1 = inlined_call_operand.vmem [shape: bf16[9,8,128], index: 1, kind: input, shape index: {}]
  %s2 = inlined_call_operand.vmem [shape: f32[1,128], index: 2, kind: input, shape index: {}]
  %s3 = inlined_call_operand.vmem [shape: bf16[9,128,128], index: 3, kind: input, shape index: {}]
  %s4 = inlined_call_operand.vmem [shape: f32[1,128], index: 4, kind: input, shape index: {}]
  %s5 = inlined_call_operand.vmem [shape: bf16[8,128], index: 5, kind: input, shape index: {}]
  %s6 = inlined_call_operand.vmem [shape: f32[1,128], index: 6, kind: input, shape index: {}]
  %s7 = inlined_call_operand.hbm [shape: f32[2,256,128], index: 7, kind: output, shape index: {}]
  %s8 = sld [smem:[#allocation0]]
  $region61: #{_lambda_.1} parent=0
    _
  %s10 = ssub.s32 1, %s8
  %s11 = scalar_select 0, %s10, %s8
  $region1: #{_lambda_.1} parent=0
    #allocation4 [shape = 'u8[262144]{0}', space=vmem, size = 0x40000, scoped, tag = 'output window, operand 0']
    #allocation5 [shape = 's32[2]{0}', space=sflag, size = 0x8, scoped, tag = 'scoped memory for _lambda_.1']
    %12 = vsyncpa [#allocation5], 0
    %s13 = scalar_lea.sflag [#allocation5], 1
    %14 = vsyncpa %s13, 0
    loop: start=0, step=1, limit=4
    $region2: #{_lambda_.1} parent=1 // loop_pre_header
      _
    $region3: #{_lambda_.1} parent=1 // loop_header
      %s16 = sphi 0, %s20
      %p17 = scmp.ge.s32.totalorder %s16, 4
      %s26 = sphi 0, %s28
      %s29 = sphi 0, %s26
      %s30 = sphi 0, %s29
      %s46 = sphi 0, %s30
      %s50 = sphi 0, %s50
      %s52 = sphi 0, %s50
      %s53 = sphi 0, %s52
      %s67 = sphi 0, %s53
      %s71 = sphi 0, %s71
      %s73 = sphi 0, %s71
      %s74 = sphi 0, %s73
      %s88 = sphi 0, %s74
      %s92 = sphi 0, %s92
      %s94 = sphi 0, %s92
      %s95 = sphi 0, %s94
      %s109 = sphi 0, %s95
      %s113 = sphi 0, %s113
      %s115 = sphi 0, %s113
      %s116 = sphi 0, %s115
      %s130 = sphi 0, %s116
      %s134 = sphi 0, %s134
      %s136 = sphi 0, %s134
      %s137 = sphi 0, %s136
      %s151 = sphi 0, %s137
      %s155 = sphi 0, %s155
      %s157 = sphi 0, %s155
      %s158 = sphi 0, %s157
      %s172 = sphi 0, %s158
      %s178 = sphi 0, %s180
      %s181 = sphi 0, %s178
      %s182 = sphi 0, %s181
      %s198 = sphi 0, %s182
    $region4: #{_lambda_.1} parent=1 // loop_header_branch
      %19 = sbr.rel (%p17) target = $region8
    $region5: #{_lambda_.1} parent=1 // loop_body
      %s21 = ssub.s32 %s16, 1
      %s22 = ssub.s32 %s16, 2
      %s23 = sadd.s32 %s16, 1
      %s24 = ssub.s32 %s16, %s23
      %p25 = scmp.eq.s32.totalorder %s24, 0
      %s27 = sadd.s32 %s26, 1
      %s28 = scalar_select %p25, %s26, %s27
      %p31 = pneg %p25
      %p32 = scmp.eq.s32.totalorder %s16, 1
      %p33 = por %p31, %p32
      %p34 = scmp.ne.s32.totalorder %s26, %s29
      %p35 = scmp.eq.s32.totalorder %s16, 0
      %p36 = por %p34, %p35
      %p37 = scmp.ne.s32.totalorder %s26, %s29
      %p38 = scmp.eq.s32.totalorder %s21, 1
      %p39 = por %p37, %p38
      %p40 = scmp.ne.s32.totalorder %s29, %s30
      %p41 = scmp.eq.s32.totalorder %s21, 0
      %p42 = por %p40, %p41
      %p43 = scmp.ne.s32.totalorder %s29, %s30
      %p44 = scmp.eq.s32.totalorder %s22, 1
      %p45 = por %p43, %p44
      %p47 = scmp.ne.s32.totalorder %s30, %s46
      %p48 = scmp.eq.s32.totalorder %s22, 0
      %p49 = por %p47, %p48
      %s51 = sadd.s32 %s50, 1
      %p54 = scmp.eq.s32.totalorder %s16, 1
      %p55 = scmp.ne.s32.totalorder %s50, %s52
      %p56 = scmp.eq.s32.totalorder %s16, 0
      %p57 = por %p55, %p56
      %p58 = scmp.ne.s32.totalorder %s50, %s52
      %p59 = scmp.eq.s32.totalorder %s21, 1
      %p60 = por %p58, %p59
      %p61 = scmp.ne.s32.totalorder %s52, %s53
      %p62 = scmp.eq.s32.totalorder %s21, 0
      %p63 = por %p61, %p62
      %p64 = scmp.ne.s32.totalorder %s52, %s53
      %p65 = scmp.eq.s32.totalorder %s22, 1
      %p66 = por %p64, %p65
      %p68 = scmp.ne.s32.totalorder %s53, %s67
      %p69 = scmp.eq.s32.totalorder %s22, 0
      %p70 = por %p68, %p69
      %s72 = sadd.s32 %s71, 1
      %p75 = scmp.eq.s32.totalorder %s16, 1
      %p76 = scmp.ne.s32.totalorder %s71, %s73
      %p77 = scmp.eq.s32.totalorder %s16, 0
      %p78 = por %p76, %p77
      %p79 = scmp.ne.s32.totalorder %s71, %s73
      %p80 = scmp.eq.s32.totalorder %s21, 1
      %p81 = por %p79, %p80
      %p82 = scmp.ne.s32.totalorder %s73, %s74
      %p83 = scmp.eq.s32.totalorder %s21, 0
      %p84 = por %p82, %p83
      %p85 = scmp.ne.s32.totalorder %s73, %s74
      %p86 = scmp.eq.s32.totalorder %s22, 1
      %p87 = por %p85, %p86
      %p89 = scmp.ne.s32.totalorder %s74, %s88
      %p90 = scmp.eq.s32.totalorder %s22, 0
      %p91 = por %p89, %p90
      %s93 = sadd.s32 %s92, 1
      %p96 = scmp.eq.s32.totalorder %s16, 1
      %p97 = scmp.ne.s32.totalorder %s92, %s94
      %p98 = scmp.eq.s32.totalorder %s16, 0
      %p99 = por %p97, %p98
      %p100 = scmp.ne.s32.totalorder %s92, %s94
      %p101 = scmp.eq.s32.totalorder %s21, 1
      %p102 = por %p100, %p101
      %p103 = scmp.ne.s32.totalorder %s94, %s95
      %p104 = scmp.eq.s32.totalorder %s21, 0
      %p105 = por %p103, %p104
      %p106 = scmp.ne.s32.totalorder %s94, %s95
      %p107 = scmp.eq.s32.totalorder %s22, 1
      %p108 = por %p106, %p107
      %p110 = scmp.ne.s32.totalorder %s95, %s109
      %p111 = scmp.eq.s32.totalorder %s22, 0
      %p112 = por %p110, %p111
      %s114 = sadd.s32 %s113, 1
      %p117 = scmp.eq.s32.totalorder %s16, 1
      %p118 = scmp.ne.s32.totalorder %s113, %s115
      %p119 = scmp.eq.s32.totalorder %s16, 0
      %p120 = por %p118, %p119
      %p121 = scmp.ne.s32.totalorder %s113, %s115
      %p122 = scmp.eq.s32.totalorder %s21, 1
      %p123 = por %p121, %p122
      %p124 = scmp.ne.s32.totalorder %s115, %s116
      %p125 = scmp.eq.s32.totalorder %s21, 0
      %p126 = por %p124, %p125
      %p127 = scmp.ne.s32.totalorder %s115, %s116
      %p128 = scmp.eq.s32.totalorder %s22, 1
      %p129 = por %p127, %p128
      %p131 = scmp.ne.s32.totalorder %s116, %s130
      %p132 = scmp.eq.s32.totalorder %s22, 0
      %p133 = por %p131, %p132
      %s135 = sadd.s32 %s134, 1
      %p138 = scmp.eq.s32.totalorder %s16, 1
      %p139 = scmp.ne.s32.totalorder %s134, %s136
      %p140 = scmp.eq.s32.totalorder %s16, 0
      %p141 = por %p139, %p140
      %p142 = scmp.ne.s32.totalorder %s134, %s136
      %p143 = scmp.eq.s32.totalorder %s21, 1
      %p144 = por %p142, %p143
      %p145 = scmp.ne.s32.totalorder %s136, %s137
      %p146 = scmp.eq.s32.totalorder %s21, 0
      %p147 = por %p145, %p146
      %p148 = scmp.ne.s32.totalorder %s136, %s137
      %p149 = scmp.eq.s32.totalorder %s22, 1
      %p150 = por %p148, %p149
      %p152 = scmp.ne.s32.totalorder %s137, %s151
      %p153 = scmp.eq.s32.totalorder %s22, 0
      %p154 = por %p152, %p153
      %s156 = sadd.s32 %s155, 1
      %p159 = scmp.eq.s32.totalorder %s16, 1
      %p160 = scmp.ne.s32.totalorder %s155, %s157
      %p161 = scmp.eq.s32.totalorder %s16, 0
      %p162 = por %p160, %p161
      %p163 = scmp.ne.s32.totalorder %s155, %s157
      %p164 = scmp.eq.s32.totalorder %s21, 1
      %p165 = por %p163, %p164
      %p166 = scmp.ne.s32.totalorder %s157, %s158
      %p167 = scmp.eq.s32.totalorder %s21, 0
      %p168 = por %p166, %p167
      %p169 = scmp.ne.s32.totalorder %s157, %s158
      %p170 = scmp.eq.s32.totalorder %s22, 1
      %p171 = por %p169, %p170
      %p173 = scmp.ne.s32.totalorder %s158, %s172
      %p174 = scmp.eq.s32.totalorder %s22, 0
      %p175 = por %p173, %p174
      %s176 = ssub.s32 %s16, %s23
      %p177 = scmp.eq.s32.totalorder %s176, 0
      %s179 = sadd.s32 %s178, 1
      %s180 = scalar_select %p177, %s178, %s179
      %p183 = pneg %p177
      %p184 = scmp.eq.s32.totalorder %s16, 1
      %p185 = por %p183, %p184
      %p186 = scmp.ne.s32.totalorder %s178, %s181
      %p187 = scmp.eq.s32.totalorder %s16, 0
      %p188 = por %p186, %p187
      %p189 = scmp.ne.s32.totalorder %s178, %s181
      %p190 = scmp.eq.s32.totalorder %s21, 1
      %p191 = por %p189, %p190
      %p192 = scmp.ne.s32.totalorder %s181, %s182
      %p193 = scmp.eq.s32.totalorder %s21, 0
      %p194 = por %p192, %p193
      %p195 = scmp.ne.s32.totalorder %s181, %s182
      %p196 = scmp.eq.s32.totalorder %s22, 1
      %p197 = por %p195, %p196
      %p199 = scmp.ne.s32.totalorder %s182, %s198
      %p200 = scmp.eq.s32.totalorder %s22, 0
      %p201 = por %p199, %p200
      %p202 = scmp.le.s32.totalorder 1, %s16
      %p203 = scmp.lt.s32.totalorder %s16, 3
      %p204 = pnand %p202, %p203
      %p205 = pneg %p204
      // Predicated region
      $region9: #{_lambda_.1} parent=5 // pred_check
        _
      $region10: #{_lambda_.1} parent=5 // pred_check_branch
        %207 = sbr.rel (%p204) target = $region12
      $region11: #{_lambda_.1} parent=5 // pred_region
        %s208 = ssub.s32 %s16, 1
        // Predicated region
        $region13: #{_lambda_.1} parent=11 // pred_check
          %p209 = pneg %p63
        $region14: #{_lambda_.1} parent=11 // pred_check_branch
          %211 = sbr.rel (%p209) target = $region16
        $region15: #{_lambda_.1} parent=11 // pred_region
          _
        $region16: #{_lambda_.1} parent=11 // pred_fallthru
          _
        // Predicated region
        $region17: #{_lambda_.1} parent=11 // pred_check
          %p212 = pneg %p84
        $region18: #{_lambda_.1} parent=11 // pred_check_branch
          %214 = sbr.rel (%p212) target = $region20
        $region19: #{_lambda_.1} parent=11 // pred_region
          _
        $region20: #{_lambda_.1} parent=11 // pred_fallthru
          _
        // Predicated region
        $region21: #{_lambda_.1} parent=11 // pred_check
          %p215 = pneg %p105
        $region22: #{_lambda_.1} parent=11 // pred_check_branch
          %217 = sbr.rel (%p215) target = $region24
        $region23: #{_lambda_.1} parent=11 // pred_region
          _
        $region24: #{_lambda_.1} parent=11 // pred_fallthru
          _
        // Predicated region
        $region25: #{_lambda_.1} parent=11 // pred_check
          %p218 = pneg %p126
        $region26: #{_lambda_.1} parent=11 // pred_check_branch
          %220 = sbr.rel (%p218) target = $region28
        $region27: #{_lambda_.1} parent=11 // pred_region
          _
        $region28: #{_lambda_.1} parent=11 // pred_fallthru
          _
        // Predicated region
        $region29: #{_lambda_.1} parent=11 // pred_check
          %p221 = pneg %p147
        $region30: #{_lambda_.1} parent=11 // pred_check_branch
          %223 = sbr.rel (%p221) target = $region32
        $region31: #{_lambda_.1} parent=11 // pred_region
          _
        $region32: #{_lambda_.1} parent=11 // pred_fallthru
          _
        // Predicated region
        $region33: #{_lambda_.1} parent=11 // pred_check
          %p224 = pneg %p168
        $region34: #{_lambda_.1} parent=11 // pred_check_branch
          %226 = sbr.rel (%p224) target = $region36
        $region35: #{_lambda_.1} parent=11 // pred_region
          _
        $region36: #{_lambda_.1} parent=11 // pred_fallthru
          _
      $region12: #{_lambda_.1} parent=5 // pred_fallthru
        _
      %p227 = scmp.lt.s32.totalorder %s16, 2
      // Predicated region
      $region37: #{_lambda_.1} parent=5 // pred_check
        %p228 = pneg %p227
      $region38: #{_lambda_.1} parent=5 // pred_check_branch
        %230 = sbr.rel (%p228) target = $region40
      $region39: #{_lambda_.1} parent=5 // pred_region
        // Predicated region
        $region41: #{_lambda_.1} parent=39 // pred_check
          %p231 = pneg %p36
        $region42: #{_lambda_.1} parent=39 // pred_check_branch
          %233 = sbr.rel (%p231) target = $region44
        $region43: #{_lambda_.1} parent=39 // pred_region
          %p234 = scmp.lt.s32.totalorder %s16, 1
          %s235 = scalar_select %p234, %s16, 1
          %s236 = smul.addr %s235, 32
          %s237 = smul.addr %s236, 8
          %s238 = scalar_lea.vmem %s0, %s237
        $region44: #{_lambda_.1} parent=39 // pred_fallthru
          _
      $region40: #{_lambda_.1} parent=5 // pred_fallthru
        _
      %p239 = scmp.le.s32.totalorder 1, %s16
      %p240 = scmp.lt.s32.totalorder %s16, 3
      %p241 = pnand %p239, %p240
      %p242 = pneg %p241
      // Predicated region
      $region45: #{_lambda_.1} parent=5 // pred_check
        _
      $region46: #{_lambda_.1} parent=5 // pred_check_branch
        %244 = sbr.rel (%p241) target = $region48
      $region47: #{_lambda_.1} parent=5 // pred_region
        %s245 = ssub.s32 %s16, 1
        %p246 = scmp.lt.s32.totalorder %s21, 1
        %s247 = scalar_select %p246, %s21, 1
        %s248 = smul.addr %s247, 32
        %s249 = smul.addr %s248, 8
        %s250 = scalar_lea.vmem %s0, %s249
        %p251 = pneg %p42
        %p252 = pneg %p39
        %p253 = pneg %p63
        %p254 = pneg %p60
        %p255 = pneg %p84
        %p256 = pneg %p81
        %p257 = pneg %p105
        %p258 = pneg %p102
        %p259 = pneg %p126
        %p260 = pneg %p123
        %p261 = pneg %p147
        %p262 = pneg %p144
        %p263 = pneg %p168
        %p264 = pneg %p165
        %p265 = pneg %p194
        %p266 = pneg %p191
        %s267 = sand.u32 %s181, 1
        %s268 = scalar_lea.sflag [#allocation5], %s267
        %s269 = sand.u32 %s181, 1
        %s270 = smul.addr %s269, 256
        %s271 = scalar_lea.vmem [#allocation4], %s270
        %p272 = scmp.lt.s32.totalorder %s21, 1
        %s273 = scalar_select %p272, %s21, 1
        %s274 = smul.addr %s273, 32
        %s275 = smul.addr %s274, 8
        %s276 = scalar_lea.vmem %s0, %s275
        %v278 = vld [vmem:[%s276] sm:$0xff]
        %v279 = vld [vmem:[%s276 + $0x8] sm:$0xff]
        %v280 = vld [vmem:[%s276 + $0x10] sm:$0xff]
        %v281 = vld [vmem:[%s276 + $0x18] sm:$0xff]
        %v282 = vld [vmem:[%s276 + $0x20] sm:$0xff]
        %v283 = vld [vmem:[%s276 + $0x28] sm:$0xff]
        %v284 = vld [vmem:[%s276 + $0x30] sm:$0xff]
        %v285 = vld [vmem:[%s276 + $0x38] sm:$0xff]
        %v286 = vld [vmem:[%s276 + $0x40] sm:$0xff]
        %v287 = vld [vmem:[%s276 + $0x48] sm:$0xff]
        %v288 = vld [vmem:[%s276 + $0x50] sm:$0xff]
        %v289 = vld [vmem:[%s276 + $0x58] sm:$0xff]
        %v290 = vld [vmem:[%s276 + $0x60] sm:$0xff]
        %v291 = vld [vmem:[%s276 + $0x68] sm:$0xff]
        %v292 = vld [vmem:[%s276 + $0x70] sm:$0xff]
        %v293 = vld [vmem:[%s276 + $0x78] sm:$0xff]
        %v294 = vld [vmem:[%s276 + $0x80] sm:$0xff]
        %v295 = vld [vmem:[%s276 + $0x88] sm:$0xff]
        %v296 = vld [vmem:[%s276 + $0x90] sm:$0xff]
        %v297 = vld [vmem:[%s276 + $0x98] sm:$0xff]
        %v298 = vld [vmem:[%s276 + $0xa0] sm:$0xff]
        %v299 = vld [vmem:[%s276 + $0xa8] sm:$0xff]
        %v300 = vld [vmem:[%s276 + $0xb0] sm:$0xff]
        %v301 = vld [vmem:[%s276 + $0xb8] sm:$0xff]
        %v302 = vld [vmem:[%s276 + $0xc0] sm:$0xff]
        %v303 = vld [vmem:[%s276 + $0xc8] sm:$0xff]
        %v304 = vld [vmem:[%s276 + $0xd0] sm:$0xff]
        %v305 = vld [vmem:[%s276 + $0xd8] sm:$0xff]
        %v306 = vld [vmem:[%s276 + $0xe0] sm:$0xff]
        %v307 = vld [vmem:[%s276 + $0xe8] sm:$0xff]
        %v308 = vld [vmem:[%s276 + $0xf0] sm:$0xff]
        %v309 = vld [vmem:[%s276 + $0xf8] sm:$0xff]
        %v310 = vlaneseq
        %v311 = vshrl.u32 %v310, 7
        %v312 = vadd.s32 %v311, 8
        %v313 = vadd.s32 %v311, 16
        %v314 = vadd.s32 %v311, 24
        %v315 = vadd.s32 %v311, 32
        %v316 = vadd.s32 %v311, 40
        %v317 = vadd.s32 %v311, 48
        %v318 = vadd.s32 %v311, 56
        %v319 = vadd.s32 %v311, 64
        %v320 = vadd.s32 %v311, 72
        %v321 = vadd.s32 %v311, 80
        %v322 = vadd.s32 %v311, 88
        %v323 = vadd.s32 %v311, 96
        %v324 = vadd.s32 %v311, 104
        %v325 = vadd.s32 %v311, 112
        %v326 = vadd.s32 %v311, 120
        %v327 = vadd.s32 %v311, 128
        %v328 = vadd.s32 %v311, 136
        %v329 = vadd.s32 %v311, 144
        %v330 = vadd.s32 %v311, 152
        %v331 = vadd.s32 %v311, 160
        %v332 = vadd.s32 %v311, 168
        %v333 = vadd.s32 %v311, 176
        %v334 = vadd.s32 %v311, 184
        %v335 = vadd.s32 %v311, 192
        %v336 = vadd.s32 %v311, 200
        %v337 = vadd.s32 %v311, 208
        %v338 = vadd.s32 %v311, 216
        %v339 = vadd.s32 %v311, 224
        %v340 = vadd.s32 %v311, 232
        %v341 = vadd.s32 %v311, 240
        %v342 = vadd.s32 %v311, 248
        %vm343 = vcmp.lt.s32.totalorder %v311, 0
        %v344 = vsub.s32 0, %v311
        %v345 = vsel %vm343, %v344, %v311
        %v346 = vshrl.u32 %v345, 4
        %v347 = vand.u32 %v345, 15
        %v348 = vsub.s32 0, %v347
        %v349 = vsel %vm343, %v348, %v347
        %vm350 = vcmp.lt.s32.totalorder %v312, 0
        %v351 = vsub.s32 0, %v312
        %v352 = vsel %vm350, %v351, %v312
        %v353 = vshrl.u32 %v352, 4
        %v354 = vand.u32 %v352, 15
        %v355 = vsub.s32 0, %v354
        %v356 = vsel %vm350, %v355, %v354
        %vm357 = vcmp.lt.s32.totalorder %v313, 0
        %v358 = vsub.s32 0, %v313
        %v359 = vsel %vm357, %v358, %v313
        %v360 = vshrl.u32 %v359, 4
        %v361 = vand.u32 %v359, 15
        %v362 = vsub.s32 0, %v361
        %v363 = vsel %vm357, %v362, %v361
        %vm364 = vcmp.lt.s32.totalorder %v314, 0
        %v365 = vsub.s32 0, %v314
        %v366 = vsel %vm364, %v365, %v314
        %v367 = vshrl.u32 %v366, 4
        %v368 = vand.u32 %v366, 15
        %v369 = vsub.s32 0, %v368
        %v370 = vsel %vm364, %v369, %v368
        %vm371 = vcmp.lt.s32.totalorder %v315, 0
        %v372 = vsub.s32 0, %v315
        %v373 = vsel %vm371, %v372, %v315
        %v374 = vshrl.u32 %v373, 4
        %v375 = vand.u32 %v373, 15
        %v376 = vsub.s32 0, %v375
        %v377 = vsel %vm371, %v376, %v375
        %vm378 = vcmp.lt.s32.totalorder %v316, 0
        %v379 = vsub.s32 0, %v316
        %v380 = vsel %vm378, %v379, %v316
        %v381 = vshrl.u32 %v380, 4
        %v382 = vand.u32 %v380, 15
        %v383 = vsub.s32 0, %v382
        %v384 = vsel %vm378, %v383, %v382
        %vm385 = vcmp.lt.s32.totalorder %v317, 0
        %v386 = vsub.s32 0, %v317
        %v387 = vsel %vm385, %v386, %v317
        %v388 = vshrl.u32 %v387, 4
        %v389 = vand.u32 %v387, 15
        %v390 = vsub.s32 0, %v389
        %v391 = vsel %vm385, %v390, %v389
        %vm392 = vcmp.lt.s32.totalorder %v318, 0
        %v393 = vsub.s32 0, %v318
        %v394 = vsel %vm392, %v393, %v318
        %v395 = vshrl.u32 %v394, 4
        %v396 = vand.u32 %v394, 15
        %v397 = vsub.s32 0, %v396
        %v398 = vsel %vm392, %v397, %v396
        %vm399 = vcmp.lt.s32.totalorder %v319, 0
        %v400 = vsub.s32 0, %v319
        %v401 = vsel %vm399, %v400, %v319
        %v402 = vshrl.u32 %v401, 4
        %v403 = vand.u32 %v401, 15
        %v404 = vsub.s32 0, %v403
        %v405 = vsel %vm399, %v404, %v403
        %vm406 = vcmp.lt.s32.totalorder %v320, 0
        %v407 = vsub.s32 0, %v320
        %v408 = vsel %vm406, %v407, %v320
        %v409 = vshrl.u32 %v408, 4
        %v410 = vand.u32 %v408, 15
        %v411 = vsub.s32 0, %v410
        %v412 = vsel %vm406, %v411, %v410
        %vm413 = vcmp.lt.s32.totalorder %v321, 0
        %v414 = vsub.s32 0, %v321
        %v415 = vsel %vm413, %v414, %v321
        %v416 = vshrl.u32 %v415, 4
        %v417 = vand.u32 %v415, 15
        %v418 = vsub.s32 0, %v417
        %v419 = vsel %vm413, %v418, %v417
        %vm420 = vcmp.lt.s32.totalorder %v322, 0
        %v421 = vsub.s32 0, %v322
        %v422 = vsel %vm420, %v421, %v322
        %v423 = vshrl.u32 %v422, 4
        %v424 = vand.u32 %v422, 15
        %v425 = vsub.s32 0, %v424
        %v426 = vsel %vm420, %v425, %v424
        %vm427 = vcmp.lt.s32.totalorder %v323, 0
        %v428 = vsub.s32 0, %v323
        %v429 = vsel %vm427, %v428, %v323
        %v430 = vshrl.u32 %v429, 4
        %v431 = vand.u32 %v429, 15
        %v432 = vsub.s32 0, %v431
        %v433 = vsel %vm427, %v432, %v431
        %vm434 = vcmp.lt.s32.totalorder %v324, 0
        %v435 = vsub.s32 0, %v324
        %v436 = vsel %vm434, %v435, %v324
        %v437 = vshrl.u32 %v436, 4
        %v438 = vand.u32 %v436, 15
        %v439 = vsub.s32 0, %v438
        %v440 = vsel %vm434, %v439, %v438
        %vm441 = vcmp.lt.s32.totalorder %v325, 0
        %v442 = vsub.s32 0, %v325
        %v443 = vsel %vm441, %v442, %v325
        %v444 = vshrl.u32 %v443, 4
        %v445 = vand.u32 %v443, 15
        %v446 = vsub.s32 0, %v445
        %v447 = vsel %vm441, %v446, %v445
        %vm448 = vcmp.lt.s32.totalorder %v326, 0
        %v449 = vsub.s32 0, %v326
        %v450 = vsel %vm448, %v449, %v326
        %v451 = vshrl.u32 %v450, 4
        %v452 = vand.u32 %v450, 15
        %v453 = vsub.s32 0, %v452
        %v454 = vsel %vm448, %v453, %v452
        %vm455 = vcmp.lt.s32.totalorder %v327, 0
        %v456 = vsub.s32 0, %v327
        %v457 = vsel %vm455, %v456, %v327
        %v458 = vshrl.u32 %v457, 4
        %v459 = vand.u32 %v457, 15
        %v460 = vsub.s32 0, %v459
        %v461 = vsel %vm455, %v460, %v459
        %vm462 = vcmp.lt.s32.totalorder %v328, 0
        %v463 = vsub.s32 0, %v328
        %v464 = vsel %vm462, %v463, %v328
        %v465 = vshrl.u32 %v464, 4
        %v466 = vand.u32 %v464, 15
        %v467 = vsub.s32 0, %v466
        %v468 = vsel %vm462, %v467, %v466
        %vm469 = vcmp.lt.s32.totalorder %v329, 0
        %v470 = vsub.s32 0, %v329
        %v471 = vsel %vm469, %v470, %v329
        %v472 = vshrl.u32 %v471, 4
        %v473 = vand.u32 %v471, 15
        %v474 = vsub.s32 0, %v473
        %v475 = vsel %vm469, %v474, %v473
        %vm476 = vcmp.lt.s32.totalorder %v330, 0
        %v477 = vsub.s32 0, %v330
        %v478 = vsel %vm476, %v477, %v330
        %v479 = vshrl.u32 %v478, 4
        %v480 = vand.u32 %v478, 15
        %v481 = vsub.s32 0, %v480
        %v482 = vsel %vm476, %v481, %v480
        %vm483 = vcmp.lt.s32.totalorder %v331, 0
        %v484 = vsub.s32 0, %v331
        %v485 = vsel %vm483, %v484, %v331
        %v486 = vshrl.u32 %v485, 4
        %v487 = vand.u32 %v485, 15
        %v488 = vsub.s32 0, %v487
        %v489 = vsel %vm483, %v488, %v487
        %vm490 = vcmp.lt.s32.totalorder %v332, 0
        %v491 = vsub.s32 0, %v332
        %v492 = vsel %vm490, %v491, %v332
        %v493 = vshrl.u32 %v492, 4
        %v494 = vand.u32 %v492, 15
        %v495 = vsub.s32 0, %v494
        %v496 = vsel %vm490, %v495, %v494
        %vm497 = vcmp.lt.s32.totalorder %v333, 0
        %v498 = vsub.s32 0, %v333
        %v499 = vsel %vm497, %v498, %v333
        %v500 = vshrl.u32 %v499, 4
        %v501 = vand.u32 %v499, 15
        %v502 = vsub.s32 0, %v501
        %v503 = vsel %vm497, %v502, %v501
        %vm504 = vcmp.lt.s32.totalorder %v334, 0
        %v505 = vsub.s32 0, %v334
        %v506 = vsel %vm504, %v505, %v334
        %v507 = vshrl.u32 %v506, 4
        %v508 = vand.u32 %v506, 15
        %v509 = vsub.s32 0, %v508
        %v510 = vsel %vm504, %v509, %v508
        %vm511 = vcmp.lt.s32.totalorder %v335, 0
        %v512 = vsub.s32 0, %v335
        %v513 = vsel %vm511, %v512, %v335
        %v514 = vshrl.u32 %v513, 4
        %v515 = vand.u32 %v513, 15
        %v516 = vsub.s32 0, %v515
        %v517 = vsel %vm511, %v516, %v515
        %vm518 = vcmp.lt.s32.totalorder %v336, 0
        %v519 = vsub.s32 0, %v336
        %v520 = vsel %vm518, %v519, %v336
        %v521 = vshrl.u32 %v520, 4
        %v522 = vand.u32 %v520, 15
        %v523 = vsub.s32 0, %v522
        %v524 = vsel %vm518, %v523, %v522
        %vm525 = vcmp.lt.s32.totalorder %v337, 0
        %v526 = vsub.s32 0, %v337
        %v527 = vsel %vm525, %v526, %v337
        %v528 = vshrl.u32 %v527, 4
        %v529 = vand.u32 %v527, 15
        %v530 = vsub.s32 0, %v529
        %v531 = vsel %vm525, %v530, %v529
        %vm532 = vcmp.lt.s32.totalorder %v338, 0
        %v533 = vsub.s32 0, %v338
        %v534 = vsel %vm532, %v533, %v338
        %v535 = vshrl.u32 %v534, 4
        %v536 = vand.u32 %v534, 15
        %v537 = vsub.s32 0, %v536
        %v538 = vsel %vm532, %v537, %v536
        %vm539 = vcmp.lt.s32.totalorder %v339, 0
        %v540 = vsub.s32 0, %v339
        %v541 = vsel %vm539, %v540, %v339
        %v542 = vshrl.u32 %v541, 4
        %v543 = vand.u32 %v541, 15
        %v544 = vsub.s32 0, %v543
        %v545 = vsel %vm539, %v544, %v543
        %vm546 = vcmp.lt.s32.totalorder %v340, 0
        %v547 = vsub.s32 0, %v340
        %v548 = vsel %vm546, %v547, %v340
        %v549 = vshrl.u32 %v548, 4
        %v550 = vand.u32 %v548, 15
        %v551 = vsub.s32 0, %v550
        %v552 = vsel %vm546, %v551, %v550
        %vm553 = vcmp.lt.s32.totalorder %v341, 0
        %v554 = vsub.s32 0, %v341
        %v555 = vsel %vm553, %v554, %v341
        %v556 = vshrl.u32 %v555, 4
        %v557 = vand.u32 %v555, 15
        %v558 = vsub.s32 0, %v557
        %v559 = vsel %vm553, %v558, %v557
        %vm560 = vcmp.lt.s32.totalorder %v342, 0
        %v561 = vsub.s32 0, %v342
        %v562 = vsel %vm560, %v561, %v342
        %v563 = vshrl.u32 %v562, 4
        %v564 = vand.u32 %v562, 15
        %v565 = vsub.s32 0, %v564
        %v566 = vsel %vm560, %v565, %v564
        %vm567 = vcmp.ne.s32.totalorder %v349, 0
        %vm568 = vcmp.ne.s32.totalorder %v356, 0
        %vm569 = vcmp.ne.s32.totalorder %v363, 0
        %vm570 = vcmp.ne.s32.totalorder %v370, 0
        %vm571 = vcmp.ne.s32.totalorder %v377, 0
        %vm572 = vcmp.ne.s32.totalorder %v384, 0
        %vm573 = vcmp.ne.s32.totalorder %v391, 0
        %vm574 = vcmp.ne.s32.totalorder %v398, 0
        %vm575 = vcmp.ne.s32.totalorder %v405, 0
        %vm576 = vcmp.ne.s32.totalorder %v412, 0
        %vm577 = vcmp.ne.s32.totalorder %v419, 0
        %vm578 = vcmp.ne.s32.totalorder %v426, 0
        %vm579 = vcmp.ne.s32.totalorder %v433, 0
        %vm580 = vcmp.ne.s32.totalorder %v440, 0
        %vm581 = vcmp.ne.s32.totalorder %v447, 0
        %vm582 = vcmp.ne.s32.totalorder %v454, 0
        %vm583 = vcmp.ne.s32.totalorder %v461, 0
        %vm584 = vcmp.ne.s32.totalorder %v468, 0
        %vm585 = vcmp.ne.s32.totalorder %v475, 0
        %vm586 = vcmp.ne.s32.totalorder %v482, 0
        %vm587 = vcmp.ne.s32.totalorder %v489, 0
        %vm588 = vcmp.ne.s32.totalorder %v496, 0
        %vm589 = vcmp.ne.s32.totalorder %v503, 0
        %vm590 = vcmp.ne.s32.totalorder %v510, 0
        %vm591 = vcmp.ne.s32.totalorder %v517, 0
        %vm592 = vcmp.ne.s32.totalorder %v524, 0
        %vm593 = vcmp.ne.s32.totalorder %v531, 0
        %vm594 = vcmp.ne.s32.totalorder %v538, 0
        %vm595 = vcmp.ne.s32.totalorder %v545, 0
        %vm596 = vcmp.ne.s32.totalorder %v552, 0
        %vm597 = vcmp.ne.s32.totalorder %v559, 0
        %vm598 = vcmp.ne.s32.totalorder %v566, 0
        %vm599 = vcmp.lt.s32.totalorder %v349, 0
        %vm600 = vcmp.lt.s32.totalorder %v356, 0
        %vm601 = vcmp.lt.s32.totalorder %v363, 0
        %vm602 = vcmp.lt.s32.totalorder %v370, 0
        %vm603 = vcmp.lt.s32.totalorder %v377, 0
        %vm604 = vcmp.lt.s32.totalorder %v384, 0
        %vm605 = vcmp.lt.s32.totalorder %v391, 0
        %vm606 = vcmp.lt.s32.totalorder %v398, 0
        %vm607 = vcmp.lt.s32.totalorder %v405, 0
        %vm608 = vcmp.lt.s32.totalorder %v412, 0
        %vm609 = vcmp.lt.s32.totalorder %v419, 0
        %vm610 = vcmp.lt.s32.totalorder %v426, 0
        %vm611 = vcmp.lt.s32.totalorder %v433, 0
        %vm612 = vcmp.lt.s32.totalorder %v440, 0
        %vm613 = vcmp.lt.s32.totalorder %v447, 0
        %vm614 = vcmp.lt.s32.totalorder %v454, 0
        %vm615 = vcmp.lt.s32.totalorder %v461, 0
        %vm616 = vcmp.lt.s32.totalorder %v468, 0
        %vm617 = vcmp.lt.s32.totalorder %v475, 0
        %vm618 = vcmp.lt.s32.totalorder %v482, 0
        %vm619 = vcmp.lt.s32.totalorder %v489, 0
        %vm620 = vcmp.lt.s32.totalorder %v496, 0
        %vm621 = vcmp.lt.s32.totalorder %v503, 0
        %vm622 = vcmp.lt.s32.totalorder %v510, 0
        %vm623 = vcmp.lt.s32.totalorder %v517, 0
        %vm624 = vcmp.lt.s32.totalorder %v524, 0
        %vm625 = vcmp.lt.s32.totalorder %v531, 0
        %vm626 = vcmp.lt.s32.totalorder %v538, 0
        %vm627 = vcmp.lt.s32.totalorder %v545, 0
        %vm628 = vcmp.lt.s32.totalorder %v552, 0
        %vm629 = vcmp.lt.s32.totalorder %v559, 0
        %vm630 = vcmp.lt.s32.totalorder %v566, 0
        %vm631 = vmand %vm599, %vm567
        %vm632 = vmand %vm600, %vm568
        %vm633 = vmand %vm601, %vm569
        %vm634 = vmand %vm602, %vm570
        %vm635 = vmand %vm603, %vm571
        %vm636 = vmand %vm604, %vm572
        %vm637 = vmand %vm605, %vm573
        %vm638 = vmand %vm606, %vm574
        %vm639 = vmand %vm607, %vm575
        %vm640 = vmand %vm608, %vm576
        %vm641 = vmand %vm609, %vm577
        %vm642 = vmand %vm610, %vm578
        %vm643 = vmand %vm611, %vm579
        %vm644 = vmand %vm612, %vm580
        %vm645 = vmand %vm613, %vm581
        %vm646 = vmand %vm614, %vm582
        %vm647 = vmand %vm615, %vm583
        %vm648 = vmand %vm616, %vm584
        %vm649 = vmand %vm617, %vm585
        %vm650 = vmand %vm618, %vm586
        %vm651 = vmand %vm619, %vm587
        %vm652 = vmand %vm620, %vm588
        %vm653 = vmand %vm621, %vm589
        %vm654 = vmand %vm622, %vm590
        %vm655 = vmand %vm623, %vm591
        %vm656 = vmand %vm624, %vm592
        %vm657 = vmand %vm625, %vm593
        %vm658 = vmand %vm626, %vm594
        %vm659 = vmand %vm627, %vm595
        %vm660 = vmand %vm628, %vm596
        %vm661 = vmand %vm629, %vm597
        %vm662 = vmand %vm630, %vm598
        %v663 = vadd.s32 %v349, 16
        %v664 = vadd.s32 %v356, 16
        %v665 = vadd.s32 %v363, 16
        %v666 = vadd.s32 %v370, 16
        %v667 = vadd.s32 %v377, 16
        %v668 = vadd.s32 %v384, 16
        %v669 = vadd.s32 %v391, 16
        %v670 = vadd.s32 %v398, 16
        %v671 = vadd.s32 %v405, 16
        %v672 = vadd.s32 %v412, 16
        %v673 = vadd.s32 %v419, 16
        %v674 = vadd.s32 %v426, 16
        %v675 = vadd.s32 %v433, 16
        %v676 = vadd.s32 %v440, 16
        %v677 = vadd.s32 %v447, 16
        %v678 = vadd.s32 %v454, 16
        %v679 = vadd.s32 %v461, 16
        %v680 = vadd.s32 %v468, 16
        %v681 = vadd.s32 %v475, 16
        %v682 = vadd.s32 %v482, 16
        %v683 = vadd.s32 %v489, 16
        %v684 = vadd.s32 %v496, 16
        %v685 = vadd.s32 %v503, 16
        %v686 = vadd.s32 %v510, 16
        %v687 = vadd.s32 %v517, 16
        %v688 = vadd.s32 %v524, 16
        %v689 = vadd.s32 %v531, 16
        %v690 = vadd.s32 %v538, 16
        %v691 = vadd.s32 %v545, 16
        %v692 = vadd.s32 %v552, 16
        %v693 = vadd.s32 %v559, 16
        %v694 = vadd.s32 %v566, 16
        %v695 = vsel %vm631, %v663, %v349
        %v696 = vsel %vm632, %v664, %v356
        %v697 = vsel %vm633, %v665, %v363
        %v698 = vsel %vm634, %v666, %v370
        %v699 = vsel %vm635, %v667, %v377
        %v700 = vsel %vm636, %v668, %v384
        %v701 = vsel %vm637, %v669, %v391
        %v702 = vsel %vm638, %v670, %v398
        %v703 = vsel %vm639, %v671, %v405
        %v704 = vsel %vm640, %v672, %v412
        %v705 = vsel %vm641, %v673, %v419
        %v706 = vsel %vm642, %v674, %v426
        %v707 = vsel %vm643, %v675, %v433
        %v708 = vsel %vm644, %v676, %v440
        %v709 = vsel %vm645, %v677, %v447
        %v710 = vsel %vm646, %v678, %v454
        %v711 = vsel %vm647, %v679, %v461
        %v712 = vsel %vm648, %v680, %v468
        %v713 = vsel %vm649, %v681, %v475
        %v714 = vsel %vm650, %v682, %v482
        %v715 = vsel %vm651, %v683, %v489
        %v716 = vsel %vm652, %v684, %v496
        %v717 = vsel %vm653, %v685, %v503
        %v718 = vsel %vm654, %v686, %v510
        %v719 = vsel %vm655, %v687, %v517
        %v720 = vsel %vm656, %v688, %v524
        %v721 = vsel %vm657, %v689, %v531
        %v722 = vsel %vm658, %v690, %v538
        %v723 = vsel %vm659, %v691, %v545
        %v724 = vsel %vm660, %v692, %v552
        %v725 = vsel %vm661, %v693, %v559
        %v726 = vsel %vm662, %v694, %v566
        %vm727 = vcmp.ne.s32.totalorder %v695, 0
        %vm728 = vcmp.ne.s32.totalorder %v696, 0
        %vm729 = vcmp.ne.s32.totalorder %v697, 0
        %vm730 = vcmp.ne.s32.totalorder %v698, 0
        %vm731 = vcmp.ne.s32.totalorder %v699, 0
        %vm732 = vcmp.ne.s32.totalorder %v700, 0
        %vm733 = vcmp.ne.s32.totalorder %v701, 0
        %vm734 = vcmp.ne.s32.totalorder %v702, 0
        %vm735 = vcmp.ne.s32.totalorder %v703, 0
        %vm736 = vcmp.ne.s32.totalorder %v704, 0
        %vm737 = vcmp.ne.s32.totalorder %v705, 0
        %vm738 = vcmp.ne.s32.totalorder %v706, 0
        %vm739 = vcmp.ne.s32.totalorder %v707, 0
        %vm740 = vcmp.ne.s32.totalorder %v708, 0
        %vm741 = vcmp.ne.s32.totalorder %v709, 0
        %vm742 = vcmp.ne.s32.totalorder %v710, 0
        %vm743 = vcmp.ne.s32.totalorder %v711, 0
        %vm744 = vcmp.ne.s32.totalorder %v712, 0
        %vm745 = vcmp.ne.s32.totalorder %v713, 0
        %vm746 = vcmp.ne.s32.totalorder %v714, 0
        %vm747 = vcmp.ne.s32.totalorder %v715, 0
        %vm748 = vcmp.ne.s32.totalorder %v716, 0
        %vm749 = vcmp.ne.s32.totalorder %v717, 0
        %vm750 = vcmp.ne.s32.totalorder %v718, 0
        %vm751 = vcmp.ne.s32.totalorder %v719, 0
        %vm752 = vcmp.ne.s32.totalorder %v720, 0
        %vm753 = vcmp.ne.s32.totalorder %v721, 0
        %vm754 = vcmp.ne.s32.totalorder %v722, 0
        %vm755 = vcmp.ne.s32.totalorder %v723, 0
        %vm756 = vcmp.ne.s32.totalorder %v724, 0
        %vm757 = vcmp.ne.s32.totalorder %v725, 0
        %vm758 = vcmp.ne.s32.totalorder %v726, 0
        %v759 = vsel %vm727, 1, 0
        %v760 = vsel %vm728, 1, 0
        %v761 = vsel %vm729, 1, 0
        %v762 = vsel %vm730, 1, 0
        %v763 = vsel %vm731, 1, 0
        %v764 = vsel %vm732, 1, 0
        %v765 = vsel %vm733, 1, 0
        %v766 = vsel %vm734, 1, 0
        %v767 = vsel %vm735, 1, 0
        %v768 = vsel %vm736, 1, 0
        %v769 = vsel %vm737, 1, 0
        %v770 = vsel %vm738, 1, 0
        %v771 = vsel %vm739, 1, 0
        %v772 = vsel %vm740, 1, 0
        %v773 = vsel %vm741, 1, 0
        %v774 = vsel %vm742, 1, 0
        %v775 = vsel %vm743, 1, 0
        %v776 = vsel %vm744, 1, 0
        %v777 = vsel %vm745, 1, 0
        %v778 = vsel %vm746, 1, 0
        %v779 = vsel %vm747, 1, 0
        %v780 = vsel %vm748, 1, 0
        %v781 = vsel %vm749, 1, 0
        %v782 = vsel %vm750, 1, 0
        %v783 = vsel %vm751, 1, 0
        %v784 = vsel %vm752, 1, 0
        %v785 = vsel %vm753, 1, 0
        %v786 = vsel %vm754, 1, 0
        %v787 = vsel %vm755, 1, 0
        %v788 = vsel %vm756, 1, 0
        %v789 = vsel %vm757, 1, 0
        %v790 = vsel %vm758, 1, 0
        %v791 = vcvt.s32.f32 %v759
        %v792 = vcvt.s32.f32 %v760
        %v793 = vcvt.s32.f32 %v761
        %v794 = vcvt.s32.f32 %v762
        %v795 = vcvt.s32.f32 %v763
        %v796 = vcvt.s32.f32 %v764
        %v797 = vcvt.s32.f32 %v765
        %v798 = vcvt.s32.f32 %v766
        %v799 = vcvt.s32.f32 %v767
        %v800 = vcvt.s32.f32 %v768
        %v801 = vcvt.s32.f32 %v769
        %v802 = vcvt.s32.f32 %v770
        %v803 = vcvt.s32.f32 %v771
        %v804 = vcvt.s32.f32 %v772
        %v805 = vcvt.s32.f32 %v773
        %v806 = vcvt.s32.f32 %v774
        %v807 = vcvt.s32.f32 %v775
        %v808 = vcvt.s32.f32 %v776
        %v809 = vcvt.s32.f32 %v777
        %v810 = vcvt.s32.f32 %v778
        %v811 = vcvt.s32.f32 %v779
        %v812 = vcvt.s32.f32 %v780
        %v813 = vcvt.s32.f32 %v781
        %v814 = vcvt.s32.f32 %v782
        %v815 = vcvt.s32.f32 %v783
        %v816 = vcvt.s32.f32 %v784
        %v817 = vcvt.s32.f32 %v785
        %v818 = vcvt.s32.f32 %v786
        %v819 = vcvt.s32.f32 %v787
        %v820 = vcvt.s32.f32 %v788
        %v821 = vcvt.s32.f32 %v789
        %v822 = vcvt.s32.f32 %v790
        %vm823 = vcmp.ne.s32.totalorder %v695, 15
        %vm824 = vcmp.ne.s32.totalorder %v696, 15
        %vm825 = vcmp.ne.s32.totalorder %v697, 15
        %vm826 = vcmp.ne.s32.totalorder %v698, 15
        %vm827 = vcmp.ne.s32.totalorder %v699, 15
        %vm828 = vcmp.ne.s32.totalorder %v700, 15
        %vm829 = vcmp.ne.s32.totalorder %v701, 15
        %vm830 = vcmp.ne.s32.totalorder %v702, 15
        %vm831 = vcmp.ne.s32.totalorder %v703, 15
        %vm832 = vcmp.ne.s32.totalorder %v704, 15
        %vm833 = vcmp.ne.s32.totalorder %v705, 15
        %vm834 = vcmp.ne.s32.totalorder %v706, 15
        %vm835 = vcmp.ne.s32.totalorder %v707, 15
        %vm836 = vcmp.ne.s32.totalorder %v708, 15
        %vm837 = vcmp.ne.s32.totalorder %v709, 15
        %vm838 = vcmp.ne.s32.totalorder %v710, 15
        %vm839 = vcmp.ne.s32.totalorder %v711, 15
        %vm840 = vcmp.ne.s32.totalorder %v712, 15
        %vm841 = vcmp.ne.s32.totalorder %v713, 15
        %vm842 = vcmp.ne.s32.totalorder %v714, 15
        %vm843 = vcmp.ne.s32.totalorder %v715, 15
        %vm844 = vcmp.ne.s32.totalorder %v716, 15
        %vm845 = vcmp.ne.s32.totalorder %v717, 15
        %vm846 = vcmp.ne.s32.totalorder %v718, 15
        %vm847 = vcmp.ne.s32.totalorder %v719, 15
        %vm848 = vcmp.ne.s32.totalorder %v720, 15
        %vm849 = vcmp.ne.s32.totalorder %v721, 15
        %vm850 = vcmp.ne.s32.totalorder %v722, 15
        %vm851 = vcmp.ne.s32.totalorder %v723, 15
        %vm852 = vcmp.ne.s32.totalorder %v724, 15
        %vm853 = vcmp.ne.s32.totalorder %v725, 15
        %vm854 = vcmp.ne.s32.totalorder %v726, 15
        %v855 = vsel %vm823, 1, 0
        %v856 = vsel %vm824, 1, 0
        %v857 = vsel %vm825, 1, 0
        %v858 = vsel %vm826, 1, 0
        %v859 = vsel %vm827, 1, 0
        %v860 = vsel %vm828, 1, 0
        %v861 = vsel %vm829, 1, 0
        %v862 = vsel %vm830, 1, 0
        %v863 = vsel %vm831, 1, 0
        %v864 = vsel %vm832, 1, 0
        %v865 = vsel %vm833, 1, 0
        %v866 = vsel %vm834, 1, 0
        %v867 = vsel %vm835, 1, 0
        %v868 = vsel %vm836, 1, 0
        %v869 = vsel %vm837, 1, 0
        %v870 = vsel %vm838, 1, 0
        %v871 = vsel %vm839, 1, 0
        %v872 = vsel %vm840, 1, 0
        %v873 = vsel %vm841, 1, 0
        %v874 = vsel %vm842, 1, 0
        %v875 = vsel %vm843, 1, 0
        %v876 = vsel %vm844, 1, 0
        %v877 = vsel %vm845, 1, 0
        %v878 = vsel %vm846, 1, 0
        %v879 = vsel %vm847, 1, 0
        %v880 = vsel %vm848, 1, 0
        %v881 = vsel %vm849, 1, 0
        %v882 = vsel %vm850, 1, 0
        %v883 = vsel %vm851, 1, 0
        %v884 = vsel %vm852, 1, 0
        %v885 = vsel %vm853, 1, 0
        %v886 = vsel %vm854, 1, 0
        %v887 = vcvt.s32.f32 %v855
        %v888 = vcvt.s32.f32 %v856
        %v889 = vcvt.s32.f32 %v857
        %v890 = vcvt.s32.f32 %v858
        %v891 = vcvt.s32.f32 %v859
        %v892 = vcvt.s32.f32 %v860
        %v893 = vcvt.s32.f32 %v861
        %v894 = vcvt.s32.f32 %v862
        %v895 = vcvt.s32.f32 %v863
        %v896 = vcvt.s32.f32 %v864
        %v897 = vcvt.s32.f32 %v865
        %v898 = vcvt.s32.f32 %v866
        %v899 = vcvt.s32.f32 %v867
        %v900 = vcvt.s32.f32 %v868
        %v901 = vcvt.s32.f32 %v869
        %v902 = vcvt.s32.f32 %v870
        %v903 = vcvt.s32.f32 %v871
        %v904 = vcvt.s32.f32 %v872
        %v905 = vcvt.s32.f32 %v873
        %v906 = vcvt.s32.f32 %v874
        %v907 = vcvt.s32.f32 %v875
        %v908 = vcvt.s32.f32 %v876
        %v909 = vcvt.s32.f32 %v877
        %v910 = vcvt.s32.f32 %v878
        %v911 = vcvt.s32.f32 %v879
        %v912 = vcvt.s32.f32 %v880
        %v913 = vcvt.s32.f32 %v881
        %v914 = vcvt.s32.f32 %v882
        %v915 = vcvt.s32.f32 %v883
        %v916 = vcvt.s32.f32 %v884
        %v917 = vcvt.s32.f32 %v885
        %v918 = vcvt.s32.f32 %v886
        %vm919 = vcmask 64512
        %920 = vst.msk [vmem:[#allocation2] sm:$0xff] %vm919, 0.0
        %921 = vst.msk [vmem:[#allocation2 + $0x8] sm:$0xff] %vm919, 0.0
        %922 = vst.msk [vmem:[#allocation2 + $0x10] sm:$0xff] %vm919, 0.0
        %923 = vst.msk [vmem:[#allocation2 + $0x18] sm:$0xff] %vm919, 0.0
        %924 = vst.msk [vmem:[#allocation2 + $0x20] sm:$0xff] %vm919, 0.0
        %925 = vst.msk [vmem:[#allocation2 + $0x28] sm:$0xff] %vm919, 0.0
        %926 = vst.msk [vmem:[#allocation2 + $0x30] sm:$0xff] %vm919, 0.0
        %927 = vst.msk [vmem:[#allocation2 + $0x38] sm:$0xff] %vm919, 0.0
        %928 = vst.msk [vmem:[#allocation2 + $0x40] sm:$0xff] %vm919, 0.0
        %929 = vst.msk [vmem:[#allocation2 + $0x48] sm:$0xff] %vm919, 0.0
        %930 = vst.msk [vmem:[#allocation2 + $0x50] sm:$0xff] %vm919, 0.0
        %931 = vst.msk [vmem:[#allocation2 + $0x58] sm:$0xff] %vm919, 0.0
        %932 = vst.msk [vmem:[#allocation2 + $0x60] sm:$0xff] %vm919, 0.0
        %933 = vst.msk [vmem:[#allocation2 + $0x68] sm:$0xff] %vm919, 0.0
        %934 = vst.msk [vmem:[#allocation2 + $0x70] sm:$0xff] %vm919, 0.0
        %935 = vst.msk [vmem:[#allocation2 + $0x78] sm:$0xff] %vm919, 0.0
        %936 = vst.msk [vmem:[#allocation2 + $0x80] sm:$0xff] %vm919, 0.0
        %937 = vst.msk [vmem:[#allocation2 + $0x88] sm:$0xff] %vm919, 0.0
        %938 = vst.msk [vmem:[#allocation2 + $0x90] sm:$0xff] %vm919, 0.0
        %939 = vst.msk [vmem:[#allocation2 + $0x98] sm:$0xff] %vm919, 0.0
        %940 = vst.msk [vmem:[#allocation2 + $0xa0] sm:$0xff] %vm919, 0.0
        %941 = vst.msk [vmem:[#allocation2 + $0xa8] sm:$0xff] %vm919, 0.0
        %942 = vst.msk [vmem:[#allocation2 + $0xb0] sm:$0xff] %vm919, 0.0
        %943 = vst.msk [vmem:[#allocation2 + $0xb8] sm:$0xff] %vm919, 0.0
        %944 = vst.msk [vmem:[#allocation2 + $0xc0] sm:$0xff] %vm919, 0.0
        %945 = vst.msk [vmem:[#allocation2 + $0xc8] sm:$0xff] %vm919, 0.0
        %946 = vst.msk [vmem:[#allocation2 + $0xd0] sm:$0xff] %vm919, 0.0
        %947 = vst.msk [vmem:[#allocation2 + $0xd8] sm:$0xff] %vm919, 0.0
        %948 = vst.msk [vmem:[#allocation2 + $0xe0] sm:$0xff] %vm919, 0.0
        %949 = vst.msk [vmem:[#allocation2 + $0xe8] sm:$0xff] %vm919, 0.0
        %950 = vst.msk [vmem:[#allocation2 + $0xf0] sm:$0xff] %vm919, 0.0
        %951 = vst.msk [vmem:[#allocation2 + $0xf8] sm:$0xff] %vm919, 0.0
        %952 = vst.msk [vmem:[#allocation2 + $0x100] sm:$0xff] %vm919, 0.0
        %953 = vst.msk [vmem:[#allocation2 + $0x108] sm:$0xff] %vm919, 0.0
        %954 = vst.msk [vmem:[#allocation2 + $0x110] sm:$0xff] %vm919, 0.0
        %955 = vst.msk [vmem:[#allocation2 + $0x118] sm:$0xff] %vm919, 0.0
        %956 = vst.msk [vmem:[#allocation2 + $0x120] sm:$0xff] %vm919, 0.0
        %957 = vst.msk [vmem:[#allocation2 + $0x128] sm:$0xff] %vm919, 0.0
        %v958 = vmax.f32 %v278, 0.0
        %v959 = vmax.f32 %v279, 0.0
        %v960 = vmax.f32 %v280, 0.0
        %v961 = vmax.f32 %v281, 0.0
        %v962 = vmax.f32 %v282, 0.0
        %v963 = vmax.f32 %v283, 0.0
        %v964 = vmax.f32 %v284, 0.0
        %v965 = vmax.f32 %v285, 0.0
        %v966 = vmax.f32 %v286, 0.0
        %v967 = vmax.f32 %v287, 0.0
        %v968 = vmax.f32 %v288, 0.0
        %v969 = vmax.f32 %v289, 0.0
        %v970 = vmax.f32 %v290, 0.0
        %v971 = vmax.f32 %v291, 0.0
        %v972 = vmax.f32 %v292, 0.0
        %v973 = vmax.f32 %v293, 0.0
        %v974 = vmax.f32 %v294, 0.0
        %v975 = vmax.f32 %v295, 0.0
        %v976 = vmax.f32 %v296, 0.0
        %v977 = vmax.f32 %v297, 0.0
        %v978 = vmax.f32 %v298, 0.0
        %v979 = vmax.f32 %v299, 0.0
        %v980 = vmax.f32 %v300, 0.0
        %v981 = vmax.f32 %v301, 0.0
        %v982 = vmax.f32 %v302, 0.0
        %v983 = vmax.f32 %v303, 0.0
        %v984 = vmax.f32 %v304, 0.0
        %v985 = vmax.f32 %v305, 0.0
        %v986 = vmax.f32 %v306, 0.0
        %v987 = vmax.f32 %v307, 0.0
        %v988 = vmax.f32 %v308, 0.0
        %v989 = vmax.f32 %v309, 0.0
        %990 = vst.msk [vmem:[#allocation2 + $0x18] sm:$0xff] %vm919, %v958
        %991 = vst.msk [vmem:[#allocation2 + $0x20] sm:$0xff] %vm919, %v959
        %992 = vst.msk [vmem:[#allocation2 + $0x28] sm:$0xff] %vm919, %v960
        %993 = vst.msk [vmem:[#allocation2 + $0x30] sm:$0xff] %vm919, %v961
        %994 = vst.msk [vmem:[#allocation2 + $0x38] sm:$0xff] %vm919, %v962
        %995 = vst.msk [vmem:[#allocation2 + $0x40] sm:$0xff] %vm919, %v963
        %996 = vst.msk [vmem:[#allocation2 + $0x48] sm:$0xff] %vm919, %v964
        %997 = vst.msk [vmem:[#allocation2 + $0x50] sm:$0xff] %vm919, %v965
        %998 = vst.msk [vmem:[#allocation2 + $0x58] sm:$0xff] %vm919, %v966
        %999 = vst.msk [vmem:[#allocation2 + $0x60] sm:$0xff] %vm919, %v967
        %1000 = vst.msk [vmem:[#allocation2 + $0x68] sm:$0xff] %vm919, %v968
        %1001 = vst.msk [vmem:[#allocation2 + $0x70] sm:$0xff] %vm919, %v969
        %1002 = vst.msk [vmem:[#allocation2 + $0x78] sm:$0xff] %vm919, %v970
        %1003 = vst.msk [vmem:[#allocation2 + $0x80] sm:$0xff] %vm919, %v971
        %1004 = vst.msk [vmem:[#allocation2 + $0x88] sm:$0xff] %vm919, %v972
        %1005 = vst.msk [vmem:[#allocation2 + $0x90] sm:$0xff] %vm919, %v973
        %1006 = vst.msk [vmem:[#allocation2 + $0x98] sm:$0xff] %vm919, %v974
        %1007 = vst.msk [vmem:[#allocation2 + $0xa0] sm:$0xff] %vm919, %v975
        %1008 = vst.msk [vmem:[#allocation2 + $0xa8] sm:$0xff] %vm919, %v976
        %1009 = vst.msk [vmem:[#allocation2 + $0xb0] sm:$0xff] %vm919, %v977
        %1010 = vst.msk [vmem:[#allocation2 + $0xb8] sm:$0xff] %vm919, %v978
        %1011 = vst.msk [vmem:[#allocation2 + $0xc0] sm:$0xff] %vm919, %v979
        %1012 = vst.msk [vmem:[#allocation2 + $0xc8] sm:$0xff] %vm919, %v980
        %1013 = vst.msk [vmem:[#allocation2 + $0xd0] sm:$0xff] %vm919, %v981
        %1014 = vst.msk [vmem:[#allocation2 + $0xd8] sm:$0xff] %vm919, %v982
        %1015 = vst.msk [vmem:[#allocation2 + $0xe0] sm:$0xff] %vm919, %v983
        %1016 = vst.msk [vmem:[#allocation2 + $0xe8] sm:$0xff] %vm919, %v984
        %1017 = vst.msk [vmem:[#allocation2 + $0xf0] sm:$0xff] %vm919, %v985
        %1018 = vst.msk [vmem:[#allocation2 + $0xf8] sm:$0xff] %vm919, %v986
        %1019 = vst.msk [vmem:[#allocation2 + $0x100] sm:$0xff] %vm919, %v987
        %1020 = vst.msk [vmem:[#allocation2 + $0x108] sm:$0xff] %vm919, %v988
        %1021 = vst.msk [vmem:[#allocation2 + $0x110] sm:$0xff] %vm919, %v989
        %v1022 = vld [vmem:[#allocation2 + $0x7] sm:$0xff]
        %v1023 = vld [vmem:[#allocation2 + $0xf] sm:$0xff]
        %v1024 = vld [vmem:[#allocation2 + $0x17] sm:$0xff]
        %v1025 = vld [vmem:[#allocation2 + $0x1f] sm:$0xff]
        %v1026 = vld [vmem:[#allocation2 + $0x27] sm:$0xff]
        %v1027 = vld [vmem:[#allocation2 + $0x2f] sm:$0xff]
        %v1028 = vld [vmem:[#allocation2 + $0x37] sm:$0xff]
        %v1029 = vld [vmem:[#allocation2 + $0x3f] sm:$0xff]
        %v1030 = vld [vmem:[#allocation2 + $0x47] sm:$0xff]
        %v1031 = vld [vmem:[#allocation2 + $0x4f] sm:$0xff]
        %v1032 = vld [vmem:[#allocation2 + $0x57] sm:$0xff]
        %v1033 = vld [vmem:[#allocation2 + $0x5f] sm:$0xff]
        %v1034 = vld [vmem:[#allocation2 + $0x67] sm:$0xff]
        %v1035 = vld [vmem:[#allocation2 + $0x6f] sm:$0xff]
        %v1036 = vld [vmem:[#allocation2 + $0x77] sm:$0xff]
        %v1037 = vld [vmem:[#allocation2 + $0x7f] sm:$0xff]
        %v1038 = vld [vmem:[#allocation2 + $0x87] sm:$0xff]
        %v1039 = vld [vmem:[#allocation2 + $0x8f] sm:$0xff]
        %v1040 = vld [vmem:[#allocation2 + $0x97] sm:$0xff]
        %v1041 = vld [vmem:[#allocation2 + $0x9f] sm:$0xff]
        %v1042 = vld [vmem:[#allocation2 + $0xa7] sm:$0xff]
        %v1043 = vld [vmem:[#allocation2 + $0xaf] sm:$0xff]
        %v1044 = vld [vmem:[#allocation2 + $0xb7] sm:$0xff]
        %v1045 = vld [vmem:[#allocation2 + $0xbf] sm:$0xff]
        %v1046 = vld [vmem:[#allocation2 + $0xc7] sm:$0xff]
        %v1047 = vld [vmem:[#allocation2 + $0xcf] sm:$0xff]
        %v1048 = vld [vmem:[#allocation2 + $0xd7] sm:$0xff]
        %v1049 = vld [vmem:[#allocation2 + $0xdf] sm:$0xff]
        %v1050 = vld [vmem:[#allocation2 + $0xe7] sm:$0xff]
        %v1051 = vld [vmem:[#allocation2 + $0xef] sm:$0xff]
        %v1052 = vld [vmem:[#allocation2 + $0xf7] sm:$0xff]
        %v1053 = vld [vmem:[#allocation2 + $0xff] sm:$0xff]
        %v1054 = vmul.f32 %v1022, %v791
        %v1055 = vmul.f32 %v1023, %v792
        %v1056 = vmul.f32 %v1024, %v793
        %v1057 = vmul.f32 %v1025, %v794
        %v1058 = vmul.f32 %v1026, %v795
        %v1059 = vmul.f32 %v1027, %v796
        %v1060 = vmul.f32 %v1028, %v797
        %v1061 = vmul.f32 %v1029, %v798
        %v1062 = vmul.f32 %v1030, %v799
        %v1063 = vmul.f32 %v1031, %v800
        %v1064 = vmul.f32 %v1032, %v801
        %v1065 = vmul.f32 %v1033, %v802
        %v1066 = vmul.f32 %v1034, %v803
        %v1067 = vmul.f32 %v1035, %v804
        %v1068 = vmul.f32 %v1036, %v805
        %v1069 = vmul.f32 %v1037, %v806
        %v1070 = vmul.f32 %v1038, %v807
        %v1071 = vmul.f32 %v1039, %v808
        %v1072 = vmul.f32 %v1040, %v809
        %v1073 = vmul.f32 %v1041, %v810
        %v1074 = vmul.f32 %v1042, %v811
        %v1075 = vmul.f32 %v1043, %v812
        %v1076 = vmul.f32 %v1044, %v813
        %v1077 = vmul.f32 %v1045, %v814
        %v1078 = vmul.f32 %v1046, %v815
        %v1079 = vmul.f32 %v1047, %v816
        %v1080 = vmul.f32 %v1048, %v817
        %v1081 = vmul.f32 %v1049, %v818
        %v1082 = vmul.f32 %v1050, %v819
        %v1083 = vmul.f32 %v1051, %v820
        %v1084 = vmul.f32 %v1052, %v821
        %v1085 = vmul.f32 %v1053, %v822
        %v1086 = vpack.c.bf16 %v1055, %v1054
        %v1087 = vpack.c.bf16 %v1057, %v1056
        %v1088 = vpack.c.bf16 %v1059, %v1058
        %v1089 = vpack.c.bf16 %v1061, %v1060
        %v1090 = vpack.c.bf16 %v1063, %v1062
        %v1091 = vpack.c.bf16 %v1065, %v1064
        %v1092 = vpack.c.bf16 %v1067, %v1066
        %v1093 = vpack.c.bf16 %v1069, %v1068
        %v1094 = vpack.c.bf16 %v1071, %v1070
        %v1095 = vpack.c.bf16 %v1073, %v1072
        %v1096 = vpack.c.bf16 %v1075, %v1074
        %v1097 = vpack.c.bf16 %v1077, %v1076
        %v1098 = vpack.c.bf16 %v1079, %v1078
        %v1099 = vpack.c.bf16 %v1081, %v1080
        %v1100 = vpack.c.bf16 %v1083, %v1082
        %v1101 = vpack.c.bf16 %v1085, %v1084
        %v1102 = vld [vmem:[%s1] sm:$0xf]
        %v1103 = vld [vmem:[#allocation2 + $0x8] sm:$0xff]
        %v1104 = vld [vmem:[#allocation2 + $0x10] sm:$0xff]
        %v1105 = vld [vmem:[#allocation2 + $0x18] sm:$0xff]
        %v1106 = vld [vmem:[#allocation2 + $0x20] sm:$0xff]
        %v1107 = vld [vmem:[#allocation2 + $0x28] sm:$0xff]
        %v1108 = vld [vmem:[#allocation2 + $0x30] sm:$0xff]
        %v1109 = vld [vmem:[#allocation2 + $0x38] sm:$0xff]
        %v1110 = vld [vmem:[#allocation2 + $0x40] sm:$0xff]
        %v1111 = vld [vmem:[#allocation2 + $0x48] sm:$0xff]
        %v1112 = vld [vmem:[#allocation2 + $0x50] sm:$0xff]
        %v1113 = vld [vmem:[#allocation2 + $0x58] sm:$0xff]
        %v1114 = vld [vmem:[#allocation2 + $0x60] sm:$0xff]
        %v1115 = vld [vmem:[#allocation2 + $0x68] sm:$0xff]
        %v1116 = vld [vmem:[#allocation2 + $0x70] sm:$0xff]
        %v1117 = vld [vmem:[#allocation2 + $0x78] sm:$0xff]
        %v1118 = vld [vmem:[#allocation2 + $0x80] sm:$0xff]
        %v1119 = vld [vmem:[#allocation2 + $0x88] sm:$0xff]
        %v1120 = vld [vmem:[#allocation2 + $0x90] sm:$0xff]
        %v1121 = vld [vmem:[#allocation2 + $0x98] sm:$0xff]
        %v1122 = vld [vmem:[#allocation2 + $0xa0] sm:$0xff]
        %v1123 = vld [vmem:[#allocation2 + $0xa8] sm:$0xff]
        %v1124 = vld [vmem:[#allocation2 + $0xb0] sm:$0xff]
        %v1125 = vld [vmem:[#allocation2 + $0xb8] sm:$0xff]
        %v1126 = vld [vmem:[#allocation2 + $0xc0] sm:$0xff]
        %v1127 = vld [vmem:[#allocation2 + $0xc8] sm:$0xff]
        %v1128 = vld [vmem:[#allocation2 + $0xd0] sm:$0xff]
        %v1129 = vld [vmem:[#allocation2 + $0xd8] sm:$0xff]
        %v1130 = vld [vmem:[#allocation2 + $0xe0] sm:$0xff]
        %v1131 = vld [vmem:[#allocation2 + $0xe8] sm:$0xff]
        %v1132 = vld [vmem:[#allocation2 + $0xf0] sm:$0xff]
        %v1133 = vld [vmem:[#allocation2 + $0xf8] sm:$0xff]
        %v1134 = vld [vmem:[#allocation2 + $0x100] sm:$0xff]
        %v1135 = vpack.c.bf16 %v1104, %v1103
        %v1136 = vpack.c.bf16 %v1106, %v1105
        %v1137 = vpack.c.bf16 %v1108, %v1107
        %v1138 = vpack.c.bf16 %v1110, %v1109
        %v1139 = vpack.c.bf16 %v1112, %v1111
        %v1140 = vpack.c.bf16 %v1114, %v1113
        %v1141 = vpack.c.bf16 %v1116, %v1115
        %v1142 = vpack.c.bf16 %v1118, %v1117
        %v1143 = vpack.c.bf16 %v1120, %v1119
        %v1144 = vpack.c.bf16 %v1122, %v1121
        %v1145 = vpack.c.bf16 %v1124, %v1123
        %v1146 = vpack.c.bf16 %v1126, %v1125
        %v1147 = vpack.c.bf16 %v1128, %v1127
        %v1148 = vpack.c.bf16 %v1130, %v1129
        %v1149 = vpack.c.bf16 %v1132, %v1131
        %v1150 = vpack.c.bf16 %v1134, %v1133
        %s1151 = scalar_lea.vmem %s1, 4
        %v1152 = vld [vmem:[%s1151] sm:$0xf]
        %v1154 = vsel %vm919, %v1135, 0
        %v1157 = vsel %vm919, %v1136, 0
        %v1160 = vsel %vm919, %v1137, 0
        %v1163 = vsel %vm919, %v1138, 0
        %v1166 = vsel %vm919, %v1139, 0
        %v1169 = vsel %vm919, %v1140, 0
        %v1172 = vsel %vm919, %v1141, 0
        %v1175 = vsel %vm919, %v1142, 0
        %v1178 = vsel %vm919, %v1143, 0
        %v1181 = vsel %vm919, %v1144, 0
        %v1184 = vsel %vm919, %v1145, 0
        %v1187 = vsel %vm919, %v1146, 0
        %v1190 = vsel %vm919, %v1147, 0
        %v1193 = vsel %vm919, %v1148, 0
        %v1196 = vsel %vm919, %v1149, 0
        %v1199 = vsel %vm919, %v1150, 0
        %vm1201 = vcmask 1043456
        %v1203 = vsel %vm1201, %v1152, 0
        %1205 = vmatprep.subr.bf16.mxu0 0
        %1206 = vmatpush1.bf16.msra.mxu0 %v1203
        %1207 = vmatprep.subr.bf16.mxu0 0
        %1208 = vmatpush1.bf16.msra.mxu0 0
        %1209 = vmatprep.subr.bf16.mxu0 0
        %1210 = vmatpush1.bf16.msra.mxu0 0
        %1211 = vmatprep.subr.bf16.mxu0 0
        %1212 = vmatpush1.bf16.msra.mxu0 0
        %1213 = vmatprep.subr.bf16.mxu0 0
        %1214 = vmatpush1.bf16.msra.mxu0 0
        %1215 = vmatprep.subr.bf16.mxu0 0
        %1216 = vmatpush1.bf16.msra.mxu0 0
        %1217 = vmatprep.subr.bf16.mxu0 0
        %1218 = vmatpush1.bf16.msra.mxu0 0
        %1219 = vmatprep.subr.bf16.mxu0 0
        %1220 = vmatpush1.bf16.msra.mxu0 0
        %1221 = vmatprep.subr.bf16.mxu0 0
        %1222 = vmatpush1.bf16.msra.mxu0 0
        %1223 = vmatprep.subr.bf16.mxu0 0
        %1224 = vmatpush1.bf16.msra.mxu0 0
        %1225 = vmatprep.subr.bf16.mxu0 0
        %1226 = vmatpush1.bf16.msra.mxu0 0
        %1227 = vmatprep.subr.bf16.mxu0 0
        %1228 = vmatpush1.bf16.msra.mxu0 0
        %1229 = vmatprep.subr.bf16.mxu0 0
        %1230 = vmatpush1.bf16.msra.mxu0 0
        %1231 = vmatprep.subr.bf16.mxu0 0
        %1232 = vmatpush1.bf16.msra.mxu0 0
        %1233 = vmatprep.subr.bf16.mxu0 0
        %1234 = vmatpush1.bf16.msra.mxu0 0
        %1235 = vmatprep.subr.bf16.mxu0 0
        %1236 = vmatpush1.bf16.msra.mxu0 0
        %1237 = vmatprep.mubr.bf16.mxu0 0
        %1238 = vmatmul.mubr.bf16.gmra.mrb[0].mxu0 %v1154
        %v1239 = vpop.f32.mrb[0].mxu0
        %v1240 = vadd.f32 0.0, %v1239
        %v1241 = vpop.f32.mrb[0].mxu0
        %v1242 = vpop.f32.mrb[0].mxu0
        %v1243 = vadd.f32 0.0, %v1242
        %v1244 = vpop.f32.mrb[0].mxu0
        %1245 = vmatprep.mubr.bf16.mxu0 0
        %1246 = vmatmul.mubr.bf16.gmra.mrb[0].mxu0 %v1157
        %v1247 = vpop.f32.mrb[0].mxu0
        %v1248 = vadd.f32 0.0, %v1247
        %v1249 = vpop.f32.mrb[0].mxu0
        %v1250 = vpop.f32.mrb[0].mxu0
        %v1251 = vadd.f32 0.0, %v1250
        %v1252 = vpop.f32.mrb[0].mxu0
        %1253 = vmatprep.mubr.bf16.mxu0 0
        %1254 = vmatmul.mubr.bf16.gmra.mrb[0].mxu0 %v1160
        %v1255 = vpop.f32.mrb[0].mxu0
        %v1256 = vadd.f32 0.0, %v1255
        %v1257 = vpop.f32.mrb[0].mxu0
        %v1258 = vpop.f32.mrb[0].mxu0
        %v1259 = vadd.f32 0.0, %v1258
        %v1260 = vpop.f32.mrb[0].mxu0
        %1261 = vmatprep.mubr.bf16.mxu0 0
        %1262 = vmatmul.mubr.bf16.gmra.mrb[0].mxu0 %v1163
        %v1263 = vpop.f32.mrb[0].mxu0
        %v1264 = vadd.f32 0.0, %v1263
        %v1265 = vpop.f32.mrb[0].mxu0
        %v1266 = vpop.f32.mrb[0].mxu0
        %v1267 = vadd.f32 0.0, %v1266
        %v1268 = vpop.f32.mrb[0].mxu0
        %1269 = vmatprep.mubr.bf16.mxu0 0
        %1270 = vmatmul.mubr.bf16.gmra.mrb[0].mxu0 %v1166
        %v1271 = vpop.f32.mrb[0].mxu0
        %v1272 = vadd.f32 0.0, %v1271
        %v1273 = vpop.f32.mrb[0].mxu0
        %v1274 = vpop.f32.mrb[0].mxu0
        %v1275 = vadd.f32 0.0, %v1274
        %v1276 = vpop.f32.mrb[0].mxu0
        %1277 = vmatprep.mubr.bf16.mxu0 0
        %1278 = vmatmul.mubr.bf16.gmra.mrb[0].mxu0 %v1169
        %v1279 = vpop.f32.mrb[0].mxu0
        %v1280 = vadd.f32 0.0, %v1279
        %v1281 = vpop.f32.mrb[0].mxu0
        %v1282 = vpop.f32.mrb[0].mxu0
        %v1283 = vadd.f32 0.0, %v1282
        %v1284 = vpop.f32.mrb[0].mxu0
        %1285 = vmatprep.mubr.bf16.mxu0 0
        %1286 = vmatmul.mubr.bf16.gmra.mrb[0].mxu0 %v1172
        %v1287 = vpop.f32.mrb[0].mxu0
        %v1288 = vadd.f32 0.0, %v1287
        %v1289 = vpop.f32.mrb[0].mxu0
        %v1290 = vpop.f32.mrb[0].mxu0
        %v1291 = vadd.f32 0.0, %v1290
        %v1292 = vpop.f32.mrb[0].mxu0
        %1293 = vmatprep.mubr.bf16.mxu0 0
        %1294 = vmatmul.mubr.bf16.gmra.mrb[0].mxu0 %v1175
        %v1295 = vpop.f32.mrb[0].mxu0
        %v1296 = vadd.f32 0.0, %v1295
        %v1297 = vpop.f32.mrb[0].mxu0
        %v1298 = vpop.f32.mrb[0].mxu0
        %v1299 = vadd.f32 0.0, %v1298
        %v1300 = vpop.f32.mrb[0].mxu0
        %1301 = vmatprep.mubr.bf16.mxu0 0
        %1302 = vmatmul.mubr.bf16.gmra.mrb[0].mxu0 %v1178
        %v1303 = vpop.f32.mrb[0].mxu0
        %v1304 = vadd.f32 0.0, %v1303
        %v1305 = vpop.f32.mrb[0].mxu0
        %v1306 = vpop.f32.mrb[0].mxu0
        %v1307 = vadd.f32 0.0, %v1306
        %v1308 = vpop.f32.mrb[0].mxu0
        %1309 = vmatprep.mubr.bf16.mxu0 0
        %1310 = vmatmul.mubr.bf16.gmra.mrb[0].mxu0 %v1181
        %v1311 = vpop.f32.mrb[0].mxu0
        %v1312 = vadd.f32 0.0, %v1311
        %v1313 = vpop.f32.mrb[0].mxu0
        %v1314 = vpop.f32.mrb[0].mxu0
        %v1315 = vadd.f32 0.0, %v1314
        %v1316 = vpop.f32.mrb[0].mxu0
        %1317 = vmatprep.mubr.bf16.mxu0 0
        %1318 = vmatmul.mubr.bf16.gmra.mrb[0].mxu0 %v1184
        %v1319 = vpop.f32.mrb[0].mxu0
        %v1320 = vadd.f32 0.0, %v1319
        %v1321 = vpop.f32.mrb[0].mxu0
        %v1322 = vpop.f32.mrb[0].mxu0
        %v1323 = vadd.f32 0.0, %v1322
        %v1324 = vpop.f32.mrb[0].mxu0
        %1325 = vmatprep.mubr.bf16.mxu0 0
        %1326 = vmatmul.mubr.bf16.gmra.mrb[0].mxu0 %v1187
        %v1327 = vpop.f32.mrb[0].mxu0
        %v1328 = vadd.f32 0.0, %v1327
        %v1329 = vpop.f32.mrb[0].mxu0
        %v1330 = vpop.f32.mrb[0].mxu0
        %v1331 = vadd.f32 0.0, %v1330
        %v1332 = vpop.f32.mrb[0].mxu0
        %1333 = vmatprep.mubr.bf16.mxu0 0
        %1334 = vmatmul.mubr.bf16.gmra.mrb[0].mxu0 %v1190
        %v1335 = vpop.f32.mrb[0].mxu0
        %v1336 = vadd.f32 0.0, %v1335
        %v1337 = vpop.f32.mrb[0].mxu0
        %v1338 = vpop.f32.mrb[0].mxu0
        %v1339 = vadd.f32 0.0, %v1338
        %v1340 = vpop.f32.mrb[0].mxu0
        %1341 = vmatprep.mubr.bf16.mxu0 0
        %1342 = vmatmul.mubr.bf16.gmra.mrb[0].mxu0 %v1193
        %v1343 = vpop.f32.mrb[0].mxu0
        %v1344 = vadd.f32 0.0, %v1343
        %v1345 = vpop.f32.mrb[0].mxu0
        %v1346 = vpop.f32.mrb[0].mxu0
        %v1347 = vadd.f32 0.0, %v1346
        %v1348 = vpop.f32.mrb[0].mxu0
        %1349 = vmatprep.mubr.bf16.mxu0 0
        %1350 = vmatmul.mubr.bf16.gmra.mrb[0].mxu0 %v1196
        %v1351 = vpop.f32.mrb[0].mxu0
        %v1352 = vadd.f32 0.0, %v1351
        %v1353 = vpop.f32.mrb[0].mxu0
        %v1354 = vpop.f32.mrb[0].mxu0
        %v1355 = vadd.f32 0.0, %v1354
        %v1356 = vpop.f32.mrb[0].mxu0
        %1357 = vmatprep.mubr.bf16.mxu0 0
        %1358 = vmatmul.mubr.bf16.gmra.mrb[0].mxu0 %v1199
        %v1359 = vpop.f32.mrb[0].mxu0
        %v1360 = vadd.f32 0.0, %v1359
        %v1361 = vpop.f32.mrb[0].mxu0
        %v1362 = vpop.f32.mrb[0].mxu0
        %v1363 = vadd.f32 0.0, %v1362
        %v1364 = vpop.f32.mrb[0].mxu0
        %1365 = vdwg.mxu0
        %v1367 = vsel %vm919, %v1086, 0
        %v1370 = vsel %vm919, %v1087, 0
        %v1373 = vsel %vm919, %v1088, 0
        %v1376 = vsel %vm919, %v1089, 0
        %v1379 = vsel %vm919, %v1090, 0
        %v1382 = vsel %vm919, %v1091, 0
        %v1385 = vsel %vm919, %v1092, 0
        %v1388 = vsel %vm919, %v1093, 0
        %v1391 = vsel %vm919, %v1094, 0
        %v1394 = vsel %vm919, %v1095, 0
        %v1397 = vsel %vm919, %v1096, 0
        %v1400 = vsel %vm919, %v1097, 0
        %v1403 = vsel %vm919, %v1098, 0
        %v1406 = vsel %vm919, %v1099, 0
        %v1409 = vsel %vm919, %v1100, 0
        %v1412 = vsel %vm919, %v1101, 0
        %v1415 = vsel %vm1201, %v1102, 0
        %1417 = vmatprep.subr.bf16.mxu0 0
        %1418 = vmatpush1.bf16.msra.mxu0 %v1415
        %1419 = vmatprep.subr.bf16.mxu0 0
        %1420 = vmatpush1.bf16.msra.mxu0 0
        %1421 = vmatprep.subr.bf16.mxu0 0
        %1422 = vmatpush1.bf16.msra.mxu0 0
        %1423 = vmatprep.subr.bf16.mxu0 0
        %1424 = vmatpush1.bf16.msra.mxu0 0
        %1425 = vmatprep.subr.bf16.mxu0 0
        %1426 = vmatpush1.bf16.msra.mxu0 0
        %1427 = vmatprep.subr.bf16.mxu0 0
        %1428 = vmatpush1.bf16.msra.mxu0 0
        %1429 = vmatprep.subr.bf16.mxu0 0
        %1430 = vmatpush1.bf16.msra.mxu0 0
        %1431 = vmatprep.subr.bf16.mxu0 0
        %1432 = vmatpush1.bf16.msra.mxu0 0
        %1433 = vmatprep.subr.bf16.mxu0 0
        %1434 = vmatpush1.bf16.msra.mxu0 0
        %1435 = vmatprep.subr.bf16.mxu0 0
        %1436 = vmatpush1.bf16.msra.mxu0 0
        %1437 = vmatprep.subr.bf16.mxu0 0
        %1438 = vmatpush1.bf16.msra.mxu0 0
        %1439 = vmatprep.subr.bf16.mxu0 0
        %1440 = vmatpush1.bf16.msra.mxu0 0
        %1441 = vmatprep.subr.bf16.mxu0 0
        %1442 = vmatpush1.bf16.msra.mxu0 0
        %1443 = vmatprep.subr.bf16.mxu0 0
        %1444 = vmatpush1.bf16.msra.mxu0 0
        %1445 = vmatprep.subr.bf16.mxu0 0
        %1446 = vmatpush1.bf16.msra.mxu0 0
        %1447 = vmatprep.subr.bf16.mxu0 0
        %1448 = vmatpush1.bf16.msra.mxu0 0
        %1449 = vmatprep.mubr.bf16.mxu0 0
        %1450 = vmatmul.mubr.bf16.gmra.mrb[0].mxu0 %v1367
        %v1451 = vpop.f32.mrb[0].mxu0
        %v1452 = vadd.f32 %v1240, %v1451
        %v1453 = vpop.f32.mrb[0].mxu0
        %v1454 = vpop.f32.mrb[0].mxu0
        %v1455 = vadd.f32 %v1243, %v1454
        %v1456 = vpop.f32.mrb[0].mxu0
        %1457 = vmatprep.mubr.bf16.mxu0 0
        %1458 = vmatmul.mubr.bf16.gmra.mrb[0].mxu0 %v1370
        %v1459 = vpop.f32.mrb[0].mxu0
        %v1460 = vadd.f32 %v1248, %v1459
        %v1461 = vpop.f32.mrb[0].mxu0
        %v1462 = vpop.f32.mrb[0].mxu0
        %v1463 = vadd.f32 %v1251, %v1462
        %v1464 = vpop.f32.mrb[0].mxu0
        %1465 = vmatprep.mubr.bf16.mxu0 0
        %1466 = vmatmul.mubr.bf16.gmra.mrb[0].mxu0 %v1373
        %v1467 = vpop.f32.mrb[0].mxu0
        %v1468 = vadd.f32 %v1256, %v1467
        %v1469 = vpop.f32.mrb[0].mxu0
        %v1470 = vpop.f32.mrb[0].mxu0
        %v1471 = vadd.f32 %v1259, %v1470
        %v1472 = vpop.f32.mrb[0].mxu0
        %1473 = vmatprep.mubr.bf16.mxu0 0
        %1474 = vmatmul.mubr.bf16.gmra.mrb[0].mxu0 %v1376
        %v1475 = vpop.f32.mrb[0].mxu0
        %v1476 = vadd.f32 %v1264, %v1475
        %v1477 = vpop.f32.mrb[0].mxu0
        %v1478 = vpop.f32.mrb[0].mxu0
        %v1479 = vadd.f32 %v1267, %v1478
        %v1480 = vpop.f32.mrb[0].mxu0
        %1481 = vmatprep.mubr.bf16.mxu0 0
        %1482 = vmatmul.mubr.bf16.gmra.mrb[0].mxu0 %v1379
        %v1483 = vpop.f32.mrb[0].mxu0
        %v1484 = vadd.f32 %v1272, %v1483
        %v1485 = vpop.f32.mrb[0].mxu0
        %v1486 = vpop.f32.mrb[0].mxu0
        %v1487 = vadd.f32 %v1275, %v1486
        %v1488 = vpop.f32.mrb[0].mxu0
        %1489 = vmatprep.mubr.bf16.mxu0 0
        %1490 = vmatmul.mubr.bf16.gmra.mrb[0].mxu0 %v1382
        %v1491 = vpop.f32.mrb[0].mxu0
        %v1492 = vadd.f32 %v1280, %v1491
        %v1493 = vpop.f32.mrb[0].mxu0
        %v1494 = vpop.f32.mrb[0].mxu0
        %v1495 = vadd.f32 %v1283, %v1494
        %v1496 = vpop.f32.mrb[0].mxu0
        %1497 = vmatprep.mubr.bf16.mxu0 0
        %1498 = vmatmul.mubr.bf16.gmra.mrb[0].mxu0 %v1385
        %v1499 = vpop.f32.mrb[0].mxu0
        %v1500 = vadd.f32 %v1288, %v1499
        %v1501 = vpop.f32.mrb[0].mxu0
        %v1502 = vpop.f32.mrb[0].mxu0
        %v1503 = vadd.f32 %v1291, %v1502
        %v1504 = vpop.f32.mrb[0].mxu0
        %1505 = vmatprep.mubr.bf16.mxu0 0
        %1506 = vmatmul.mubr.bf16.gmra.mrb[0].mxu0 %v1388
        %v1507 = vpop.f32.mrb[0].mxu0
        %v1508 = vadd.f32 %v1296, %v1507
        %v1509 = vpop.f32.mrb[0].mxu0
        %v1510 = vpop.f32.mrb[0].mxu0
        %v1511 = vadd.f32 %v1299, %v1510
        %v1512 = vpop.f32.mrb[0].mxu0
        %1513 = vmatprep.mubr.bf16.mxu0 0
        %1514 = vmatmul.mubr.bf16.gmra.mrb[0].mxu0 %v1391
        %v1515 = vpop.f32.mrb[0].mxu0
        %v1516 = vadd.f32 %v1304, %v1515
        %v1517 = vpop.f32.mrb[0].mxu0
        %v1518 = vpop.f32.mrb[0].mxu0
        %v1519 = vadd.f32 %v1307, %v1518
        %v1520 = vpop.f32.mrb[0].mxu0
        %1521 = vmatprep.mubr.bf16.mxu0 0
        %1522 = vmatmul.mubr.bf16.gmra.mrb[0].mxu0 %v1394
        %v1523 = vpop.f32.mrb[0].mxu0
        %v1524 = vadd.f32 %v1312, %v1523
        %v1525 = vpop.f32.mrb[0].mxu0
        %v1526 = vpop.f32.mrb[0].mxu0
        %v1527 = vadd.f32 %v1315, %v1526
        %v1528 = vpop.f32.mrb[0].mxu0
        %1529 = vmatprep.mubr.bf16.mxu0 0
        %1530 = vmatmul.mubr.bf16.gmra.mrb[0].mxu0 %v1397
        %v1531 = vpop.f32.mrb[0].mxu0
        %v1532 = vadd.f32 %v1320, %v1531
        %v1533 = vpop.f32.mrb[0].mxu0
        %v1534 = vpop.f32.mrb[0].mxu0
        %v1535 = vadd.f32 %v1323, %v1534
        %v1536 = vpop.f32.mrb[0].mxu0
        %1537 = vmatprep.mubr.bf16.mxu0 0
        %1538 = vmatmul.mubr.bf16.gmra.mrb[0].mxu0 %v1400
        %v1539 = vpop.f32.mrb[0].mxu0
        %v1540 = vadd.f32 %v1328, %v1539
        %v1541 = vpop.f32.mrb[0].mxu0
        %v1542 = vpop.f32.mrb[0].mxu0
        %v1543 = vadd.f32 %v1331, %v1542
        %v1544 = vpop.f32.mrb[0].mxu0
        %1545 = vmatprep.mubr.bf16.mxu0 0
        %1546 = vmatmul.mubr.bf16.gmra.mrb[0].mxu0 %v1403
        %v1547 = vpop.f32.mrb[0].mxu0
        %v1548 = vadd.f32 %v1336, %v1547
        %v1549 = vpop.f32.mrb[0].mxu0
        %v1550 = vpop.f32.mrb[0].mxu0
        %v1551 = vadd.f32 %v1339, %v1550
        %v1552 = vpop.f32.mrb[0].mxu0
        %1553 = vmatprep.mubr.bf16.mxu0 0
        %1554 = vmatmul.mubr.bf16.gmra.mrb[0].mxu0 %v1406
        %v1555 = vpop.f32.mrb[0].mxu0
        %v1556 = vadd.f32 %v1344, %v1555
        %v1557 = vpop.f32.mrb[0].mxu0
        %v1558 = vpop.f32.mrb[0].mxu0
        %v1559 = vadd.f32 %v1347, %v1558
        %v1560 = vpop.f32.mrb[0].mxu0
        %1561 = vmatprep.mubr.bf16.mxu0 0
        %1562 = vmatmul.mubr.bf16.gmra.mrb[0].mxu0 %v1409
        %v1563 = vpop.f32.mrb[0].mxu0
        %v1564 = vadd.f32 %v1352, %v1563
        %v1565 = vpop.f32.mrb[0].mxu0
        %v1566 = vpop.f32.mrb[0].mxu0
        %v1567 = vadd.f32 %v1355, %v1566
        %v1568 = vpop.f32.mrb[0].mxu0
        %1569 = vmatprep.mubr.bf16.mxu0 0
        %1570 = vmatmul.mubr.bf16.gmra.mrb[0].mxu0 %v1412
        %v1571 = vpop.f32.mrb[0].mxu0
        %v1572 = vadd.f32 %v1360, %v1571
        %v1573 = vpop.f32.mrb[0].mxu0
        %v1574 = vpop.f32.mrb[0].mxu0
        %v1575 = vadd.f32 %v1363, %v1574
        %v1576 = vpop.f32.mrb[0].mxu0
        %1577 = vdwg.mxu0
        %v1578 = vld [vmem:[#allocation2 + $0x9] sm:$0xff]
        %v1579 = vld [vmem:[#allocation2 + $0x11] sm:$0xff]
        %v1580 = vld [vmem:[#allocation2 + $0x19] sm:$0xff]
        %v1581 = vld [vmem:[#allocation2 + $0x21] sm:$0xff]
        %v1582 = vld [vmem:[#allocation2 + $0x29] sm:$0xff]
        %v1583 = vld [vmem:[#allocation2 + $0x31] sm:$0xff]
        %v1584 = vld [vmem:[#allocation2 + $0x39] sm:$0xff]
        %v1585 = vld [vmem:[#allocation2 + $0x41] sm:$0xff]
        %v1586 = vld [vmem:[#allocation2 + $0x49] sm:$0xff]
        %v1587 = vld [vmem:[#allocation2 + $0x51] sm:$0xff]
        %v1588 = vld [vmem:[#allocation2 + $0x59] sm:$0xff]
        %v1589 = vld [vmem:[#allocation2 + $0x61] sm:$0xff]
        %v1590 = vld [vmem:[#allocation2 + $0x69] sm:$0xff]
        %v1591 = vld [vmem:[#allocation2 + $0x71] sm:$0xff]
        %v1592 = vld [vmem:[#allocation2 + $0x79] sm:$0xff]
        %v1593 = vld [vmem:[#allocation2 + $0x81] sm:$0xff]
        %v1594 = vld [vmem:[#allocation2 + $0x89] sm:$0xff]
        %v1595 = vld [vmem:[#allocation2 + $0x91] sm:$0xff]
        %v1596 = vld [vmem:[#allocation2 + $0x99] sm:$0xff]
        %v1597 = vld [vmem:[#allocation2 + $0xa1] sm:$0xff]
        %v1598 = vld [vmem:[#allocation2 + $0xa9] sm:$0xff]
        %v1599 = vld [vmem:[#allocation2 + $0xb1] sm:$0xff]
        %v1600 = vld [vmem:[#allocation2 + $0xb9] sm:$0xff]
        %v1601 = vld [vmem:[#allocation2 + $0xc1] sm:$0xff]
        %v1602 = vld [vmem:[#allocation2 + $0xc9] sm:$0xff]
        %v1603 = vld [vmem:[#allocation2 + $0xd1] sm:$0xff]
        %v1604 = vld [vmem:[#allocation2 + $0xd9] sm:$0xff]
        %v1605 = vld [vmem:[#allocation2 + $0xe1] sm:$0xff]
        %v1606 = vld [vmem:[#allocation2 + $0xe9] sm:$0xff]
        %v1607 = vld [vmem:[#allocation2 + $0xf1] sm:$0xff]
        %v1608 = vld [vmem:[#allocation2 + $0xf9] sm:$0xff]
        %v1609 = vld [vmem:[#allocation2 + $0x101] sm:$0xff]
        %v1610 = vmul.f32 %v1578, %v887
        %v1611 = vmul.f32 %v1579, %v888
        %v1612 = vmul.f32 %v1580, %v889
        %v1613 = vmul.f32 %v1581, %v890
        %v1614 = vmul.f32 %v1582, %v891
        %v1615 = vmul.f32 %v1583, %v892
        %v1616 = vmul.f32 %v1584, %v893
        %v1617 = vmul.f32 %v1585, %v894
        %v1618 = vmul.f32 %v1586, %v895
        %v1619 = vmul.f32 %v1587, %v896
        %v1620 = vmul.f32 %v1588, %v897
        %v1621 = vmul.f32 %v1589, %v898
        %v1622 = vmul.f32 %v1590, %v899
        %v1623 = vmul.f32 %v1591, %v900
        %v1624 = vmul.f32 %v1592, %v901
        %v1625 = vmul.f32 %v1593, %v902
        %v1626 = vmul.f32 %v1594, %v903
        %v1627 = vmul.f32 %v1595, %v904
        %v1628 = vmul.f32 %v1596, %v905
        %v1629 = vmul.f32 %v1597, %v906
        %v1630 = vmul.f32 %v1598, %v907
        %v1631 = vmul.f32 %v1599, %v908
        %v1632 = vmul.f32 %v1600, %v909
        %v1633 = vmul.f32 %v1601, %v910
        %v1634 = vmul.f32 %v1602, %v911
        %v1635 = vmul.f32 %v1603, %v912
        %v1636 = vmul.f32 %v1604, %v913
        %v1637 = vmul.f32 %v1605, %v914
        %v1638 = vmul.f32 %v1606, %v915
        %v1639 = vmul.f32 %v1607, %v916
        %v1640 = vmul.f32 %v1608, %v917
        %v1641 = vmul.f32 %v1609, %v918
        %v1642 = vpack.c.bf16 %v1611, %v1610
        %v1643 = vpack.c.bf16 %v1613, %v1612
        %v1644 = vpack.c.bf16 %v1615, %v1614
        %v1645 = vpack.c.bf16 %v1617, %v1616
        %v1646 = vpack.c.bf16 %v1619, %v1618
        %v1647 = vpack.c.bf16 %v1621, %v1620
        %v1648 = vpack.c.bf16 %v1623, %v1622
        %v1649 = vpack.c.bf16 %v1625, %v1624
        %v1650 = vpack.c.bf16 %v1627, %v1626
        %v1651 = vpack.c.bf16 %v1629, %v1628
        %v1652 = vpack.c.bf16 %v1631, %v1630
        %v1653 = vpack.c.bf16 %v1633, %v1632
        %v1654 = vpack.c.bf16 %v1635, %v1634
        %v1655 = vpack.c.bf16 %v1637, %v1636
        %v1656 = vpack.c.bf16 %v1639, %v1638
        %v1657 = vpack.c.bf16 %v1641, %v1640
        %s1658 = scalar_lea.vmem %s1, 8
        %v1659 = vld [vmem:[%s1658] sm:$0xf]
        %v1661 = vsel %vm919, %v1642, 0
        %v1664 = vsel %vm919, %v1643, 0
        %v1667 = vsel %vm919, %v1644, 0
        %v1670 = vsel %vm919, %v1645, 0
        %v1673 = vsel %vm919, %v1646, 0
        %v1676 = vsel %vm919, %v1647, 0
        %v1679 = vsel %vm919, %v1648, 0
        %v1682 = vsel %vm919, %v1649, 0
        %v1685 = vsel %vm919, %v1650, 0
        %v1688 = vsel %vm919, %v1651, 0
        %v1691 = vsel %vm919, %v1652, 0
        %v1694 = vsel %vm919, %v1653, 0
        %v1697 = vsel %vm919, %v1654, 0
        %v1700 = vsel %vm919, %v1655, 0
        %v1703 = vsel %vm919, %v1656, 0
        %v1706 = vsel %vm919, %v1657, 0
        %v1709 = vsel %vm1201, %v1659, 0
        %1711 = vmatprep.subr.bf16.mxu0 0
        %1712 = vmatpush1.bf16.msra.mxu0 %v1709
        %1713 = vmatprep.subr.bf16.mxu0 0
        %1714 = vmatpush1.bf16.msra.mxu0 0
        %1715 = vmatprep.subr.bf16.mxu0 0
        %1716 = vmatpush1.bf16.msra.mxu0 0
        %1717 = vmatprep.subr.bf16.mxu0 0
        %1718 = vmatpush1.bf16.msra.mxu0 0
        %1719 = vmatprep.subr.bf16.mxu0 0
        %1720 = vmatpush1.bf16.msra.mxu0 0
        %1721 = vmatprep.subr.bf16.mxu0 0
        %1722 = vmatpush1.bf16.msra.mxu0 0
        %1723 = vmatprep.subr.bf16.mxu0 0
        %1724 = vmatpush1.bf16.msra.mxu0 0
        %1725 = vmatprep.subr.bf16.mxu0 0
        %1726 = vmatpush1.bf16.msra.mxu0 0
        %1727 = vmatprep.subr.bf16.mxu0 0
        %1728 = vmatpush1.bf16.msra.mxu0 0
        %1729 = vmatprep.subr.bf16.mxu0 0
        %1730 = vmatpush1.bf16.msra.mxu0 0
        %1731 = vmatprep.subr.bf16.mxu0 0
        %1732 = vmatpush1.bf16.msra.mxu0 0
        %1733 = vmatprep.subr.bf16.mxu0 0
        %1734 = vmatpush1.bf16.msra.mxu0 0
        %1735 = vmatprep.subr.bf16.mxu0 0
        %1736 = vmatpush1.bf16.msra.mxu0 0
        %1737 = vmatprep.subr.bf16.mxu0 0
        %1738 = vmatpush1.bf16.msra.mxu0 0
        %1739 = vmatprep.subr.bf16.mxu0 0
        %1740 = vmatpush1.bf16.msra.mxu0 0
        %1741 = vmatprep.subr.bf16.mxu0 0
        %1742 = vmatpush1.bf16.msra.mxu0 0
        %1743 = vmatprep.mubr.bf16.mxu0 0
        %1744 = vmatmul.mubr.bf16.gmra.mrb[0].mxu0 %v1661
        %v1745 = vpop.f32.mrb[0].mxu0
        %v1746 = vadd.f32 0.0, %v1745
        %v1747 = vpop.f32.mrb[0].mxu0
        %v1748 = vpop.f32.mrb[0].mxu0
        %v1749 = vadd.f32 0.0, %v1748
        %v1750 = vpop.f32.mrb[0].mxu0
        %1751 = vmatprep.mubr.bf16.mxu0 0
        %1752 = vmatmul.mubr.bf16.gmra.mrb[0].mxu0 %v1664
        %v1753 = vpop.f32.mrb[0].mxu0
        %v1754 = vadd.f32 0.0, %v1753
        %v1755 = vpop.f32.mrb[0].mxu0
        %v1756 = vpop.f32.mrb[0].mxu0
        %v1757 = vadd.f32 0.0, %v1756
        %v1758 = vpop.f32.mrb[0].mxu0
        %1759 = vmatprep.mubr.bf16.mxu0 0
        %1760 = vmatmul.mubr.bf16.gmra.mrb[0].mxu0 %v1667
        %v1761 = vpop.f32.mrb[0].mxu0
        %v1762 = vadd.f32 0.0, %v1761
        %v1763 = vpop.f32.mrb[0].mxu0
        %v1764 = vpop.f32.mrb[0].mxu0
        %v1765 = vadd.f32 0.0, %v1764
        %v1766 = vpop.f32.mrb[0].mxu0
        %1767 = vmatprep.mubr.bf16.mxu0 0
        %1768 = vmatmul.mubr.bf16.gmra.mrb[0].mxu0 %v1670
        %v1769 = vpop.f32.mrb[0].mxu0
        %v1770 = vadd.f32 0.0, %v1769
        %v1771 = vpop.f32.mrb[0].mxu0
        %v1772 = vpop.f32.mrb[0].mxu0
        %v1773 = vadd.f32 0.0, %v1772
        %v1774 = vpop.f32.mrb[0].mxu0
        %1775 = vmatprep.mubr.bf16.mxu0 0
        %1776 = vmatmul.mubr.bf16.gmra.mrb[0].mxu0 %v1673
        %v1777 = vpop.f32.mrb[0].mxu0
        %v1778 = vadd.f32 0.0, %v1777
        %v1779 = vpop.f32.mrb[0].mxu0
        %v1780 = vpop.f32.mrb[0].mxu0
        %v1781 = vadd.f32 0.0, %v1780
        %v1782 = vpop.f32.mrb[0].mxu0
        %1783 = vmatprep.mubr.bf16.mxu0 0
        %1784 = vmatmul.mubr.bf16.gmra.mrb[0].mxu0 %v1676
        %v1785 = vpop.f32.mrb[0].mxu0
        %v1786 = vadd.f32 0.0, %v1785
        %v1787 = vpop.f32.mrb[0].mxu0
        %v1788 = vpop.f32.mrb[0].mxu0
        %v1789 = vadd.f32 0.0, %v1788
        %v1790 = vpop.f32.mrb[0].mxu0
        %1791 = vmatprep.mubr.bf16.mxu0 0
        %1792 = vmatmul.mubr.bf16.gmra.mrb[0].mxu0 %v1679
        %v1793 = vpop.f32.mrb[0].mxu0
        %v1794 = vadd.f32 0.0, %v1793
        %v1795 = vpop.f32.mrb[0].mxu0
        %v1796 = vpop.f32.mrb[0].mxu0
        %v1797 = vadd.f32 0.0, %v1796
        %v1798 = vpop.f32.mrb[0].mxu0
        %1799 = vmatprep.mubr.bf16.mxu0 0
        %1800 = vmatmul.mubr.bf16.gmra.mrb[0].mxu0 %v1682
        %v1801 = vpop.f32.mrb[0].mxu0
        %v1802 = vadd.f32 0.0, %v1801
        %v1803 = vpop.f32.mrb[0].mxu0
        %v1804 = vpop.f32.mrb[0].mxu0
        %v1805 = vadd.f32 0.0, %v1804
        %v1806 = vpop.f32.mrb[0].mxu0
        %1807 = vmatprep.mubr.bf16.mxu0 0
        %1808 = vmatmul.mubr.bf16.gmra.mrb[0].mxu0 %v1685
        %v1809 = vpop.f32.mrb[0].mxu0
        %v1810 = vadd.f32 0.0, %v1809
        %v1811 = vpop.f32.mrb[0].mxu0
        %v1812 = vpop.f32.mrb[0].mxu0
        %v1813 = vadd.f32 0.0, %v1812
        %v1814 = vpop.f32.mrb[0].mxu0
        %1815 = vmatprep.mubr.bf16.mxu0 0
        %1816 = vmatmul.mubr.bf16.gmra.mrb[0].mxu0 %v1688
        %v1817 = vpop.f32.mrb[0].mxu0
        %v1818 = vadd.f32 0.0, %v1817
        %v1819 = vpop.f32.mrb[0].mxu0
        %v1820 = vpop.f32.mrb[0].mxu0
        %v1821 = vadd.f32 0.0, %v1820
        %v1822 = vpop.f32.mrb[0].mxu0
        %1823 = vmatprep.mubr.bf16.mxu0 0
        %1824 = vmatmul.mubr.bf16.gmra.mrb[0].mxu0 %v1691
        %v1825 = vpop.f32.mrb[0].mxu0
        %v1826 = vadd.f32 0.0, %v1825
        %v1827 = vpop.f32.mrb[0].mxu0
        %v1828 = vpop.f32.mrb[0].mxu0
        %v1829 = vadd.f32 0.0, %v1828
        %v1830 = vpop.f32.mrb[0].mxu0
        %1831 = vmatprep.mubr.bf16.mxu0 0
        %1832 = vmatmul.mubr.bf16.gmra.mrb[0].mxu0 %v1694
        %v1833 = vpop.f32.mrb[0].mxu0
        %v1834 = vadd.f32 0.0, %v1833
        %v1835 = vpop.f32.mrb[0].mxu0
        %v1836 = vpop.f32.mrb[0].mxu0
        %v1837 = vadd.f32 0.0, %v1836
        %v1838 = vpop.f32.mrb[0].mxu0
        %1839 = vmatprep.mubr.bf16.mxu0 0
        %1840 = vmatmul.mubr.bf16.gmra.mrb[0].mxu0 %v1697
        %v1841 = vpop.f32.mrb[0].mxu0
        %v1842 = vadd.f32 0.0, %v1841
        %v1843 = vpop.f32.mrb[0].mxu0
        %v1844 = vpop.f32.mrb[0].mxu0
        %v1845 = vadd.f32 0.0, %v1844
        %v1846 = vpop.f32.mrb[0].mxu0
        %1847 = vmatprep.mubr.bf16.mxu0 0
        %1848 = vmatmul.mubr.bf16.gmra.mrb[0].mxu0 %v1700
        %v1849 = vpop.f32.mrb[0].mxu0
        %v1850 = vadd.f32 0.0, %v1849
        %v1851 = vpop.f32.mrb[0].mxu0
        %v1852 = vpop.f32.mrb[0].mxu0
        %v1853 = vadd.f32 0.0, %v1852
        %v1854 = vpop.f32.mrb[0].mxu0
        %1855 = vmatprep.mubr.bf16.mxu0 0
        %1856 = vmatmul.mubr.bf16.gmra.mrb[0].mxu0 %v1703
        %v1857 = vpop.f32.mrb[0].mxu0
        %v1858 = vadd.f32 0.0, %v1857
        %v1859 = vpop.f32.mrb[0].mxu0
        %v1860 = vpop.f32.mrb[0].mxu0
        %v1861 = vadd.f32 0.0, %v1860
        %v1862 = vpop.f32.mrb[0].mxu0
        %1863 = vmatprep.mubr.bf16.mxu0 0
        %1864 = vmatmul.mubr.bf16.gmra.mrb[0].mxu0 %v1706
        %v1865 = vpop.f32.mrb[0].mxu0
        %v1866 = vadd.f32 0.0, %v1865
        %v1867 = vpop.f32.mrb[0].mxu0
        %v1868 = vpop.f32.mrb[0].mxu0
        %v1869 = vadd.f32 0.0, %v1868
        %v1870 = vpop.f32.mrb[0].mxu0
        %1871 = vdwg.mxu0
        %v1872 = vadd.f32 %v1452, %v1746
        %v1873 = vadd.f32 %v1455, %v1749
        %v1874 = vadd.f32 %v1460, %v1754
        %v1875 = vadd.f32 %v1463, %v1757
        %v1876 = vadd.f32 %v1468, %v1762
        %v1877 = vadd.f32 %v1471, %v1765
        %v1878 = vadd.f32 %v1476, %v1770
        %v1879 = vadd.f32 %v1479, %v1773
        %v1880 = vadd.f32 %v1484, %v1778
        %v1881 = vadd.f32 %v1487, %v1781
        %v1882 = vadd.f32 %v1492, %v1786
        %v1883 = vadd.f32 %v1495, %v1789
        %v1884 = vadd.f32 %v1500, %v1794
        %v1885 = vadd.f32 %v1503, %v1797
        %v1886 = vadd.f32 %v1508, %v1802
        %v1887 = vadd.f32 %v1511, %v1805
        %v1888 = vadd.f32 %v1516, %v1810
        %v1889 = vadd.f32 %v1519, %v1813
        %v1890 = vadd.f32 %v1524, %v1818
        %v1891 = vadd.f32 %v1527, %v1821
        %v1892 = vadd.f32 %v1532, %v1826
        %v1893 = vadd.f32 %v1535, %v1829
        %v1894 = vadd.f32 %v1540, %v1834
        %v1895 = vadd.f32 %v1543, %v1837
        %v1896 = vadd.f32 %v1548, %v1842
        %v1897 = vadd.f32 %v1551, %v1845
        %v1898 = vadd.f32 %v1556, %v1850
        %v1899 = vadd.f32 %v1559, %v1853
        %v1900 = vadd.f32 %v1564, %v1858
        %v1901 = vadd.f32 %v1567, %v1861
        %v1902 = vadd.f32 %v1572, %v1866
        %v1903 = vadd.f32 %v1575, %v1869
        %v1904 = vld [vmem:[#allocation2 + $0x17] sm:$0xff]
        %v1905 = vld [vmem:[#allocation2 + $0x1f] sm:$0xff]
        %v1906 = vld [vmem:[#allocation2 + $0x27] sm:$0xff]
        %v1907 = vld [vmem:[#allocation2 + $0x2f] sm:$0xff]
        %v1908 = vld [vmem:[#allocation2 + $0x37] sm:$0xff]
        %v1909 = vld [vmem:[#allocation2 + $0x3f] sm:$0xff]
        %v1910 = vld [vmem:[#allocation2 + $0x47] sm:$0xff]
        %v1911 = vld [vmem:[#allocation2 + $0x4f] sm:$0xff]
        %v1912 = vld [vmem:[#allocation2 + $0x57] sm:$0xff]
        %v1913 = vld [vmem:[#allocation2 + $0x5f] sm:$0xff]
        %v1914 = vld [vmem:[#allocation2 + $0x67] sm:$0xff]
        %v1915 = vld [vmem:[#allocation2 + $0x6f] sm:$0xff]
        %v1916 = vld [vmem:[#allocation2 + $0x77] sm:$0xff]
        %v1917 = vld [vmem:[#allocation2 + $0x7f] sm:$0xff]
        %v1918 = vld [vmem:[#allocation2 + $0x87] sm:$0xff]
        %v1919 = vld [vmem:[#allocation2 + $0x8f] sm:$0xff]
        %v1920 = vld [vmem:[#allocation2 + $0x97] sm:$0xff]
        %v1921 = vld [vmem:[#allocation2 + $0x9f] sm:$0xff]
        %v1922 = vld [vmem:[#allocation2 + $0xa7] sm:$0xff]
        %v1923 = vld [vmem:[#allocation2 + $0xaf] sm:$0xff]
        %v1924 = vld [vmem:[#allocation2 + $0xb7] sm:$0xff]
        %v1925 = vld [vmem:[#allocation2 + $0xbf] sm:$0xff]
        %v1926 = vld [vmem:[#allocation2 + $0xc7] sm:$0xff]
        %v1927 = vld [vmem:[#allocation2 + $0xcf] sm:$0xff]
        %v1928 = vld [vmem:[#allocation2 + $0xd7] sm:$0xff]
        %v1929 = vld [vmem:[#allocation2 + $0xdf] sm:$0xff]
        %v1930 = vld [vmem:[#allocation2 + $0xe7] sm:$0xff]
        %v1931 = vld [vmem:[#allocation2 + $0xef] sm:$0xff]
        %v1932 = vld [vmem:[#allocation2 + $0xf7] sm:$0xff]
        %v1933 = vld [vmem:[#allocation2 + $0xff] sm:$0xff]
        %v1934 = vld [vmem:[#allocation2 + $0x107] sm:$0xff]
        %v1935 = vld [vmem:[#allocation2 + $0x10f] sm:$0xff]
        %v1936 = vmul.f32 %v1904, %v791
        %v1937 = vmul.f32 %v1905, %v792
        %v1938 = vmul.f32 %v1906, %v793
        %v1939 = vmul.f32 %v1907, %v794
        %v1940 = vmul.f32 %v1908, %v795
        %v1941 = vmul.f32 %v1909, %v796
        %v1942 = vmul.f32 %v1910, %v797
        %v1943 = vmul.f32 %v1911, %v798
        %v1944 = vmul.f32 %v1912, %v799
        %v1945 = vmul.f32 %v1913, %v800
        %v1946 = vmul.f32 %v1914, %v801
        %v1947 = vmul.f32 %v1915, %v802
        %v1948 = vmul.f32 %v1916, %v803
        %v1949 = vmul.f32 %v1917, %v804
        %v1950 = vmul.f32 %v1918, %v805
        %v1951 = vmul.f32 %v1919, %v806
        %v1952 = vmul.f32 %v1920, %v807
        %v1953 = vmul.f32 %v1921, %v808
        %v1954 = vmul.f32 %v1922, %v809
        %v1955 = vmul.f32 %v1923, %v810
        %v1956 = vmul.f32 %v1924, %v811
        %v1957 = vmul.f32 %v1925, %v812
        %v1958 = vmul.f32 %v1926, %v813
        %v1959 = vmul.f32 %v1927, %v814
        %v1960 = vmul.f32 %v1928, %v815
        %v1961 = vmul.f32 %v1929, %v816
        %v1962 = vmul.f32 %v1930, %v817
        %v1963 = vmul.f32 %v1931, %v818
        %v1964 = vmul.f32 %v1932, %v819
        %v1965 = vmul.f32 %v1933, %v820
        %v1966 = vmul.f32 %v1934, %v821
        %v1967 = vmul.f32 %v1935, %v822
        %v1968 = vpack.c.bf16 %v1937, %v1936
        %v1969 = vpack.c.bf16 %v1939, %v1938
        %v1970 = vpack.c.bf16 %v1941, %v1940
        %v1971 = vpack.c.bf16 %v1943, %v1942
        %v1972 = vpack.c.bf16 %v1945, %v1944
        %v1973 = vpack.c.bf16 %v1947, %v1946
        %v1974 = vpack.c.bf16 %v1949, %v1948
        %v1975 = vpack.c.bf16 %v1951, %v1950
        %v1976 = vpack.c.bf16 %v1953, %v1952
        %v1977 = vpack.c.bf16 %v1955, %v1954
        %v1978 = vpack.c.bf16 %v1957, %v1956
        %v1979 = vpack.c.bf16 %v1959, %v1958
        %v1980 = vpack.c.bf16 %v1961, %v1960
        %v1981 = vpack.c.bf16 %v1963, %v1962
        %v1982 = vpack.c.bf16 %v1965, %v1964
        %v1983 = vpack.c.bf16 %v1967, %v1966
        %s1984 = scalar_lea.vmem %s1, 12
        %v1985 = vld [vmem:[%s1984] sm:$0xf]
        %v1987 = vsel %vm919, %v1968, 0
        %v1990 = vsel %vm919, %v1969, 0
        %v1993 = vsel %vm919, %v1970, 0
        %v1996 = vsel %vm919, %v1971, 0
        %v1999 = vsel %vm919, %v1972, 0
        %v2002 = vsel %vm919, %v1973, 0
        %v2005 = vsel %vm919, %v1974, 0
        %v2008 = vsel %vm919, %v1975, 0
        %v2011 = vsel %vm919, %v1976, 0
        %v2014 = vsel %vm919, %v1977, 0
        %v2017 = vsel %vm919, %v1978, 0
        %v2020 = vsel %vm919, %v1979, 0
        %v2023 = vsel %vm919, %v1980, 0
        %v2026 = vsel %vm919, %v1981, 0
        %v2029 = vsel %vm919, %v1982, 0
        %v2032 = vsel %vm919, %v1983, 0
        %v2035 = vsel %vm1201, %v1985, 0
        %2037 = vmatprep.subr.bf16.mxu0 0
        %2038 = vmatpush1.bf16.msra.mxu0 %v2035
        %2039 = vmatprep.subr.bf16.mxu0 0
        %2040 = vmatpush1.bf16.msra.mxu0 0
        %2041 = vmatprep.subr.bf16.mxu0 0
        %2042 = vmatpush1.bf16.msra.mxu0 0
        %2043 = vmatprep.subr.bf16.mxu0 0
        %2044 = vmatpush1.bf16.msra.mxu0 0
        %2045 = vmatprep.subr.bf16.mxu0 0
        %2046 = vmatpush1.bf16.msra.mxu0 0
        %2047 = vmatprep.subr.bf16.mxu0 0
        %2048 = vmatpush1.bf16.msra.mxu0 0
        %2049 = vmatprep.subr.bf16.mxu0 0
        %2050 = vmatpush1.bf16.msra.mxu0 0
        %2051 = vmatprep.subr.bf16.mxu0 0
        %2052 = vmatpush1.bf16.msra.mxu0 0
        %2053 = vmatprep.subr.bf16.mxu0 0
        %2054 = vmatpush1.bf16.msra.mxu0 0
        %2055 = vmatprep.subr.bf16.mxu0 0
        %2056 = vmatpush1.bf16.msra.mxu0 0
        %2057 = vmatprep.subr.bf16.mxu0 0
        %2058 = vmatpush1.bf16.msra.mxu0 0
        %2059 = vmatprep.subr.bf16.mxu0 0
        %2060 = vmatpush1.bf16.msra.mxu0 0
        %2061 = vmatprep.subr.bf16.mxu0 0
        %2062 = vmatpush1.bf16.msra.mxu0 0
        %2063 = vmatprep.subr.bf16.mxu0 0
        %2064 = vmatpush1.bf16.msra.mxu0 0
        %2065 = vmatprep.subr.bf16.mxu0 0
        %2066 = vmatpush1.bf16.msra.mxu0 0
        %2067 = vmatprep.subr.bf16.mxu0 0
        %2068 = vmatpush1.bf16.msra.mxu0 0
        %2069 = vmatprep.mubr.bf16.mxu0 0
        %2070 = vmatmul.mubr.bf16.gmra.mrb[0].mxu0 %v1987
        %v2071 = vpop.f32.mrb[0].mxu0
        %v2072 = vadd.f32 0.0, %v2071
        %v2073 = vpop.f32.mrb[0].mxu0
        %v2074 = vpop.f32.mrb[0].mxu0
        %v2075 = vadd.f32 0.0, %v2074
        %v2076 = vpop.f32.mrb[0].mxu0
        %2077 = vmatprep.mubr.bf16.mxu0 0
        %2078 = vmatmul.mubr.bf16.gmra.mrb[0].mxu0 %v1990
        %v2079 = vpop.f32.mrb[0].mxu0
        %v2080 = vadd.f32 0.0, %v2079
        %v2081 = vpop.f32.mrb[0].mxu0
        %v2082 = vpop.f32.mrb[0].mxu0
        %v2083 = vadd.f32 0.0, %v2082
        %v2084 = vpop.f32.mrb[0].mxu0
        %2085 = vmatprep.mubr.bf16.mxu0 0
        %2086 = vmatmul.mubr.bf16.gmra.mrb[0].mxu0 %v1993
        %v2087 = vpop.f32.mrb[0].mxu0
        %v2088 = vadd.f32 0.0, %v2087
        %v2089 = vpop.f32.mrb[0].mxu0
        %v2090 = vpop.f32.mrb[0].mxu0
        %v2091 = vadd.f32 0.0, %v2090
        %v2092 = vpop.f32.mrb[0].mxu0
        %2093 = vmatprep.mubr.bf16.mxu0 0
        %2094 = vmatmul.mubr.bf16.gmra.mrb[0].mxu0 %v1996
        %v2095 = vpop.f32.mrb[0].mxu0
        %v2096 = vadd.f32 0.0, %v2095
        %v2097 = vpop.f32.mrb[0].mxu0
        %v2098 = vpop.f32.mrb[0].mxu0
        %v2099 = vadd.f32 0.0, %v2098
        %v2100 = vpop.f32.mrb[0].mxu0
        %2101 = vmatprep.mubr.bf16.mxu0 0
        %2102 = vmatmul.mubr.bf16.gmra.mrb[0].mxu0 %v1999
        %v2103 = vpop.f32.mrb[0].mxu0
        %v2104 = vadd.f32 0.0, %v2103
        %v2105 = vpop.f32.mrb[0].mxu0
        %v2106 = vpop.f32.mrb[0].mxu0
        %v2107 = vadd.f32 0.0, %v2106
        %v2108 = vpop.f32.mrb[0].mxu0
        %2109 = vmatprep.mubr.bf16.mxu0 0
        %2110 = vmatmul.mubr.bf16.gmra.mrb[0].mxu0 %v2002
        %v2111 = vpop.f32.mrb[0].mxu0
        %v2112 = vadd.f32 0.0, %v2111
        %v2113 = vpop.f32.mrb[0].mxu0
        %v2114 = vpop.f32.mrb[0].mxu0
        %v2115 = vadd.f32 0.0, %v2114
        %v2116 = vpop.f32.mrb[0].mxu0
        %2117 = vmatprep.mubr.bf16.mxu0 0
        %2118 = vmatmul.mubr.bf16.gmra.mrb[0].mxu0 %v2005
        %v2119 = vpop.f32.mrb[0].mxu0
        %v2120 = vadd.f32 0.0, %v2119
        %v2121 = vpop.f32.mrb[0].mxu0
        %v2122 = vpop.f32.mrb[0].mxu0
        %v2123 = vadd.f32 0.0, %v2122
        %v2124 = vpop.f32.mrb[0].mxu0
        %2125 = vmatprep.mubr.bf16.mxu0 0
        %2126 = vmatmul.mubr.bf16.gmra.mrb[0].mxu0 %v2008
        %v2127 = vpop.f32.mrb[0].mxu0
        %v2128 = vadd.f32 0.0, %v2127
        %v2129 = vpop.f32.mrb[0].mxu0
        %v2130 = vpop.f32.mrb[0].mxu0
        %v2131 = vadd.f32 0.0, %v2130
        %v2132 = vpop.f32.mrb[0].mxu0
        %2133 = vmatprep.mubr.bf16.mxu0 0
        %2134 = vmatmul.mubr.bf16.gmra.mrb[0].mxu0 %v2011
        %v2135 = vpop.f32.mrb[0].mxu0
        %v2136 = vadd.f32 0.0, %v2135
        %v2137 = vpop.f32.mrb[0].mxu0
        %v2138 = vpop.f32.mrb[0].mxu0
        %v2139 = vadd.f32 0.0, %v2138
        %v2140 = vpop.f32.mrb[0].mxu0
        %2141 = vmatprep.mubr.bf16.mxu0 0
        %2142 = vmatmul.mubr.bf16.gmra.mrb[0].mxu0 %v2014
        %v2143 = vpop.f32.mrb[0].mxu0
        %v2144 = vadd.f32 0.0, %v2143
        %v2145 = vpop.f32.mrb[0].mxu0
        %v2146 = vpop.f32.mrb[0].mxu0
        %v2147 = vadd.f32 0.0, %v2146
        %v2148 = vpop.f32.mrb[0].mxu0
        %2149 = vmatprep.mubr.bf16.mxu0 0
        %2150 = vmatmul.mubr.bf16.gmra.mrb[0].mxu0 %v2017
        %v2151 = vpop.f32.mrb[0].mxu0
        %v2152 = vadd.f32 0.0, %v2151
        %v2153 = vpop.f32.mrb[0].mxu0
        %v2154 = vpop.f32.mrb[0].mxu0
        %v2155 = vadd.f32 0.0, %v2154
        %v2156 = vpop.f32.mrb[0].mxu0
        %2157 = vmatprep.mubr.bf16.mxu0 0
        %2158 = vmatmul.mubr.bf16.gmra.mrb[0].mxu0 %v2020
        %v2159 = vpop.f32.mrb[0].mxu0
        %v2160 = vadd.f32 0.0, %v2159
        %v2161 = vpop.f32.mrb[0].mxu0
        %v2162 = vpop.f32.mrb[0].mxu0
        %v2163 = vadd.f32 0.0, %v2162
        %v2164 = vpop.f32.mrb[0].mxu0
        %2165 = vmatprep.mubr.bf16.mxu0 0
        %2166 = vmatmul.mubr.bf16.gmra.mrb[0].mxu0 %v2023
        %v2167 = vpop.f32.mrb[0].mxu0
        %v2168 = vadd.f32 0.0, %v2167
        %v2169 = vpop.f32.mrb[0].mxu0
        %v2170 = vpop.f32.mrb[0].mxu0
        %v2171 = vadd.f32 0.0, %v2170
        %v2172 = vpop.f32.mrb[0].mxu0
        %2173 = vmatprep.mubr.bf16.mxu0 0
        %2174 = vmatmul.mubr.bf16.gmra.mrb[0].mxu0 %v2026
        %v2175 = vpop.f32.mrb[0].mxu0
        %v2176 = vadd.f32 0.0, %v2175
        %v2177 = vpop.f32.mrb[0].mxu0
        %v2178 = vpop.f32.mrb[0].mxu0
        %v2179 = vadd.f32 0.0, %v2178
        %v2180 = vpop.f32.mrb[0].mxu0
        %2181 = vmatprep.mubr.bf16.mxu0 0
        %2182 = vmatmul.mubr.bf16.gmra.mrb[0].mxu0 %v2029
        %v2183 = vpop.f32.mrb[0].mxu0
        %v2184 = vadd.f32 0.0, %v2183
        %v2185 = vpop.f32.mrb[0].mxu0
        %v2186 = vpop.f32.mrb[0].mxu0
        %v2187 = vadd.f32 0.0, %v2186
        %v2188 = vpop.f32.mrb[0].mxu0
        %2189 = vmatprep.mubr.bf16.mxu0 0
        %2190 = vmatmul.mubr.bf16.gmra.mrb[0].mxu0 %v2032
        %v2191 = vpop.f32.mrb[0].mxu0
        %v2192 = vadd.f32 0.0, %v2191
        %v2193 = vpop.f32.mrb[0].mxu0
        %v2194 = vpop.f32.mrb[0].mxu0
        %v2195 = vadd.f32 0.0, %v2194
        %v2196 = vpop.f32.mrb[0].mxu0
        %2197 = vdwg.mxu0
        %v2198 = vadd.f32 %v1872, %v2072
        %v2199 = vadd.f32 %v1873, %v2075
        %v2200 = vadd.f32 %v1874, %v2080
        %v2201 = vadd.f32 %v1875, %v2083
        %v2202 = vadd.f32 %v1876, %v2088
        %v2203 = vadd.f32 %v1877, %v2091
        %v2204 = vadd.f32 %v1878, %v2096
        %v2205 = vadd.f32 %v1879, %v2099
        %v2206 = vadd.f32 %v1880, %v2104
        %v2207 = vadd.f32 %v1881, %v2107
        %v2208 = vadd.f32 %v1882, %v2112
        %v2209 = vadd.f32 %v1883, %v2115
        %v2210 = vadd.f32 %v1884, %v2120
        %v2211 = vadd.f32 %v1885, %v2123
        %v2212 = vadd.f32 %v1886, %v2128
        %v2213 = vadd.f32 %v1887, %v2131
        %v2214 = vadd.f32 %v1888, %v2136
        %v2215 = vadd.f32 %v1889, %v2139
        %v2216 = vadd.f32 %v1890, %v2144
        %v2217 = vadd.f32 %v1891, %v2147
        %v2218 = vadd.f32 %v1892, %v2152
        %v2219 = vadd.f32 %v1893, %v2155
        %v2220 = vadd.f32 %v1894, %v2160
        %v2221 = vadd.f32 %v1895, %v2163
        %v2222 = vadd.f32 %v1896, %v2168
        %v2223 = vadd.f32 %v1897, %v2171
        %v2224 = vadd.f32 %v1898, %v2176
        %v2225 = vadd.f32 %v1899, %v2179
        %v2226 = vadd.f32 %v1900, %v2184
        %v2227 = vadd.f32 %v1901, %v2187
        %v2228 = vadd.f32 %v1902, %v2192
        %v2229 = vadd.f32 %v1903, %v2195
        %v2230 = vld [vmem:[#allocation2 + $0x18] sm:$0xff]
        %v2231 = vld [vmem:[#allocation2 + $0x20] sm:$0xff]
        %v2232 = vld [vmem:[#allocation2 + $0x28] sm:$0xff]
        %v2233 = vld [vmem:[#allocation2 + $0x30] sm:$0xff]
        %v2234 = vld [vmem:[#allocation2 + $0x38] sm:$0xff]
        %v2235 = vld [vmem:[#allocation2 + $0x40] sm:$0xff]
        %v2236 = vld [vmem:[#allocation2 + $0x48] sm:$0xff]
        %v2237 = vld [vmem:[#allocation2 + $0x50] sm:$0xff]
        %v2238 = vld [vmem:[#allocation2 + $0x58] sm:$0xff]
        %v2239 = vld [vmem:[#allocation2 + $0x60] sm:$0xff]
        %v2240 = vld [vmem:[#allocation2 + $0x68] sm:$0xff]
        %v2241 = vld [vmem:[#allocation2 + $0x70] sm:$0xff]
        %v2242 = vld [vmem:[#allocation2 + $0x78] sm:$0xff]
        %v2243 = vld [vmem:[#allocation2 + $0x80] sm:$0xff]
        %v2244 = vld [vmem:[#allocation2 + $0x88] sm:$0xff]
        %v2245 = vld [vmem:[#allocation2 + $0x90] sm:$0xff]
        %v2246 = vld [vmem:[#allocation2 + $0x98] sm:$0xff]
        %v2247 = vld [vmem:[#allocation2 + $0xa0] sm:$0xff]
        %v2248 = vld [vmem:[#allocation2 + $0xa8] sm:$0xff]
        %v2249 = vld [vmem:[#allocation2 + $0xb0] sm:$0xff]
        %v2250 = vld [vmem:[#allocation2 + $0xb8] sm:$0xff]
        %v2251 = vld [vmem:[#allocation2 + $0xc0] sm:$0xff]
        %v2252 = vld [vmem:[#allocation2 + $0xc8] sm:$0xff]
        %v2253 = vld [vmem:[#allocation2 + $0xd0] sm:$0xff]
        %v2254 = vld [vmem:[#allocation2 + $0xd8] sm:$0xff]
        %v2255 = vld [vmem:[#allocation2 + $0xe0] sm:$0xff]
        %v2256 = vld [vmem:[#allocation2 + $0xe8] sm:$0xff]
        %v2257 = vld [vmem:[#allocation2 + $0xf0] sm:$0xff]
        %v2258 = vld [vmem:[#allocation2 + $0xf8] sm:$0xff]
        %v2259 = vld [vmem:[#allocation2 + $0x100] sm:$0xff]
        %v2260 = vld [vmem:[#allocation2 + $0x108] sm:$0xff]
        %v2261 = vld [vmem:[#allocation2 + $0x110] sm:$0xff]
        %v2262 = vpack.c.bf16 %v2231, %v2230
        %v2263 = vpack.c.bf16 %v2233, %v2232
        %v2264 = vpack.c.bf16 %v2235, %v2234
        %v2265 = vpack.c.bf16 %v2237, %v2236
        %v2266 = vpack.c.bf16 %v2239, %v2238
        %v2267 = vpack.c.bf16 %v2241, %v2240
        %v2268 = vpack.c.bf16 %v2243, %v2242
        %v2269 = vpack.c.bf16 %v2245, %v2244
        %v2270 = vpack.c.bf16 %v2247, %v2246
        %v2271 = vpack.c.bf16 %v2249, %v2248
        %v2272 = vpack.c.bf16 %v2251, %v2250
        %v2273 = vpack.c.bf16 %v2253, %v2252
        %v2274 = vpack.c.bf16 %v2255, %v2254
        %v2275 = vpack.c.bf16 %v2257, %v2256
        %v2276 = vpack.c.bf16 %v2259, %v2258
        %v2277 = vpack.c.bf16 %v2261, %v2260
        %s2278 = scalar_lea.vmem %s1, 16
        %v2279 = vld [vmem:[%s2278] sm:$0xf]
        %v2281 = vsel %vm919, %v2262, 0
        %v2284 = vsel %vm919, %v2263, 0
        %v2287 = vsel %vm919, %v2264, 0
        %v2290 = vsel %vm919, %v2265, 0
        %v2293 = vsel %vm919, %v2266, 0
        %v2296 = vsel %vm919, %v2267, 0
        %v2299 = vsel %vm919, %v2268, 0
        %v2302 = vsel %vm919, %v2269, 0
        %v2305 = vsel %vm919, %v2270, 0
        %v2308 = vsel %vm919, %v2271, 0
        %v2311 = vsel %vm919, %v2272, 0
        %v2314 = vsel %vm919, %v2273, 0
        %v2317 = vsel %vm919, %v2274, 0
        %v2320 = vsel %vm919, %v2275, 0
        %v2323 = vsel %vm919, %v2276, 0
        %v2326 = vsel %vm919, %v2277, 0
        %v2329 = vsel %vm1201, %v2279, 0
        %2331 = vmatprep.subr.bf16.mxu0 0
        %2332 = vmatpush1.bf16.msra.mxu0 %v2329
        %2333 = vmatprep.subr.bf16.mxu0 0
        %2334 = vmatpush1.bf16.msra.mxu0 0
        %2335 = vmatprep.subr.bf16.mxu0 0
        %2336 = vmatpush1.bf16.msra.mxu0 0
        %2337 = vmatprep.subr.bf16.mxu0 0
        %2338 = vmatpush1.bf16.msra.mxu0 0
        %2339 = vmatprep.subr.bf16.mxu0 0
        %2340 = vmatpush1.bf16.msra.mxu0 0
        %2341 = vmatprep.subr.bf16.mxu0 0
        %2342 = vmatpush1.bf16.msra.mxu0 0
        %2343 = vmatprep.subr.bf16.mxu0 0
        %2344 = vmatpush1.bf16.msra.mxu0 0
        %2345 = vmatprep.subr.bf16.mxu0 0
        %2346 = vmatpush1.bf16.msra.mxu0 0
        %2347 = vmatprep.subr.bf16.mxu0 0
        %2348 = vmatpush1.bf16.msra.mxu0 0
        %2349 = vmatprep.subr.bf16.mxu0 0
        %2350 = vmatpush1.bf16.msra.mxu0 0
        %2351 = vmatprep.subr.bf16.mxu0 0
        %2352 = vmatpush1.bf16.msra.mxu0 0
        %2353 = vmatprep.subr.bf16.mxu0 0
        %2354 = vmatpush1.bf16.msra.mxu0 0
        %2355 = vmatprep.subr.bf16.mxu0 0
        %2356 = vmatpush1.bf16.msra.mxu0 0
        %2357 = vmatprep.subr.bf16.mxu0 0
        %2358 = vmatpush1.bf16.msra.mxu0 0
        %2359 = vmatprep.subr.bf16.mxu0 0
        %2360 = vmatpush1.bf16.msra.mxu0 0
        %2361 = vmatprep.subr.bf16.mxu0 0
        %2362 = vmatpush1.bf16.msra.mxu0 0
        %2363 = vmatprep.mubr.bf16.mxu0 0
        %2364 = vmatmul.mubr.bf16.gmra.mrb[0].mxu0 %v2281
        %v2365 = vpop.f32.mrb[0].mxu0
        %v2366 = vadd.f32 0.0, %v2365
        %v2367 = vpop.f32.mrb[0].mxu0
        %v2368 = vpop.f32.mrb[0].mxu0
        %v2369 = vadd.f32 0.0, %v2368
        %v2370 = vpop.f32.mrb[0].mxu0
        %2371 = vmatprep.mubr.bf16.mxu0 0
        %2372 = vmatmul.mubr.bf16.gmra.mrb[0].mxu0 %v2284
        %v2373 = vpop.f32.mrb[0].mxu0
        %v2374 = vadd.f32 0.0, %v2373
        %v2375 = vpop.f32.mrb[0].mxu0
        %v2376 = vpop.f32.mrb[0].mxu0
        %v2377 = vadd.f32 0.0, %v2376
        %v2378 = vpop.f32.mrb[0].mxu0
        %2379 = vmatprep.mubr.bf16.mxu0 0
        %2380 = vmatmul.mubr.bf16.gmra.mrb[0].mxu0 %v2287
        %v2381 = vpop.f32.mrb[0].mxu0
        %v2382 = vadd.f32 0.0, %v2381
        %v2383 = vpop.f32.mrb[0].mxu0
        %v2384 = vpop.f32.mrb[0].mxu0
        %v2385 = vadd.f32 0.0, %v2384
        %v2386 = vpop.f32.mrb[0].mxu0
        %2387 = vmatprep.mubr.bf16.mxu0 0
        %2388 = vmatmul.mubr.bf16.gmra.mrb[0].mxu0 %v2290
        %v2389 = vpop.f32.mrb[0].mxu0
        %v2390 = vadd.f32 0.0, %v2389
        %v2391 = vpop.f32.mrb[0].mxu0
        %v2392 = vpop.f32.mrb[0].mxu0
        %v2393 = vadd.f32 0.0, %v2392
        %v2394 = vpop.f32.mrb[0].mxu0
        %2395 = vmatprep.mubr.bf16.mxu0 0
        %2396 = vmatmul.mubr.bf16.gmra.mrb[0].mxu0 %v2293
        %v2397 = vpop.f32.mrb[0].mxu0
        %v2398 = vadd.f32 0.0, %v2397
        %v2399 = vpop.f32.mrb[0].mxu0
        %v2400 = vpop.f32.mrb[0].mxu0
        %v2401 = vadd.f32 0.0, %v2400
        %v2402 = vpop.f32.mrb[0].mxu0
        %2403 = vmatprep.mubr.bf16.mxu0 0
        %2404 = vmatmul.mubr.bf16.gmra.mrb[0].mxu0 %v2296
        %v2405 = vpop.f32.mrb[0].mxu0
        %v2406 = vadd.f32 0.0, %v2405
        %v2407 = vpop.f32.mrb[0].mxu0
        %v2408 = vpop.f32.mrb[0].mxu0
        %v2409 = vadd.f32 0.0, %v2408
        %v2410 = vpop.f32.mrb[0].mxu0
        %2411 = vmatprep.mubr.bf16.mxu0 0
        %2412 = vmatmul.mubr.bf16.gmra.mrb[0].mxu0 %v2299
        %v2413 = vpop.f32.mrb[0].mxu0
        %v2414 = vadd.f32 0.0, %v2413
        %v2415 = vpop.f32.mrb[0].mxu0
        %v2416 = vpop.f32.mrb[0].mxu0
        %v2417 = vadd.f32 0.0, %v2416
        %v2418 = vpop.f32.mrb[0].mxu0
        %2419 = vmatprep.mubr.bf16.mxu0 0
        %2420 = vmatmul.mubr.bf16.gmra.mrb[0].mxu0 %v2302
        %v2421 = vpop.f32.mrb[0].mxu0
        %v2422 = vadd.f32 0.0, %v2421
        %v2423 = vpop.f32.mrb[0].mxu0
        %v2424 = vpop.f32.mrb[0].mxu0
        %v2425 = vadd.f32 0.0, %v2424
        %v2426 = vpop.f32.mrb[0].mxu0
        %2427 = vmatprep.mubr.bf16.mxu0 0
        %2428 = vmatmul.mubr.bf16.gmra.mrb[0].mxu0 %v2305
        %v2429 = vpop.f32.mrb[0].mxu0
        %v2430 = vadd.f32 0.0, %v2429
        %v2431 = vpop.f32.mrb[0].mxu0
        %v2432 = vpop.f32.mrb[0].mxu0
        %v2433 = vadd.f32 0.0, %v2432
        %v2434 = vpop.f32.mrb[0].mxu0
        %2435 = vmatprep.mubr.bf16.mxu0 0
        %2436 = vmatmul.mubr.bf16.gmra.mrb[0].mxu0 %v2308
        %v2437 = vpop.f32.mrb[0].mxu0
        %v2438 = vadd.f32 0.0, %v2437
        %v2439 = vpop.f32.mrb[0].mxu0
        %v2440 = vpop.f32.mrb[0].mxu0
        %v2441 = vadd.f32 0.0, %v2440
        %v2442 = vpop.f32.mrb[0].mxu0
        %2443 = vmatprep.mubr.bf16.mxu0 0
        %2444 = vmatmul.mubr.bf16.gmra.mrb[0].mxu0 %v2311
        %v2445 = vpop.f32.mrb[0].mxu0
        %v2446 = vadd.f32 0.0, %v2445
        %v2447 = vpop.f32.mrb[0].mxu0
        %v2448 = vpop.f32.mrb[0].mxu0
        %v2449 = vadd.f32 0.0, %v2448
        %v2450 = vpop.f32.mrb[0].mxu0
        %2451 = vmatprep.mubr.bf16.mxu0 0
        %2452 = vmatmul.mubr.bf16.gmra.mrb[0].mxu0 %v2314
        %v2453 = vpop.f32.mrb[0].mxu0
        %v2454 = vadd.f32 0.0, %v2453
        %v2455 = vpop.f32.mrb[0].mxu0
        %v2456 = vpop.f32.mrb[0].mxu0
        %v2457 = vadd.f32 0.0, %v2456
        %v2458 = vpop.f32.mrb[0].mxu0
        %2459 = vmatprep.mubr.bf16.mxu0 0
        %2460 = vmatmul.mubr.bf16.gmra.mrb[0].mxu0 %v2317
        %v2461 = vpop.f32.mrb[0].mxu0
        %v2462 = vadd.f32 0.0, %v2461
        %v2463 = vpop.f32.mrb[0].mxu0
        %v2464 = vpop.f32.mrb[0].mxu0
        %v2465 = vadd.f32 0.0, %v2464
        %v2466 = vpop.f32.mrb[0].mxu0
        %2467 = vmatprep.mubr.bf16.mxu0 0
        %2468 = vmatmul.mubr.bf16.gmra.mrb[0].mxu0 %v2320
        %v2469 = vpop.f32.mrb[0].mxu0
        %v2470 = vadd.f32 0.0, %v2469
        %v2471 = vpop.f32.mrb[0].mxu0
        %v2472 = vpop.f32.mrb[0].mxu0
        %v2473 = vadd.f32 0.0, %v2472
        %v2474 = vpop.f32.mrb[0].mxu0
        %2475 = vmatprep.mubr.bf16.mxu0 0
        %2476 = vmatmul.mubr.bf16.gmra.mrb[0].mxu0 %v2323
        %v2477 = vpop.f32.mrb[0].mxu0
        %v2478 = vadd.f32 0.0, %v2477
        %v2479 = vpop.f32.mrb[0].mxu0
        %v2480 = vpop.f32.mrb[0].mxu0
        %v2481 = vadd.f32 0.0, %v2480
        %v2482 = vpop.f32.mrb[0].mxu0
        %2483 = vmatprep.mubr.bf16.mxu0 0
        %2484 = vmatmul.mubr.bf16.gmra.mrb[0].mxu0 %v2326
        %v2485 = vpop.f32.mrb[0].mxu0
        %v2486 = vadd.f32 0.0, %v2485
        %v2487 = vpop.f32.mrb[0].mxu0
        %v2488 = vpop.f32.mrb[0].mxu0
        %v2489 = vadd.f32 0.0, %v2488
        %v2490 = vpop.f32.mrb[0].mxu0
        %2491 = vdwg.mxu0
        %v2492 = vadd.f32 %v2198, %v2366
        %v2493 = vadd.f32 %v2199, %v2369
        %v2494 = vadd.f32 %v2200, %v2374
        %v2495 = vadd.f32 %v2201, %v2377
        %v2496 = vadd.f32 %v2202, %v2382
        %v2497 = vadd.f32 %v2203, %v2385
        %v2498 = vadd.f32 %v2204, %v2390
        %v2499 = vadd.f32 %v2205, %v2393
        %v2500 = vadd.f32 %v2206, %v2398
        %v2501 = vadd.f32 %v2207, %v2401
        %v2502 = vadd.f32 %v2208, %v2406
        %v2503 = vadd.f32 %v2209, %v2409
        %v2504 = vadd.f32 %v2210, %v2414
        %v2505 = vadd.f32 %v2211, %v2417
        %v2506 = vadd.f32 %v2212, %v2422
        %v2507 = vadd.f32 %v2213, %v2425
        %v2508 = vadd.f32 %v2214, %v2430
        %v2509 = vadd.f32 %v2215, %v2433
        %v2510 = vadd.f32 %v2216, %v2438
        %v2511 = vadd.f32 %v2217, %v2441
        %v2512 = vadd.f32 %v2218, %v2446
        %v2513 = vadd.f32 %v2219, %v2449
        %v2514 = vadd.f32 %v2220, %v2454
        %v2515 = vadd.f32 %v2221, %v2457
        %v2516 = vadd.f32 %v2222, %v2462
        %v2517 = vadd.f32 %v2223, %v2465
        %v2518 = vadd.f32 %v2224, %v2470
        %v2519 = vadd.f32 %v2225, %v2473
        %v2520 = vadd.f32 %v2226, %v2478
        %v2521 = vadd.f32 %v2227, %v2481
        %v2522 = vadd.f32 %v2228, %v2486
        %v2523 = vadd.f32 %v2229, %v2489
        %v2524 = vld [vmem:[#allocation2 + $0x19] sm:$0xff]
        %v2525 = vld [vmem:[#allocation2 + $0x21] sm:$0xff]
        %v2526 = vld [vmem:[#allocation2 + $0x29] sm:$0xff]
        %v2527 = vld [vmem:[#allocation2 + $0x31] sm:$0xff]
        %v2528 = vld [vmem:[#allocation2 + $0x39] sm:$0xff]
        %v2529 = vld [vmem:[#allocation2 + $0x41] sm:$0xff]
        %v2530 = vld [vmem:[#allocation2 + $0x49] sm:$0xff]
        %v2531 = vld [vmem:[#allocation2 + $0x51] sm:$0xff]
        %v2532 = vld [vmem:[#allocation2 + $0x59] sm:$0xff]
        %v2533 = vld [vmem:[#allocation2 + $0x61] sm:$0xff]
        %v2534 = vld [vmem:[#allocation2 + $0x69] sm:$0xff]
        %v2535 = vld [vmem:[#allocation2 + $0x71] sm:$0xff]
        %v2536 = vld [vmem:[#allocation2 + $0x79] sm:$0xff]
        %v2537 = vld [vmem:[#allocation2 + $0x81] sm:$0xff]
        %v2538 = vld [vmem:[#allocation2 + $0x89] sm:$0xff]
        %v2539 = vld [vmem:[#allocation2 + $0x91] sm:$0xff]
        %v2540 = vld [vmem:[#allocation2 + $0x99] sm:$0xff]
        %v2541 = vld [vmem:[#allocation2 + $0xa1] sm:$0xff]
        %v2542 = vld [vmem:[#allocation2 + $0xa9] sm:$0xff]
        %v2543 = vld [vmem:[#allocation2 + $0xb1] sm:$0xff]
        %v2544 = vld [vmem:[#allocation2 + $0xb9] sm:$0xff]
        %v2545 = vld [vmem:[#allocation2 + $0xc1] sm:$0xff]
        %v2546 = vld [vmem:[#allocation2 + $0xc9] sm:$0xff]
        %v2547 = vld [vmem:[#allocation2 + $0xd1] sm:$0xff]
        %v2548 = vld [vmem:[#allocation2 + $0xd9] sm:$0xff]
        %v2549 = vld [vmem:[#allocation2 + $0xe1] sm:$0xff]
        %v2550 = vld [vmem:[#allocation2 + $0xe9] sm:$0xff]
        %v2551 = vld [vmem:[#allocation2 + $0xf1] sm:$0xff]
        %v2552 = vld [vmem:[#allocation2 + $0xf9] sm:$0xff]
        %v2553 = vld [vmem:[#allocation2 + $0x101] sm:$0xff]
        %v2554 = vld [vmem:[#allocation2 + $0x109] sm:$0xff]
        %v2555 = vld [vmem:[#allocation2 + $0x111] sm:$0xff]
        %v2556 = vmul.f32 %v2524, %v887
        %v2557 = vmul.f32 %v2525, %v888
        %v2558 = vmul.f32 %v2526, %v889
        %v2559 = vmul.f32 %v2527, %v890
        %v2560 = vmul.f32 %v2528, %v891
        %v2561 = vmul.f32 %v2529, %v892
        %v2562 = vmul.f32 %v2530, %v893
        %v2563 = vmul.f32 %v2531, %v894
        %v2564 = vmul.f32 %v2532, %v895
        %v2565 = vmul.f32 %v2533, %v896
        %v2566 = vmul.f32 %v2534, %v897
        %v2567 = vmul.f32 %v2535, %v898
        %v2568 = vmul.f32 %v2536, %v899
        %v2569 = vmul.f32 %v2537, %v900
        %v2570 = vmul.f32 %v2538, %v901
        %v2571 = vmul.f32 %v2539, %v902
        %v2572 = vmul.f32 %v2540, %v903
        %v2573 = vmul.f32 %v2541, %v904
        %v2574 = vmul.f32 %v2542, %v905
        %v2575 = vmul.f32 %v2543, %v906
        %v2576 = vmul.f32 %v2544, %v907
        %v2577 = vmul.f32 %v2545, %v908
        %v2578 = vmul.f32 %v2546, %v909
        %v2579 = vmul.f32 %v2547, %v910
        %v2580 = vmul.f32 %v2548, %v911
        %v2581 = vmul.f32 %v2549, %v912
        %v2582 = vmul.f32 %v2550, %v913
        %v2583 = vmul.f32 %v2551, %v914
        %v2584 = vmul.f32 %v2552, %v915
        %v2585 = vmul.f32 %v2553, %v916
        %v2586 = vmul.f32 %v2554, %v917
        %v2587 = vmul.f32 %v2555, %v918
        %v2588 = vpack.c.bf16 %v2557, %v2556
        %v2589 = vpack.c.bf16 %v2559, %v2558
        %v2590 = vpack.c.bf16 %v2561, %v2560
        %v2591 = vpack.c.bf16 %v2563, %v2562
        %v2592 = vpack.c.bf16 %v2565, %v2564
        %v2593 = vpack.c.bf16 %v2567, %v2566
        %v2594 = vpack.c.bf16 %v2569, %v2568
        %v2595 = vpack.c.bf16 %v2571, %v2570
        %v2596 = vpack.c.bf16 %v2573, %v2572
        %v2597 = vpack.c.bf16 %v2575, %v2574
        %v2598 = vpack.c.bf16 %v2577, %v2576
        %v2599 = vpack.c.bf16 %v2579, %v2578
        %v2600 = vpack.c.bf16 %v2581, %v2580
        %v2601 = vpack.c.bf16 %v2583, %v2582
        %v2602 = vpack.c.bf16 %v2585, %v2584
        %v2603 = vpack.c.bf16 %v2587, %v2586
        %s2604 = scalar_lea.vmem %s1, 20
        %v2605 = vld [vmem:[%s2604] sm:$0xf]
        %v2607 = vsel %vm919, %v2588, 0
        %v2610 = vsel %vm919, %v2589, 0
        %v2613 = vsel %vm919, %v2590, 0
        %v2616 = vsel %vm919, %v2591, 0
        %v2619 = vsel %vm919, %v2592, 0
        %v2622 = vsel %vm919, %v2593, 0
        %v2625 = vsel %vm919, %v2594, 0
        %v2628 = vsel %vm919, %v2595, 0
        %v2631 = vsel %vm919, %v2596, 0
        %v2634 = vsel %vm919, %v2597, 0
        %v2637 = vsel %vm919, %v2598, 0
        %v2640 = vsel %vm919, %v2599, 0
        %v2643 = vsel %vm919, %v2600, 0
        %v2646 = vsel %vm919, %v2601, 0
        %v2649 = vsel %vm919, %v2602, 0
        %v2652 = vsel %vm919, %v2603, 0
        %v2655 = vsel %vm1201, %v2605, 0
        %2657 = vmatprep.subr.bf16.mxu0 0
        %2658 = vmatpush1.bf16.msra.mxu0 %v2655
        %2659 = vmatprep.subr.bf16.mxu0 0
        %2660 = vmatpush1.bf16.msra.mxu0 0
        %2661 = vmatprep.subr.bf16.mxu0 0
        %2662 = vmatpush1.bf16.msra.mxu0 0
        %2663 = vmatprep.subr.bf16.mxu0 0
        %2664 = vmatpush1.bf16.msra.mxu0 0
        %2665 = vmatprep.subr.bf16.mxu0 0
        %2666 = vmatpush1.bf16.msra.mxu0 0
        %2667 = vmatprep.subr.bf16.mxu0 0
        %2668 = vmatpush1.bf16.msra.mxu0 0
        %2669 = vmatprep.subr.bf16.mxu0 0
        %2670 = vmatpush1.bf16.msra.mxu0 0
        %2671 = vmatprep.subr.bf16.mxu0 0
        %2672 = vmatpush1.bf16.msra.mxu0 0
        %2673 = vmatprep.subr.bf16.mxu0 0
        %2674 = vmatpush1.bf16.msra.mxu0 0
        %2675 = vmatprep.subr.bf16.mxu0 0
        %2676 = vmatpush1.bf16.msra.mxu0 0
        %2677 = vmatprep.subr.bf16.mxu0 0
        %2678 = vmatpush1.bf16.msra.mxu0 0
        %2679 = vmatprep.subr.bf16.mxu0 0
        %2680 = vmatpush1.bf16.msra.mxu0 0
        %2681 = vmatprep.subr.bf16.mxu0 0
        %2682 = vmatpush1.bf16.msra.mxu0 0
        %2683 = vmatprep.subr.bf16.mxu0 0
        %2684 = vmatpush1.bf16.msra.mxu0 0
        %2685 = vmatprep.subr.bf16.mxu0 0
        %2686 = vmatpush1.bf16.msra.mxu0 0
        %2687 = vmatprep.subr.bf16.mxu0 0
        %2688 = vmatpush1.bf16.msra.mxu0 0
        %2689 = vmatprep.mubr.bf16.mxu0 0
        %2690 = vmatmul.mubr.bf16.gmra.mrb[0].mxu0 %v2607
        %v2691 = vpop.f32.mrb[0].mxu0
        %v2692 = vadd.f32 0.0, %v2691
        %v2693 = vpop.f32.mrb[0].mxu0
        %v2694 = vpop.f32.mrb[0].mxu0
        %v2695 = vadd.f32 0.0, %v2694
        %v2696 = vpop.f32.mrb[0].mxu0
        %2697 = vmatprep.mubr.bf16.mxu0 0
        %2698 = vmatmul.mubr.bf16.gmra.mrb[0].mxu0 %v2610
        %v2699 = vpop.f32.mrb[0].mxu0
        %v2700 = vadd.f32 0.0, %v2699
        %v2701 = vpop.f32.mrb[0].mxu0
        %v2702 = vpop.f32.mrb[0].mxu0
        %v2703 = vadd.f32 0.0, %v2702
        %v2704 = vpop.f32.mrb[0].mxu0
        %2705 = vmatprep.mubr.bf16.mxu0 0
        %2706 = vmatmul.mubr.bf16.gmra.mrb[0].mxu0 %v2613
        %v2707 = vpop.f32.mrb[0].mxu0
        %v2708 = vadd.f32 0.0, %v2707
        %v2709 = vpop.f32.mrb[0].mxu0
        %v2710 = vpop.f32.mrb[0].mxu0
        %v2711 = vadd.f32 0.0, %v2710
        %v2712 = vpop.f32.mrb[0].mxu0
        %2713 = vmatprep.mubr.bf16.mxu0 0
        %2714 = vmatmul.mubr.bf16.gmra.mrb[0].mxu0 %v2616
        %v2715 = vpop.f32.mrb[0].mxu0
        %v2716 = vadd.f32 0.0, %v2715
        %v2717 = vpop.f32.mrb[0].mxu0
        %v2718 = vpop.f32.mrb[0].mxu0
        %v2719 = vadd.f32 0.0, %v2718
        %v2720 = vpop.f32.mrb[0].mxu0
        %2721 = vmatprep.mubr.bf16.mxu0 0
        %2722 = vmatmul.mubr.bf16.gmra.mrb[0].mxu0 %v2619
        %v2723 = vpop.f32.mrb[0].mxu0
        %v2724 = vadd.f32 0.0, %v2723
        %v2725 = vpop.f32.mrb[0].mxu0
        %v2726 = vpop.f32.mrb[0].mxu0
        %v2727 = vadd.f32 0.0, %v2726
        %v2728 = vpop.f32.mrb[0].mxu0
        %2729 = vmatprep.mubr.bf16.mxu0 0
        %2730 = vmatmul.mubr.bf16.gmra.mrb[0].mxu0 %v2622
        %v2731 = vpop.f32.mrb[0].mxu0
        %v2732 = vadd.f32 0.0, %v2731
        %v2733 = vpop.f32.mrb[0].mxu0
        %v2734 = vpop.f32.mrb[0].mxu0
        %v2735 = vadd.f32 0.0, %v2734
        %v2736 = vpop.f32.mrb[0].mxu0
        %2737 = vmatprep.mubr.bf16.mxu0 0
        %2738 = vmatmul.mubr.bf16.gmra.mrb[0].mxu0 %v2625
        %v2739 = vpop.f32.mrb[0].mxu0
        %v2740 = vadd.f32 0.0, %v2739
        %v2741 = vpop.f32.mrb[0].mxu0
        %v2742 = vpop.f32.mrb[0].mxu0
        %v2743 = vadd.f32 0.0, %v2742
        %v2744 = vpop.f32.mrb[0].mxu0
        %2745 = vmatprep.mubr.bf16.mxu0 0
        %2746 = vmatmul.mubr.bf16.gmra.mrb[0].mxu0 %v2628
        %v2747 = vpop.f32.mrb[0].mxu0
        %v2748 = vadd.f32 0.0, %v2747
        %v2749 = vpop.f32.mrb[0].mxu0
        %v2750 = vpop.f32.mrb[0].mxu0
        %v2751 = vadd.f32 0.0, %v2750
        %v2752 = vpop.f32.mrb[0].mxu0
        %2753 = vmatprep.mubr.bf16.mxu0 0
        %2754 = vmatmul.mubr.bf16.gmra.mrb[0].mxu0 %v2631
        %v2755 = vpop.f32.mrb[0].mxu0
        %v2756 = vadd.f32 0.0, %v2755
        %v2757 = vpop.f32.mrb[0].mxu0
        %v2758 = vpop.f32.mrb[0].mxu0
        %v2759 = vadd.f32 0.0, %v2758
        %v2760 = vpop.f32.mrb[0].mxu0
        %2761 = vmatprep.mubr.bf16.mxu0 0
        %2762 = vmatmul.mubr.bf16.gmra.mrb[0].mxu0 %v2634
        %v2763 = vpop.f32.mrb[0].mxu0
        %v2764 = vadd.f32 0.0, %v2763
        %v2765 = vpop.f32.mrb[0].mxu0
        %v2766 = vpop.f32.mrb[0].mxu0
        %v2767 = vadd.f32 0.0, %v2766
        %v2768 = vpop.f32.mrb[0].mxu0
        %2769 = vmatprep.mubr.bf16.mxu0 0
        %2770 = vmatmul.mubr.bf16.gmra.mrb[0].mxu0 %v2637
        %v2771 = vpop.f32.mrb[0].mxu0
        %v2772 = vadd.f32 0.0, %v2771
        %v2773 = vpop.f32.mrb[0].mxu0
        %v2774 = vpop.f32.mrb[0].mxu0
        %v2775 = vadd.f32 0.0, %v2774
        %v2776 = vpop.f32.mrb[0].mxu0
        %2777 = vmatprep.mubr.bf16.mxu0 0
        %2778 = vmatmul.mubr.bf16.gmra.mrb[0].mxu0 %v2640
        %v2779 = vpop.f32.mrb[0].mxu0
        %v2780 = vadd.f32 0.0, %v2779
        %v2781 = vpop.f32.mrb[0].mxu0
        %v2782 = vpop.f32.mrb[0].mxu0
        %v2783 = vadd.f32 0.0, %v2782
        %v2784 = vpop.f32.mrb[0].mxu0
        %2785 = vmatprep.mubr.bf16.mxu0 0
        %2786 = vmatmul.mubr.bf16.gmra.mrb[0].mxu0 %v2643
        %v2787 = vpop.f32.mrb[0].mxu0
        %v2788 = vadd.f32 0.0, %v2787
        %v2789 = vpop.f32.mrb[0].mxu0
        %v2790 = vpop.f32.mrb[0].mxu0
        %v2791 = vadd.f32 0.0, %v2790
        %v2792 = vpop.f32.mrb[0].mxu0
        %2793 = vmatprep.mubr.bf16.mxu0 0
        %2794 = vmatmul.mubr.bf16.gmra.mrb[0].mxu0 %v2646
        %v2795 = vpop.f32.mrb[0].mxu0
        %v2796 = vadd.f32 0.0, %v2795
        %v2797 = vpop.f32.mrb[0].mxu0
        %v2798 = vpop.f32.mrb[0].mxu0
        %v2799 = vadd.f32 0.0, %v2798
        %v2800 = vpop.f32.mrb[0].mxu0
        %2801 = vmatprep.mubr.bf16.mxu0 0
        %2802 = vmatmul.mubr.bf16.gmra.mrb[0].mxu0 %v2649
        %v2803 = vpop.f32.mrb[0].mxu0
        %v2804 = vadd.f32 0.0, %v2803
        %v2805 = vpop.f32.mrb[0].mxu0
        %v2806 = vpop.f32.mrb[0].mxu0
        %v2807 = vadd.f32 0.0, %v2806
        %v2808 = vpop.f32.mrb[0].mxu0
        %2809 = vmatprep.mubr.bf16.mxu0 0
        %2810 = vmatmul.mubr.bf16.gmra.mrb[0].mxu0 %v2652
        %v2811 = vpop.f32.mrb[0].mxu0
        %v2812 = vadd.f32 0.0, %v2811
        %v2813 = vpop.f32.mrb[0].mxu0
        %v2814 = vpop.f32.mrb[0].mxu0
        %v2815 = vadd.f32 0.0, %v2814
        %v2816 = vpop.f32.mrb[0].mxu0
        %2817 = vdwg.mxu0
        %v2818 = vadd.f32 %v2492, %v2692
        %v2819 = vadd.f32 %v2493, %v2695
        %v2820 = vadd.f32 %v2494, %v2700
        %v2821 = vadd.f32 %v2495, %v2703
        %v2822 = vadd.f32 %v2496, %v2708
        %v2823 = vadd.f32 %v2497, %v2711
        %v2824 = vadd.f32 %v2498, %v2716
        %v2825 = vadd.f32 %v2499, %v2719
        %v2826 = vadd.f32 %v2500, %v2724
        %v2827 = vadd.f32 %v2501, %v2727
        %v2828 = vadd.f32 %v2502, %v2732
        %v2829 = vadd.f32 %v2503, %v2735
        %v2830 = vadd.f32 %v2504, %v2740
        %v2831 = vadd.f32 %v2505, %v2743
        %v2832 = vadd.f32 %v2506, %v2748
        %v2833 = vadd.f32 %v2507, %v2751
        %v2834 = vadd.f32 %v2508, %v2756
        %v2835 = vadd.f32 %v2509, %v2759
        %v2836 = vadd.f32 %v2510, %v2764
        %v2837 = vadd.f32 %v2511, %v2767
        %v2838 = vadd.f32 %v2512, %v2772
        %v2839 = vadd.f32 %v2513, %v2775
        %v2840 = vadd.f32 %v2514, %v2780
        %v2841 = vadd.f32 %v2515, %v2783
        %v2842 = vadd.f32 %v2516, %v2788
        %v2843 = vadd.f32 %v2517, %v2791
        %v2844 = vadd.f32 %v2518, %v2796
        %v2845 = vadd.f32 %v2519, %v2799
        %v2846 = vadd.f32 %v2520, %v2804
        %v2847 = vadd.f32 %v2521, %v2807
        %v2848 = vadd.f32 %v2522, %v2812
        %v2849 = vadd.f32 %v2523, %v2815
        %v2850 = vld [vmem:[#allocation2 + $0x27] sm:$0xff]
        %v2851 = vld [vmem:[#allocation2 + $0x2f] sm:$0xff]
        %v2852 = vld [vmem:[#allocation2 + $0x37] sm:$0xff]
        %v2853 = vld [vmem:[#allocation2 + $0x3f] sm:$0xff]
        %v2854 = vld [vmem:[#allocation2 + $0x47] sm:$0xff]
        %v2855 = vld [vmem:[#allocation2 + $0x4f] sm:$0xff]
        %v2856 = vld [vmem:[#allocation2 + $0x57] sm:$0xff]
        %v2857 = vld [vmem:[#allocation2 + $0x5f] sm:$0xff]
        %v2858 = vld [vmem:[#allocation2 + $0x67] sm:$0xff]
        %v2859 = vld [vmem:[#allocation2 + $0x6f] sm:$0xff]
        %v2860 = vld [vmem:[#allocation2 + $0x77] sm:$0xff]
        %v2861 = vld [vmem:[#allocation2 + $0x7f] sm:$0xff]
        %v2862 = vld [vmem:[#allocation2 + $0x87] sm:$0xff]
        %v2863 = vld [vmem:[#allocation2 + $0x8f] sm:$0xff]
        %v2864 = vld [vmem:[#allocation2 + $0x97] sm:$0xff]
        %v2865 = vld [vmem:[#allocation2 + $0x9f] sm:$0xff]
        %v2866 = vld [vmem:[#allocation2 + $0xa7] sm:$0xff]
        %v2867 = vld [vmem:[#allocation2 + $0xaf] sm:$0xff]
        %v2868 = vld [vmem:[#allocation2 + $0xb7] sm:$0xff]
        %v2869 = vld [vmem:[#allocation2 + $0xbf] sm:$0xff]
        %v2870 = vld [vmem:[#allocation2 + $0xc7] sm:$0xff]
        %v2871 = vld [vmem:[#allocation2 + $0xcf] sm:$0xff]
        %v2872 = vld [vmem:[#allocation2 + $0xd7] sm:$0xff]
        %v2873 = vld [vmem:[#allocation2 + $0xdf] sm:$0xff]
        %v2874 = vld [vmem:[#allocation2 + $0xe7] sm:$0xff]
        %v2875 = vld [vmem:[#allocation2 + $0xef] sm:$0xff]
        %v2876 = vld [vmem:[#allocation2 + $0xf7] sm:$0xff]
        %v2877 = vld [vmem:[#allocation2 + $0xff] sm:$0xff]
        %v2878 = vld [vmem:[#allocation2 + $0x107] sm:$0xff]
        %v2879 = vld [vmem:[#allocation2 + $0x10f] sm:$0xff]
        %v2880 = vld [vmem:[#allocation2 + $0x117] sm:$0xff]
        %v2881 = vld [vmem:[#allocation2 + $0x11f] sm:$0xff]
        %v2882 = vmul.f32 %v2850, %v791
        %v2883 = vmul.f32 %v2851, %v792
        %v2884 = vmul.f32 %v2852, %v793
        %v2885 = vmul.f32 %v2853, %v794
        %v2886 = vmul.f32 %v2854, %v795
        %v2887 = vmul.f32 %v2855, %v796
        %v2888 = vmul.f32 %v2856, %v797
        %v2889 = vmul.f32 %v2857, %v798
        %v2890 = vmul.f32 %v2858, %v799
        %v2891 = vmul.f32 %v2859, %v800
        %v2892 = vmul.f32 %v2860, %v801
        %v2893 = vmul.f32 %v2861, %v802
        %v2894 = vmul.f32 %v2862, %v803
        %v2895 = vmul.f32 %v2863, %v804
        %v2896 = vmul.f32 %v2864, %v805
        %v2897 = vmul.f32 %v2865, %v806
        %v2898 = vmul.f32 %v2866, %v807
        %v2899 = vmul.f32 %v2867, %v808
        %v2900 = vmul.f32 %v2868, %v809
        %v2901 = vmul.f32 %v2869, %v810
        %v2902 = vmul.f32 %v2870, %v811
        %v2903 = vmul.f32 %v2871, %v812
        %v2904 = vmul.f32 %v2872, %v813
        %v2905 = vmul.f32 %v2873, %v814
        %v2906 = vmul.f32 %v2874, %v815
        %v2907 = vmul.f32 %v2875, %v816
        %v2908 = vmul.f32 %v2876, %v817
        %v2909 = vmul.f32 %v2877, %v818
        %v2910 = vmul.f32 %v2878, %v819
        %v2911 = vmul.f32 %v2879, %v820
        %v2912 = vmul.f32 %v2880, %v821
        %v2913 = vmul.f32 %v2881, %v822
        %v2914 = vpack.c.bf16 %v2883, %v2882
        %v2915 = vpack.c.bf16 %v2885, %v2884
        %v2916 = vpack.c.bf16 %v2887, %v2886
        %v2917 = vpack.c.bf16 %v2889, %v2888
        %v2918 = vpack.c.bf16 %v2891, %v2890
        %v2919 = vpack.c.bf16 %v2893, %v2892
        %v2920 = vpack.c.bf16 %v2895, %v2894
        %v2921 = vpack.c.bf16 %v2897, %v2896
        %v2922 = vpack.c.bf16 %v2899, %v2898
        %v2923 = vpack.c.bf16 %v2901, %v2900
        %v2924 = vpack.c.bf16 %v2903, %v2902
        %v2925 = vpack.c.bf16 %v2905, %v2904
        %v2926 = vpack.c.bf16 %v2907, %v2906
        %v2927 = vpack.c.bf16 %v2909, %v2908
        %v2928 = vpack.c.bf16 %v2911, %v2910
        %v2929 = vpack.c.bf16 %v2913, %v2912
        %s2930 = scalar_lea.vmem %s1, 24
        %v2931 = vld [vmem:[%s2930] sm:$0xf]
        %v2933 = vsel %vm919, %v2914, 0
        %v2936 = vsel %vm919, %v2915, 0
        %v2939 = vsel %vm919, %v2916, 0
        %v2942 = vsel %vm919, %v2917, 0
        %v2945 = vsel %vm919, %v2918, 0
        %v2948 = vsel %vm919, %v2919, 0
        %v2951 = vsel %vm919, %v2920, 0
        %v2954 = vsel %vm919, %v2921, 0
        %v2957 = vsel %vm919, %v2922, 0
        %v2960 = vsel %vm919, %v2923, 0
        %v2963 = vsel %vm919, %v2924, 0
        %v2966 = vsel %vm919, %v2925, 0
        %v2969 = vsel %vm919, %v2926, 0
        %v2972 = vsel %vm919, %v2927, 0
        %v2975 = vsel %vm919, %v2928, 0
        %v2978 = vsel %vm919, %v2929, 0
        %v2981 = vsel %vm1201, %v2931, 0
        %2983 = vmatprep.subr.bf16.mxu0 0
        %2984 = vmatpush1.bf16.msra.mxu0 %v2981
        %2985 = vmatprep.subr.bf16.mxu0 0
        %2986 = vmatpush1.bf16.msra.mxu0 0
        %2987 = vmatprep.subr.bf16.mxu0 0
        %2988 = vmatpush1.bf16.msra.mxu0 0
        %2989 = vmatprep.subr.bf16.mxu0 0
        %2990 = vmatpush1.bf16.msra.mxu0 0
        %2991 = vmatprep.subr.bf16.mxu0 0
        %2992 = vmatpush1.bf16.msra.mxu0 0
        %2993 = vmatprep.subr.bf16.mxu0 0
        %2994 = vmatpush1.bf16.msra.mxu0 0
        %2995 = vmatprep.subr.bf16.mxu0 0
        %2996 = vmatpush1.bf16.msra.mxu0 0
        %2997 = vmatprep.subr.bf16.mxu0 0
        %2998 = vmatpush1.bf16.msra.mxu0 0
        %2999 = vmatprep.subr.bf16.mxu0 0
        %3000 = vmatpush1.bf16.msra.mxu0 0
        %3001 = vmatprep.subr.bf16.mxu0 0
        %3002 = vmatpush1.bf16.msra.mxu0 0
        %3003 = vmatprep.subr.bf16.mxu0 0
        %3004 = vmatpush1.bf16.msra.mxu0 0
        %3005 = vmatprep.subr.bf16.mxu0 0
        %3006 = vmatpush1.bf16.msra.mxu0 0
        %3007 = vmatprep.subr.bf16.mxu0 0
        %3008 = vmatpush1.bf16.msra.mxu0 0
        %3009 = vmatprep.subr.bf16.mxu0 0
        %3010 = vmatpush1.bf16.msra.mxu0 0
        %3011 = vmatprep.subr.bf16.mxu0 0
        %3012 = vmatpush1.bf16.msra.mxu0 0
        %3013 = vmatprep.subr.bf16.mxu0 0
        %3014 = vmatpush1.bf16.msra.mxu0 0
        %3015 = vmatprep.mubr.bf16.mxu0 0
        %3016 = vmatmul.mubr.bf16.gmra.mrb[0].mxu0 %v2933
        %v3017 = vpop.f32.mrb[0].mxu0
        %v3018 = vadd.f32 0.0, %v3017
        %v3019 = vpop.f32.mrb[0].mxu0
        %v3020 = vpop.f32.mrb[0].mxu0
        %v3021 = vadd.f32 0.0, %v3020
        %v3022 = vpop.f32.mrb[0].mxu0
        %3023 = vmatprep.mubr.bf16.mxu0 0
        %3024 = vmatmul.mubr.bf16.gmra.mrb[0].mxu0 %v2936
        %v3025 = vpop.f32.mrb[0].mxu0
        %v3026 = vadd.f32 0.0, %v3025
        %v3027 = vpop.f32.mrb[0].mxu0
        %v3028 = vpop.f32.mrb[0].mxu0
        %v3029 = vadd.f32 0.0, %v3028
        %v3030 = vpop.f32.mrb[0].mxu0
        %3031 = vmatprep.mubr.bf16.mxu0 0
        %3032 = vmatmul.mubr.bf16.gmra.mrb[0].mxu0 %v2939
        %v3033 = vpop.f32.mrb[0].mxu0
        %v3034 = vadd.f32 0.0, %v3033
        %v3035 = vpop.f32.mrb[0].mxu0
        %v3036 = vpop.f32.mrb[0].mxu0
        %v3037 = vadd.f32 0.0, %v3036
        %v3038 = vpop.f32.mrb[0].mxu0
        %3039 = vmatprep.mubr.bf16.mxu0 0
        %3040 = vmatmul.mubr.bf16.gmra.mrb[0].mxu0 %v2942
        %v3041 = vpop.f32.mrb[0].mxu0
        %v3042 = vadd.f32 0.0, %v3041
        %v3043 = vpop.f32.mrb[0].mxu0
        %v3044 = vpop.f32.mrb[0].mxu0
        %v3045 = vadd.f32 0.0, %v3044
        %v3046 = vpop.f32.mrb[0].mxu0
        %3047 = vmatprep.mubr.bf16.mxu0 0
        %3048 = vmatmul.mubr.bf16.gmra.mrb[0].mxu0 %v2945
        %v3049 = vpop.f32.mrb[0].mxu0
        %v3050 = vadd.f32 0.0, %v3049
        %v3051 = vpop.f32.mrb[0].mxu0
        %v3052 = vpop.f32.mrb[0].mxu0
        %v3053 = vadd.f32 0.0, %v3052
        %v3054 = vpop.f32.mrb[0].mxu0
        %3055 = vmatprep.mubr.bf16.mxu0 0
        %3056 = vmatmul.mubr.bf16.gmra.mrb[0].mxu0 %v2948
        %v3057 = vpop.f32.mrb[0].mxu0
        %v3058 = vadd.f32 0.0, %v3057
        %v3059 = vpop.f32.mrb[0].mxu0
        %v3060 = vpop.f32.mrb[0].mxu0
        %v3061 = vadd.f32 0.0, %v3060
        %v3062 = vpop.f32.mrb[0].mxu0
        %3063 = vmatprep.mubr.bf16.mxu0 0
        %3064 = vmatmul.mubr.bf16.gmra.mrb[0].mxu0 %v2951
        %v3065 = vpop.f32.mrb[0].mxu0
        %v3066 = vadd.f32 0.0, %v3065
        %v3067 = vpop.f32.mrb[0].mxu0
        %v3068 = vpop.f32.mrb[0].mxu0
        %v3069 = vadd.f32 0.0, %v3068
        %v3070 = vpop.f32.mrb[0].mxu0
        %3071 = vmatprep.mubr.bf16.mxu0 0
        %3072 = vmatmul.mubr.bf16.gmra.mrb[0].mxu0 %v2954
        %v3073 = vpop.f32.mrb[0].mxu0
        %v3074 = vadd.f32 0.0, %v3073
        %v3075 = vpop.f32.mrb[0].mxu0
        %v3076 = vpop.f32.mrb[0].mxu0
        %v3077 = vadd.f32 0.0, %v3076
        %v3078 = vpop.f32.mrb[0].mxu0
        %3079 = vmatprep.mubr.bf16.mxu0 0
        %3080 = vmatmul.mubr.bf16.gmra.mrb[0].mxu0 %v2957
        %v3081 = vpop.f32.mrb[0].mxu0
        %v3082 = vadd.f32 0.0, %v3081
        %v3083 = vpop.f32.mrb[0].mxu0
        %v3084 = vpop.f32.mrb[0].mxu0
        %v3085 = vadd.f32 0.0, %v3084
        %v3086 = vpop.f32.mrb[0].mxu0
        %3087 = vmatprep.mubr.bf16.mxu0 0
        %3088 = vmatmul.mubr.bf16.gmra.mrb[0].mxu0 %v2960
        %v3089 = vpop.f32.mrb[0].mxu0
        %v3090 = vadd.f32 0.0, %v3089
        %v3091 = vpop.f32.mrb[0].mxu0
        %v3092 = vpop.f32.mrb[0].mxu0
        %v3093 = vadd.f32 0.0, %v3092
        %v3094 = vpop.f32.mrb[0].mxu0
        %3095 = vmatprep.mubr.bf16.mxu0 0
        %3096 = vmatmul.mubr.bf16.gmra.mrb[0].mxu0 %v2963
        %v3097 = vpop.f32.mrb[0].mxu0
        %v3098 = vadd.f32 0.0, %v3097
        %v3099 = vpop.f32.mrb[0].mxu0
        %v3100 = vpop.f32.mrb[0].mxu0
        %v3101 = vadd.f32 0.0, %v3100
        %v3102 = vpop.f32.mrb[0].mxu0
        %3103 = vmatprep.mubr.bf16.mxu0 0
        %3104 = vmatmul.mubr.bf16.gmra.mrb[0].mxu0 %v2966
        %v3105 = vpop.f32.mrb[0].mxu0
        %v3106 = vadd.f32 0.0, %v3105
        %v3107 = vpop.f32.mrb[0].mxu0
        %v3108 = vpop.f32.mrb[0].mxu0
        %v3109 = vadd.f32 0.0, %v3108
        %v3110 = vpop.f32.mrb[0].mxu0
        %3111 = vmatprep.mubr.bf16.mxu0 0
        %3112 = vmatmul.mubr.bf16.gmra.mrb[0].mxu0 %v2969
        %v3113 = vpop.f32.mrb[0].mxu0
        %v3114 = vadd.f32 0.0, %v3113
        %v3115 = vpop.f32.mrb[0].mxu0
        %v3116 = vpop.f32.mrb[0].mxu0
        %v3117 = vadd.f32 0.0, %v3116
        %v3118 = vpop.f32.mrb[0].mxu0
        %3119 = vmatprep.mubr.bf16.mxu0 0
        %3120 = vmatmul.mubr.bf16.gmra.mrb[0].mxu0 %v2972
        %v3121 = vpop.f32.mrb[0].mxu0
        %v3122 = vadd.f32 0.0, %v3121
        %v3123 = vpop.f32.mrb[0].mxu0
        %v3124 = vpop.f32.mrb[0].mxu0
        %v3125 = vadd.f32 0.0, %v3124
        %v3126 = vpop.f32.mrb[0].mxu0
        %3127 = vmatprep.mubr.bf16.mxu0 0
        %3128 = vmatmul.mubr.bf16.gmra.mrb[0].mxu0 %v2975
        %v3129 = vpop.f32.mrb[0].mxu0
        %v3130 = vadd.f32 0.0, %v3129
        %v3131 = vpop.f32.mrb[0].mxu0
        %v3132 = vpop.f32.mrb[0].mxu0
        %v3133 = vadd.f32 0.0, %v3132
        %v3134 = vpop.f32.mrb[0].mxu0
        %3135 = vmatprep.mubr.bf16.mxu0 0
        %3136 = vmatmul.mubr.bf16.gmra.mrb[0].mxu0 %v2978
        %v3137 = vpop.f32.mrb[0].mxu0
        %v3138 = vadd.f32 0.0, %v3137
        %v3139 = vpop.f32.mrb[0].mxu0
        %v3140 = vpop.f32.mrb[0].mxu0
        %v3141 = vadd.f32 0.0, %v3140
        %v3142 = vpop.f32.mrb[0].mxu0
        %3143 = vdwg.mxu0
        %v3144 = vadd.f32 %v2818, %v3018
        %v3145 = vadd.f32 %v2819, %v3021
        %v3146 = vadd.f32 %v2820, %v3026
        %v3147 = vadd.f32 %v2821, %v3029
        %v3148 = vadd.f32 %v2822, %v3034
        %v3149 = vadd.f32 %v2823, %v3037
        %v3150 = vadd.f32 %v2824, %v3042
        %v3151 = vadd.f32 %v2825, %v3045
        %v3152 = vadd.f32 %v2826, %v3050
        %v3153 = vadd.f32 %v2827, %v3053
        %v3154 = vadd.f32 %v2828, %v3058
        %v3155 = vadd.f32 %v2829, %v3061
        %v3156 = vadd.f32 %v2830, %v3066
        %v3157 = vadd.f32 %v2831, %v3069
        %v3158 = vadd.f32 %v2832, %v3074
        %v3159 = vadd.f32 %v2833, %v3077
        %v3160 = vadd.f32 %v2834, %v3082
        %v3161 = vadd.f32 %v2835, %v3085
        %v3162 = vadd.f32 %v2836, %v3090
        %v3163 = vadd.f32 %v2837, %v3093
        %v3164 = vadd.f32 %v2838, %v3098
        %v3165 = vadd.f32 %v2839, %v3101
        %v3166 = vadd.f32 %v2840, %v3106
        %v3167 = vadd.f32 %v2841, %v3109
        %v3168 = vadd.f32 %v2842, %v3114
        %v3169 = vadd.f32 %v2843, %v3117
        %v3170 = vadd.f32 %v2844, %v3122
        %v3171 = vadd.f32 %v2845, %v3125
        %v3172 = vadd.f32 %v2846, %v3130
        %v3173 = vadd.f32 %v2847, %v3133
        %v3174 = vadd.f32 %v2848, %v3138
        %v3175 = vadd.f32 %v2849, %v3141
        %v3176 = vld [vmem:[#allocation2 + $0x28] sm:$0xff]
        %v3177 = vld [vmem:[#allocation2 + $0x30] sm:$0xff]
        %v3178 = vld [vmem:[#allocation2 + $0x38] sm:$0xff]
        %v3179 = vld [vmem:[#allocation2 + $0x40] sm:$0xff]
        %v3180 = vld [vmem:[#allocation2 + $0x48] sm:$0xff]
        %v3181 = vld [vmem:[#allocation2 + $0x50] sm:$0xff]
        %v3182 = vld [vmem:[#allocation2 + $0x58] sm:$0xff]
        %v3183 = vld [vmem:[#allocation2 + $0x60] sm:$0xff]
        %v3184 = vld [vmem:[#allocation2 + $0x68] sm:$0xff]
        %v3185 = vld [vmem:[#allocation2 + $0x70] sm:$0xff]
        %v3186 = vld [vmem:[#allocation2 + $0x78] sm:$0xff]
        %v3187 = vld [vmem:[#allocation2 + $0x80] sm:$0xff]
        %v3188 = vld [vmem:[#allocation2 + $0x88] sm:$0xff]
        %v3189 = vld [vmem:[#allocation2 + $0x90] sm:$0xff]
        %v3190 = vld [vmem:[#allocation2 + $0x98] sm:$0xff]
        %v3191 = vld [vmem:[#allocation2 + $0xa0] sm:$0xff]
        %v3192 = vld [vmem:[#allocation2 + $0xa8] sm:$0xff]
        %v3193 = vld [vmem:[#allocation2 + $0xb0] sm:$0xff]
        %v3194 = vld [vmem:[#allocation2 + $0xb8] sm:$0xff]
        %v3195 = vld [vmem:[#allocation2 + $0xc0] sm:$0xff]
        %v3196 = vld [vmem:[#allocation2 + $0xc8] sm:$0xff]
        %v3197 = vld [vmem:[#allocation2 + $0xd0] sm:$0xff]
        %v3198 = vld [vmem:[#allocation2 + $0xd8] sm:$0xff]
        %v3199 = vld [vmem:[#allocation2 + $0xe0] sm:$0xff]
        %v3200 = vld [vmem:[#allocation2 + $0xe8] sm:$0xff]
        %v3201 = vld [vmem:[#allocation2 + $0xf0] sm:$0xff]
        %v3202 = vld [vmem:[#allocation2 + $0xf8] sm:$0xff]
        %v3203 = vld [vmem:[#allocation2 + $0x100] sm:$0xff]
        %v3204 = vld [vmem:[#allocation2 + $0x108] sm:$0xff]
        %v3205 = vld [vmem:[#allocation2 + $0x110] sm:$0xff]
        %v3206 = vld [vmem:[#allocation2 + $0x118] sm:$0xff]
        %v3207 = vld [vmem:[#allocation2 + $0x120] sm:$0xff]
        %v3208 = vpack.c.bf16 %v3177, %v3176
        %v3209 = vpack.c.bf16 %v3179, %v3178
        %v3210 = vpack.c.bf16 %v3181, %v3180
        %v3211 = vpack.c.bf16 %v3183, %v3182
        %v3212 = vpack.c.bf16 %v3185, %v3184
        %v3213 = vpack.c.bf16 %v3187, %v3186
        %v3214 = vpack.c.bf16 %v3189, %v3188
        %v3215 = vpack.c.bf16 %v3191, %v3190
        %v3216 = vpack.c.bf16 %v3193, %v3192
        %v3217 = vpack.c.bf16 %v3195, %v3194
        %v3218 = vpack.c.bf16 %v3197, %v3196
        %v3219 = vpack.c.bf16 %v3199, %v3198
        %v3220 = vpack.c.bf16 %v3201, %v3200
        %v3221 = vpack.c.bf16 %v3203, %v3202
        %v3222 = vpack.c.bf16 %v3205, %v3204
        %v3223 = vpack.c.bf16 %v3207, %v3206
        %s3224 = scalar_lea.vmem %s1, 28
        %v3225 = vld [vmem:[%s3224] sm:$0xf]
        %v3227 = vsel %vm919, %v3208, 0
        %v3230 = vsel %vm919, %v3209, 0
        %v3233 = vsel %vm919, %v3210, 0
        %v3236 = vsel %vm919, %v3211, 0
        %v3239 = vsel %vm919, %v3212, 0
        %v3242 = vsel %vm919, %v3213, 0
        %v3245 = vsel %vm919, %v3214, 0
        %v3248 = vsel %vm919, %v3215, 0
        %v3251 = vsel %vm919, %v3216, 0
        %v3254 = vsel %vm919, %v3217, 0
        %v3257 = vsel %vm919, %v3218, 0
        %v3260 = vsel %vm919, %v3219, 0
        %v3263 = vsel %vm919, %v3220, 0
        %v3266 = vsel %vm919, %v3221, 0
        %v3269 = vsel %vm919, %v3222, 0
        %v3272 = vsel %vm919, %v3223, 0
        %v3275 = vsel %vm1201, %v3225, 0
        %3277 = vmatprep.subr.bf16.mxu0 0
        %3278 = vmatpush1.bf16.msra.mxu0 %v3275
        %3279 = vmatprep.subr.bf16.mxu0 0
        %3280 = vmatpush1.bf16.msra.mxu0 0
        %3281 = vmatprep.subr.bf16.mxu0 0
        %3282 = vmatpush1.bf16.msra.mxu0 0
        %3283 = vmatprep.subr.bf16.mxu0 0
        %3284 = vmatpush1.bf16.msra.mxu0 0
        %3285 = vmatprep.subr.bf16.mxu0 0
        %3286 = vmatpush1.bf16.msra.mxu0 0
        %3287 = vmatprep.subr.bf16.mxu0 0
        %3288 = vmatpush1.bf16.msra.mxu0 0
        %3289 = vmatprep.subr.bf16.mxu0 0
        %3290 = vmatpush1.bf16.msra.mxu0 0
        %3291 = vmatprep.subr.bf16.mxu0 0
        %3292 = vmatpush1.bf16.msra.mxu0 0
        %3293 = vmatprep.subr.bf16.mxu0 0
        %3294 = vmatpush1.bf16.msra.mxu0 0
        %3295 = vmatprep.subr.bf16.mxu0 0
        %3296 = vmatpush1.bf16.msra.mxu0 0
        %3297 = vmatprep.subr.bf16.mxu0 0
        %3298 = vmatpush1.bf16.msra.mxu0 0
        %3299 = vmatprep.subr.bf16.mxu0 0
        %3300 = vmatpush1.bf16.msra.mxu0 0
        %3301 = vmatprep.subr.bf16.mxu0 0
        %3302 = vmatpush1.bf16.msra.mxu0 0
        %3303 = vmatprep.subr.bf16.mxu0 0
        %3304 = vmatpush1.bf16.msra.mxu0 0
        %3305 = vmatprep.subr.bf16.mxu0 0
        %3306 = vmatpush1.bf16.msra.mxu0 0
        %3307 = vmatprep.subr.bf16.mxu0 0
        %3308 = vmatpush1.bf16.msra.mxu0 0
        %3309 = vmatprep.mubr.bf16.mxu0 0
        %3310 = vmatmul.mubr.bf16.gmra.mrb[0].mxu0 %v3227
        %v3311 = vpop.f32.mrb[0].mxu0
        %v3312 = vadd.f32 0.0, %v3311
        %v3313 = vpop.f32.mrb[0].mxu0
        %v3314 = vpop.f32.mrb[0].mxu0
        %v3315 = vadd.f32 0.0, %v3314
        %v3316 = vpop.f32.mrb[0].mxu0
        %3317 = vmatprep.mubr.bf16.mxu0 0
        %3318 = vmatmul.mubr.bf16.gmra.mrb[0].mxu0 %v3230
        %v3319 = vpop.f32.mrb[0].mxu0
        %v3320 = vadd.f32 0.0, %v3319
        %v3321 = vpop.f32.mrb[0].mxu0
        %v3322 = vpop.f32.mrb[0].mxu0
        %v3323 = vadd.f32 0.0, %v3322
        %v3324 = vpop.f32.mrb[0].mxu0
        %3325 = vmatprep.mubr.bf16.mxu0 0
        %3326 = vmatmul.mubr.bf16.gmra.mrb[0].mxu0 %v3233
        %v3327 = vpop.f32.mrb[0].mxu0
        %v3328 = vadd.f32 0.0, %v3327
        %v3329 = vpop.f32.mrb[0].mxu0
        %v3330 = vpop.f32.mrb[0].mxu0
        %v3331 = vadd.f32 0.0, %v3330
        %v3332 = vpop.f32.mrb[0].mxu0
        %3333 = vmatprep.mubr.bf16.mxu0 0
        %3334 = vmatmul.mubr.bf16.gmra.mrb[0].mxu0 %v3236
        %v3335 = vpop.f32.mrb[0].mxu0
        %v3336 = vadd.f32 0.0, %v3335
        %v3337 = vpop.f32.mrb[0].mxu0
        %v3338 = vpop.f32.mrb[0].mxu0
        %v3339 = vadd.f32 0.0, %v3338
        %v3340 = vpop.f32.mrb[0].mxu0
        %3341 = vmatprep.mubr.bf16.mxu0 0
        %3342 = vmatmul.mubr.bf16.gmra.mrb[0].mxu0 %v3239
        %v3343 = vpop.f32.mrb[0].mxu0
        %v3344 = vadd.f32 0.0, %v3343
        %v3345 = vpop.f32.mrb[0].mxu0
        %v3346 = vpop.f32.mrb[0].mxu0
        %v3347 = vadd.f32 0.0, %v3346
        %v3348 = vpop.f32.mrb[0].mxu0
        %3349 = vmatprep.mubr.bf16.mxu0 0
        %3350 = vmatmul.mubr.bf16.gmra.mrb[0].mxu0 %v3242
        %v3351 = vpop.f32.mrb[0].mxu0
        %v3352 = vadd.f32 0.0, %v3351
        %v3353 = vpop.f32.mrb[0].mxu0
        %v3354 = vpop.f32.mrb[0].mxu0
        %v3355 = vadd.f32 0.0, %v3354
        %v3356 = vpop.f32.mrb[0].mxu0
        %3357 = vmatprep.mubr.bf16.mxu0 0
        %3358 = vmatmul.mubr.bf16.gmra.mrb[0].mxu0 %v3245
        %v3359 = vpop.f32.mrb[0].mxu0
        %v3360 = vadd.f32 0.0, %v3359
        %v3361 = vpop.f32.mrb[0].mxu0
        %v3362 = vpop.f32.mrb[0].mxu0
        %v3363 = vadd.f32 0.0, %v3362
        %v3364 = vpop.f32.mrb[0].mxu0
        %3365 = vmatprep.mubr.bf16.mxu0 0
        %3366 = vmatmul.mubr.bf16.gmra.mrb[0].mxu0 %v3248
        %v3367 = vpop.f32.mrb[0].mxu0
        %v3368 = vadd.f32 0.0, %v3367
        %v3369 = vpop.f32.mrb[0].mxu0
        %v3370 = vpop.f32.mrb[0].mxu0
        %v3371 = vadd.f32 0.0, %v3370
        %v3372 = vpop.f32.mrb[0].mxu0
        %3373 = vmatprep.mubr.bf16.mxu0 0
        %3374 = vmatmul.mubr.bf16.gmra.mrb[0].mxu0 %v3251
        %v3375 = vpop.f32.mrb[0].mxu0
        %v3376 = vadd.f32 0.0, %v3375
        %v3377 = vpop.f32.mrb[0].mxu0
        %v3378 = vpop.f32.mrb[0].mxu0
        %v3379 = vadd.f32 0.0, %v3378
        %v3380 = vpop.f32.mrb[0].mxu0
        %3381 = vmatprep.mubr.bf16.mxu0 0
        %3382 = vmatmul.mubr.bf16.gmra.mrb[0].mxu0 %v3254
        %v3383 = vpop.f32.mrb[0].mxu0
        %v3384 = vadd.f32 0.0, %v3383
        %v3385 = vpop.f32.mrb[0].mxu0
        %v3386 = vpop.f32.mrb[0].mxu0
        %v3387 = vadd.f32 0.0, %v3386
        %v3388 = vpop.f32.mrb[0].mxu0
        %3389 = vmatprep.mubr.bf16.mxu0 0
        %3390 = vmatmul.mubr.bf16.gmra.mrb[0].mxu0 %v3257
        %v3391 = vpop.f32.mrb[0].mxu0
        %v3392 = vadd.f32 0.0, %v3391
        %v3393 = vpop.f32.mrb[0].mxu0
        %v3394 = vpop.f32.mrb[0].mxu0
        %v3395 = vadd.f32 0.0, %v3394
        %v3396 = vpop.f32.mrb[0].mxu0
        %3397 = vmatprep.mubr.bf16.mxu0 0
        %3398 = vmatmul.mubr.bf16.gmra.mrb[0].mxu0 %v3260
        %v3399 = vpop.f32.mrb[0].mxu0
        %v3400 = vadd.f32 0.0, %v3399
        %v3401 = vpop.f32.mrb[0].mxu0
        %v3402 = vpop.f32.mrb[0].mxu0
        %v3403 = vadd.f32 0.0, %v3402
        %v3404 = vpop.f32.mrb[0].mxu0
        %3405 = vmatprep.mubr.bf16.mxu0 0
        %3406 = vmatmul.mubr.bf16.gmra.mrb[0].mxu0 %v3263
        %v3407 = vpop.f32.mrb[0].mxu0
        %v3408 = vadd.f32 0.0, %v3407
        %v3409 = vpop.f32.mrb[0].mxu0
        %v3410 = vpop.f32.mrb[0].mxu0
        %v3411 = vadd.f32 0.0, %v3410
        %v3412 = vpop.f32.mrb[0].mxu0
        %3413 = vmatprep.mubr.bf16.mxu0 0
        %3414 = vmatmul.mubr.bf16.gmra.mrb[0].mxu0 %v3266
        %v3415 = vpop.f32.mrb[0].mxu0
        %v3416 = vadd.f32 0.0, %v3415
        %v3417 = vpop.f32.mrb[0].mxu0
        %v3418 = vpop.f32.mrb[0].mxu0
        %v3419 = vadd.f32 0.0, %v3418
        %v3420 = vpop.f32.mrb[0].mxu0
        %3421 = vmatprep.mubr.bf16.mxu0 0
        %3422 = vmatmul.mubr.bf16.gmra.mrb[0].mxu0 %v3269
        %v3423 = vpop.f32.mrb[0].mxu0
        %v3424 = vadd.f32 0.0, %v3423
        %v3425 = vpop.f32.mrb[0].mxu0
        %v3426 = vpop.f32.mrb[0].mxu0
        %v3427 = vadd.f32 0.0, %v3426
        %v3428 = vpop.f32.mrb[0].mxu0
        %3429 = vmatprep.mubr.bf16.mxu0 0
        %3430 = vmatmul.mubr.bf16.gmra.mrb[0].mxu0 %v3272
        %v3431 = vpop.f32.mrb[0].mxu0
        %v3432 = vadd.f32 0.0, %v3431
        %v3433 = vpop.f32.mrb[0].mxu0
        %v3434 = vpop.f32.mrb[0].mxu0
        %v3435 = vadd.f32 0.0, %v3434
        %v3436 = vpop.f32.mrb[0].mxu0
        %3437 = vdwg.mxu0
        %v3438 = vadd.f32 %v3144, %v3312
        %v3439 = vadd.f32 %v3145, %v3315
        %v3440 = vadd.f32 %v3146, %v3320
        %v3441 = vadd.f32 %v3147, %v3323
        %v3442 = vadd.f32 %v3148, %v3328
        %v3443 = vadd.f32 %v3149, %v3331
        %v3444 = vadd.f32 %v3150, %v3336
        %v3445 = vadd.f32 %v3151, %v3339
        %v3446 = vadd.f32 %v3152, %v3344
        %v3447 = vadd.f32 %v3153, %v3347
        %v3448 = vadd.f32 %v3154, %v3352
        %v3449 = vadd.f32 %v3155, %v3355
        %v3450 = vadd.f32 %v3156, %v3360
        %v3451 = vadd.f32 %v3157, %v3363
        %v3452 = vadd.f32 %v3158, %v3368
        %v3453 = vadd.f32 %v3159, %v3371
        %v3454 = vadd.f32 %v3160, %v3376
        %v3455 = vadd.f32 %v3161, %v3379
        %v3456 = vadd.f32 %v3162, %v3384
        %v3457 = vadd.f32 %v3163, %v3387
        %v3458 = vadd.f32 %v3164, %v3392
        %v3459 = vadd.f32 %v3165, %v3395
        %v3460 = vadd.f32 %v3166, %v3400
        %v3461 = vadd.f32 %v3167, %v3403
        %v3462 = vadd.f32 %v3168, %v3408
        %v3463 = vadd.f32 %v3169, %v3411
        %v3464 = vadd.f32 %v3170, %v3416
        %v3465 = vadd.f32 %v3171, %v3419
        %v3466 = vadd.f32 %v3172, %v3424
        %v3467 = vadd.f32 %v3173, %v3427
        %v3468 = vadd.f32 %v3174, %v3432
        %v3469 = vadd.f32 %v3175, %v3435
        %v3470 = vld [vmem:[#allocation2 + $0x29] sm:$0xff]
        %v3471 = vld [vmem:[#allocation2 + $0x31] sm:$0xff]
        %v3472 = vld [vmem:[#allocation2 + $0x39] sm:$0xff]
        %v3473 = vld [vmem:[#allocation2 + $0x41] sm:$0xff]
        %v3474 = vld [vmem:[#allocation2 + $0x49] sm:$0xff]
        %v3475 = vld [vmem:[#allocation2 + $0x51] sm:$0xff]
        %v3476 = vld [vmem:[#allocation2 + $0x59] sm:$0xff]
        %v3477 = vld [vmem:[#allocation2 + $0x61] sm:$0xff]
        %v3478 = vld [vmem:[#allocation2 + $0x69] sm:$0xff]
        %v3479 = vld [vmem:[#allocation2 + $0x71] sm:$0xff]
        %v3480 = vld [vmem:[#allocation2 + $0x79] sm:$0xff]
        %v3481 = vld [vmem:[#allocation2 + $0x81] sm:$0xff]
        %v3482 = vld [vmem:[#allocation2 + $0x89] sm:$0xff]
        %v3483 = vld [vmem:[#allocation2 + $0x91] sm:$0xff]
        %v3484 = vld [vmem:[#allocation2 + $0x99] sm:$0xff]
        %v3485 = vld [vmem:[#allocation2 + $0xa1] sm:$0xff]
        %v3486 = vld [vmem:[#allocation2 + $0xa9] sm:$0xff]
        %v3487 = vld [vmem:[#allocation2 + $0xb1] sm:$0xff]
        %v3488 = vld [vmem:[#allocation2 + $0xb9] sm:$0xff]
        %v3489 = vld [vmem:[#allocation2 + $0xc1] sm:$0xff]
        %v3490 = vld [vmem:[#allocation2 + $0xc9] sm:$0xff]
        %v3491 = vld [vmem:[#allocation2 + $0xd1] sm:$0xff]
        %v3492 = vld [vmem:[#allocation2 + $0xd9] sm:$0xff]
        %v3493 = vld [vmem:[#allocation2 + $0xe1] sm:$0xff]
        %v3494 = vld [vmem:[#allocation2 + $0xe9] sm:$0xff]
        %v3495 = vld [vmem:[#allocation2 + $0xf1] sm:$0xff]
        %v3496 = vld [vmem:[#allocation2 + $0xf9] sm:$0xff]
        %v3497 = vld [vmem:[#allocation2 + $0x101] sm:$0xff]
        %v3498 = vld [vmem:[#allocation2 + $0x109] sm:$0xff]
        %v3499 = vld [vmem:[#allocation2 + $0x111] sm:$0xff]
        %v3500 = vld [vmem:[#allocation2 + $0x119] sm:$0xff]
        %v3501 = vld [vmem:[#allocation2 + $0x121] sm:$0xff]
        %v3502 = vmul.f32 %v3470, %v887
        %v3503 = vmul.f32 %v3471, %v888
        %v3504 = vmul.f32 %v3472, %v889
        %v3505 = vmul.f32 %v3473, %v890
        %v3506 = vmul.f32 %v3474, %v891
        %v3507 = vmul.f32 %v3475, %v892
        %v3508 = vmul.f32 %v3476, %v893
        %v3509 = vmul.f32 %v3477, %v894
        %v3510 = vmul.f32 %v3478, %v895
        %v3511 = vmul.f32 %v3479, %v896
        %v3512 = vmul.f32 %v3480, %v897
        %v3513 = vmul.f32 %v3481, %v898
        %v3514 = vmul.f32 %v3482, %v899
        %v3515 = vmul.f32 %v3483, %v900
        %v3516 = vmul.f32 %v3484, %v901
        %v3517 = vmul.f32 %v3485, %v902
        %v3518 = vmul.f32 %v3486, %v903
        %v3519 = vmul.f32 %v3487, %v904
        %v3520 = vmul.f32 %v3488, %v905
        %v3521 = vmul.f32 %v3489, %v906
        %v3522 = vmul.f32 %v3490, %v907
        %v3523 = vmul.f32 %v3491, %v908
        %v3524 = vmul.f32 %v3492, %v909
        %v3525 = vmul.f32 %v3493, %v910
        %v3526 = vmul.f32 %v3494, %v911
        %v3527 = vmul.f32 %v3495, %v912
        %v3528 = vmul.f32 %v3496, %v913
        %v3529 = vmul.f32 %v3497, %v914
        %v3530 = vmul.f32 %v3498, %v915
        %v3531 = vmul.f32 %v3499, %v916
        %v3532 = vmul.f32 %v3500, %v917
        %v3533 = vmul.f32 %v3501, %v918
        %v3534 = vpack.c.bf16 %v3503, %v3502
        %v3535 = vpack.c.bf16 %v3505, %v3504
        %v3536 = vpack.c.bf16 %v3507, %v3506
        %v3537 = vpack.c.bf16 %v3509, %v3508
        %v3538 = vpack.c.bf16 %v3511, %v3510
        %v3539 = vpack.c.bf16 %v3513, %v3512
        %v3540 = vpack.c.bf16 %v3515, %v3514
        %v3541 = vpack.c.bf16 %v3517, %v3516
        %v3542 = vpack.c.bf16 %v3519, %v3518
        %v3543 = vpack.c.bf16 %v3521, %v3520
        %v3544 = vpack.c.bf16 %v3523, %v3522
        %v3545 = vpack.c.bf16 %v3525, %v3524
        %v3546 = vpack.c.bf16 %v3527, %v3526
        %v3547 = vpack.c.bf16 %v3529, %v3528
        %v3548 = vpack.c.bf16 %v3531, %v3530
        %v3549 = vpack.c.bf16 %v3533, %v3532
        %s3550 = scalar_lea.vmem %s1, 32
        %v3551 = vld [vmem:[%s3550] sm:$0xf]
        %v3553 = vsel %vm919, %v3534, 0
        %v3556 = vsel %vm919, %v3535, 0
        %v3559 = vsel %vm919, %v3536, 0
        %v3562 = vsel %vm919, %v3537, 0
        %v3565 = vsel %vm919, %v3538, 0
        %v3568 = vsel %vm919, %v3539, 0
        %v3571 = vsel %vm919, %v3540, 0
        %v3574 = vsel %vm919, %v3541, 0
        %v3577 = vsel %vm919, %v3542, 0
        %v3580 = vsel %vm919, %v3543, 0
        %v3583 = vsel %vm919, %v3544, 0
        %v3586 = vsel %vm919, %v3545, 0
        %v3589 = vsel %vm919, %v3546, 0
        %v3592 = vsel %vm919, %v3547, 0
        %v3595 = vsel %vm919, %v3548, 0
        %v3598 = vsel %vm919, %v3549, 0
        %v3601 = vsel %vm1201, %v3551, 0
        %3603 = vmatprep.subr.bf16.mxu0 0
        %3604 = vmatpush1.bf16.msra.mxu0 %v3601
        %3605 = vmatprep.subr.bf16.mxu0 0
        %3606 = vmatpush1.bf16.msra.mxu0 0
        %3607 = vmatprep.subr.bf16.mxu0 0
        %3608 = vmatpush1.bf16.msra.mxu0 0
        %3609 = vmatprep.subr.bf16.mxu0 0
        %3610 = vmatpush1.bf16.msra.mxu0 0
        %3611 = vmatprep.subr.bf16.mxu0 0
        %3612 = vmatpush1.bf16.msra.mxu0 0
        %3613 = vmatprep.subr.bf16.mxu0 0
        %3614 = vmatpush1.bf16.msra.mxu0 0
        %3615 = vmatprep.subr.bf16.mxu0 0
        %3616 = vmatpush1.bf16.msra.mxu0 0
        %3617 = vmatprep.subr.bf16.mxu0 0
        %3618 = vmatpush1.bf16.msra.mxu0 0
        %3619 = vmatprep.subr.bf16.mxu0 0
        %3620 = vmatpush1.bf16.msra.mxu0 0
        %3621 = vmatprep.subr.bf16.mxu0 0
        %3622 = vmatpush1.bf16.msra.mxu0 0
        %3623 = vmatprep.subr.bf16.mxu0 0
        %3624 = vmatpush1.bf16.msra.mxu0 0
        %3625 = vmatprep.subr.bf16.mxu0 0
        %3626 = vmatpush1.bf16.msra.mxu0 0
        %3627 = vmatprep.subr.bf16.mxu0 0
        %3628 = vmatpush1.bf16.msra.mxu0 0
        %3629 = vmatprep.subr.bf16.mxu0 0
        %3630 = vmatpush1.bf16.msra.mxu0 0
        %3631 = vmatprep.subr.bf16.mxu0 0
        %3632 = vmatpush1.bf16.msra.mxu0 0
        %3633 = vmatprep.subr.bf16.mxu0 0
        %3634 = vmatpush1.bf16.msra.mxu0 0
        %3635 = vmatprep.mubr.bf16.mxu0 0
        %3636 = vmatmul.mubr.bf16.gmra.mrb[0].mxu0 %v3553
        %v3637 = vpop.f32.mrb[0].mxu0
        %v3638 = vadd.f32 0.0, %v3637
        %v3639 = vpop.f32.mrb[0].mxu0
        %v3640 = vpop.f32.mrb[0].mxu0
        %v3641 = vadd.f32 0.0, %v3640
        %v3642 = vpop.f32.mrb[0].mxu0
        %3643 = vmatprep.mubr.bf16.mxu0 0
        %3644 = vmatmul.mubr.bf16.gmra.mrb[0].mxu0 %v3556
        %v3645 = vpop.f32.mrb[0].mxu0
        %v3646 = vadd.f32 0.0, %v3645
        %v3647 = vpop.f32.mrb[0].mxu0
        %v3648 = vpop.f32.mrb[0].mxu0
        %v3649 = vadd.f32 0.0, %v3648
        %v3650 = vpop.f32.mrb[0].mxu0
        %3651 = vmatprep.mubr.bf16.mxu0 0
        %3652 = vmatmul.mubr.bf16.gmra.mrb[0].mxu0 %v3559
        %v3653 = vpop.f32.mrb[0].mxu0
        %v3654 = vadd.f32 0.0, %v3653
        %v3655 = vpop.f32.mrb[0].mxu0
        %v3656 = vpop.f32.mrb[0].mxu0
        %v3657 = vadd.f32 0.0, %v3656
        %v3658 = vpop.f32.mrb[0].mxu0
        %3659 = vmatprep.mubr.bf16.mxu0 0
        %3660 = vmatmul.mubr.bf16.gmra.mrb[0].mxu0 %v3562
        %v3661 = vpop.f32.mrb[0].mxu0
        %v3662 = vadd.f32 0.0, %v3661
        %v3663 = vpop.f32.mrb[0].mxu0
        %v3664 = vpop.f32.mrb[0].mxu0
        %v3665 = vadd.f32 0.0, %v3664
        %v3666 = vpop.f32.mrb[0].mxu0
        %3667 = vmatprep.mubr.bf16.mxu0 0
        %3668 = vmatmul.mubr.bf16.gmra.mrb[0].mxu0 %v3565
        %v3669 = vpop.f32.mrb[0].mxu0
        %v3670 = vadd.f32 0.0, %v3669
        %v3671 = vpop.f32.mrb[0].mxu0
        %v3672 = vpop.f32.mrb[0].mxu0
        %v3673 = vadd.f32 0.0, %v3672
        %v3674 = vpop.f32.mrb[0].mxu0
        %3675 = vmatprep.mubr.bf16.mxu0 0
        %3676 = vmatmul.mubr.bf16.gmra.mrb[0].mxu0 %v3568
        %v3677 = vpop.f32.mrb[0].mxu0
        %v3678 = vadd.f32 0.0, %v3677
        %v3679 = vpop.f32.mrb[0].mxu0
        %v3680 = vpop.f32.mrb[0].mxu0
        %v3681 = vadd.f32 0.0, %v3680
        %v3682 = vpop.f32.mrb[0].mxu0
        %3683 = vmatprep.mubr.bf16.mxu0 0
        %3684 = vmatmul.mubr.bf16.gmra.mrb[0].mxu0 %v3571
        %v3685 = vpop.f32.mrb[0].mxu0
        %v3686 = vadd.f32 0.0, %v3685
        %v3687 = vpop.f32.mrb[0].mxu0
        %v3688 = vpop.f32.mrb[0].mxu0
        %v3689 = vadd.f32 0.0, %v3688
        %v3690 = vpop.f32.mrb[0].mxu0
        %3691 = vmatprep.mubr.bf16.mxu0 0
        %3692 = vmatmul.mubr.bf16.gmra.mrb[0].mxu0 %v3574
        %v3693 = vpop.f32.mrb[0].mxu0
        %v3694 = vadd.f32 0.0, %v3693
        %v3695 = vpop.f32.mrb[0].mxu0
        %v3696 = vpop.f32.mrb[0].mxu0
        %v3697 = vadd.f32 0.0, %v3696
        %v3698 = vpop.f32.mrb[0].mxu0
        %3699 = vmatprep.mubr.bf16.mxu0 0
        %3700 = vmatmul.mubr.bf16.gmra.mrb[0].mxu0 %v3577
        %v3701 = vpop.f32.mrb[0].mxu0
        %v3702 = vadd.f32 0.0, %v3701
        %v3703 = vpop.f32.mrb[0].mxu0
        %v3704 = vpop.f32.mrb[0].mxu0
        %v3705 = vadd.f32 0.0, %v3704
        %v3706 = vpop.f32.mrb[0].mxu0
        %3707 = vmatprep.mubr.bf16.mxu0 0
        %3708 = vmatmul.mubr.bf16.gmra.mrb[0].mxu0 %v3580
        %v3709 = vpop.f32.mrb[0].mxu0
        %v3710 = vadd.f32 0.0, %v3709
        %v3711 = vpop.f32.mrb[0].mxu0
        %v3712 = vpop.f32.mrb[0].mxu0
        %v3713 = vadd.f32 0.0, %v3712
        %v3714 = vpop.f32.mrb[0].mxu0
        %3715 = vmatprep.mubr.bf16.mxu0 0
        %3716 = vmatmul.mubr.bf16.gmra.mrb[0].mxu0 %v3583
        %v3717 = vpop.f32.mrb[0].mxu0
        %v3718 = vadd.f32 0.0, %v3717
        %v3719 = vpop.f32.mrb[0].mxu0
        %v3720 = vpop.f32.mrb[0].mxu0
        %v3721 = vadd.f32 0.0, %v3720
        %v3722 = vpop.f32.mrb[0].mxu0
        %3723 = vmatprep.mubr.bf16.mxu0 0
        %3724 = vmatmul.mubr.bf16.gmra.mrb[0].mxu0 %v3586
        %v3725 = vpop.f32.mrb[0].mxu0
        %v3726 = vadd.f32 0.0, %v3725
        %v3727 = vpop.f32.mrb[0].mxu0
        %v3728 = vpop.f32.mrb[0].mxu0
        %v3729 = vadd.f32 0.0, %v3728
        %v3730 = vpop.f32.mrb[0].mxu0
        %3731 = vmatprep.mubr.bf16.mxu0 0
        %3732 = vmatmul.mubr.bf16.gmra.mrb[0].mxu0 %v3589
        %v3733 = vpop.f32.mrb[0].mxu0
        %v3734 = vadd.f32 0.0, %v3733
        %v3735 = vpop.f32.mrb[0].mxu0
        %v3736 = vpop.f32.mrb[0].mxu0
        %v3737 = vadd.f32 0.0, %v3736
        %v3738 = vpop.f32.mrb[0].mxu0
        %3739 = vmatprep.mubr.bf16.mxu0 0
        %3740 = vmatmul.mubr.bf16.gmra.mrb[0].mxu0 %v3592
        %v3741 = vpop.f32.mrb[0].mxu0
        %v3742 = vadd.f32 0.0, %v3741
        %v3743 = vpop.f32.mrb[0].mxu0
        %v3744 = vpop.f32.mrb[0].mxu0
        %v3745 = vadd.f32 0.0, %v3744
        %v3746 = vpop.f32.mrb[0].mxu0
        %3747 = vmatprep.mubr.bf16.mxu0 0
        %3748 = vmatmul.mubr.bf16.gmra.mrb[0].mxu0 %v3595
        %v3749 = vpop.f32.mrb[0].mxu0
        %v3750 = vadd.f32 0.0, %v3749
        %v3751 = vpop.f32.mrb[0].mxu0
        %v3752 = vpop.f32.mrb[0].mxu0
        %v3753 = vadd.f32 0.0, %v3752
        %v3754 = vpop.f32.mrb[0].mxu0
        %3755 = vmatprep.mubr.bf16.mxu0 0
        %3756 = vmatmul.mubr.bf16.gmra.mrb[0].mxu0 %v3598
        %v3757 = vpop.f32.mrb[0].mxu0
        %v3758 = vadd.f32 0.0, %v3757
        %v3759 = vpop.f32.mrb[0].mxu0
        %v3760 = vpop.f32.mrb[0].mxu0
        %v3761 = vadd.f32 0.0, %v3760
        %v3762 = vpop.f32.mrb[0].mxu0
        %3763 = vdwg.mxu0
        %v3764 = vadd.f32 %v3438, %v3638
        %v3765 = vadd.f32 %v3439, %v3641
        %v3766 = vadd.f32 %v3440, %v3646
        %v3767 = vadd.f32 %v3441, %v3649
        %v3768 = vadd.f32 %v3442, %v3654
        %v3769 = vadd.f32 %v3443, %v3657
        %v3770 = vadd.f32 %v3444, %v3662
        %v3771 = vadd.f32 %v3445, %v3665
        %v3772 = vadd.f32 %v3446, %v3670
        %v3773 = vadd.f32 %v3447, %v3673
        %v3774 = vadd.f32 %v3448, %v3678
        %v3775 = vadd.f32 %v3449, %v3681
        %v3776 = vadd.f32 %v3450, %v3686
        %v3777 = vadd.f32 %v3451, %v3689
        %v3778 = vadd.f32 %v3452, %v3694
        %v3779 = vadd.f32 %v3453, %v3697
        %v3780 = vadd.f32 %v3454, %v3702
        %v3781 = vadd.f32 %v3455, %v3705
        %v3782 = vadd.f32 %v3456, %v3710
        %v3783 = vadd.f32 %v3457, %v3713
        %v3784 = vadd.f32 %v3458, %v3718
        %v3785 = vadd.f32 %v3459, %v3721
        %v3786 = vadd.f32 %v3460, %v3726
        %v3787 = vadd.f32 %v3461, %v3729
        %v3788 = vadd.f32 %v3462, %v3734
        %v3789 = vadd.f32 %v3463, %v3737
        %v3790 = vadd.f32 %v3464, %v3742
        %v3791 = vadd.f32 %v3465, %v3745
        %v3792 = vadd.f32 %v3466, %v3750
        %v3793 = vadd.f32 %v3467, %v3753
        %v3794 = vadd.f32 %v3468, %v3758
        %v3795 = vadd.f32 %v3469, %v3761
        %v3796 = vld [vmem:[%s2] sm:$0x1]
        %v3798 = vlaneseq
        %v3799 = vshrl.u32 %v3798, 7
        %v3800 = vsub.s32 0, %v3799
        %v3801 = vrot.slane %v3796, %v3800
        %v3803 = vadd.f32 %v3764, %v3801
        %v3804 = vadd.f32 %v3765, %v3801
        %v3805 = vadd.f32 %v3766, %v3801
        %v3806 = vadd.f32 %v3767, %v3801
        %v3807 = vadd.f32 %v3768, %v3801
        %v3808 = vadd.f32 %v3769, %v3801
        %v3809 = vadd.f32 %v3770, %v3801
        %v3810 = vadd.f32 %v3771, %v3801
        %v3811 = vadd.f32 %v3772, %v3801
        %v3812 = vadd.f32 %v3773, %v3801
        %v3813 = vadd.f32 %v3774, %v3801
        %v3814 = vadd.f32 %v3775, %v3801
        %v3815 = vadd.f32 %v3776, %v3801
        %v3816 = vadd.f32 %v3777, %v3801
        %v3817 = vadd.f32 %v3778, %v3801
        %v3818 = vadd.f32 %v3779, %v3801
        %v3819 = vadd.f32 %v3780, %v3801
        %v3820 = vadd.f32 %v3781, %v3801
        %v3821 = vadd.f32 %v3782, %v3801
        %v3822 = vadd.f32 %v3783, %v3801
        %v3823 = vadd.f32 %v3784, %v3801
        %v3824 = vadd.f32 %v3785, %v3801
        %v3825 = vadd.f32 %v3786, %v3801
        %v3826 = vadd.f32 %v3787, %v3801
        %v3827 = vadd.f32 %v3788, %v3801
        %v3828 = vadd.f32 %v3789, %v3801
        %v3829 = vadd.f32 %v3790, %v3801
        %v3830 = vadd.f32 %v3791, %v3801
        %v3831 = vadd.f32 %v3792, %v3801
        %v3832 = vadd.f32 %v3793, %v3801
        %v3833 = vadd.f32 %v3794, %v3801
        %v3834 = vadd.f32 %v3795, %v3801
        %v3835 = vmax.f32 %v3803, 0.0
        %v3836 = vmax.f32 %v3804, 0.0
        %v3837 = vmax.f32 %v3805, 0.0
        %v3838 = vmax.f32 %v3806, 0.0
        %v3839 = vmax.f32 %v3807, 0.0
        %v3840 = vmax.f32 %v3808, 0.0
        %v3841 = vmax.f32 %v3809, 0.0
        %v3842 = vmax.f32 %v3810, 0.0
        %v3843 = vmax.f32 %v3811, 0.0
        %v3844 = vmax.f32 %v3812, 0.0
        %v3845 = vmax.f32 %v3813, 0.0
        %v3846 = vmax.f32 %v3814, 0.0
        %v3847 = vmax.f32 %v3815, 0.0
        %v3848 = vmax.f32 %v3816, 0.0
        %v3849 = vmax.f32 %v3817, 0.0
        %v3850 = vmax.f32 %v3818, 0.0
        %v3851 = vmax.f32 %v3819, 0.0
        %v3852 = vmax.f32 %v3820, 0.0
        %v3853 = vmax.f32 %v3821, 0.0
        %v3854 = vmax.f32 %v3822, 0.0
        %v3855 = vmax.f32 %v3823, 0.0
        %v3856 = vmax.f32 %v3824, 0.0
        %v3857 = vmax.f32 %v3825, 0.0
        %v3858 = vmax.f32 %v3826, 0.0
        %v3859 = vmax.f32 %v3827, 0.0
        %v3860 = vmax.f32 %v3828, 0.0
        %v3861 = vmax.f32 %v3829, 0.0
        %v3862 = vmax.f32 %v3830, 0.0
        %v3863 = vmax.f32 %v3831, 0.0
        %v3864 = vmax.f32 %v3832, 0.0
        %v3865 = vmax.f32 %v3833, 0.0
        %v3866 = vmax.f32 %v3834, 0.0
        %3867 = vst [vmem:[#allocation3] sm:$0xff] 0.0
        %3868 = vst [vmem:[#allocation3 + $0x8] sm:$0xff] 0.0
        %3869 = vst [vmem:[#allocation3 + $0x10] sm:$0xff] 0.0
        %3870 = vst [vmem:[#allocation3 + $0x18] sm:$0xff] 0.0
        %3871 = vst [vmem:[#allocation3 + $0x20] sm:$0xff] 0.0
        %3872 = vst [vmem:[#allocation3 + $0x28] sm:$0xff] 0.0
        %3873 = vst [vmem:[#allocation3 + $0x30] sm:$0xff] 0.0
        %3874 = vst [vmem:[#allocation3 + $0x38] sm:$0xff] 0.0
        %3875 = vst [vmem:[#allocation3 + $0x40] sm:$0xff] 0.0
        %3876 = vst [vmem:[#allocation3 + $0x48] sm:$0xff] 0.0
        %3877 = vst [vmem:[#allocation3 + $0x50] sm:$0xff] 0.0
        %3878 = vst [vmem:[#allocation3 + $0x58] sm:$0xff] 0.0
        %3879 = vst [vmem:[#allocation3 + $0x60] sm:$0xff] 0.0
        %3880 = vst [vmem:[#allocation3 + $0x68] sm:$0xff] 0.0
        %3881 = vst [vmem:[#allocation3 + $0x70] sm:$0xff] 0.0
        %3882 = vst [vmem:[#allocation3 + $0x78] sm:$0xff] 0.0
        %3883 = vst [vmem:[#allocation3 + $0x80] sm:$0xff] 0.0
        %3884 = vst [vmem:[#allocation3 + $0x88] sm:$0xff] 0.0
        %3885 = vst [vmem:[#allocation3 + $0x90] sm:$0xff] 0.0
        %3886 = vst [vmem:[#allocation3 + $0x98] sm:$0xff] 0.0
        %3887 = vst [vmem:[#allocation3 + $0xa0] sm:$0xff] 0.0
        %3888 = vst [vmem:[#allocation3 + $0xa8] sm:$0xff] 0.0
        %3889 = vst [vmem:[#allocation3 + $0xb0] sm:$0xff] 0.0
        %3890 = vst [vmem:[#allocation3 + $0xb8] sm:$0xff] 0.0
        %3891 = vst [vmem:[#allocation3 + $0xc0] sm:$0xff] 0.0
        %3892 = vst [vmem:[#allocation3 + $0xc8] sm:$0xff] 0.0
        %3893 = vst [vmem:[#allocation3 + $0xd0] sm:$0xff] 0.0
        %3894 = vst [vmem:[#allocation3 + $0xd8] sm:$0xff] 0.0
        %3895 = vst [vmem:[#allocation3 + $0xe0] sm:$0xff] 0.0
        %3896 = vst [vmem:[#allocation3 + $0xe8] sm:$0xff] 0.0
        %3897 = vst [vmem:[#allocation3 + $0xf0] sm:$0xff] 0.0
        %3898 = vst [vmem:[#allocation3 + $0xf8] sm:$0xff] 0.0
        %3899 = vst [vmem:[#allocation3 + $0x100] sm:$0xff] 0.0
        %3900 = vst [vmem:[#allocation3 + $0x108] sm:$0xff] 0.0
        %3901 = vst [vmem:[#allocation3 + $0x110] sm:$0xff] 0.0
        %3902 = vst [vmem:[#allocation3 + $0x118] sm:$0xff] 0.0
        %3903 = vst [vmem:[#allocation3 + $0x120] sm:$0xff] 0.0
        %3904 = vst [vmem:[#allocation3 + $0x128] sm:$0xff] 0.0
        %3905 = vst [vmem:[#allocation3 + $0x18] sm:$0xff] %v3835
        %3906 = vst [vmem:[#allocation3 + $0x20] sm:$0xff] %v3836
        %3907 = vst [vmem:[#allocation3 + $0x28] sm:$0xff] %v3837
        %3908 = vst [vmem:[#allocation3 + $0x30] sm:$0xff] %v3838
        %3909 = vst [vmem:[#allocation3 + $0x38] sm:$0xff] %v3839
        %3910 = vst [vmem:[#allocation3 + $0x40] sm:$0xff] %v3840
        %3911 = vst [vmem:[#allocation3 + $0x48] sm:$0xff] %v3841
        %3912 = vst [vmem:[#allocation3 + $0x50] sm:$0xff] %v3842
        %3913 = vst [vmem:[#allocation3 + $0x58] sm:$0xff] %v3843
        %3914 = vst [vmem:[#allocation3 + $0x60] sm:$0xff] %v3844
        %3915 = vst [vmem:[#allocation3 + $0x68] sm:$0xff] %v3845
        %3916 = vst [vmem:[#allocation3 + $0x70] sm:$0xff] %v3846
        %3917 = vst [vmem:[#allocation3 + $0x78] sm:$0xff] %v3847
        %3918 = vst [vmem:[#allocation3 + $0x80] sm:$0xff] %v3848
        %3919 = vst [vmem:[#allocation3 + $0x88] sm:$0xff] %v3849
        %3920 = vst [vmem:[#allocation3 + $0x90] sm:$0xff] %v3850
        %3921 = vst [vmem:[#allocation3 + $0x98] sm:$0xff] %v3851
        %3922 = vst [vmem:[#allocation3 + $0xa0] sm:$0xff] %v3852
        %3923 = vst [vmem:[#allocation3 + $0xa8] sm:$0xff] %v3853
        %3924 = vst [vmem:[#allocation3 + $0xb0] sm:$0xff] %v3854
        %3925 = vst [vmem:[#allocation3 + $0xb8] sm:$0xff] %v3855
        %3926 = vst [vmem:[#allocation3 + $0xc0] sm:$0xff] %v3856
        %3927 = vst [vmem:[#allocation3 + $0xc8] sm:$0xff] %v3857
        %3928 = vst [vmem:[#allocation3 + $0xd0] sm:$0xff] %v3858
        %3929 = vst [vmem:[#allocation3 + $0xd8] sm:$0xff] %v3859
        %3930 = vst [vmem:[#allocation3 + $0xe0] sm:$0xff] %v3860
        %3931 = vst [vmem:[#allocation3 + $0xe8] sm:$0xff] %v3861
        %3932 = vst [vmem:[#allocation3 + $0xf0] sm:$0xff] %v3862
        %3933 = vst [vmem:[#allocation3 + $0xf8] sm:$0xff] %v3863
        %3934 = vst [vmem:[#allocation3 + $0x100] sm:$0xff] %v3864
        %3935 = vst [vmem:[#allocation3 + $0x108] sm:$0xff] %v3865
        %3936 = vst [vmem:[#allocation3 + $0x110] sm:$0xff] %v3866
        %v3937 = vld [vmem:[#allocation3 + $0x7] sm:$0xff]
        %v3938 = vld [vmem:[#allocation3 + $0xf] sm:$0xff]
        %v3939 = vld [vmem:[#allocation3 + $0x17] sm:$0xff]
        %v3940 = vld [vmem:[#allocation3 + $0x1f] sm:$0xff]
        %v3941 = vld [vmem:[#allocation3 + $0x27] sm:$0xff]
        %v3942 = vld [vmem:[#allocation3 + $0x2f] sm:$0xff]
        %v3943 = vld [vmem:[#allocation3 + $0x37] sm:$0xff]
        %v3944 = vld [vmem:[#allocation3 + $0x3f] sm:$0xff]
        %v3945 = vld [vmem:[#allocation3 + $0x47] sm:$0xff]
        %v3946 = vld [vmem:[#allocation3 + $0x4f] sm:$0xff]
        %v3947 = vld [vmem:[#allocation3 + $0x57] sm:$0xff]
        %v3948 = vld [vmem:[#allocation3 + $0x5f] sm:$0xff]
        %v3949 = vld [vmem:[#allocation3 + $0x67] sm:$0xff]
        %v3950 = vld [vmem:[#allocation3 + $0x6f] sm:$0xff]
        %v3951 = vld [vmem:[#allocation3 + $0x77] sm:$0xff]
        %v3952 = vld [vmem:[#allocation3 + $0x7f] sm:$0xff]
        %v3953 = vld [vmem:[#allocation3 + $0x87] sm:$0xff]
        %v3954 = vld [vmem:[#allocation3 + $0x8f] sm:$0xff]
        %v3955 = vld [vmem:[#allocation3 + $0x97] sm:$0xff]
        %v3956 = vld [vmem:[#allocation3 + $0x9f] sm:$0xff]
        %v3957 = vld [vmem:[#allocation3 + $0xa7] sm:$0xff]
        %v3958 = vld [vmem:[#allocation3 + $0xaf] sm:$0xff]
        %v3959 = vld [vmem:[#allocation3 + $0xb7] sm:$0xff]
        %v3960 = vld [vmem:[#allocation3 + $0xbf] sm:$0xff]
        %v3961 = vld [vmem:[#allocation3 + $0xc7] sm:$0xff]
        %v3962 = vld [vmem:[#allocation3 + $0xcf] sm:$0xff]
        %v3963 = vld [vmem:[#allocation3 + $0xd7] sm:$0xff]
        %v3964 = vld [vmem:[#allocation3 + $0xdf] sm:$0xff]
        %v3965 = vld [vmem:[#allocation3 + $0xe7] sm:$0xff]
        %v3966 = vld [vmem:[#allocation3 + $0xef] sm:$0xff]
        %v3967 = vld [vmem:[#allocation3 + $0xf7] sm:$0xff]
        %v3968 = vld [vmem:[#allocation3 + $0xff] sm:$0xff]
        %v3969 = vmul.f32 %v3937, %v791
        %v3970 = vmul.f32 %v3938, %v792
        %v3971 = vmul.f32 %v3939, %v793
        %v3972 = vmul.f32 %v3940, %v794
        %v3973 = vmul.f32 %v3941, %v795
        %v3974 = vmul.f32 %v3942, %v796
        %v3975 = vmul.f32 %v3943, %v797
        %v3976 = vmul.f32 %v3944, %v798
        %v3977 = vmul.f32 %v3945, %v799
        %v3978 = vmul.f32 %v3946, %v800
        %v3979 = vmul.f32 %v3947, %v801
        %v3980 = vmul.f32 %v3948, %v802
        %v3981 = vmul.f32 %v3949, %v803
        %v3982 = vmul.f32 %v3950, %v804
        %v3983 = vmul.f32 %v3951, %v805
        %v3984 = vmul.f32 %v3952, %v806
        %v3985 = vmul.f32 %v3953, %v807
        %v3986 = vmul.f32 %v3954, %v808
        %v3987 = vmul.f32 %v3955, %v809
        %v3988 = vmul.f32 %v3956, %v810
        %v3989 = vmul.f32 %v3957, %v811
        %v3990 = vmul.f32 %v3958, %v812
        %v3991 = vmul.f32 %v3959, %v813
        %v3992 = vmul.f32 %v3960, %v814
        %v3993 = vmul.f32 %v3961, %v815
        %v3994 = vmul.f32 %v3962, %v816
        %v3995 = vmul.f32 %v3963, %v817
        %v3996 = vmul.f32 %v3964, %v818
        %v3997 = vmul.f32 %v3965, %v819
        %v3998 = vmul.f32 %v3966, %v820
        %v3999 = vmul.f32 %v3967, %v821
        %v4000 = vmul.f32 %v3968, %v822
        %v4001 = vpack.c.bf16 %v3970, %v3969
        %v4002 = vpack.c.bf16 %v3972, %v3971
        %v4003 = vpack.c.bf16 %v3974, %v3973
        %v4004 = vpack.c.bf16 %v3976, %v3975
        %v4005 = vpack.c.bf16 %v3978, %v3977
        %v4006 = vpack.c.bf16 %v3980, %v3979
        %v4007 = vpack.c.bf16 %v3982, %v3981
        %v4008 = vpack.c.bf16 %v3984, %v3983
        %v4009 = vpack.c.bf16 %v3986, %v3985
        %v4010 = vpack.c.bf16 %v3988, %v3987
        %v4011 = vpack.c.bf16 %v3990, %v3989
        %v4012 = vpack.c.bf16 %v3992, %v3991
        %v4013 = vpack.c.bf16 %v3994, %v3993
        %v4014 = vpack.c.bf16 %v3996, %v3995
        %v4015 = vpack.c.bf16 %v3998, %v3997
        %v4016 = vpack.c.bf16 %v4000, %v3999
        %v4017 = vld [vmem:[%s3] sm:$0xf]
        %v4018 = vld [vmem:[%s3 + $0x4] sm:$0xf]
        %v4019 = vld [vmem:[%s3 + $0x8] sm:$0xf]
        %v4020 = vld [vmem:[%s3 + $0xc] sm:$0xf]
        %v4021 = vld [vmem:[%s3 + $0x10] sm:$0xf]
        %v4022 = vld [vmem:[%s3 + $0x14] sm:$0xf]
        %v4023 = vld [vmem:[%s3 + $0x18] sm:$0xf]
        %v4024 = vld [vmem:[%s3 + $0x1c] sm:$0xf]
        %v4025 = vld [vmem:[%s3 + $0x20] sm:$0xf]
        %v4026 = vld [vmem:[%s3 + $0x24] sm:$0xf]
        %v4027 = vld [vmem:[%s3 + $0x28] sm:$0xf]
        %v4028 = vld [vmem:[%s3 + $0x2c] sm:$0xf]
        %v4029 = vld [vmem:[%s3 + $0x30] sm:$0xf]
        %v4030 = vld [vmem:[%s3 + $0x34] sm:$0xf]
        %v4031 = vld [vmem:[%s3 + $0x38] sm:$0xf]
        %v4032 = vld [vmem:[%s3 + $0x3c] sm:$0xf]
        %v4033 = vld [vmem:[#allocation3 + $0x8] sm:$0xff]
        %v4034 = vld [vmem:[#allocation3 + $0x10] sm:$0xff]
        %v4035 = vld [vmem:[#allocation3 + $0x18] sm:$0xff]
        %v4036 = vld [vmem:[#allocation3 + $0x20] sm:$0xff]
        %v4037 = vld [vmem:[#allocation3 + $0x28] sm:$0xff]
        %v4038 = vld [vmem:[#allocation3 + $0x30] sm:$0xff]
        %v4039 = vld [vmem:[#allocation3 + $0x38] sm:$0xff]
        %v4040 = vld [vmem:[#allocation3 + $0x40] sm:$0xff]
        %v4041 = vld [vmem:[#allocation3 + $0x48] sm:$0xff]
        %v4042 = vld [vmem:[#allocation3 + $0x50] sm:$0xff]
        %v4043 = vld [vmem:[#allocation3 + $0x58] sm:$0xff]
        %v4044 = vld [vmem:[#allocation3 + $0x60] sm:$0xff]
        %v4045 = vld [vmem:[#allocation3 + $0x68] sm:$0xff]
        %v4046 = vld [vmem:[#allocation3 + $0x70] sm:$0xff]
        %v4047 = vld [vmem:[#allocation3 + $0x78] sm:$0xff]
        %v4048 = vld [vmem:[#allocation3 + $0x80] sm:$0xff]
        %v4049 = vld [vmem:[#allocation3 + $0x88] sm:$0xff]
        %v4050 = vld [vmem:[#allocation3 + $0x90] sm:$0xff]
        %v4051 = vld [vmem:[#allocation3 + $0x98] sm:$0xff]
        %v4052 = vld [vmem:[#allocation3 + $0xa0] sm:$0xff]
        %v4053 = vld [vmem:[#allocation3 + $0xa8] sm:$0xff]
        %v4054 = vld [vmem:[#allocation3 + $0xb0] sm:$0xff]
        %v4055 = vld [vmem:[#allocation3 + $0xb8] sm:$0xff]
        %v4056 = vld [vmem:[#allocation3 + $0xc0] sm:$0xff]
        %v4057 = vld [vmem:[#allocation3 + $0xc8] sm:$0xff]
        %v4058 = vld [vmem:[#allocation3 + $0xd0] sm:$0xff]
        %v4059 = vld [vmem:[#allocation3 + $0xd8] sm:$0xff]
        %v4060 = vld [vmem:[#allocation3 + $0xe0] sm:$0xff]
        %v4061 = vld [vmem:[#allocation3 + $0xe8] sm:$0xff]
        %v4062 = vld [vmem:[#allocation3 + $0xf0] sm:$0xff]
        %v4063 = vld [vmem:[#allocation3 + $0xf8] sm:$0xff]
        %v4064 = vld [vmem:[#allocation3 + $0x100] sm:$0xff]
        %v4065 = vpack.c.bf16 %v4034, %v4033
        %v4066 = vpack.c.bf16 %v4036, %v4035
        %v4067 = vpack.c.bf16 %v4038, %v4037
        %v4068 = vpack.c.bf16 %v4040, %v4039
        %v4069 = vpack.c.bf16 %v4042, %v4041
        %v4070 = vpack.c.bf16 %v4044, %v4043
        %v4071 = vpack.c.bf16 %v4046, %v4045
        %v4072 = vpack.c.bf16 %v4048, %v4047
        %v4073 = vpack.c.bf16 %v4050, %v4049
        %v4074 = vpack.c.bf16 %v4052, %v4051
        %v4075 = vpack.c.bf16 %v4054, %v4053
        %v4076 = vpack.c.bf16 %v4056, %v4055
        %v4077 = vpack.c.bf16 %v4058, %v4057
        %v4078 = vpack.c.bf16 %v4060, %v4059
        %v4079 = vpack.c.bf16 %v4062, %v4061
        %v4080 = vpack.c.bf16 %v4064, %v4063
        %s4081 = scalar_lea.vmem %s3, 64
        %v4082 = vld [vmem:[%s4081] sm:$0xf]
        %v4083 = vld [vmem:[%s4081 + $0x4] sm:$0xf]
        %v4084 = vld [vmem:[%s4081 + $0x8] sm:$0xf]
        %v4085 = vld [vmem:[%s4081 + $0xc] sm:$0xf]
        %v4086 = vld [vmem:[%s4081 + $0x10] sm:$0xf]
        %v4087 = vld [vmem:[%s4081 + $0x14] sm:$0xf]
        %v4088 = vld [vmem:[%s4081 + $0x18] sm:$0xf]
        %v4089 = vld [vmem:[%s4081 + $0x1c] sm:$0xf]
        %v4090 = vld [vmem:[%s4081 + $0x20] sm:$0xf]
        %v4091 = vld [vmem:[%s4081 + $0x24] sm:$0xf]
        %v4092 = vld [vmem:[%s4081 + $0x28] sm:$0xf]
        %v4093 = vld [vmem:[%s4081 + $0x2c] sm:$0xf]
        %v4094 = vld [vmem:[%s4081 + $0x30] sm:$0xf]
        %v4095 = vld [vmem:[%s4081 + $0x34] sm:$0xf]
        %v4096 = vld [vmem:[%s4081 + $0x38] sm:$0xf]
        %v4097 = vld [vmem:[%s4081 + $0x3c] sm:$0xf]
        %v4114 = vunpack.c.l.b16 %v4082
        %v4115 = vunpack.c.l.b16 %v4083
        %v4116 = vunpack.c.l.b16 %v4084
        %v4117 = vunpack.c.l.b16 %v4085
        %v4118 = vunpack.c.l.b16 %v4086
        %v4119 = vunpack.c.l.b16 %v4087
        %v4120 = vunpack.c.l.b16 %v4088
        %v4121 = vunpack.c.l.b16 %v4089
        %v4122 = vunpack.c.l.b16 %v4090
        %v4123 = vunpack.c.l.b16 %v4091
        %v4124 = vunpack.c.l.b16 %v4092
        %v4125 = vunpack.c.l.b16 %v4093
        %v4126 = vunpack.c.l.b16 %v4094
        %v4127 = vunpack.c.l.b16 %v4095
        %v4128 = vunpack.c.l.b16 %v4096
        %v4129 = vunpack.c.l.b16 %v4097
        %v4130 = vpack.c.b16 %v4115, %v4114
        %v4131 = vpack.c.b16 %v4117, %v4116
        %v4132 = vpack.c.b16 %v4119, %v4118
        %v4133 = vpack.c.b16 %v4121, %v4120
        %v4134 = vpack.c.b16 %v4123, %v4122
        %v4135 = vpack.c.b16 %v4125, %v4124
        %v4136 = vpack.c.b16 %v4127, %v4126
        %v4137 = vpack.c.b16 %v4129, %v4128
        %4146 = vmatprep.subr.bf16.mxu0 0
        %4147 = vmatpush1.bf16.msra.mxu0 %v4130
        %4148 = vmatprep.subr.bf16.mxu0 0
        %4149 = vmatpush1.bf16.msra.mxu0 %v4131
        %4150 = vmatprep.subr.bf16.mxu0 0
        %4151 = vmatpush1.bf16.msra.mxu0 %v4132
        %4152 = vmatprep.subr.bf16.mxu0 0
        %4153 = vmatpush1.bf16.msra.mxu0 %v4133
        %4154 = vmatprep.subr.bf16.mxu0 0
        %4155 = vmatpush1.bf16.msra.mxu0 %v4134
        %4156 = vmatprep.subr.bf16.mxu0 0
        %4157 = vmatpush1.bf16.msra.mxu0 %v4135
        %4158 = vmatprep.subr.bf16.mxu0 0
        %4159 = vmatpush1.bf16.msra.mxu0 %v4136
        %4160 = vmatprep.subr.bf16.mxu0 0
        %4161 = vmatpush1.bf16.msra.mxu0 %v4137
        %4162 = vmatprep.subr.bf16.mxu0 0
        %4163 = vmatpush1.bf16.msra.mxu0 0
        %4164 = vmatprep.subr.bf16.mxu0 0
        %4165 = vmatpush1.bf16.msra.mxu0 0
        %4166 = vmatprep.subr.bf16.mxu0 0
        %4167 = vmatpush1.bf16.msra.mxu0 0
        %4168 = vmatprep.subr.bf16.mxu0 0
        %4169 = vmatpush1.bf16.msra.mxu0 0
        %4170 = vmatprep.subr.bf16.mxu0 0
        %4171 = vmatpush1.bf16.msra.mxu0 0
        %4172 = vmatprep.subr.bf16.mxu0 0
        %4173 = vmatpush1.bf16.msra.mxu0 0
        %4174 = vmatprep.subr.bf16.mxu0 0
        %4175 = vmatpush1.bf16.msra.mxu0 0
        %4176 = vmatprep.subr.bf16.mxu0 0
        %4177 = vmatpush1.bf16.msra.mxu0 0
        %4178 = vmatprep.mubr.bf16.mxu0 0
        %4179 = vmatmul.mubr.bf16.gmra.mrb[0].mxu0 %v4065
        %v4180 = vpop.f32.mrb[0].mxu0
        %v4181 = vadd.f32 0.0, %v4180
        %v4182 = vpop.f32.mrb[0].mxu0
        %v4183 = vpop.f32.mrb[0].mxu0
        %v4184 = vadd.f32 0.0, %v4183
        %v4185 = vpop.f32.mrb[0].mxu0
        %4186 = vmatprep.mubr.bf16.mxu0 0
        %4187 = vmatmul.mubr.bf16.gmra.mrb[0].mxu0 %v4066
        %v4188 = vpop.f32.mrb[0].mxu0
        %v4189 = vadd.f32 0.0, %v4188
        %v4190 = vpop.f32.mrb[0].mxu0
        %v4191 = vpop.f32.mrb[0].mxu0
        %v4192 = vadd.f32 0.0, %v4191
        %v4193 = vpop.f32.mrb[0].mxu0
        %4194 = vmatprep.mubr.bf16.mxu0 0
        %4195 = vmatmul.mubr.bf16.gmra.mrb[0].mxu0 %v4067
        %v4196 = vpop.f32.mrb[0].mxu0
        %v4197 = vadd.f32 0.0, %v4196
        %v4198 = vpop.f32.mrb[0].mxu0
        %v4199 = vpop.f32.mrb[0].mxu0
        %v4200 = vadd.f32 0.0, %v4199
        %v4201 = vpop.f32.mrb[0].mxu0
        %4202 = vmatprep.mubr.bf16.mxu0 0
        %4203 = vmatmul.mubr.bf16.gmra.mrb[0].mxu0 %v4068
        %v4204 = vpop.f32.mrb[0].mxu0
        %v4205 = vadd.f32 0.0, %v4204
        %v4206 = vpop.f32.mrb[0].mxu0
        %v4207 = vpop.f32.mrb[0].mxu0
        %v4208 = vadd.f32 0.0, %v4207
        %v4209 = vpop.f32.mrb[0].mxu0
        %4210 = vmatprep.mubr.bf16.mxu0 0
        %4211 = vmatmul.mubr.bf16.gmra.mrb[0].mxu0 %v4069
        %v4212 = vpop.f32.mrb[0].mxu0
        %v4213 = vadd.f32 0.0, %v4212
        %v4214 = vpop.f32.mrb[0].mxu0
        %v4215 = vpop.f32.mrb[0].mxu0
        %v4216 = vadd.f32 0.0, %v4215
        %v4217 = vpop.f32.mrb[0].mxu0
        %4218 = vmatprep.mubr.bf16.mxu0 0
        %4219 = vmatmul.mubr.bf16.gmra.mrb[0].mxu0 %v4070
        %v4220 = vpop.f32.mrb[0].mxu0
        %v4221 = vadd.f32 0.0, %v4220
        %v4222 = vpop.f32.mrb[0].mxu0
        %v4223 = vpop.f32.mrb[0].mxu0
        %v4224 = vadd.f32 0.0, %v4223
        %v4225 = vpop.f32.mrb[0].mxu0
        %4226 = vmatprep.mubr.bf16.mxu0 0
        %4227 = vmatmul.mubr.bf16.gmra.mrb[0].mxu0 %v4071
        %v4228 = vpop.f32.mrb[0].mxu0
        %v4229 = vadd.f32 0.0, %v4228
        %v4230 = vpop.f32.mrb[0].mxu0
        %v4231 = vpop.f32.mrb[0].mxu0
        %v4232 = vadd.f32 0.0, %v4231
        %v4233 = vpop.f32.mrb[0].mxu0
        %4234 = vmatprep.mubr.bf16.mxu0 0
        %4235 = vmatmul.mubr.bf16.gmra.mrb[0].mxu0 %v4072
        %v4236 = vpop.f32.mrb[0].mxu0
        %v4237 = vadd.f32 0.0, %v4236
        %v4238 = vpop.f32.mrb[0].mxu0
        %v4239 = vpop.f32.mrb[0].mxu0
        %v4240 = vadd.f32 0.0, %v4239
        %v4241 = vpop.f32.mrb[0].mxu0
        %4242 = vmatprep.mubr.bf16.mxu0 0
        %4243 = vmatmul.mubr.bf16.gmra.mrb[0].mxu0 %v4073
        %v4244 = vpop.f32.mrb[0].mxu0
        %v4245 = vadd.f32 0.0, %v4244
        %v4246 = vpop.f32.mrb[0].mxu0
        %v4247 = vpop.f32.mrb[0].mxu0
        %v4248 = vadd.f32 0.0, %v4247
        %v4249 = vpop.f32.mrb[0].mxu0
        %4250 = vmatprep.mubr.bf16.mxu0 0
        %4251 = vmatmul.mubr.bf16.gmra.mrb[0].mxu0 %v4074
        %v4252 = vpop.f32.mrb[0].mxu0
        %v4253 = vadd.f32 0.0, %v4252
        %v4254 = vpop.f32.mrb[0].mxu0
        %v4255 = vpop.f32.mrb[0].mxu0
        %v4256 = vadd.f32 0.0, %v4255
        %v4257 = vpop.f32.mrb[0].mxu0
        %4258 = vmatprep.mubr.bf16.mxu0 0
        %4259 = vmatmul.mubr.bf16.gmra.mrb[0].mxu0 %v4075
        %v4260 = vpop.f32.mrb[0].mxu0
        %v4261 = vadd.f32 0.0, %v4260
        %v4262 = vpop.f32.mrb[0].mxu0
        %v4263 = vpop.f32.mrb[0].mxu0
        %v4264 = vadd.f32 0.0, %v4263
        %v4265 = vpop.f32.mrb[0].mxu0
        %4266 = vmatprep.mubr.bf16.mxu0 0
        %4267 = vmatmul.mubr.bf16.gmra.mrb[0].mxu0 %v4076
        %v4268 = vpop.f32.mrb[0].mxu0
        %v4269 = vadd.f32 0.0, %v4268
        %v4270 = vpop.f32.mrb[0].mxu0
        %v4271 = vpop.f32.mrb[0].mxu0
        %v4272 = vadd.f32 0.0, %v4271
        %v4273 = vpop.f32.mrb[0].mxu0
        %4274 = vmatprep.mubr.bf16.mxu0 0
        %4275 = vmatmul.mubr.bf16.gmra.mrb[0].mxu0 %v4077
        %v4276 = vpop.f32.mrb[0].mxu0
        %v4277 = vadd.f32 0.0, %v4276
        %v4278 = vpop.f32.mrb[0].mxu0
        %v4279 = vpop.f32.mrb[0].mxu0
        %v4280 = vadd.f32 0.0, %v4279
        %v4281 = vpop.f32.mrb[0].mxu0
        %4282 = vmatprep.mubr.bf16.mxu0 0
        %4283 = vmatmul.mubr.bf16.gmra.mrb[0].mxu0 %v4078
        %v4284 = vpop.f32.mrb[0].mxu0
        %v4285 = vadd.f32 0.0, %v4284
        %v4286 = vpop.f32.mrb[0].mxu0
        %v4287 = vpop.f32.mrb[0].mxu0
        %v4288 = vadd.f32 0.0, %v4287
        %v4289 = vpop.f32.mrb[0].mxu0
        %4290 = vmatprep.mubr.bf16.mxu0 0
        %4291 = vmatmul.mubr.bf16.gmra.mrb[0].mxu0 %v4079
        %v4292 = vpop.f32.mrb[0].mxu0
        %v4293 = vadd.f32 0.0, %v4292
        %v4294 = vpop.f32.mrb[0].mxu0
        %v4295 = vpop.f32.mrb[0].mxu0
        %v4296 = vadd.f32 0.0, %v4295
        %v4297 = vpop.f32.mrb[0].mxu0
        %4298 = vmatprep.mubr.bf16.mxu0 0
        %4299 = vmatmul.mubr.bf16.gmra.mrb[0].mxu0 %v4080
        %v4300 = vpop.f32.mrb[0].mxu0
        %v4301 = vadd.f32 0.0, %v4300
        %v4302 = vpop.f32.mrb[0].mxu0
        %v4303 = vpop.f32.mrb[0].mxu0
        %v4304 = vadd.f32 0.0, %v4303
        %v4305 = vpop.f32.mrb[0].mxu0
        %4306 = vdwg.mxu0
        %v4323 = vunpack.c.l.b16 %v4017
        %v4324 = vunpack.c.l.b16 %v4018
        %v4325 = vunpack.c.l.b16 %v4019
        %v4326 = vunpack.c.l.b16 %v4020
        %v4327 = vunpack.c.l.b16 %v4021
        %v4328 = vunpack.c.l.b16 %v4022
        %v4329 = vunpack.c.l.b16 %v4023
        %v4330 = vunpack.c.l.b16 %v4024
        %v4331 = vunpack.c.l.b16 %v4025
        %v4332 = vunpack.c.l.b16 %v4026
        %v4333 = vunpack.c.l.b16 %v4027
        %v4334 = vunpack.c.l.b16 %v4028
        %v4335 = vunpack.c.l.b16 %v4029
        %v4336 = vunpack.c.l.b16 %v4030
        %v4337 = vunpack.c.l.b16 %v4031
        %v4338 = vunpack.c.l.b16 %v4032
        %v4339 = vpack.c.b16 %v4324, %v4323
        %v4340 = vpack.c.b16 %v4326, %v4325
        %v4341 = vpack.c.b16 %v4328, %v4327
        %v4342 = vpack.c.b16 %v4330, %v4329
        %v4343 = vpack.c.b16 %v4332, %v4331
        %v4344 = vpack.c.b16 %v4334, %v4333
        %v4345 = vpack.c.b16 %v4336, %v4335
        %v4346 = vpack.c.b16 %v4338, %v4337
        %4355 = vmatprep.subr.bf16.mxu0 0
        %4356 = vmatpush1.bf16.msra.mxu0 %v4339
        %4357 = vmatprep.subr.bf16.mxu0 0
        %4358 = vmatpush1.bf16.msra.mxu0 %v4340
        %4359 = vmatprep.subr.bf16.mxu0 0
        %4360 = vmatpush1.bf16.msra.mxu0 %v4341
        %4361 = vmatprep.subr.bf16.mxu0 0
        %4362 = vmatpush1.bf16.msra.mxu0 %v4342
        %4363 = vmatprep.subr.bf16.mxu0 0
        %4364 = vmatpush1.bf16.msra.mxu0 %v4343
        %4365 = vmatprep.subr.bf16.mxu0 0
        %4366 = vmatpush1.bf16.msra.mxu0 %v4344
        %4367 = vmatprep.subr.bf16.mxu0 0
        %4368 = vmatpush1.bf16.msra.mxu0 %v4345
        %4369 = vmatprep.subr.bf16.mxu0 0
        %4370 = vmatpush1.bf16.msra.mxu0 %v4346
        %4371 = vmatprep.subr.bf16.mxu0 0
        %4372 = vmatpush1.bf16.msra.mxu0 0
        %4373 = vmatprep.subr.bf16.mxu0 0
        %4374 = vmatpush1.bf16.msra.mxu0 0
        %4375 = vmatprep.subr.bf16.mxu0 0
        %4376 = vmatpush1.bf16.msra.mxu0 0
        %4377 = vmatprep.subr.bf16.mxu0 0
        %4378 = vmatpush1.bf16.msra.mxu0 0
        %4379 = vmatprep.subr.bf16.mxu0 0
        %4380 = vmatpush1.bf16.msra.mxu0 0
        %4381 = vmatprep.subr.bf16.mxu0 0
        %4382 = vmatpush1.bf16.msra.mxu0 0
        %4383 = vmatprep.subr.bf16.mxu0 0
        %4384 = vmatpush1.bf16.msra.mxu0 0
        %4385 = vmatprep.subr.bf16.mxu0 0
        %4386 = vmatpush1.bf16.msra.mxu0 0
        %4387 = vmatprep.mubr.bf16.mxu0 0
        %4388 = vmatmul.mubr.bf16.gmra.mrb[0].mxu0 %v4001
        %v4389 = vpop.f32.mrb[0].mxu0
        %v4390 = vadd.f32 %v4181, %v4389
        %v4391 = vpop.f32.mrb[0].mxu0
        %v4392 = vpop.f32.mrb[0].mxu0
        %v4393 = vadd.f32 %v4184, %v4392
        %v4394 = vpop.f32.mrb[0].mxu0
        %4395 = vmatprep.mubr.bf16.mxu0 0
        %4396 = vmatmul.mubr.bf16.gmra.mrb[0].mxu0 %v4002
        %v4397 = vpop.f32.mrb[0].mxu0
        %v4398 = vadd.f32 %v4189, %v4397
        %v4399 = vpop.f32.mrb[0].mxu0
        %v4400 = vpop.f32.mrb[0].mxu0
        %v4401 = vadd.f32 %v4192, %v4400
        %v4402 = vpop.f32.mrb[0].mxu0
        %4403 = vmatprep.mubr.bf16.mxu0 0
        %4404 = vmatmul.mubr.bf16.gmra.mrb[0].mxu0 %v4003
        %v4405 = vpop.f32.mrb[0].mxu0
        %v4406 = vadd.f32 %v4197, %v4405
        %v4407 = vpop.f32.mrb[0].mxu0
        %v4408 = vpop.f32.mrb[0].mxu0
        %v4409 = vadd.f32 %v4200, %v4408
        %v4410 = vpop.f32.mrb[0].mxu0
        %4411 = vmatprep.mubr.bf16.mxu0 0
        %4412 = vmatmul.mubr.bf16.gmra.mrb[0].mxu0 %v4004
        %v4413 = vpop.f32.mrb[0].mxu0
        %v4414 = vadd.f32 %v4205, %v4413
        %v4415 = vpop.f32.mrb[0].mxu0
        %v4416 = vpop.f32.mrb[0].mxu0
        %v4417 = vadd.f32 %v4208, %v4416
        %v4418 = vpop.f32.mrb[0].mxu0
        %4419 = vmatprep.mubr.bf16.mxu0 0
        %4420 = vmatmul.mubr.bf16.gmra.mrb[0].mxu0 %v4005
        %v4421 = vpop.f32.mrb[0].mxu0
        %v4422 = vadd.f32 %v4213, %v4421
        %v4423 = vpop.f32.mrb[0].mxu0
        %v4424 = vpop.f32.mrb[0].mxu0
        %v4425 = vadd.f32 %v4216, %v4424
        %v4426 = vpop.f32.mrb[0].mxu0
        %4427 = vmatprep.mubr.bf16.mxu0 0
        %4428 = vmatmul.mubr.bf16.gmra.mrb[0].mxu0 %v4006
        %v4429 = vpop.f32.mrb[0].mxu0
        %v4430 = vadd.f32 %v4221, %v4429
        %v4431 = vpop.f32.mrb[0].mxu0
        %v4432 = vpop.f32.mrb[0].mxu0
        %v4433 = vadd.f32 %v4224, %v4432
        %v4434 = vpop.f32.mrb[0].mxu0
        %4435 = vmatprep.mubr.bf16.mxu0 0
        %4436 = vmatmul.mubr.bf16.gmra.mrb[0].mxu0 %v4007
        %v4437 = vpop.f32.mrb[0].mxu0
        %v4438 = vadd.f32 %v4229, %v4437
        %v4439 = vpop.f32.mrb[0].mxu0
        %v4440 = vpop.f32.mrb[0].mxu0
        %v4441 = vadd.f32 %v4232, %v4440
        %v4442 = vpop.f32.mrb[0].mxu0
        %4443 = vmatprep.mubr.bf16.mxu0 0
        %4444 = vmatmul.mubr.bf16.gmra.mrb[0].mxu0 %v4008
        %v4445 = vpop.f32.mrb[0].mxu0
        %v4446 = vadd.f32 %v4237, %v4445
        %v4447 = vpop.f32.mrb[0].mxu0
        %v4448 = vpop.f32.mrb[0].mxu0
        %v4449 = vadd.f32 %v4240, %v4448
        %v4450 = vpop.f32.mrb[0].mxu0
        %4451 = vmatprep.mubr.bf16.mxu0 0
        %4452 = vmatmul.mubr.bf16.gmra.mrb[0].mxu0 %v4009
        %v4453 = vpop.f32.mrb[0].mxu0
        %v4454 = vadd.f32 %v4245, %v4453
        %v4455 = vpop.f32.mrb[0].mxu0
        %v4456 = vpop.f32.mrb[0].mxu0
        %v4457 = vadd.f32 %v4248, %v4456
        %v4458 = vpop.f32.mrb[0].mxu0
        %4459 = vmatprep.mubr.bf16.mxu0 0
        %4460 = vmatmul.mubr.bf16.gmra.mrb[0].mxu0 %v4010
        %v4461 = vpop.f32.mrb[0].mxu0
        %v4462 = vadd.f32 %v4253, %v4461
        %v4463 = vpop.f32.mrb[0].mxu0
        %v4464 = vpop.f32.mrb[0].mxu0
        %v4465 = vadd.f32 %v4256, %v4464
        %v4466 = vpop.f32.mrb[0].mxu0
        %4467 = vmatprep.mubr.bf16.mxu0 0
        %4468 = vmatmul.mubr.bf16.gmra.mrb[0].mxu0 %v4011
        %v4469 = vpop.f32.mrb[0].mxu0
        %v4470 = vadd.f32 %v4261, %v4469
        %v4471 = vpop.f32.mrb[0].mxu0
        %v4472 = vpop.f32.mrb[0].mxu0
        %v4473 = vadd.f32 %v4264, %v4472
        %v4474 = vpop.f32.mrb[0].mxu0
        %4475 = vmatprep.mubr.bf16.mxu0 0
        %4476 = vmatmul.mubr.bf16.gmra.mrb[0].mxu0 %v4012
        %v4477 = vpop.f32.mrb[0].mxu0
        %v4478 = vadd.f32 %v4269, %v4477
        %v4479 = vpop.f32.mrb[0].mxu0
        %v4480 = vpop.f32.mrb[0].mxu0
        %v4481 = vadd.f32 %v4272, %v4480
        %v4482 = vpop.f32.mrb[0].mxu0
        %4483 = vmatprep.mubr.bf16.mxu0 0
        %4484 = vmatmul.mubr.bf16.gmra.mrb[0].mxu0 %v4013
        %v4485 = vpop.f32.mrb[0].mxu0
        %v4486 = vadd.f32 %v4277, %v4485
        %v4487 = vpop.f32.mrb[0].mxu0
        %v4488 = vpop.f32.mrb[0].mxu0
        %v4489 = vadd.f32 %v4280, %v4488
        %v4490 = vpop.f32.mrb[0].mxu0
        %4491 = vmatprep.mubr.bf16.mxu0 0
        %4492 = vmatmul.mubr.bf16.gmra.mrb[0].mxu0 %v4014
        %v4493 = vpop.f32.mrb[0].mxu0
        %v4494 = vadd.f32 %v4285, %v4493
        %v4495 = vpop.f32.mrb[0].mxu0
        %v4496 = vpop.f32.mrb[0].mxu0
        %v4497 = vadd.f32 %v4288, %v4496
        %v4498 = vpop.f32.mrb[0].mxu0
        %4499 = vmatprep.mubr.bf16.mxu0 0
        %4500 = vmatmul.mubr.bf16.gmra.mrb[0].mxu0 %v4015
        %v4501 = vpop.f32.mrb[0].mxu0
        %v4502 = vadd.f32 %v4293, %v4501
        %v4503 = vpop.f32.mrb[0].mxu0
        %v4504 = vpop.f32.mrb[0].mxu0
        %v4505 = vadd.f32 %v4296, %v4504
        %v4506 = vpop.f32.mrb[0].mxu0
        %4507 = vmatprep.mubr.bf16.mxu0 0
        %4508 = vmatmul.mubr.bf16.gmra.mrb[0].mxu0 %v4016
        %v4509 = vpop.f32.mrb[0].mxu0
        %v4510 = vadd.f32 %v4301, %v4509
        %v4511 = vpop.f32.mrb[0].mxu0
        %v4512 = vpop.f32.mrb[0].mxu0
        %v4513 = vadd.f32 %v4304, %v4512
        %v4514 = vpop.f32.mrb[0].mxu0
        %4515 = vdwg.mxu0
        %v4516 = vld [vmem:[#allocation3 + $0x9] sm:$0xff]
        %v4517 = vld [vmem:[#allocation3 + $0x11] sm:$0xff]
        %v4518 = vld [vmem:[#allocation3 + $0x19] sm:$0xff]
        %v4519 = vld [vmem:[#allocation3 + $0x21] sm:$0xff]
        %v4520 = vld [vmem:[#allocation3 + $0x29] sm:$0xff]
        %v4521 = vld [vmem:[#allocation3 + $0x31] sm:$0xff]
        %v4522 = vld [vmem:[#allocation3 + $0x39] sm:$0xff]
        %v4523 = vld [vmem:[#allocation3 + $0x41] sm:$0xff]
        %v4524 = vld [vmem:[#allocation3 + $0x49] sm:$0xff]
        %v4525 = vld [vmem:[#allocation3 + $0x51] sm:$0xff]
        %v4526 = vld [vmem:[#allocation3 + $0x59] sm:$0xff]
        %v4527 = vld [vmem:[#allocation3 + $0x61] sm:$0xff]
        %v4528 = vld [vmem:[#allocation3 + $0x69] sm:$0xff]
        %v4529 = vld [vmem:[#allocation3 + $0x71] sm:$0xff]
        %v4530 = vld [vmem:[#allocation3 + $0x79] sm:$0xff]
        %v4531 = vld [vmem:[#allocation3 + $0x81] sm:$0xff]
        %v4532 = vld [vmem:[#allocation3 + $0x89] sm:$0xff]
        %v4533 = vld [vmem:[#allocation3 + $0x91] sm:$0xff]
        %v4534 = vld [vmem:[#allocation3 + $0x99] sm:$0xff]
        %v4535 = vld [vmem:[#allocation3 + $0xa1] sm:$0xff]
        %v4536 = vld [vmem:[#allocation3 + $0xa9] sm:$0xff]
        %v4537 = vld [vmem:[#allocation3 + $0xb1] sm:$0xff]
        %v4538 = vld [vmem:[#allocation3 + $0xb9] sm:$0xff]
        %v4539 = vld [vmem:[#allocation3 + $0xc1] sm:$0xff]
        %v4540 = vld [vmem:[#allocation3 + $0xc9] sm:$0xff]
        %v4541 = vld [vmem:[#allocation3 + $0xd1] sm:$0xff]
        %v4542 = vld [vmem:[#allocation3 + $0xd9] sm:$0xff]
        %v4543 = vld [vmem:[#allocation3 + $0xe1] sm:$0xff]
        %v4544 = vld [vmem:[#allocation3 + $0xe9] sm:$0xff]
        %v4545 = vld [vmem:[#allocation3 + $0xf1] sm:$0xff]
        %v4546 = vld [vmem:[#allocation3 + $0xf9] sm:$0xff]
        %v4547 = vld [vmem:[#allocation3 + $0x101] sm:$0xff]
        %v4548 = vmul.f32 %v4516, %v887
        %v4549 = vmul.f32 %v4517, %v888
        %v4550 = vmul.f32 %v4518, %v889
        %v4551 = vmul.f32 %v4519, %v890
        %v4552 = vmul.f32 %v4520, %v891
        %v4553 = vmul.f32 %v4521, %v892
        %v4554 = vmul.f32 %v4522, %v893
        %v4555 = vmul.f32 %v4523, %v894
        %v4556 = vmul.f32 %v4524, %v895
        %v4557 = vmul.f32 %v4525, %v896
        %v4558 = vmul.f32 %v4526, %v897
        %v4559 = vmul.f32 %v4527, %v898
        %v4560 = vmul.f32 %v4528, %v899
        %v4561 = vmul.f32 %v4529, %v900
        %v4562 = vmul.f32 %v4530, %v901
        %v4563 = vmul.f32 %v4531, %v902
        %v4564 = vmul.f32 %v4532, %v903
        %v4565 = vmul.f32 %v4533, %v904
        %v4566 = vmul.f32 %v4534, %v905
        %v4567 = vmul.f32 %v4535, %v906
        %v4568 = vmul.f32 %v4536, %v907
        %v4569 = vmul.f32 %v4537, %v908
        %v4570 = vmul.f32 %v4538, %v909
        %v4571 = vmul.f32 %v4539, %v910
        %v4572 = vmul.f32 %v4540, %v911
        %v4573 = vmul.f32 %v4541, %v912
        %v4574 = vmul.f32 %v4542, %v913
        %v4575 = vmul.f32 %v4543, %v914
        %v4576 = vmul.f32 %v4544, %v915
        %v4577 = vmul.f32 %v4545, %v916
        %v4578 = vmul.f32 %v4546, %v917
        %v4579 = vmul.f32 %v4547, %v918
        %v4580 = vpack.c.bf16 %v4549, %v4548
        %v4581 = vpack.c.bf16 %v4551, %v4550
        %v4582 = vpack.c.bf16 %v4553, %v4552
        %v4583 = vpack.c.bf16 %v4555, %v4554
        %v4584 = vpack.c.bf16 %v4557, %v4556
        %v4585 = vpack.c.bf16 %v4559, %v4558
        %v4586 = vpack.c.bf16 %v4561, %v4560
        %v4587 = vpack.c.bf16 %v4563, %v4562
        %v4588 = vpack.c.bf16 %v4565, %v4564
        %v4589 = vpack.c.bf16 %v4567, %v4566
        %v4590 = vpack.c.bf16 %v4569, %v4568
        %v4591 = vpack.c.bf16 %v4571, %v4570
        %v4592 = vpack.c.bf16 %v4573, %v4572
        %v4593 = vpack.c.bf16 %v4575, %v4574
        %v4594 = vpack.c.bf16 %v4577, %v4576
        %v4595 = vpack.c.bf16 %v4579, %v4578
        %s4596 = scalar_lea.vmem %s3, 128
        %v4597 = vld [vmem:[%s4596] sm:$0xf]
        %v4598 = vld [vmem:[%s4596 + $0x4] sm:$0xf]
        %v4599 = vld [vmem:[%s4596 + $0x8] sm:$0xf]
        %v4600 = vld [vmem:[%s4596 + $0xc] sm:$0xf]
        %v4601 = vld [vmem:[%s4596 + $0x10] sm:$0xf]
        %v4602 = vld [vmem:[%s4596 + $0x14] sm:$0xf]
        %v4603 = vld [vmem:[%s4596 + $0x18] sm:$0xf]
        %v4604 = vld [vmem:[%s4596 + $0x1c] sm:$0xf]
        %v4605 = vld [vmem:[%s4596 + $0x20] sm:$0xf]
        %v4606 = vld [vmem:[%s4596 + $0x24] sm:$0xf]
        %v4607 = vld [vmem:[%s4596 + $0x28] sm:$0xf]
        %v4608 = vld [vmem:[%s4596 + $0x2c] sm:$0xf]
        %v4609 = vld [vmem:[%s4596 + $0x30] sm:$0xf]
        %v4610 = vld [vmem:[%s4596 + $0x34] sm:$0xf]
        %v4611 = vld [vmem:[%s4596 + $0x38] sm:$0xf]
        %v4612 = vld [vmem:[%s4596 + $0x3c] sm:$0xf]
        %v4629 = vunpack.c.l.b16 %v4597
        %v4630 = vunpack.c.l.b16 %v4598
        %v4631 = vunpack.c.l.b16 %v4599
        %v4632 = vunpack.c.l.b16 %v4600
        %v4633 = vunpack.c.l.b16 %v4601
        %v4634 = vunpack.c.l.b16 %v4602
        %v4635 = vunpack.c.l.b16 %v4603
        %v4636 = vunpack.c.l.b16 %v4604
        %v4637 = vunpack.c.l.b16 %v4605
        %v4638 = vunpack.c.l.b16 %v4606
        %v4639 = vunpack.c.l.b16 %v4607
        %v4640 = vunpack.c.l.b16 %v4608
        %v4641 = vunpack.c.l.b16 %v4609
        %v4642 = vunpack.c.l.b16 %v4610
        %v4643 = vunpack.c.l.b16 %v4611
        %v4644 = vunpack.c.l.b16 %v4612
        %v4645 = vpack.c.b16 %v4630, %v4629
        %v4646 = vpack.c.b16 %v4632, %v4631
        %v4647 = vpack.c.b16 %v4634, %v4633
        %v4648 = vpack.c.b16 %v4636, %v4635
        %v4649 = vpack.c.b16 %v4638, %v4637
        %v4650 = vpack.c.b16 %v4640, %v4639
        %v4651 = vpack.c.b16 %v4642, %v4641
        %v4652 = vpack.c.b16 %v4644, %v4643
        %4661 = vmatprep.subr.bf16.mxu0 0
        %4662 = vmatpush1.bf16.msra.mxu0 %v4645
        %4663 = vmatprep.subr.bf16.mxu0 0
        %4664 = vmatpush1.bf16.msra.mxu0 %v4646
        %4665 = vmatprep.subr.bf16.mxu0 0
        %4666 = vmatpush1.bf16.msra.mxu0 %v4647
        %4667 = vmatprep.subr.bf16.mxu0 0
        %4668 = vmatpush1.bf16.msra.mxu0 %v4648
        %4669 = vmatprep.subr.bf16.mxu0 0
        %4670 = vmatpush1.bf16.msra.mxu0 %v4649
        %4671 = vmatprep.subr.bf16.mxu0 0
        %4672 = vmatpush1.bf16.msra.mxu0 %v4650
        %4673 = vmatprep.subr.bf16.mxu0 0
        %4674 = vmatpush1.bf16.msra.mxu0 %v4651
        %4675 = vmatprep.subr.bf16.mxu0 0
        %4676 = vmatpush1.bf16.msra.mxu0 %v4652
        %4677 = vmatprep.subr.bf16.mxu0 0
        %4678 = vmatpush1.bf16.msra.mxu0 0
        %4679 = vmatprep.subr.bf16.mxu0 0
        %4680 = vmatpush1.bf16.msra.mxu0 0
        %4681 = vmatprep.subr.bf16.mxu0 0
        %4682 = vmatpush1.bf16.msra.mxu0 0
        %4683 = vmatprep.subr.bf16.mxu0 0
        %4684 = vmatpush1.bf16.msra.mxu0 0
        %4685 = vmatprep.subr.bf16.mxu0 0
        %4686 = vmatpush1.bf16.msra.mxu0 0
        %4687 = vmatprep.subr.bf16.mxu0 0
        %4688 = vmatpush1.bf16.msra.mxu0 0
        %4689 = vmatprep.subr.bf16.mxu0 0
        %4690 = vmatpush1.bf16.msra.mxu0 0
        %4691 = vmatprep.subr.bf16.mxu0 0
        %4692 = vmatpush1.bf16.msra.mxu0 0
        %4693 = vmatprep.mubr.bf16.mxu0 0
        %4694 = vmatmul.mubr.bf16.gmra.mrb[0].mxu0 %v4580
        %v4695 = vpop.f32.mrb[0].mxu0
        %v4696 = vadd.f32 0.0, %v4695
        %v4697 = vpop.f32.mrb[0].mxu0
        %v4698 = vpop.f32.mrb[0].mxu0
        %v4699 = vadd.f32 0.0, %v4698
        %v4700 = vpop.f32.mrb[0].mxu0
        %4701 = vmatprep.mubr.bf16.mxu0 0
        %4702 = vmatmul.mubr.bf16.gmra.mrb[0].mxu0 %v4581
        %v4703 = vpop.f32.mrb[0].mxu0
        %v4704 = vadd.f32 0.0, %v4703
        %v4705 = vpop.f32.mrb[0].mxu0
        %v4706 = vpop.f32.mrb[0].mxu0
        %v4707 = vadd.f32 0.0, %v4706
        %v4708 = vpop.f32.mrb[0].mxu0
        %4709 = vmatprep.mubr.bf16.mxu0 0
        %4710 = vmatmul.mubr.bf16.gmra.mrb[0].mxu0 %v4582
        %v4711 = vpop.f32.mrb[0].mxu0
        %v4712 = vadd.f32 0.0, %v4711
        %v4713 = vpop.f32.mrb[0].mxu0
        %v4714 = vpop.f32.mrb[0].mxu0
        %v4715 = vadd.f32 0.0, %v4714
        %v4716 = vpop.f32.mrb[0].mxu0
        %4717 = vmatprep.mubr.bf16.mxu0 0
        %4718 = vmatmul.mubr.bf16.gmra.mrb[0].mxu0 %v4583
        %v4719 = vpop.f32.mrb[0].mxu0
        %v4720 = vadd.f32 0.0, %v4719
        %v4721 = vpop.f32.mrb[0].mxu0
        %v4722 = vpop.f32.mrb[0].mxu0
        %v4723 = vadd.f32 0.0, %v4722
        %v4724 = vpop.f32.mrb[0].mxu0
        %4725 = vmatprep.mubr.bf16.mxu0 0
        %4726 = vmatmul.mubr.bf16.gmra.mrb[0].mxu0 %v4584
        %v4727 = vpop.f32.mrb[0].mxu0
        %v4728 = vadd.f32 0.0, %v4727
        %v4729 = vpop.f32.mrb[0].mxu0
        %v4730 = vpop.f32.mrb[0].mxu0
        %v4731 = vadd.f32 0.0, %v4730
        %v4732 = vpop.f32.mrb[0].mxu0
        %4733 = vmatprep.mubr.bf16.mxu0 0
        %4734 = vmatmul.mubr.bf16.gmra.mrb[0].mxu0 %v4585
        %v4735 = vpop.f32.mrb[0].mxu0
        %v4736 = vadd.f32 0.0, %v4735
        %v4737 = vpop.f32.mrb[0].mxu0
        %v4738 = vpop.f32.mrb[0].mxu0
        %v4739 = vadd.f32 0.0, %v4738
        %v4740 = vpop.f32.mrb[0].mxu0
        %4741 = vmatprep.mubr.bf16.mxu0 0
        %4742 = vmatmul.mubr.bf16.gmra.mrb[0].mxu0 %v4586
        %v4743 = vpop.f32.mrb[0].mxu0
        %v4744 = vadd.f32 0.0, %v4743
        %v4745 = vpop.f32.mrb[0].mxu0
        %v4746 = vpop.f32.mrb[0].mxu0
        %v4747 = vadd.f32 0.0, %v4746
        %v4748 = vpop.f32.mrb[0].mxu0
        %4749 = vmatprep.mubr.bf16.mxu0 0
        %4750 = vmatmul.mubr.bf16.gmra.mrb[0].mxu0 %v4587
        %v4751 = vpop.f32.mrb[0].mxu0
        %v4752 = vadd.f32 0.0, %v4751
        %v4753 = vpop.f32.mrb[0].mxu0
        %v4754 = vpop.f32.mrb[0].mxu0
        %v4755 = vadd.f32 0.0, %v4754
        %v4756 = vpop.f32.mrb[0].mxu0
        %4757 = vmatprep.mubr.bf16.mxu0 0
        %4758 = vmatmul.mubr.bf16.gmra.mrb[0].mxu0 %v4588
        %v4759 = vpop.f32.mrb[0].mxu0
        %v4760 = vadd.f32 0.0, %v4759
        %v4761 = vpop.f32.mrb[0].mxu0
        %v4762 = vpop.f32.mrb[0].mxu0
        %v4763 = vadd.f32 0.0, %v4762
        %v4764 = vpop.f32.mrb[0].mxu0
        %4765 = vmatprep.mubr.bf16.mxu0 0
        %4766 = vmatmul.mubr.bf16.gmra.mrb[0].mxu0 %v4589
        %v4767 = vpop.f32.mrb[0].mxu0
        %v4768 = vadd.f32 0.0, %v4767
        %v4769 = vpop.f32.mrb[0].mxu0
        %v4770 = vpop.f32.mrb[0].mxu0
        %v4771 = vadd.f32 0.0, %v4770
        %v4772 = vpop.f32.mrb[0].mxu0
        %4773 = vmatprep.mubr.bf16.mxu0 0
        %4774 = vmatmul.mubr.bf16.gmra.mrb[0].mxu0 %v4590
        %v4775 = vpop.f32.mrb[0].mxu0
        %v4776 = vadd.f32 0.0, %v4775
        %v4777 = vpop.f32.mrb[0].mxu0
        %v4778 = vpop.f32.mrb[0].mxu0
        %v4779 = vadd.f32 0.0, %v4778
        %v4780 = vpop.f32.mrb[0].mxu0
        %4781 = vmatprep.mubr.bf16.mxu0 0
        %4782 = vmatmul.mubr.bf16.gmra.mrb[0].mxu0 %v4591
        %v4783 = vpop.f32.mrb[0].mxu0
        %v4784 = vadd.f32 0.0, %v4783
        %v4785 = vpop.f32.mrb[0].mxu0
        %v4786 = vpop.f32.mrb[0].mxu0
        %v4787 = vadd.f32 0.0, %v4786
        %v4788 = vpop.f32.mrb[0].mxu0
        %4789 = vmatprep.mubr.bf16.mxu0 0
        %4790 = vmatmul.mubr.bf16.gmra.mrb[0].mxu0 %v4592
        %v4791 = vpop.f32.mrb[0].mxu0
        %v4792 = vadd.f32 0.0, %v4791
        %v4793 = vpop.f32.mrb[0].mxu0
        %v4794 = vpop.f32.mrb[0].mxu0
        %v4795 = vadd.f32 0.0, %v4794
        %v4796 = vpop.f32.mrb[0].mxu0
        %4797 = vmatprep.mubr.bf16.mxu0 0
        %4798 = vmatmul.mubr.bf16.gmra.mrb[0].mxu0 %v4593
        %v4799 = vpop.f32.mrb[0].mxu0
        %v4800 = vadd.f32 0.0, %v4799
        %v4801 = vpop.f32.mrb[0].mxu0
        %v4802 = vpop.f32.mrb[0].mxu0
        %v4803 = vadd.f32 0.0, %v4802
        %v4804 = vpop.f32.mrb[0].mxu0
        %4805 = vmatprep.mubr.bf16.mxu0 0
        %4806 = vmatmul.mubr.bf16.gmra.mrb[0].mxu0 %v4594
        %v4807 = vpop.f32.mrb[0].mxu0
        %v4808 = vadd.f32 0.0, %v4807
        %v4809 = vpop.f32.mrb[0].mxu0
        %v4810 = vpop.f32.mrb[0].mxu0
        %v4811 = vadd.f32 0.0, %v4810
        %v4812 = vpop.f32.mrb[0].mxu0
        %4813 = vmatprep.mubr.bf16.mxu0 0
        %4814 = vmatmul.mubr.bf16.gmra.mrb[0].mxu0 %v4595
        %v4815 = vpop.f32.mrb[0].mxu0
        %v4816 = vadd.f32 0.0, %v4815
        %v4817 = vpop.f32.mrb[0].mxu0
        %v4818 = vpop.f32.mrb[0].mxu0
        %v4819 = vadd.f32 0.0, %v4818
        %v4820 = vpop.f32.mrb[0].mxu0
        %4821 = vdwg.mxu0
        %v4822 = vadd.f32 %v4390, %v4696
        %v4823 = vadd.f32 %v4393, %v4699
        %v4824 = vadd.f32 %v4398, %v4704
        %v4825 = vadd.f32 %v4401, %v4707
        %v4826 = vadd.f32 %v4406, %v4712
        %v4827 = vadd.f32 %v4409, %v4715
        %v4828 = vadd.f32 %v4414, %v4720
        %v4829 = vadd.f32 %v4417, %v4723
        %v4830 = vadd.f32 %v4422, %v4728
        %v4831 = vadd.f32 %v4425, %v4731
        %v4832 = vadd.f32 %v4430, %v4736
        %v4833 = vadd.f32 %v4433, %v4739
        %v4834 = vadd.f32 %v4438, %v4744
        %v4835 = vadd.f32 %v4441, %v4747
        %v4836 = vadd.f32 %v4446, %v4752
        %v4837 = vadd.f32 %v4449, %v4755
        %v4838 = vadd.f32 %v4454, %v4760
        %v4839 = vadd.f32 %v4457, %v4763
        %v4840 = vadd.f32 %v4462, %v4768
        %v4841 = vadd.f32 %v4465, %v4771
        %v4842 = vadd.f32 %v4470, %v4776
        %v4843 = vadd.f32 %v4473, %v4779
        %v4844 = vadd.f32 %v4478, %v4784
        %v4845 = vadd.f32 %v4481, %v4787
        %v4846 = vadd.f32 %v4486, %v4792
        %v4847 = vadd.f32 %v4489, %v4795
        %v4848 = vadd.f32 %v4494, %v4800
        %v4849 = vadd.f32 %v4497, %v4803
        %v4850 = vadd.f32 %v4502, %v4808
        %v4851 = vadd.f32 %v4505, %v4811
        %v4852 = vadd.f32 %v4510, %v4816
        %v4853 = vadd.f32 %v4513, %v4819
        %v4854 = vld [vmem:[#allocation3 + $0x17] sm:$0xff]
        %v4855 = vld [vmem:[#allocation3 + $0x1f] sm:$0xff]
        %v4856 = vld [vmem:[#allocation3 + $0x27] sm:$0xff]
        %v4857 = vld [vmem:[#allocation3 + $0x2f] sm:$0xff]
        %v4858 = vld [vmem:[#allocation3 + $0x37] sm:$0xff]
        %v4859 = vld [vmem:[#allocation3 + $0x3f] sm:$0xff]
        %v4860 = vld [vmem:[#allocation3 + $0x47] sm:$0xff]
        %v4861 = vld [vmem:[#allocation3 + $0x4f] sm:$0xff]
        %v4862 = vld [vmem:[#allocation3 + $0x57] sm:$0xff]
        %v4863 = vld [vmem:[#allocation3 + $0x5f] sm:$0xff]
        %v4864 = vld [vmem:[#allocation3 + $0x67] sm:$0xff]
        %v4865 = vld [vmem:[#allocation3 + $0x6f] sm:$0xff]
        %v4866 = vld [vmem:[#allocation3 + $0x77] sm:$0xff]
        %v4867 = vld [vmem:[#allocation3 + $0x7f] sm:$0xff]
        %v4868 = vld [vmem:[#allocation3 + $0x87] sm:$0xff]
        %v4869 = vld [vmem:[#allocation3 + $0x8f] sm:$0xff]
        %v4870 = vld [vmem:[#allocation3 + $0x97] sm:$0xff]
        %v4871 = vld [vmem:[#allocation3 + $0x9f] sm:$0xff]
        %v4872 = vld [vmem:[#allocation3 + $0xa7] sm:$0xff]
        %v4873 = vld [vmem:[#allocation3 + $0xaf] sm:$0xff]
        %v4874 = vld [vmem:[#allocation3 + $0xb7] sm:$0xff]
        %v4875 = vld [vmem:[#allocation3 + $0xbf] sm:$0xff]
        %v4876 = vld [vmem:[#allocation3 + $0xc7] sm:$0xff]
        %v4877 = vld [vmem:[#allocation3 + $0xcf] sm:$0xff]
        %v4878 = vld [vmem:[#allocation3 + $0xd7] sm:$0xff]
        %v4879 = vld [vmem:[#allocation3 + $0xdf] sm:$0xff]
        %v4880 = vld [vmem:[#allocation3 + $0xe7] sm:$0xff]
        %v4881 = vld [vmem:[#allocation3 + $0xef] sm:$0xff]
        %v4882 = vld [vmem:[#allocation3 + $0xf7] sm:$0xff]
        %v4883 = vld [vmem:[#allocation3 + $0xff] sm:$0xff]
        %v4884 = vld [vmem:[#allocation3 + $0x107] sm:$0xff]
        %v4885 = vld [vmem:[#allocation3 + $0x10f] sm:$0xff]
        %v4886 = vmul.f32 %v4854, %v791
        %v4887 = vmul.f32 %v4855, %v792
        %v4888 = vmul.f32 %v4856, %v793
        %v4889 = vmul.f32 %v4857, %v794
        %v4890 = vmul.f32 %v4858, %v795
        %v4891 = vmul.f32 %v4859, %v796
        %v4892 = vmul.f32 %v4860, %v797
        %v4893 = vmul.f32 %v4861, %v798
        %v4894 = vmul.f32 %v4862, %v799
        %v4895 = vmul.f32 %v4863, %v800
        %v4896 = vmul.f32 %v4864, %v801
        %v4897 = vmul.f32 %v4865, %v802
        %v4898 = vmul.f32 %v4866, %v803
        %v4899 = vmul.f32 %v4867, %v804
        %v4900 = vmul.f32 %v4868, %v805
        %v4901 = vmul.f32 %v4869, %v806
        %v4902 = vmul.f32 %v4870, %v807
        %v4903 = vmul.f32 %v4871, %v808
        %v4904 = vmul.f32 %v4872, %v809
        %v4905 = vmul.f32 %v4873, %v810
        %v4906 = vmul.f32 %v4874, %v811
        %v4907 = vmul.f32 %v4875, %v812
        %v4908 = vmul.f32 %v4876, %v813
        %v4909 = vmul.f32 %v4877, %v814
        %v4910 = vmul.f32 %v4878, %v815
        %v4911 = vmul.f32 %v4879, %v816
        %v4912 = vmul.f32 %v4880, %v817
        %v4913 = vmul.f32 %v4881, %v818
        %v4914 = vmul.f32 %v4882, %v819
        %v4915 = vmul.f32 %v4883, %v820
        %v4916 = vmul.f32 %v4884, %v821
        %v4917 = vmul.f32 %v4885, %v822
        %v4918 = vpack.c.bf16 %v4887, %v4886
        %v4919 = vpack.c.bf16 %v4889, %v4888
        %v4920 = vpack.c.bf16 %v4891, %v4890
        %v4921 = vpack.c.bf16 %v4893, %v4892
        %v4922 = vpack.c.bf16 %v4895, %v4894
        %v4923 = vpack.c.bf16 %v4897, %v4896
        %v4924 = vpack.c.bf16 %v4899, %v4898
        %v4925 = vpack.c.bf16 %v4901, %v4900
        %v4926 = vpack.c.bf16 %v4903, %v4902
        %v4927 = vpack.c.bf16 %v4905, %v4904
        %v4928 = vpack.c.bf16 %v4907, %v4906
        %v4929 = vpack.c.bf16 %v4909, %v4908
        %v4930 = vpack.c.bf16 %v4911, %v4910
        %v4931 = vpack.c.bf16 %v4913, %v4912
        %v4932 = vpack.c.bf16 %v4915, %v4914
        %v4933 = vpack.c.bf16 %v4917, %v4916
        %s4934 = scalar_lea.vmem %s3, 192
        %v4935 = vld [vmem:[%s4934] sm:$0xf]
        %v4936 = vld [vmem:[%s4934 + $0x4] sm:$0xf]
        %v4937 = vld [vmem:[%s4934 + $0x8] sm:$0xf]
        %v4938 = vld [vmem:[%s4934 + $0xc] sm:$0xf]
        %v4939 = vld [vmem:[%s4934 + $0x10] sm:$0xf]
        %v4940 = vld [vmem:[%s4934 + $0x14] sm:$0xf]
        %v4941 = vld [vmem:[%s4934 + $0x18] sm:$0xf]
        %v4942 = vld [vmem:[%s4934 + $0x1c] sm:$0xf]
        %v4943 = vld [vmem:[%s4934 + $0x20] sm:$0xf]
        %v4944 = vld [vmem:[%s4934 + $0x24] sm:$0xf]
        %v4945 = vld [vmem:[%s4934 + $0x28] sm:$0xf]
        %v4946 = vld [vmem:[%s4934 + $0x2c] sm:$0xf]
        %v4947 = vld [vmem:[%s4934 + $0x30] sm:$0xf]
        %v4948 = vld [vmem:[%s4934 + $0x34] sm:$0xf]
        %v4949 = vld [vmem:[%s4934 + $0x38] sm:$0xf]
        %v4950 = vld [vmem:[%s4934 + $0x3c] sm:$0xf]
        %v4967 = vunpack.c.l.b16 %v4935
        %v4968 = vunpack.c.l.b16 %v4936
        %v4969 = vunpack.c.l.b16 %v4937
        %v4970 = vunpack.c.l.b16 %v4938
        %v4971 = vunpack.c.l.b16 %v4939
        %v4972 = vunpack.c.l.b16 %v4940
        %v4973 = vunpack.c.l.b16 %v4941
        %v4974 = vunpack.c.l.b16 %v4942
        %v4975 = vunpack.c.l.b16 %v4943
        %v4976 = vunpack.c.l.b16 %v4944
        %v4977 = vunpack.c.l.b16 %v4945
        %v4978 = vunpack.c.l.b16 %v4946
        %v4979 = vunpack.c.l.b16 %v4947
        %v4980 = vunpack.c.l.b16 %v4948
        %v4981 = vunpack.c.l.b16 %v4949
        %v4982 = vunpack.c.l.b16 %v4950
        %v4983 = vpack.c.b16 %v4968, %v4967
        %v4984 = vpack.c.b16 %v4970, %v4969
        %v4985 = vpack.c.b16 %v4972, %v4971
        %v4986 = vpack.c.b16 %v4974, %v4973
        %v4987 = vpack.c.b16 %v4976, %v4975
        %v4988 = vpack.c.b16 %v4978, %v4977
        %v4989 = vpack.c.b16 %v4980, %v4979
        %v4990 = vpack.c.b16 %v4982, %v4981
        %4999 = vmatprep.subr.bf16.mxu0 0
        %5000 = vmatpush1.bf16.msra.mxu0 %v4983
        %5001 = vmatprep.subr.bf16.mxu0 0
        %5002 = vmatpush1.bf16.msra.mxu0 %v4984
        %5003 = vmatprep.subr.bf16.mxu0 0
        %5004 = vmatpush1.bf16.msra.mxu0 %v4985
        %5005 = vmatprep.subr.bf16.mxu0 0
        %5006 = vmatpush1.bf16.msra.mxu0 %v4986
        %5007 = vmatprep.subr.bf16.mxu0 0
        %5008 = vmatpush1.bf16.msra.mxu0 %v4987
        %5009 = vmatprep.subr.bf16.mxu0 0
        %5010 = vmatpush1.bf16.msra.mxu0 %v4988
        %5011 = vmatprep.subr.bf16.mxu0 0
        %5012 = vmatpush1.bf16.msra.mxu0 %v4989
        %5013 = vmatprep.subr.bf16.mxu0 0
        %5014 = vmatpush1.bf16.msra.mxu0 %v4990
        %5015 = vmatprep.subr.bf16.mxu0 0
        %5016 = vmatpush1.bf16.msra.mxu0 0
        %5017 = vmatprep.subr.bf16.mxu0 0
        %5018 = vmatpush1.bf16.msra.mxu0 0
        %5019 = vmatprep.subr.bf16.mxu0 0
        %5020 = vmatpush1.bf16.msra.mxu0 0
        %5021 = vmatprep.subr.bf16.mxu0 0
        %5022 = vmatpush1.bf16.msra.mxu0 0
        %5023 = vmatprep.subr.bf16.mxu0 0
        %5024 = vmatpush1.bf16.msra.mxu0 0
        %5025 = vmatprep.subr.bf16.mxu0 0
        %5026 = vmatpush1.bf16.msra.mxu0 0
        %5027 = vmatprep.subr.bf16.mxu0 0
        %5028 = vmatpush1.bf16.msra.mxu0 0
        %5029 = vmatprep.subr.bf16.mxu0 0
        %5030 = vmatpush1.bf16.msra.mxu0 0
        %5031 = vmatprep.mubr.bf16.mxu0 0
        %5032 = vmatmul.mubr.bf16.gmra.mrb[0].mxu0 %v4918
        %v5033 = vpop.f32.mrb[0].mxu0
        %v5034 = vadd.f32 0.0, %v5033
        %v5035 = vpop.f32.mrb[0].mxu0
        %v5036 = vpop.f32.mrb[0].mxu0
        %v5037 = vadd.f32 0.0, %v5036
        %v5038 = vpop.f32.mrb[0].mxu0
        %5039 = vmatprep.mubr.bf16.mxu0 0
        %5040 = vmatmul.mubr.bf16.gmra.mrb[0].mxu0 %v4919
        %v5041 = vpop.f32.mrb[0].mxu0
        %v5042 = vadd.f32 0.0, %v5041
        %v5043 = vpop.f32.mrb[0].mxu0
        %v5044 = vpop.f32.mrb[0].mxu0
        %v5045 = vadd.f32 0.0, %v5044
        %v5046 = vpop.f32.mrb[0].mxu0
        %5047 = vmatprep.mubr.bf16.mxu0 0
        %5048 = vmatmul.mubr.bf16.gmra.mrb[0].mxu0 %v4920
        %v5049 = vpop.f32.mrb[0].mxu0
        %v5050 = vadd.f32 0.0, %v5049
        %v5051 = vpop.f32.mrb[0].mxu0
        %v5052 = vpop.f32.mrb[0].mxu0
        %v5053 = vadd.f32 0.0, %v5052
        %v5054 = vpop.f32.mrb[0].mxu0
        %5055 = vmatprep.mubr.bf16.mxu0 0
        %5056 = vmatmul.mubr.bf16.gmra.mrb[0].mxu0 %v4921
        %v5057 = vpop.f32.mrb[0].mxu0
        %v5058 = vadd.f32 0.0, %v5057
        %v5059 = vpop.f32.mrb[0].mxu0
        %v5060 = vpop.f32.mrb[0].mxu0
        %v5061 = vadd.f32 0.0, %v5060
        %v5062 = vpop.f32.mrb[0].mxu0
        %5063 = vmatprep.mubr.bf16.mxu0 0
        %5064 = vmatmul.mubr.bf16.gmra.mrb[0].mxu0 %v4922
        %v5065 = vpop.f32.mrb[0].mxu0
        %v5066 = vadd.f32 0.0, %v5065
        %v5067 = vpop.f32.mrb[0].mxu0
        %v5068 = vpop.f32.mrb[0].mxu0
        %v5069 = vadd.f32 0.0, %v5068
        %v5070 = vpop.f32.mrb[0].mxu0
        %5071 = vmatprep.mubr.bf16.mxu0 0
        %5072 = vmatmul.mubr.bf16.gmra.mrb[0].mxu0 %v4923
        %v5073 = vpop.f32.mrb[0].mxu0
        %v5074 = vadd.f32 0.0, %v5073
        %v5075 = vpop.f32.mrb[0].mxu0
        %v5076 = vpop.f32.mrb[0].mxu0
        %v5077 = vadd.f32 0.0, %v5076
        %v5078 = vpop.f32.mrb[0].mxu0
        %5079 = vmatprep.mubr.bf16.mxu0 0
        %5080 = vmatmul.mubr.bf16.gmra.mrb[0].mxu0 %v4924
        %v5081 = vpop.f32.mrb[0].mxu0
        %v5082 = vadd.f32 0.0, %v5081
        %v5083 = vpop.f32.mrb[0].mxu0
        %v5084 = vpop.f32.mrb[0].mxu0
        %v5085 = vadd.f32 0.0, %v5084
        %v5086 = vpop.f32.mrb[0].mxu0
        %5087 = vmatprep.mubr.bf16.mxu0 0
        %5088 = vmatmul.mubr.bf16.gmra.mrb[0].mxu0 %v4925
        %v5089 = vpop.f32.mrb[0].mxu0
        %v5090 = vadd.f32 0.0, %v5089
        %v5091 = vpop.f32.mrb[0].mxu0
        %v5092 = vpop.f32.mrb[0].mxu0
        %v5093 = vadd.f32 0.0, %v5092
        %v5094 = vpop.f32.mrb[0].mxu0
        %5095 = vmatprep.mubr.bf16.mxu0 0
        %5096 = vmatmul.mubr.bf16.gmra.mrb[0].mxu0 %v4926
        %v5097 = vpop.f32.mrb[0].mxu0
        %v5098 = vadd.f32 0.0, %v5097
        %v5099 = vpop.f32.mrb[0].mxu0
        %v5100 = vpop.f32.mrb[0].mxu0
        %v5101 = vadd.f32 0.0, %v5100
        %v5102 = vpop.f32.mrb[0].mxu0
        %5103 = vmatprep.mubr.bf16.mxu0 0
        %5104 = vmatmul.mubr.bf16.gmra.mrb[0].mxu0 %v4927
        %v5105 = vpop.f32.mrb[0].mxu0
        %v5106 = vadd.f32 0.0, %v5105
        %v5107 = vpop.f32.mrb[0].mxu0
        %v5108 = vpop.f32.mrb[0].mxu0
        %v5109 = vadd.f32 0.0, %v5108
        %v5110 = vpop.f32.mrb[0].mxu0
        %5111 = vmatprep.mubr.bf16.mxu0 0
        %5112 = vmatmul.mubr.bf16.gmra.mrb[0].mxu0 %v4928
        %v5113 = vpop.f32.mrb[0].mxu0
        %v5114 = vadd.f32 0.0, %v5113
        %v5115 = vpop.f32.mrb[0].mxu0
        %v5116 = vpop.f32.mrb[0].mxu0
        %v5117 = vadd.f32 0.0, %v5116
        %v5118 = vpop.f32.mrb[0].mxu0
        %5119 = vmatprep.mubr.bf16.mxu0 0
        %5120 = vmatmul.mubr.bf16.gmra.mrb[0].mxu0 %v4929
        %v5121 = vpop.f32.mrb[0].mxu0
        %v5122 = vadd.f32 0.0, %v5121
        %v5123 = vpop.f32.mrb[0].mxu0
        %v5124 = vpop.f32.mrb[0].mxu0
        %v5125 = vadd.f32 0.0, %v5124
        %v5126 = vpop.f32.mrb[0].mxu0
        %5127 = vmatprep.mubr.bf16.mxu0 0
        %5128 = vmatmul.mubr.bf16.gmra.mrb[0].mxu0 %v4930
        %v5129 = vpop.f32.mrb[0].mxu0
        %v5130 = vadd.f32 0.0, %v5129
        %v5131 = vpop.f32.mrb[0].mxu0
        %v5132 = vpop.f32.mrb[0].mxu0
        %v5133 = vadd.f32 0.0, %v5132
        %v5134 = vpop.f32.mrb[0].mxu0
        %5135 = vmatprep.mubr.bf16.mxu0 0
        %5136 = vmatmul.mubr.bf16.gmra.mrb[0].mxu0 %v4931
        %v5137 = vpop.f32.mrb[0].mxu0
        %v5138 = vadd.f32 0.0, %v5137
        %v5139 = vpop.f32.mrb[0].mxu0
        %v5140 = vpop.f32.mrb[0].mxu0
        %v5141 = vadd.f32 0.0, %v5140
        %v5142 = vpop.f32.mrb[0].mxu0
        %5143 = vmatprep.mubr.bf16.mxu0 0
        %5144 = vmatmul.mubr.bf16.gmra.mrb[0].mxu0 %v4932
        %v5145 = vpop.f32.mrb[0].mxu0
        %v5146 = vadd.f32 0.0, %v5145
        %v5147 = vpop.f32.mrb[0].mxu0
        %v5148 = vpop.f32.mrb[0].mxu0
        %v5149 = vadd.f32 0.0, %v5148
        %v5150 = vpop.f32.mrb[0].mxu0
        %5151 = vmatprep.mubr.bf16.mxu0 0
        %5152 = vmatmul.mubr.bf16.gmra.mrb[0].mxu0 %v4933
        %v5153 = vpop.f32.mrb[0].mxu0
        %v5154 = vadd.f32 0.0, %v5153
        %v5155 = vpop.f32.mrb[0].mxu0
        %v5156 = vpop.f32.mrb[0].mxu0
        %v5157 = vadd.f32 0.0, %v5156
        %v5158 = vpop.f32.mrb[0].mxu0
        %5159 = vdwg.mxu0
        %v5160 = vadd.f32 %v4822, %v5034
        %v5161 = vadd.f32 %v4823, %v5037
        %v5162 = vadd.f32 %v4824, %v5042
        %v5163 = vadd.f32 %v4825, %v5045
        %v5164 = vadd.f32 %v4826, %v5050
        %v5165 = vadd.f32 %v4827, %v5053
        %v5166 = vadd.f32 %v4828, %v5058
        %v5167 = vadd.f32 %v4829, %v5061
        %v5168 = vadd.f32 %v4830, %v5066
        %v5169 = vadd.f32 %v4831, %v5069
        %v5170 = vadd.f32 %v4832, %v5074
        %v5171 = vadd.f32 %v4833, %v5077
        %v5172 = vadd.f32 %v4834, %v5082
        %v5173 = vadd.f32 %v4835, %v5085
        %v5174 = vadd.f32 %v4836, %v5090
        %v5175 = vadd.f32 %v4837, %v5093
        %v5176 = vadd.f32 %v4838, %v5098
        %v5177 = vadd.f32 %v4839, %v5101
        %v5178 = vadd.f32 %v4840, %v5106
        %v5179 = vadd.f32 %v4841, %v5109
        %v5180 = vadd.f32 %v4842, %v5114
        %v5181 = vadd.f32 %v4843, %v5117
        %v5182 = vadd.f32 %v4844, %v5122
        %v5183 = vadd.f32 %v4845, %v5125
        %v5184 = vadd.f32 %v4846, %v5130
        %v5185 = vadd.f32 %v4847, %v5133
        %v5186 = vadd.f32 %v4848, %v5138
        %v5187 = vadd.f32 %v4849, %v5141
        %v5188 = vadd.f32 %v4850, %v5146
        %v5189 = vadd.f32 %v4851, %v5149
        %v5190 = vadd.f32 %v4852, %v5154
        %v5191 = vadd.f32 %v4853, %v5157
        %v5192 = vld [vmem:[#allocation3 + $0x18] sm:$0xff]
        %v5193 = vld [vmem:[#allocation3 + $0x20] sm:$0xff]
        %v5194 = vld [vmem:[#allocation3 + $0x28] sm:$0xff]
        %v5195 = vld [vmem:[#allocation3 + $0x30] sm:$0xff]
        %v5196 = vld [vmem:[#allocation3 + $0x38] sm:$0xff]
        %v5197 = vld [vmem:[#allocation3 + $0x40] sm:$0xff]
        %v5198 = vld [vmem:[#allocation3 + $0x48] sm:$0xff]
        %v5199 = vld [vmem:[#allocation3 + $0x50] sm:$0xff]
        %v5200 = vld [vmem:[#allocation3 + $0x58] sm:$0xff]
        %v5201 = vld [vmem:[#allocation3 + $0x60] sm:$0xff]
        %v5202 = vld [vmem:[#allocation3 + $0x68] sm:$0xff]
        %v5203 = vld [vmem:[#allocation3 + $0x70] sm:$0xff]
        %v5204 = vld [vmem:[#allocation3 + $0x78] sm:$0xff]
        %v5205 = vld [vmem:[#allocation3 + $0x80] sm:$0xff]
        %v5206 = vld [vmem:[#allocation3 + $0x88] sm:$0xff]
        %v5207 = vld [vmem:[#allocation3 + $0x90] sm:$0xff]
        %v5208 = vld [vmem:[#allocation3 + $0x98] sm:$0xff]
        %v5209 = vld [vmem:[#allocation3 + $0xa0] sm:$0xff]
        %v5210 = vld [vmem:[#allocation3 + $0xa8] sm:$0xff]
        %v5211 = vld [vmem:[#allocation3 + $0xb0] sm:$0xff]
        %v5212 = vld [vmem:[#allocation3 + $0xb8] sm:$0xff]
        %v5213 = vld [vmem:[#allocation3 + $0xc0] sm:$0xff]
        %v5214 = vld [vmem:[#allocation3 + $0xc8] sm:$0xff]
        %v5215 = vld [vmem:[#allocation3 + $0xd0] sm:$0xff]
        %v5216 = vld [vmem:[#allocation3 + $0xd8] sm:$0xff]
        %v5217 = vld [vmem:[#allocation3 + $0xe0] sm:$0xff]
        %v5218 = vld [vmem:[#allocation3 + $0xe8] sm:$0xff]
        %v5219 = vld [vmem:[#allocation3 + $0xf0] sm:$0xff]
        %v5220 = vld [vmem:[#allocation3 + $0xf8] sm:$0xff]
        %v5221 = vld [vmem:[#allocation3 + $0x100] sm:$0xff]
        %v5222 = vld [vmem:[#allocation3 + $0x108] sm:$0xff]
        %v5223 = vld [vmem:[#allocation3 + $0x110] sm:$0xff]
        %v5224 = vpack.c.bf16 %v5193, %v5192
        %v5225 = vpack.c.bf16 %v5195, %v5194
        %v5226 = vpack.c.bf16 %v5197, %v5196
        %v5227 = vpack.c.bf16 %v5199, %v5198
        %v5228 = vpack.c.bf16 %v5201, %v5200
        %v5229 = vpack.c.bf16 %v5203, %v5202
        %v5230 = vpack.c.bf16 %v5205, %v5204
        %v5231 = vpack.c.bf16 %v5207, %v5206
        %v5232 = vpack.c.bf16 %v5209, %v5208
        %v5233 = vpack.c.bf16 %v5211, %v5210
        %v5234 = vpack.c.bf16 %v5213, %v5212
        %v5235 = vpack.c.bf16 %v5215, %v5214
        %v5236 = vpack.c.bf16 %v5217, %v5216
        %v5237 = vpack.c.bf16 %v5219, %v5218
        %v5238 = vpack.c.bf16 %v5221, %v5220
        %v5239 = vpack.c.bf16 %v5223, %v5222
        %s5240 = scalar_lea.vmem %s3, 256
        %v5241 = vld [vmem:[%s5240] sm:$0xf]
        %v5242 = vld [vmem:[%s5240 + $0x4] sm:$0xf]
        %v5243 = vld [vmem:[%s5240 + $0x8] sm:$0xf]
        %v5244 = vld [vmem:[%s5240 + $0xc] sm:$0xf]
        %v5245 = vld [vmem:[%s5240 + $0x10] sm:$0xf]
        %v5246 = vld [vmem:[%s5240 + $0x14] sm:$0xf]
        %v5247 = vld [vmem:[%s5240 + $0x18] sm:$0xf]
        %v5248 = vld [vmem:[%s5240 + $0x1c] sm:$0xf]
        %v5249 = vld [vmem:[%s5240 + $0x20] sm:$0xf]
        %v5250 = vld [vmem:[%s5240 + $0x24] sm:$0xf]
        %v5251 = vld [vmem:[%s5240 + $0x28] sm:$0xf]
        %v5252 = vld [vmem:[%s5240 + $0x2c] sm:$0xf]
        %v5253 = vld [vmem:[%s5240 + $0x30] sm:$0xf]
        %v5254 = vld [vmem:[%s5240 + $0x34] sm:$0xf]
        %v5255 = vld [vmem:[%s5240 + $0x38] sm:$0xf]
        %v5256 = vld [vmem:[%s5240 + $0x3c] sm:$0xf]
        %v5273 = vunpack.c.l.b16 %v5241
        %v5274 = vunpack.c.l.b16 %v5242
        %v5275 = vunpack.c.l.b16 %v5243
        %v5276 = vunpack.c.l.b16 %v5244
        %v5277 = vunpack.c.l.b16 %v5245
        %v5278 = vunpack.c.l.b16 %v5246
        %v5279 = vunpack.c.l.b16 %v5247
        %v5280 = vunpack.c.l.b16 %v5248
        %v5281 = vunpack.c.l.b16 %v5249
        %v5282 = vunpack.c.l.b16 %v5250
        %v5283 = vunpack.c.l.b16 %v5251
        %v5284 = vunpack.c.l.b16 %v5252
        %v5285 = vunpack.c.l.b16 %v5253
        %v5286 = vunpack.c.l.b16 %v5254
        %v5287 = vunpack.c.l.b16 %v5255
        %v5288 = vunpack.c.l.b16 %v5256
        %v5289 = vpack.c.b16 %v5274, %v5273
        %v5290 = vpack.c.b16 %v5276, %v5275
        %v5291 = vpack.c.b16 %v5278, %v5277
        %v5292 = vpack.c.b16 %v5280, %v5279
        %v5293 = vpack.c.b16 %v5282, %v5281
        %v5294 = vpack.c.b16 %v5284, %v5283
        %v5295 = vpack.c.b16 %v5286, %v5285
        %v5296 = vpack.c.b16 %v5288, %v5287
        %5305 = vmatprep.subr.bf16.mxu0 0
        %5306 = vmatpush1.bf16.msra.mxu0 %v5289
        %5307 = vmatprep.subr.bf16.mxu0 0
        %5308 = vmatpush1.bf16.msra.mxu0 %v5290
        %5309 = vmatprep.subr.bf16.mxu0 0
        %5310 = vmatpush1.bf16.msra.mxu0 %v5291
        %5311 = vmatprep.subr.bf16.mxu0 0
        %5312 = vmatpush1.bf16.msra.mxu0 %v5292
        %5313 = vmatprep.subr.bf16.mxu0 0
        %5314 = vmatpush1.bf16.msra.mxu0 %v5293
        %5315 = vmatprep.subr.bf16.mxu0 0
        %5316 = vmatpush1.bf16.msra.mxu0 %v5294
        %5317 = vmatprep.subr.bf16.mxu0 0
        %5318 = vmatpush1.bf16.msra.mxu0 %v5295
        %5319 = vmatprep.subr.bf16.mxu0 0
        %5320 = vmatpush1.bf16.msra.mxu0 %v5296
        %5321 = vmatprep.subr.bf16.mxu0 0
        %5322 = vmatpush1.bf16.msra.mxu0 0
        %5323 = vmatprep.subr.bf16.mxu0 0
        %5324 = vmatpush1.bf16.msra.mxu0 0
        %5325 = vmatprep.subr.bf16.mxu0 0
        %5326 = vmatpush1.bf16.msra.mxu0 0
        %5327 = vmatprep.subr.bf16.mxu0 0
        %5328 = vmatpush1.bf16.msra.mxu0 0
        %5329 = vmatprep.subr.bf16.mxu0 0
        %5330 = vmatpush1.bf16.msra.mxu0 0
        %5331 = vmatprep.subr.bf16.mxu0 0
        %5332 = vmatpush1.bf16.msra.mxu0 0
        %5333 = vmatprep.subr.bf16.mxu0 0
        %5334 = vmatpush1.bf16.msra.mxu0 0
        %5335 = vmatprep.subr.bf16.mxu0 0
        %5336 = vmatpush1.bf16.msra.mxu0 0
        %5337 = vmatprep.mubr.bf16.mxu0 0
        %5338 = vmatmul.mubr.bf16.gmra.mrb[0].mxu0 %v5224
        %v5339 = vpop.f32.mrb[0].mxu0
        %v5340 = vadd.f32 0.0, %v5339
        %v5341 = vpop.f32.mrb[0].mxu0
        %v5342 = vpop.f32.mrb[0].mxu0
        %v5343 = vadd.f32 0.0, %v5342
        %v5344 = vpop.f32.mrb[0].mxu0
        %5345 = vmatprep.mubr.bf16.mxu0 0
        %5346 = vmatmul.mubr.bf16.gmra.mrb[0].mxu0 %v5225
        %v5347 = vpop.f32.mrb[0].mxu0
        %v5348 = vadd.f32 0.0, %v5347
        %v5349 = vpop.f32.mrb[0].mxu0
        %v5350 = vpop.f32.mrb[0].mxu0
        %v5351 = vadd.f32 0.0, %v5350
        %v5352 = vpop.f32.mrb[0].mxu0
        %5353 = vmatprep.mubr.bf16.mxu0 0
        %5354 = vmatmul.mubr.bf16.gmra.mrb[0].mxu0 %v5226
        %v5355 = vpop.f32.mrb[0].mxu0
        %v5356 = vadd.f32 0.0, %v5355
        %v5357 = vpop.f32.mrb[0].mxu0
        %v5358 = vpop.f32.mrb[0].mxu0
        %v5359 = vadd.f32 0.0, %v5358
        %v5360 = vpop.f32.mrb[0].mxu0
        %5361 = vmatprep.mubr.bf16.mxu0 0
        %5362 = vmatmul.mubr.bf16.gmra.mrb[0].mxu0 %v5227
        %v5363 = vpop.f32.mrb[0].mxu0
        %v5364 = vadd.f32 0.0, %v5363
        %v5365 = vpop.f32.mrb[0].mxu0
        %v5366 = vpop.f32.mrb[0].mxu0
        %v5367 = vadd.f32 0.0, %v5366
        %v5368 = vpop.f32.mrb[0].mxu0
        %5369 = vmatprep.mubr.bf16.mxu0 0
        %5370 = vmatmul.mubr.bf16.gmra.mrb[0].mxu0 %v5228
        %v5371 = vpop.f32.mrb[0].mxu0
        %v5372 = vadd.f32 0.0, %v5371
        %v5373 = vpop.f32.mrb[0].mxu0
        %v5374 = vpop.f32.mrb[0].mxu0
        %v5375 = vadd.f32 0.0, %v5374
        %v5376 = vpop.f32.mrb[0].mxu0
        %5377 = vmatprep.mubr.bf16.mxu0 0
        %5378 = vmatmul.mubr.bf16.gmra.mrb[0].mxu0 %v5229
        %v5379 = vpop.f32.mrb[0].mxu0
        %v5380 = vadd.f32 0.0, %v5379
        %v5381 = vpop.f32.mrb[0].mxu0
        %v5382 = vpop.f32.mrb[0].mxu0
        %v5383 = vadd.f32 0.0, %v5382
        %v5384 = vpop.f32.mrb[0].mxu0
        %5385 = vmatprep.mubr.bf16.mxu0 0
        %5386 = vmatmul.mubr.bf16.gmra.mrb[0].mxu0 %v5230
        %v5387 = vpop.f32.mrb[0].mxu0
        %v5388 = vadd.f32 0.0, %v5387
        %v5389 = vpop.f32.mrb[0].mxu0
        %v5390 = vpop.f32.mrb[0].mxu0
        %v5391 = vadd.f32 0.0, %v5390
        %v5392 = vpop.f32.mrb[0].mxu0
        %5393 = vmatprep.mubr.bf16.mxu0 0
        %5394 = vmatmul.mubr.bf16.gmra.mrb[0].mxu0 %v5231
        %v5395 = vpop.f32.mrb[0].mxu0
        %v5396 = vadd.f32 0.0, %v5395
        %v5397 = vpop.f32.mrb[0].mxu0
        %v5398 = vpop.f32.mrb[0].mxu0
        %v5399 = vadd.f32 0.0, %v5398
        %v5400 = vpop.f32.mrb[0].mxu0
        %5401 = vmatprep.mubr.bf16.mxu0 0
        %5402 = vmatmul.mubr.bf16.gmra.mrb[0].mxu0 %v5232
        %v5403 = vpop.f32.mrb[0].mxu0
        %v5404 = vadd.f32 0.0, %v5403
        %v5405 = vpop.f32.mrb[0].mxu0
        %v5406 = vpop.f32.mrb[0].mxu0
        %v5407 = vadd.f32 0.0, %v5406
        %v5408 = vpop.f32.mrb[0].mxu0
        %5409 = vmatprep.mubr.bf16.mxu0 0
        %5410 = vmatmul.mubr.bf16.gmra.mrb[0].mxu0 %v5233
        %v5411 = vpop.f32.mrb[0].mxu0
        %v5412 = vadd.f32 0.0, %v5411
        %v5413 = vpop.f32.mrb[0].mxu0
        %v5414 = vpop.f32.mrb[0].mxu0
        %v5415 = vadd.f32 0.0, %v5414
        %v5416 = vpop.f32.mrb[0].mxu0
        %5417 = vmatprep.mubr.bf16.mxu0 0
        %5418 = vmatmul.mubr.bf16.gmra.mrb[0].mxu0 %v5234
        %v5419 = vpop.f32.mrb[0].mxu0
        %v5420 = vadd.f32 0.0, %v5419
        %v5421 = vpop.f32.mrb[0].mxu0
        %v5422 = vpop.f32.mrb[0].mxu0
        %v5423 = vadd.f32 0.0, %v5422
        %v5424 = vpop.f32.mrb[0].mxu0
        %5425 = vmatprep.mubr.bf16.mxu0 0
        %5426 = vmatmul.mubr.bf16.gmra.mrb[0].mxu0 %v5235
        %v5427 = vpop.f32.mrb[0].mxu0
        %v5428 = vadd.f32 0.0, %v5427
        %v5429 = vpop.f32.mrb[0].mxu0
        %v5430 = vpop.f32.mrb[0].mxu0
        %v5431 = vadd.f32 0.0, %v5430
        %v5432 = vpop.f32.mrb[0].mxu0
        %5433 = vmatprep.mubr.bf16.mxu0 0
        %5434 = vmatmul.mubr.bf16.gmra.mrb[0].mxu0 %v5236
        %v5435 = vpop.f32.mrb[0].mxu0
        %v5436 = vadd.f32 0.0, %v5435
        %v5437 = vpop.f32.mrb[0].mxu0
        %v5438 = vpop.f32.mrb[0].mxu0
        %v5439 = vadd.f32 0.0, %v5438
        %v5440 = vpop.f32.mrb[0].mxu0
        %5441 = vmatprep.mubr.bf16.mxu0 0
        %5442 = vmatmul.mubr.bf16.gmra.mrb[0].mxu0 %v5237
        %v5443 = vpop.f32.mrb[0].mxu0
        %v5444 = vadd.f32 0.0, %v5443
        %v5445 = vpop.f32.mrb[0].mxu0
        %v5446 = vpop.f32.mrb[0].mxu0
        %v5447 = vadd.f32 0.0, %v5446
        %v5448 = vpop.f32.mrb[0].mxu0
        %5449 = vmatprep.mubr.bf16.mxu0 0
        %5450 = vmatmul.mubr.bf16.gmra.mrb[0].mxu0 %v5238
        %v5451 = vpop.f32.mrb[0].mxu0
        %v5452 = vadd.f32 0.0, %v5451
        %v5453 = vpop.f32.mrb[0].mxu0
        %v5454 = vpop.f32.mrb[0].mxu0
        %v5455 = vadd.f32 0.0, %v5454
        %v5456 = vpop.f32.mrb[0].mxu0
        %5457 = vmatprep.mubr.bf16.mxu0 0
        %5458 = vmatmul.mubr.bf16.gmra.mrb[0].mxu0 %v5239
        %v5459 = vpop.f32.mrb[0].mxu0
        %v5460 = vadd.f32 0.0, %v5459
        %v5461 = vpop.f32.mrb[0].mxu0
        %v5462 = vpop.f32.mrb[0].mxu0
        %v5463 = vadd.f32 0.0, %v5462
        %v5464 = vpop.f32.mrb[0].mxu0
        %5465 = vdwg.mxu0
        %v5466 = vadd.f32 %v5160, %v5340
        %v5467 = vadd.f32 %v5161, %v5343
        %v5468 = vadd.f32 %v5162, %v5348
        %v5469 = vadd.f32 %v5163, %v5351
        %v5470 = vadd.f32 %v5164, %v5356
        %v5471 = vadd.f32 %v5165, %v5359
        %v5472 = vadd.f32 %v5166, %v5364
        %v5473 = vadd.f32 %v5167, %v5367
        %v5474 = vadd.f32 %v5168, %v5372
        %v5475 = vadd.f32 %v5169, %v5375
        %v5476 = vadd.f32 %v5170, %v5380
        %v5477 = vadd.f32 %v5171, %v5383
        %v5478 = vadd.f32 %v5172, %v5388
        %v5479 = vadd.f32 %v5173, %v5391
        %v5480 = vadd.f32 %v5174, %v5396
        %v5481 = vadd.f32 %v5175, %v5399
        %v5482 = vadd.f32 %v5176, %v5404
        %v5483 = vadd.f32 %v5177, %v5407
        %v5484 = vadd.f32 %v5178, %v5412
        %v5485 = vadd.f32 %v5179, %v5415
        %v5486 = vadd.f32 %v5180, %v5420
        %v5487 = vadd.f32 %v5181, %v5423
        %v5488 = vadd.f32 %v5182, %v5428
        %v5489 = vadd.f32 %v5183, %v5431
        %v5490 = vadd.f32 %v5184, %v5436
        %v5491 = vadd.f32 %v5185, %v5439
        %v5492 = vadd.f32 %v5186, %v5444
        %v5493 = vadd.f32 %v5187, %v5447
        %v5494 = vadd.f32 %v5188, %v5452
        %v5495 = vadd.f32 %v5189, %v5455
        %v5496 = vadd.f32 %v5190, %v5460
        %v5497 = vadd.f32 %v5191, %v5463
        %v5498 = vld [vmem:[#allocation3 + $0x19] sm:$0xff]
        %v5499 = vld [vmem:[#allocation3 + $0x21] sm:$0xff]
        %v5500 = vld [vmem:[#allocation3 + $0x29] sm:$0xff]
        %v5501 = vld [vmem:[#allocation3 + $0x31] sm:$0xff]
        %v5502 = vld [vmem:[#allocation3 + $0x39] sm:$0xff]
        %v5503 = vld [vmem:[#allocation3 + $0x41] sm:$0xff]
        %v5504 = vld [vmem:[#allocation3 + $0x49] sm:$0xff]
        %v5505 = vld [vmem:[#allocation3 + $0x51] sm:$0xff]
        %v5506 = vld [vmem:[#allocation3 + $0x59] sm:$0xff]
        %v5507 = vld [vmem:[#allocation3 + $0x61] sm:$0xff]
        %v5508 = vld [vmem:[#allocation3 + $0x69] sm:$0xff]
        %v5509 = vld [vmem:[#allocation3 + $0x71] sm:$0xff]
        %v5510 = vld [vmem:[#allocation3 + $0x79] sm:$0xff]
        %v5511 = vld [vmem:[#allocation3 + $0x81] sm:$0xff]
        %v5512 = vld [vmem:[#allocation3 + $0x89] sm:$0xff]
        %v5513 = vld [vmem:[#allocation3 + $0x91] sm:$0xff]
        %v5514 = vld [vmem:[#allocation3 + $0x99] sm:$0xff]
        %v5515 = vld [vmem:[#allocation3 + $0xa1] sm:$0xff]
        %v5516 = vld [vmem:[#allocation3 + $0xa9] sm:$0xff]
        %v5517 = vld [vmem:[#allocation3 + $0xb1] sm:$0xff]
        %v5518 = vld [vmem:[#allocation3 + $0xb9] sm:$0xff]
        %v5519 = vld [vmem:[#allocation3 + $0xc1] sm:$0xff]
        %v5520 = vld [vmem:[#allocation3 + $0xc9] sm:$0xff]
        %v5521 = vld [vmem:[#allocation3 + $0xd1] sm:$0xff]
        %v5522 = vld [vmem:[#allocation3 + $0xd9] sm:$0xff]
        %v5523 = vld [vmem:[#allocation3 + $0xe1] sm:$0xff]
        %v5524 = vld [vmem:[#allocation3 + $0xe9] sm:$0xff]
        %v5525 = vld [vmem:[#allocation3 + $0xf1] sm:$0xff]
        %v5526 = vld [vmem:[#allocation3 + $0xf9] sm:$0xff]
        %v5527 = vld [vmem:[#allocation3 + $0x101] sm:$0xff]
        %v5528 = vld [vmem:[#allocation3 + $0x109] sm:$0xff]
        %v5529 = vld [vmem:[#allocation3 + $0x111] sm:$0xff]
        %v5530 = vmul.f32 %v5498, %v887
        %v5531 = vmul.f32 %v5499, %v888
        %v5532 = vmul.f32 %v5500, %v889
        %v5533 = vmul.f32 %v5501, %v890
        %v5534 = vmul.f32 %v5502, %v891
        %v5535 = vmul.f32 %v5503, %v892
        %v5536 = vmul.f32 %v5504, %v893
        %v5537 = vmul.f32 %v5505, %v894
        %v5538 = vmul.f32 %v5506, %v895
        %v5539 = vmul.f32 %v5507, %v896
        %v5540 = vmul.f32 %v5508, %v897
        %v5541 = vmul.f32 %v5509, %v898
        %v5542 = vmul.f32 %v5510, %v899
        %v5543 = vmul.f32 %v5511, %v900
        %v5544 = vmul.f32 %v5512, %v901
        %v5545 = vmul.f32 %v5513, %v902
        %v5546 = vmul.f32 %v5514, %v903
        %v5547 = vmul.f32 %v5515, %v904
        %v5548 = vmul.f32 %v5516, %v905
        %v5549 = vmul.f32 %v5517, %v906
        %v5550 = vmul.f32 %v5518, %v907
        %v5551 = vmul.f32 %v5519, %v908
        %v5552 = vmul.f32 %v5520, %v909
        %v5553 = vmul.f32 %v5521, %v910
        %v5554 = vmul.f32 %v5522, %v911
        %v5555 = vmul.f32 %v5523, %v912
        %v5556 = vmul.f32 %v5524, %v913
        %v5557 = vmul.f32 %v5525, %v914
        %v5558 = vmul.f32 %v5526, %v915
        %v5559 = vmul.f32 %v5527, %v916
        %v5560 = vmul.f32 %v5528, %v917
        %v5561 = vmul.f32 %v5529, %v918
        %v5562 = vpack.c.bf16 %v5531, %v5530
        %v5563 = vpack.c.bf16 %v5533, %v5532
        %v5564 = vpack.c.bf16 %v5535, %v5534
        %v5565 = vpack.c.bf16 %v5537, %v5536
        %v5566 = vpack.c.bf16 %v5539, %v5538
        %v5567 = vpack.c.bf16 %v5541, %v5540
        %v5568 = vpack.c.bf16 %v5543, %v5542
        %v5569 = vpack.c.bf16 %v5545, %v5544
        %v5570 = vpack.c.bf16 %v5547, %v5546
        %v5571 = vpack.c.bf16 %v5549, %v5548
        %v5572 = vpack.c.bf16 %v5551, %v5550
        %v5573 = vpack.c.bf16 %v5553, %v5552
        %v5574 = vpack.c.bf16 %v5555, %v5554
        %v5575 = vpack.c.bf16 %v5557, %v5556
        %v5576 = vpack.c.bf16 %v5559, %v5558
        %v5577 = vpack.c.bf16 %v5561, %v5560
        %s5578 = scalar_lea.vmem %s3, 320
        %v5579 = vld [vmem:[%s5578] sm:$0xf]
        %v5580 = vld [vmem:[%s5578 + $0x4] sm:$0xf]
        %v5581 = vld [vmem:[%s5578 + $0x8] sm:$0xf]
        %v5582 = vld [vmem:[%s5578 + $0xc] sm:$0xf]
        %v5583 = vld [vmem:[%s5578 + $0x10] sm:$0xf]
        %v5584 = vld [vmem:[%s5578 + $0x14] sm:$0xf]
        %v5585 = vld [vmem:[%s5578 + $0x18] sm:$0xf]
        %v5586 = vld [vmem:[%s5578 + $0x1c] sm:$0xf]
        %v5587 = vld [vmem:[%s5578 + $0x20] sm:$0xf]
        %v5588 = vld [vmem:[%s5578 + $0x24] sm:$0xf]
        %v5589 = vld [vmem:[%s5578 + $0x28] sm:$0xf]
        %v5590 = vld [vmem:[%s5578 + $0x2c] sm:$0xf]
        %v5591 = vld [vmem:[%s5578 + $0x30] sm:$0xf]
        %v5592 = vld [vmem:[%s5578 + $0x34] sm:$0xf]
        %v5593 = vld [vmem:[%s5578 + $0x38] sm:$0xf]
        %v5594 = vld [vmem:[%s5578 + $0x3c] sm:$0xf]
        %v5611 = vunpack.c.l.b16 %v5579
        %v5612 = vunpack.c.l.b16 %v5580
        %v5613 = vunpack.c.l.b16 %v5581
        %v5614 = vunpack.c.l.b16 %v5582
        %v5615 = vunpack.c.l.b16 %v5583
        %v5616 = vunpack.c.l.b16 %v5584
        %v5617 = vunpack.c.l.b16 %v5585
        %v5618 = vunpack.c.l.b16 %v5586
        %v5619 = vunpack.c.l.b16 %v5587
        %v5620 = vunpack.c.l.b16 %v5588
        %v5621 = vunpack.c.l.b16 %v5589
        %v5622 = vunpack.c.l.b16 %v5590
        %v5623 = vunpack.c.l.b16 %v5591
        %v5624 = vunpack.c.l.b16 %v5592
        %v5625 = vunpack.c.l.b16 %v5593
        %v5626 = vunpack.c.l.b16 %v5594
        %v5627 = vpack.c.b16 %v5612, %v5611
        %v5628 = vpack.c.b16 %v5614, %v5613
        %v5629 = vpack.c.b16 %v5616, %v5615
        %v5630 = vpack.c.b16 %v5618, %v5617
        %v5631 = vpack.c.b16 %v5620, %v5619
        %v5632 = vpack.c.b16 %v5622, %v5621
        %v5633 = vpack.c.b16 %v5624, %v5623
        %v5634 = vpack.c.b16 %v5626, %v5625
        %5643 = vmatprep.subr.bf16.mxu0 0
        %5644 = vmatpush1.bf16.msra.mxu0 %v5627
        %5645 = vmatprep.subr.bf16.mxu0 0
        %5646 = vmatpush1.bf16.msra.mxu0 %v5628
        %5647 = vmatprep.subr.bf16.mxu0 0
        %5648 = vmatpush1.bf16.msra.mxu0 %v5629
        %5649 = vmatprep.subr.bf16.mxu0 0
        %5650 = vmatpush1.bf16.msra.mxu0 %v5630
        %5651 = vmatprep.subr.bf16.mxu0 0
        %5652 = vmatpush1.bf16.msra.mxu0 %v5631
        %5653 = vmatprep.subr.bf16.mxu0 0
        %5654 = vmatpush1.bf16.msra.mxu0 %v5632
        %5655 = vmatprep.subr.bf16.mxu0 0
        %5656 = vmatpush1.bf16.msra.mxu0 %v5633
        %5657 = vmatprep.subr.bf16.mxu0 0
        %5658 = vmatpush1.bf16.msra.mxu0 %v5634
        %5659 = vmatprep.subr.bf16.mxu0 0
        %5660 = vmatpush1.bf16.msra.mxu0 0
        %5661 = vmatprep.subr.bf16.mxu0 0
        %5662 = vmatpush1.bf16.msra.mxu0 0
        %5663 = vmatprep.subr.bf16.mxu0 0
        %5664 = vmatpush1.bf16.msra.mxu0 0
        %5665 = vmatprep.subr.bf16.mxu0 0
        %5666 = vmatpush1.bf16.msra.mxu0 0
        %5667 = vmatprep.subr.bf16.mxu0 0
        %5668 = vmatpush1.bf16.msra.mxu0 0
        %5669 = vmatprep.subr.bf16.mxu0 0
        %5670 = vmatpush1.bf16.msra.mxu0 0
        %5671 = vmatprep.subr.bf16.mxu0 0
        %5672 = vmatpush1.bf16.msra.mxu0 0
        %5673 = vmatprep.subr.bf16.mxu0 0
        %5674 = vmatpush1.bf16.msra.mxu0 0
        %5675 = vmatprep.mubr.bf16.mxu0 0
        %5676 = vmatmul.mubr.bf16.gmra.mrb[0].mxu0 %v5562
        %v5677 = vpop.f32.mrb[0].mxu0
        %v5678 = vadd.f32 0.0, %v5677
        %v5679 = vpop.f32.mrb[0].mxu0
        %v5680 = vpop.f32.mrb[0].mxu0
        %v5681 = vadd.f32 0.0, %v5680
        %v5682 = vpop.f32.mrb[0].mxu0
        %5683 = vmatprep.mubr.bf16.mxu0 0
        %5684 = vmatmul.mubr.bf16.gmra.mrb[0].mxu0 %v5563
        %v5685 = vpop.f32.mrb[0].mxu0
        %v5686 = vadd.f32 0.0, %v5685
        %v5687 = vpop.f32.mrb[0].mxu0
        %v5688 = vpop.f32.mrb[0].mxu0
        %v5689 = vadd.f32 0.0, %v5688
        %v5690 = vpop.f32.mrb[0].mxu0
        %5691 = vmatprep.mubr.bf16.mxu0 0
        %5692 = vmatmul.mubr.bf16.gmra.mrb[0].mxu0 %v5564
        %v5693 = vpop.f32.mrb[0].mxu0
        %v5694 = vadd.f32 0.0, %v5693
        %v5695 = vpop.f32.mrb[0].mxu0
        %v5696 = vpop.f32.mrb[0].mxu0
        %v5697 = vadd.f32 0.0, %v5696
        %v5698 = vpop.f32.mrb[0].mxu0
        %5699 = vmatprep.mubr.bf16.mxu0 0
        %5700 = vmatmul.mubr.bf16.gmra.mrb[0].mxu0 %v5565
        %v5701 = vpop.f32.mrb[0].mxu0
        %v5702 = vadd.f32 0.0, %v5701
        %v5703 = vpop.f32.mrb[0].mxu0
        %v5704 = vpop.f32.mrb[0].mxu0
        %v5705 = vadd.f32 0.0, %v5704
        %v5706 = vpop.f32.mrb[0].mxu0
        %5707 = vmatprep.mubr.bf16.mxu0 0
        %5708 = vmatmul.mubr.bf16.gmra.mrb[0].mxu0 %v5566
        %v5709 = vpop.f32.mrb[0].mxu0
        %v5710 = vadd.f32 0.0, %v5709
        %v5711 = vpop.f32.mrb[0].mxu0
        %v5712 = vpop.f32.mrb[0].mxu0
        %v5713 = vadd.f32 0.0, %v5712
        %v5714 = vpop.f32.mrb[0].mxu0
        %5715 = vmatprep.mubr.bf16.mxu0 0
        %5716 = vmatmul.mubr.bf16.gmra.mrb[0].mxu0 %v5567
        %v5717 = vpop.f32.mrb[0].mxu0
        %v5718 = vadd.f32 0.0, %v5717
        %v5719 = vpop.f32.mrb[0].mxu0
        %v5720 = vpop.f32.mrb[0].mxu0
        %v5721 = vadd.f32 0.0, %v5720
        %v5722 = vpop.f32.mrb[0].mxu0
        %5723 = vmatprep.mubr.bf16.mxu0 0
        %5724 = vmatmul.mubr.bf16.gmra.mrb[0].mxu0 %v5568
        %v5725 = vpop.f32.mrb[0].mxu0
        %v5726 = vadd.f32 0.0, %v5725
        %v5727 = vpop.f32.mrb[0].mxu0
        %v5728 = vpop.f32.mrb[0].mxu0
        %v5729 = vadd.f32 0.0, %v5728
        %v5730 = vpop.f32.mrb[0].mxu0
        %5731 = vmatprep.mubr.bf16.mxu0 0
        %5732 = vmatmul.mubr.bf16.gmra.mrb[0].mxu0 %v5569
        %v5733 = vpop.f32.mrb[0].mxu0
        %v5734 = vadd.f32 0.0, %v5733
        %v5735 = vpop.f32.mrb[0].mxu0
        %v5736 = vpop.f32.mrb[0].mxu0
        %v5737 = vadd.f32 0.0, %v5736
        %v5738 = vpop.f32.mrb[0].mxu0
        %5739 = vmatprep.mubr.bf16.mxu0 0
        %5740 = vmatmul.mubr.bf16.gmra.mrb[0].mxu0 %v5570
        %v5741 = vpop.f32.mrb[0].mxu0
        %v5742 = vadd.f32 0.0, %v5741
        %v5743 = vpop.f32.mrb[0].mxu0
        %v5744 = vpop.f32.mrb[0].mxu0
        %v5745 = vadd.f32 0.0, %v5744
        %v5746 = vpop.f32.mrb[0].mxu0
        %5747 = vmatprep.mubr.bf16.mxu0 0
        %5748 = vmatmul.mubr.bf16.gmra.mrb[0].mxu0 %v5571
        %v5749 = vpop.f32.mrb[0].mxu0
        %v5750 = vadd.f32 0.0, %v5749
        %v5751 = vpop.f32.mrb[0].mxu0
        %v5752 = vpop.f32.mrb[0].mxu0
        %v5753 = vadd.f32 0.0, %v5752
        %v5754 = vpop.f32.mrb[0].mxu0
        %5755 = vmatprep.mubr.bf16.mxu0 0
        %5756 = vmatmul.mubr.bf16.gmra.mrb[0].mxu0 %v5572
        %v5757 = vpop.f32.mrb[0].mxu0
        %v5758 = vadd.f32 0.0, %v5757
        %v5759 = vpop.f32.mrb[0].mxu0
        %v5760 = vpop.f32.mrb[0].mxu0
        %v5761 = vadd.f32 0.0, %v5760
        %v5762 = vpop.f32.mrb[0].mxu0
        %5763 = vmatprep.mubr.bf16.mxu0 0
        %5764 = vmatmul.mubr.bf16.gmra.mrb[0].mxu0 %v5573
        %v5765 = vpop.f32.mrb[0].mxu0
        %v5766 = vadd.f32 0.0, %v5765
        %v5767 = vpop.f32.mrb[0].mxu0
        %v5768 = vpop.f32.mrb[0].mxu0
        %v5769 = vadd.f32 0.0, %v5768
        %v5770 = vpop.f32.mrb[0].mxu0
        %5771 = vmatprep.mubr.bf16.mxu0 0
        %5772 = vmatmul.mubr.bf16.gmra.mrb[0].mxu0 %v5574
        %v5773 = vpop.f32.mrb[0].mxu0
        %v5774 = vadd.f32 0.0, %v5773
        %v5775 = vpop.f32.mrb[0].mxu0
        %v5776 = vpop.f32.mrb[0].mxu0
        %v5777 = vadd.f32 0.0, %v5776
        %v5778 = vpop.f32.mrb[0].mxu0
        %5779 = vmatprep.mubr.bf16.mxu0 0
        %5780 = vmatmul.mubr.bf16.gmra.mrb[0].mxu0 %v5575
        %v5781 = vpop.f32.mrb[0].mxu0
        %v5782 = vadd.f32 0.0, %v5781
        %v5783 = vpop.f32.mrb[0].mxu0
        %v5784 = vpop.f32.mrb[0].mxu0
        %v5785 = vadd.f32 0.0, %v5784
        %v5786 = vpop.f32.mrb[0].mxu0
        %5787 = vmatprep.mubr.bf16.mxu0 0
        %5788 = vmatmul.mubr.bf16.gmra.mrb[0].mxu0 %v5576
        %v5789 = vpop.f32.mrb[0].mxu0
        %v5790 = vadd.f32 0.0, %v5789
        %v5791 = vpop.f32.mrb[0].mxu0
        %v5792 = vpop.f32.mrb[0].mxu0
        %v5793 = vadd.f32 0.0, %v5792
        %v5794 = vpop.f32.mrb[0].mxu0
        %5795 = vmatprep.mubr.bf16.mxu0 0
        %5796 = vmatmul.mubr.bf16.gmra.mrb[0].mxu0 %v5577
        %v5797 = vpop.f32.mrb[0].mxu0
        %v5798 = vadd.f32 0.0, %v5797
        %v5799 = vpop.f32.mrb[0].mxu0
        %v5800 = vpop.f32.mrb[0].mxu0
        %v5801 = vadd.f32 0.0, %v5800
        %v5802 = vpop.f32.mrb[0].mxu0
        %5803 = vdwg.mxu0
        %v5804 = vadd.f32 %v5466, %v5678
        %v5805 = vadd.f32 %v5467, %v5681
        %v5806 = vadd.f32 %v5468, %v5686
        %v5807 = vadd.f32 %v5469, %v5689
        %v5808 = vadd.f32 %v5470, %v5694
        %v5809 = vadd.f32 %v5471, %v5697
        %v5810 = vadd.f32 %v5472, %v5702
        %v5811 = vadd.f32 %v5473, %v5705
        %v5812 = vadd.f32 %v5474, %v5710
        %v5813 = vadd.f32 %v5475, %v5713
        %v5814 = vadd.f32 %v5476, %v5718
        %v5815 = vadd.f32 %v5477, %v5721
        %v5816 = vadd.f32 %v5478, %v5726
        %v5817 = vadd.f32 %v5479, %v5729
        %v5818 = vadd.f32 %v5480, %v5734
        %v5819 = vadd.f32 %v5481, %v5737
        %v5820 = vadd.f32 %v5482, %v5742
        %v5821 = vadd.f32 %v5483, %v5745
        %v5822 = vadd.f32 %v5484, %v5750
        %v5823 = vadd.f32 %v5485, %v5753
        %v5824 = vadd.f32 %v5486, %v5758
        %v5825 = vadd.f32 %v5487, %v5761
        %v5826 = vadd.f32 %v5488, %v5766
        %v5827 = vadd.f32 %v5489, %v5769
        %v5828 = vadd.f32 %v5490, %v5774
        %v5829 = vadd.f32 %v5491, %v5777
        %v5830 = vadd.f32 %v5492, %v5782
        %v5831 = vadd.f32 %v5493, %v5785
        %v5832 = vadd.f32 %v5494, %v5790
        %v5833 = vadd.f32 %v5495, %v5793
        %v5834 = vadd.f32 %v5496, %v5798
        %v5835 = vadd.f32 %v5497, %v5801
        %v5836 = vld [vmem:[#allocation3 + $0x27] sm:$0xff]
        %v5837 = vld [vmem:[#allocation3 + $0x2f] sm:$0xff]
        %v5838 = vld [vmem:[#allocation3 + $0x37] sm:$0xff]
        %v5839 = vld [vmem:[#allocation3 + $0x3f] sm:$0xff]
        %v5840 = vld [vmem:[#allocation3 + $0x47] sm:$0xff]
        %v5841 = vld [vmem:[#allocation3 + $0x4f] sm:$0xff]
        %v5842 = vld [vmem:[#allocation3 + $0x57] sm:$0xff]
        %v5843 = vld [vmem:[#allocation3 + $0x5f] sm:$0xff]
        %v5844 = vld [vmem:[#allocation3 + $0x67] sm:$0xff]
        %v5845 = vld [vmem:[#allocation3 + $0x6f] sm:$0xff]
        %v5846 = vld [vmem:[#allocation3 + $0x77] sm:$0xff]
        %v5847 = vld [vmem:[#allocation3 + $0x7f] sm:$0xff]
        %v5848 = vld [vmem:[#allocation3 + $0x87] sm:$0xff]
        %v5849 = vld [vmem:[#allocation3 + $0x8f] sm:$0xff]
        %v5850 = vld [vmem:[#allocation3 + $0x97] sm:$0xff]
        %v5851 = vld [vmem:[#allocation3 + $0x9f] sm:$0xff]
        %v5852 = vld [vmem:[#allocation3 + $0xa7] sm:$0xff]
        %v5853 = vld [vmem:[#allocation3 + $0xaf] sm:$0xff]
        %v5854 = vld [vmem:[#allocation3 + $0xb7] sm:$0xff]
        %v5855 = vld [vmem:[#allocation3 + $0xbf] sm:$0xff]
        %v5856 = vld [vmem:[#allocation3 + $0xc7] sm:$0xff]
        %v5857 = vld [vmem:[#allocation3 + $0xcf] sm:$0xff]
        %v5858 = vld [vmem:[#allocation3 + $0xd7] sm:$0xff]
        %v5859 = vld [vmem:[#allocation3 + $0xdf] sm:$0xff]
        %v5860 = vld [vmem:[#allocation3 + $0xe7] sm:$0xff]
        %v5861 = vld [vmem:[#allocation3 + $0xef] sm:$0xff]
        %v5862 = vld [vmem:[#allocation3 + $0xf7] sm:$0xff]
        %v5863 = vld [vmem:[#allocation3 + $0xff] sm:$0xff]
        %v5864 = vld [vmem:[#allocation3 + $0x107] sm:$0xff]
        %v5865 = vld [vmem:[#allocation3 + $0x10f] sm:$0xff]
        %v5866 = vld [vmem:[#allocation3 + $0x117] sm:$0xff]
        %v5867 = vld [vmem:[#allocation3 + $0x11f] sm:$0xff]
        %v5868 = vmul.f32 %v5836, %v791
        %v5869 = vmul.f32 %v5837, %v792
        %v5870 = vmul.f32 %v5838, %v793
        %v5871 = vmul.f32 %v5839, %v794
        %v5872 = vmul.f32 %v5840, %v795
        %v5873 = vmul.f32 %v5841, %v796
        %v5874 = vmul.f32 %v5842, %v797
        %v5875 = vmul.f32 %v5843, %v798
        %v5876 = vmul.f32 %v5844, %v799
        %v5877 = vmul.f32 %v5845, %v800
        %v5878 = vmul.f32 %v5846, %v801
        %v5879 = vmul.f32 %v5847, %v802
        %v5880 = vmul.f32 %v5848, %v803
        %v5881 = vmul.f32 %v5849, %v804
        %v5882 = vmul.f32 %v5850, %v805
        %v5883 = vmul.f32 %v5851, %v806
        %v5884 = vmul.f32 %v5852, %v807
        %v5885 = vmul.f32 %v5853, %v808
        %v5886 = vmul.f32 %v5854, %v809
        %v5887 = vmul.f32 %v5855, %v810
        %v5888 = vmul.f32 %v5856, %v811
        %v5889 = vmul.f32 %v5857, %v812
        %v5890 = vmul.f32 %v5858, %v813
        %v5891 = vmul.f32 %v5859, %v814
        %v5892 = vmul.f32 %v5860, %v815
        %v5893 = vmul.f32 %v5861, %v816
        %v5894 = vmul.f32 %v5862, %v817
        %v5895 = vmul.f32 %v5863, %v818
        %v5896 = vmul.f32 %v5864, %v819
        %v5897 = vmul.f32 %v5865, %v820
        %v5898 = vmul.f32 %v5866, %v821
        %v5899 = vmul.f32 %v5867, %v822
        %v5900 = vpack.c.bf16 %v5869, %v5868
        %v5901 = vpack.c.bf16 %v5871, %v5870
        %v5902 = vpack.c.bf16 %v5873, %v5872
        %v5903 = vpack.c.bf16 %v5875, %v5874
        %v5904 = vpack.c.bf16 %v5877, %v5876
        %v5905 = vpack.c.bf16 %v5879, %v5878
        %v5906 = vpack.c.bf16 %v5881, %v5880
        %v5907 = vpack.c.bf16 %v5883, %v5882
        %v5908 = vpack.c.bf16 %v5885, %v5884
        %v5909 = vpack.c.bf16 %v5887, %v5886
        %v5910 = vpack.c.bf16 %v5889, %v5888
        %v5911 = vpack.c.bf16 %v5891, %v5890
        %v5912 = vpack.c.bf16 %v5893, %v5892
        %v5913 = vpack.c.bf16 %v5895, %v5894
        %v5914 = vpack.c.bf16 %v5897, %v5896
        %v5915 = vpack.c.bf16 %v5899, %v5898
        %s5916 = scalar_lea.vmem %s3, 384
        %v5917 = vld [vmem:[%s5916] sm:$0xf]
        %v5918 = vld [vmem:[%s5916 + $0x4] sm:$0xf]
        %v5919 = vld [vmem:[%s5916 + $0x8] sm:$0xf]
        %v5920 = vld [vmem:[%s5916 + $0xc] sm:$0xf]
        %v5921 = vld [vmem:[%s5916 + $0x10] sm:$0xf]
        %v5922 = vld [vmem:[%s5916 + $0x14] sm:$0xf]
        %v5923 = vld [vmem:[%s5916 + $0x18] sm:$0xf]
        %v5924 = vld [vmem:[%s5916 + $0x1c] sm:$0xf]
        %v5925 = vld [vmem:[%s5916 + $0x20] sm:$0xf]
        %v5926 = vld [vmem:[%s5916 + $0x24] sm:$0xf]
        %v5927 = vld [vmem:[%s5916 + $0x28] sm:$0xf]
        %v5928 = vld [vmem:[%s5916 + $0x2c] sm:$0xf]
        %v5929 = vld [vmem:[%s5916 + $0x30] sm:$0xf]
        %v5930 = vld [vmem:[%s5916 + $0x34] sm:$0xf]
        %v5931 = vld [vmem:[%s5916 + $0x38] sm:$0xf]
        %v5932 = vld [vmem:[%s5916 + $0x3c] sm:$0xf]
        %v5949 = vunpack.c.l.b16 %v5917
        %v5950 = vunpack.c.l.b16 %v5918
        %v5951 = vunpack.c.l.b16 %v5919
        %v5952 = vunpack.c.l.b16 %v5920
        %v5953 = vunpack.c.l.b16 %v5921
        %v5954 = vunpack.c.l.b16 %v5922
        %v5955 = vunpack.c.l.b16 %v5923
        %v5956 = vunpack.c.l.b16 %v5924
        %v5957 = vunpack.c.l.b16 %v5925
        %v5958 = vunpack.c.l.b16 %v5926
        %v5959 = vunpack.c.l.b16 %v5927
        %v5960 = vunpack.c.l.b16 %v5928
        %v5961 = vunpack.c.l.b16 %v5929
        %v5962 = vunpack.c.l.b16 %v5930
        %v5963 = vunpack.c.l.b16 %v5931
        %v5964 = vunpack.c.l.b16 %v5932
        %v5965 = vpack.c.b16 %v5950, %v5949
        %v5966 = vpack.c.b16 %v5952, %v5951
        %v5967 = vpack.c.b16 %v5954, %v5953
        %v5968 = vpack.c.b16 %v5956, %v5955
        %v5969 = vpack.c.b16 %v5958, %v5957
        %v5970 = vpack.c.b16 %v5960, %v5959
        %v5971 = vpack.c.b16 %v5962, %v5961
        %v5972 = vpack.c.b16 %v5964, %v5963
        %5981 = vmatprep.subr.bf16.mxu0 0
        %5982 = vmatpush1.bf16.msra.mxu0 %v5965
        %5983 = vmatprep.subr.bf16.mxu0 0
        %5984 = vmatpush1.bf16.msra.mxu0 %v5966
        %5985 = vmatprep.subr.bf16.mxu0 0
        %5986 = vmatpush1.bf16.msra.mxu0 %v5967
        %5987 = vmatprep.subr.bf16.mxu0 0
        %5988 = vmatpush1.bf16.msra.mxu0 %v5968
        %5989 = vmatprep.subr.bf16.mxu0 0
        %5990 = vmatpush1.bf16.msra.mxu0 %v5969
        %5991 = vmatprep.subr.bf16.mxu0 0
        %5992 = vmatpush1.bf16.msra.mxu0 %v5970
        %5993 = vmatprep.subr.bf16.mxu0 0
        %5994 = vmatpush1.bf16.msra.mxu0 %v5971
        %5995 = vmatprep.subr.bf16.mxu0 0
        %5996 = vmatpush1.bf16.msra.mxu0 %v5972
        %5997 = vmatprep.subr.bf16.mxu0 0
        %5998 = vmatpush1.bf16.msra.mxu0 0
        %5999 = vmatprep.subr.bf16.mxu0 0
        %6000 = vmatpush1.bf16.msra.mxu0 0
        %6001 = vmatprep.subr.bf16.mxu0 0
        %6002 = vmatpush1.bf16.msra.mxu0 0
        %6003 = vmatprep.subr.bf16.mxu0 0
        %6004 = vmatpush1.bf16.msra.mxu0 0
        %6005 = vmatprep.subr.bf16.mxu0 0
        %6006 = vmatpush1.bf16.msra.mxu0 0
        %6007 = vmatprep.subr.bf16.mxu0 0
        %6008 = vmatpush1.bf16.msra.mxu0 0
        %6009 = vmatprep.subr.bf16.mxu0 0
        %6010 = vmatpush1.bf16.msra.mxu0 0
        %6011 = vmatprep.subr.bf16.mxu0 0
        %6012 = vmatpush1.bf16.msra.mxu0 0
        %6013 = vmatprep.mubr.bf16.mxu0 0
        %6014 = vmatmul.mubr.bf16.gmra.mrb[0].mxu0 %v5900
        %v6015 = vpop.f32.mrb[0].mxu0
        %v6016 = vadd.f32 0.0, %v6015
        %v6017 = vpop.f32.mrb[0].mxu0
        %v6018 = vpop.f32.mrb[0].mxu0
        %v6019 = vadd.f32 0.0, %v6018
        %v6020 = vpop.f32.mrb[0].mxu0
        %6021 = vmatprep.mubr.bf16.mxu0 0
        %6022 = vmatmul.mubr.bf16.gmra.mrb[0].mxu0 %v5901
        %v6023 = vpop.f32.mrb[0].mxu0
        %v6024 = vadd.f32 0.0, %v6023
        %v6025 = vpop.f32.mrb[0].mxu0
        %v6026 = vpop.f32.mrb[0].mxu0
        %v6027 = vadd.f32 0.0, %v6026
        %v6028 = vpop.f32.mrb[0].mxu0
        %6029 = vmatprep.mubr.bf16.mxu0 0
        %6030 = vmatmul.mubr.bf16.gmra.mrb[0].mxu0 %v5902
        %v6031 = vpop.f32.mrb[0].mxu0
        %v6032 = vadd.f32 0.0, %v6031
        %v6033 = vpop.f32.mrb[0].mxu0
        %v6034 = vpop.f32.mrb[0].mxu0
        %v6035 = vadd.f32 0.0, %v6034
        %v6036 = vpop.f32.mrb[0].mxu0
        %6037 = vmatprep.mubr.bf16.mxu0 0
        %6038 = vmatmul.mubr.bf16.gmra.mrb[0].mxu0 %v5903
        %v6039 = vpop.f32.mrb[0].mxu0
        %v6040 = vadd.f32 0.0, %v6039
        %v6041 = vpop.f32.mrb[0].mxu0
        %v6042 = vpop.f32.mrb[0].mxu0
        %v6043 = vadd.f32 0.0, %v6042
        %v6044 = vpop.f32.mrb[0].mxu0
        %6045 = vmatprep.mubr.bf16.mxu0 0
        %6046 = vmatmul.mubr.bf16.gmra.mrb[0].mxu0 %v5904
        %v6047 = vpop.f32.mrb[0].mxu0
        %v6048 = vadd.f32 0.0, %v6047
        %v6049 = vpop.f32.mrb[0].mxu0
        %v6050 = vpop.f32.mrb[0].mxu0
        %v6051 = vadd.f32 0.0, %v6050
        %v6052 = vpop.f32.mrb[0].mxu0
        %6053 = vmatprep.mubr.bf16.mxu0 0
        %6054 = vmatmul.mubr.bf16.gmra.mrb[0].mxu0 %v5905
        %v6055 = vpop.f32.mrb[0].mxu0
        %v6056 = vadd.f32 0.0, %v6055
        %v6057 = vpop.f32.mrb[0].mxu0
        %v6058 = vpop.f32.mrb[0].mxu0
        %v6059 = vadd.f32 0.0, %v6058
        %v6060 = vpop.f32.mrb[0].mxu0
        %6061 = vmatprep.mubr.bf16.mxu0 0
        %6062 = vmatmul.mubr.bf16.gmra.mrb[0].mxu0 %v5906
        %v6063 = vpop.f32.mrb[0].mxu0
        %v6064 = vadd.f32 0.0, %v6063
        %v6065 = vpop.f32.mrb[0].mxu0
        %v6066 = vpop.f32.mrb[0].mxu0
        %v6067 = vadd.f32 0.0, %v6066
        %v6068 = vpop.f32.mrb[0].mxu0
        %6069 = vmatprep.mubr.bf16.mxu0 0
        %6070 = vmatmul.mubr.bf16.gmra.mrb[0].mxu0 %v5907
        %v6071 = vpop.f32.mrb[0].mxu0
        %v6072 = vadd.f32 0.0, %v6071
        %v6073 = vpop.f32.mrb[0].mxu0
        %v6074 = vpop.f32.mrb[0].mxu0
        %v6075 = vadd.f32 0.0, %v6074
        %v6076 = vpop.f32.mrb[0].mxu0
        %6077 = vmatprep.mubr.bf16.mxu0 0
        %6078 = vmatmul.mubr.bf16.gmra.mrb[0].mxu0 %v5908
        %v6079 = vpop.f32.mrb[0].mxu0
        %v6080 = vadd.f32 0.0, %v6079
        %v6081 = vpop.f32.mrb[0].mxu0
        %v6082 = vpop.f32.mrb[0].mxu0
        %v6083 = vadd.f32 0.0, %v6082
        %v6084 = vpop.f32.mrb[0].mxu0
        %6085 = vmatprep.mubr.bf16.mxu0 0
        %6086 = vmatmul.mubr.bf16.gmra.mrb[0].mxu0 %v5909
        %v6087 = vpop.f32.mrb[0].mxu0
        %v6088 = vadd.f32 0.0, %v6087
        %v6089 = vpop.f32.mrb[0].mxu0
        %v6090 = vpop.f32.mrb[0].mxu0
        %v6091 = vadd.f32 0.0, %v6090
        %v6092 = vpop.f32.mrb[0].mxu0
        %6093 = vmatprep.mubr.bf16.mxu0 0
        %6094 = vmatmul.mubr.bf16.gmra.mrb[0].mxu0 %v5910
        %v6095 = vpop.f32.mrb[0].mxu0
        %v6096 = vadd.f32 0.0, %v6095
        %v6097 = vpop.f32.mrb[0].mxu0
        %v6098 = vpop.f32.mrb[0].mxu0
        %v6099 = vadd.f32 0.0, %v6098
        %v6100 = vpop.f32.mrb[0].mxu0
        %6101 = vmatprep.mubr.bf16.mxu0 0
        %6102 = vmatmul.mubr.bf16.gmra.mrb[0].mxu0 %v5911
        %v6103 = vpop.f32.mrb[0].mxu0
        %v6104 = vadd.f32 0.0, %v6103
        %v6105 = vpop.f32.mrb[0].mxu0
        %v6106 = vpop.f32.mrb[0].mxu0
        %v6107 = vadd.f32 0.0, %v6106
        %v6108 = vpop.f32.mrb[0].mxu0
        %6109 = vmatprep.mubr.bf16.mxu0 0
        %6110 = vmatmul.mubr.bf16.gmra.mrb[0].mxu0 %v5912
        %v6111 = vpop.f32.mrb[0].mxu0
        %v6112 = vadd.f32 0.0, %v6111
        %v6113 = vpop.f32.mrb[0].mxu0
        %v6114 = vpop.f32.mrb[0].mxu0
        %v6115 = vadd.f32 0.0, %v6114
        %v6116 = vpop.f32.mrb[0].mxu0
        %6117 = vmatprep.mubr.bf16.mxu0 0
        %6118 = vmatmul.mubr.bf16.gmra.mrb[0].mxu0 %v5913
        %v6119 = vpop.f32.mrb[0].mxu0
        %v6120 = vadd.f32 0.0, %v6119
        %v6121 = vpop.f32.mrb[0].mxu0
        %v6122 = vpop.f32.mrb[0].mxu0
        %v6123 = vadd.f32 0.0, %v6122
        %v6124 = vpop.f32.mrb[0].mxu0
        %6125 = vmatprep.mubr.bf16.mxu0 0
        %6126 = vmatmul.mubr.bf16.gmra.mrb[0].mxu0 %v5914
        %v6127 = vpop.f32.mrb[0].mxu0
        %v6128 = vadd.f32 0.0, %v6127
        %v6129 = vpop.f32.mrb[0].mxu0
        %v6130 = vpop.f32.mrb[0].mxu0
        %v6131 = vadd.f32 0.0, %v6130
        %v6132 = vpop.f32.mrb[0].mxu0
        %6133 = vmatprep.mubr.bf16.mxu0 0
        %6134 = vmatmul.mubr.bf16.gmra.mrb[0].mxu0 %v5915
        %v6135 = vpop.f32.mrb[0].mxu0
        %v6136 = vadd.f32 0.0, %v6135
        %v6137 = vpop.f32.mrb[0].mxu0
        %v6138 = vpop.f32.mrb[0].mxu0
        %v6139 = vadd.f32 0.0, %v6138
        %v6140 = vpop.f32.mrb[0].mxu0
        %6141 = vdwg.mxu0
        %v6142 = vadd.f32 %v5804, %v6016
        %v6143 = vadd.f32 %v5805, %v6019
        %v6144 = vadd.f32 %v5806, %v6024
        %v6145 = vadd.f32 %v5807, %v6027
        %v6146 = vadd.f32 %v5808, %v6032
        %v6147 = vadd.f32 %v5809, %v6035
        %v6148 = vadd.f32 %v5810, %v6040
        %v6149 = vadd.f32 %v5811, %v6043
        %v6150 = vadd.f32 %v5812, %v6048
        %v6151 = vadd.f32 %v5813, %v6051
        %v6152 = vadd.f32 %v5814, %v6056
        %v6153 = vadd.f32 %v5815, %v6059
        %v6154 = vadd.f32 %v5816, %v6064
        %v6155 = vadd.f32 %v5817, %v6067
        %v6156 = vadd.f32 %v5818, %v6072
        %v6157 = vadd.f32 %v5819, %v6075
        %v6158 = vadd.f32 %v5820, %v6080
        %v6159 = vadd.f32 %v5821, %v6083
        %v6160 = vadd.f32 %v5822, %v6088
        %v6161 = vadd.f32 %v5823, %v6091
        %v6162 = vadd.f32 %v5824, %v6096
        %v6163 = vadd.f32 %v5825, %v6099
        %v6164 = vadd.f32 %v5826, %v6104
        %v6165 = vadd.f32 %v5827, %v6107
        %v6166 = vadd.f32 %v5828, %v6112
        %v6167 = vadd.f32 %v5829, %v6115
        %v6168 = vadd.f32 %v5830, %v6120
        %v6169 = vadd.f32 %v5831, %v6123
        %v6170 = vadd.f32 %v5832, %v6128
        %v6171 = vadd.f32 %v5833, %v6131
        %v6172 = vadd.f32 %v5834, %v6136
        %v6173 = vadd.f32 %v5835, %v6139
        %v6174 = vld [vmem:[#allocation3 + $0x28] sm:$0xff]
        %v6175 = vld [vmem:[#allocation3 + $0x30] sm:$0xff]
        %v6176 = vld [vmem:[#allocation3 + $0x38] sm:$0xff]
        %v6177 = vld [vmem:[#allocation3 + $0x40] sm:$0xff]
        %v6178 = vld [vmem:[#allocation3 + $0x48] sm:$0xff]
        %v6179 = vld [vmem:[#allocation3 + $0x50] sm:$0xff]
        %v6180 = vld [vmem:[#allocation3 + $0x58] sm:$0xff]
        %v6181 = vld [vmem:[#allocation3 + $0x60] sm:$0xff]
        %v6182 = vld [vmem:[#allocation3 + $0x68] sm:$0xff]
        %v6183 = vld [vmem:[#allocation3 + $0x70] sm:$0xff]
        %v6184 = vld [vmem:[#allocation3 + $0x78] sm:$0xff]
        %v6185 = vld [vmem:[#allocation3 + $0x80] sm:$0xff]
        %v6186 = vld [vmem:[#allocation3 + $0x88] sm:$0xff]
        %v6187 = vld [vmem:[#allocation3 + $0x90] sm:$0xff]
        %v6188 = vld [vmem:[#allocation3 + $0x98] sm:$0xff]
        %v6189 = vld [vmem:[#allocation3 + $0xa0] sm:$0xff]
        %v6190 = vld [vmem:[#allocation3 + $0xa8] sm:$0xff]
        %v6191 = vld [vmem:[#allocation3 + $0xb0] sm:$0xff]
        %v6192 = vld [vmem:[#allocation3 + $0xb8] sm:$0xff]
        %v6193 = vld [vmem:[#allocation3 + $0xc0] sm:$0xff]
        %v6194 = vld [vmem:[#allocation3 + $0xc8] sm:$0xff]
        %v6195 = vld [vmem:[#allocation3 + $0xd0] sm:$0xff]
        %v6196 = vld [vmem:[#allocation3 + $0xd8] sm:$0xff]
        %v6197 = vld [vmem:[#allocation3 + $0xe0] sm:$0xff]
        %v6198 = vld [vmem:[#allocation3 + $0xe8] sm:$0xff]
        %v6199 = vld [vmem:[#allocation3 + $0xf0] sm:$0xff]
        %v6200 = vld [vmem:[#allocation3 + $0xf8] sm:$0xff]
        %v6201 = vld [vmem:[#allocation3 + $0x100] sm:$0xff]
        %v6202 = vld [vmem:[#allocation3 + $0x108] sm:$0xff]
        %v6203 = vld [vmem:[#allocation3 + $0x110] sm:$0xff]
        %v6204 = vld [vmem:[#allocation3 + $0x118] sm:$0xff]
        %v6205 = vld [vmem:[#allocation3 + $0x120] sm:$0xff]
        %v6206 = vpack.c.bf16 %v6175, %v6174
        %v6207 = vpack.c.bf16 %v6177, %v6176
        %v6208 = vpack.c.bf16 %v6179, %v6178
        %v6209 = vpack.c.bf16 %v6181, %v6180
        %v6210 = vpack.c.bf16 %v6183, %v6182
        %v6211 = vpack.c.bf16 %v6185, %v6184
        %v6212 = vpack.c.bf16 %v6187, %v6186
        %v6213 = vpack.c.bf16 %v6189, %v6188
        %v6214 = vpack.c.bf16 %v6191, %v6190
        %v6215 = vpack.c.bf16 %v6193, %v6192
        %v6216 = vpack.c.bf16 %v6195, %v6194
        %v6217 = vpack.c.bf16 %v6197, %v6196
        %v6218 = vpack.c.bf16 %v6199, %v6198
        %v6219 = vpack.c.bf16 %v6201, %v6200
        %v6220 = vpack.c.bf16 %v6203, %v6202
        %v6221 = vpack.c.bf16 %v6205, %v6204
        %s6222 = scalar_lea.vmem %s3, 448
        %v6223 = vld [vmem:[%s6222] sm:$0xf]
        %v6224 = vld [vmem:[%s6222 + $0x4] sm:$0xf]
        %v6225 = vld [vmem:[%s6222 + $0x8] sm:$0xf]
        %v6226 = vld [vmem:[%s6222 + $0xc] sm:$0xf]
        %v6227 = vld [vmem:[%s6222 + $0x10] sm:$0xf]
        %v6228 = vld [vmem:[%s6222 + $0x14] sm:$0xf]
        %v6229 = vld [vmem:[%s6222 + $0x18] sm:$0xf]
        %v6230 = vld [vmem:[%s6222 + $0x1c] sm:$0xf]
        %v6231 = vld [vmem:[%s6222 + $0x20] sm:$0xf]
        %v6232 = vld [vmem:[%s6222 + $0x24] sm:$0xf]
        %v6233 = vld [vmem:[%s6222 + $0x28] sm:$0xf]
        %v6234 = vld [vmem:[%s6222 + $0x2c] sm:$0xf]
        %v6235 = vld [vmem:[%s6222 + $0x30] sm:$0xf]
        %v6236 = vld [vmem:[%s6222 + $0x34] sm:$0xf]
        %v6237 = vld [vmem:[%s6222 + $0x38] sm:$0xf]
        %v6238 = vld [vmem:[%s6222 + $0x3c] sm:$0xf]
        %v6255 = vunpack.c.l.b16 %v6223
        %v6256 = vunpack.c.l.b16 %v6224
        %v6257 = vunpack.c.l.b16 %v6225
        %v6258 = vunpack.c.l.b16 %v6226
        %v6259 = vunpack.c.l.b16 %v6227
        %v6260 = vunpack.c.l.b16 %v6228
        %v6261 = vunpack.c.l.b16 %v6229
        %v6262 = vunpack.c.l.b16 %v6230
        %v6263 = vunpack.c.l.b16 %v6231
        %v6264 = vunpack.c.l.b16 %v6232
        %v6265 = vunpack.c.l.b16 %v6233
        %v6266 = vunpack.c.l.b16 %v6234
        %v6267 = vunpack.c.l.b16 %v6235
        %v6268 = vunpack.c.l.b16 %v6236
        %v6269 = vunpack.c.l.b16 %v6237
        %v6270 = vunpack.c.l.b16 %v6238
        %v6271 = vpack.c.b16 %v6256, %v6255
        %v6272 = vpack.c.b16 %v6258, %v6257
        %v6273 = vpack.c.b16 %v6260, %v6259
        %v6274 = vpack.c.b16 %v6262, %v6261
        %v6275 = vpack.c.b16 %v6264, %v6263
        %v6276 = vpack.c.b16 %v6266, %v6265
        %v6277 = vpack.c.b16 %v6268, %v6267
        %v6278 = vpack.c.b16 %v6270, %v6269
        %6287 = vmatprep.subr.bf16.mxu0 0
        %6288 = vmatpush1.bf16.msra.mxu0 %v6271
        %6289 = vmatprep.subr.bf16.mxu0 0
        %6290 = vmatpush1.bf16.msra.mxu0 %v6272
        %6291 = vmatprep.subr.bf16.mxu0 0
        %6292 = vmatpush1.bf16.msra.mxu0 %v6273
        %6293 = vmatprep.subr.bf16.mxu0 0
        %6294 = vmatpush1.bf16.msra.mxu0 %v6274
        %6295 = vmatprep.subr.bf16.mxu0 0
        %6296 = vmatpush1.bf16.msra.mxu0 %v6275
        %6297 = vmatprep.subr.bf16.mxu0 0
        %6298 = vmatpush1.bf16.msra.mxu0 %v6276
        %6299 = vmatprep.subr.bf16.mxu0 0
        %6300 = vmatpush1.bf16.msra.mxu0 %v6277
        %6301 = vmatprep.subr.bf16.mxu0 0
        %6302 = vmatpush1.bf16.msra.mxu0 %v6278
        %6303 = vmatprep.subr.bf16.mxu0 0
        %6304 = vmatpush1.bf16.msra.mxu0 0
        %6305 = vmatprep.subr.bf16.mxu0 0
        %6306 = vmatpush1.bf16.msra.mxu0 0
        %6307 = vmatprep.subr.bf16.mxu0 0
        %6308 = vmatpush1.bf16.msra.mxu0 0
        %6309 = vmatprep.subr.bf16.mxu0 0
        %6310 = vmatpush1.bf16.msra.mxu0 0
        %6311 = vmatprep.subr.bf16.mxu0 0
        %6312 = vmatpush1.bf16.msra.mxu0 0
        %6313 = vmatprep.subr.bf16.mxu0 0
        %6314 = vmatpush1.bf16.msra.mxu0 0
        %6315 = vmatprep.subr.bf16.mxu0 0
        %6316 = vmatpush1.bf16.msra.mxu0 0
        %6317 = vmatprep.subr.bf16.mxu0 0
        %6318 = vmatpush1.bf16.msra.mxu0 0
        %6319 = vmatprep.mubr.bf16.mxu0 0
        %6320 = vmatmul.mubr.bf16.gmra.mrb[0].mxu0 %v6206
        %v6321 = vpop.f32.mrb[0].mxu0
        %v6322 = vadd.f32 0.0, %v6321
        %v6323 = vpop.f32.mrb[0].mxu0
        %v6324 = vpop.f32.mrb[0].mxu0
        %v6325 = vadd.f32 0.0, %v6324
        %v6326 = vpop.f32.mrb[0].mxu0
        %6327 = vmatprep.mubr.bf16.mxu0 0
        %6328 = vmatmul.mubr.bf16.gmra.mrb[0].mxu0 %v6207
        %v6329 = vpop.f32.mrb[0].mxu0
        %v6330 = vadd.f32 0.0, %v6329
        %v6331 = vpop.f32.mrb[0].mxu0
        %v6332 = vpop.f32.mrb[0].mxu0
        %v6333 = vadd.f32 0.0, %v6332
        %v6334 = vpop.f32.mrb[0].mxu0
        %6335 = vmatprep.mubr.bf16.mxu0 0
        %6336 = vmatmul.mubr.bf16.gmra.mrb[0].mxu0 %v6208
        %v6337 = vpop.f32.mrb[0].mxu0
        %v6338 = vadd.f32 0.0, %v6337
        %v6339 = vpop.f32.mrb[0].mxu0
        %v6340 = vpop.f32.mrb[0].mxu0
        %v6341 = vadd.f32 0.0, %v6340
        %v6342 = vpop.f32.mrb[0].mxu0
        %6343 = vmatprep.mubr.bf16.mxu0 0
        %6344 = vmatmul.mubr.bf16.gmra.mrb[0].mxu0 %v6209
        %v6345 = vpop.f32.mrb[0].mxu0
        %v6346 = vadd.f32 0.0, %v6345
        %v6347 = vpop.f32.mrb[0].mxu0
        %v6348 = vpop.f32.mrb[0].mxu0
        %v6349 = vadd.f32 0.0, %v6348
        %v6350 = vpop.f32.mrb[0].mxu0
        %6351 = vmatprep.mubr.bf16.mxu0 0
        %6352 = vmatmul.mubr.bf16.gmra.mrb[0].mxu0 %v6210
        %v6353 = vpop.f32.mrb[0].mxu0
        %v6354 = vadd.f32 0.0, %v6353
        %v6355 = vpop.f32.mrb[0].mxu0
        %v6356 = vpop.f32.mrb[0].mxu0
        %v6357 = vadd.f32 0.0, %v6356
        %v6358 = vpop.f32.mrb[0].mxu0
        %6359 = vmatprep.mubr.bf16.mxu0 0
        %6360 = vmatmul.mubr.bf16.gmra.mrb[0].mxu0 %v6211
        %v6361 = vpop.f32.mrb[0].mxu0
        %v6362 = vadd.f32 0.0, %v6361
        %v6363 = vpop.f32.mrb[0].mxu0
        %v6364 = vpop.f32.mrb[0].mxu0
        %v6365 = vadd.f32 0.0, %v6364
        %v6366 = vpop.f32.mrb[0].mxu0
        %6367 = vmatprep.mubr.bf16.mxu0 0
        %6368 = vmatmul.mubr.bf16.gmra.mrb[0].mxu0 %v6212
        %v6369 = vpop.f32.mrb[0].mxu0
        %v6370 = vadd.f32 0.0, %v6369
        %v6371 = vpop.f32.mrb[0].mxu0
        %v6372 = vpop.f32.mrb[0].mxu0
        %v6373 = vadd.f32 0.0, %v6372
        %v6374 = vpop.f32.mrb[0].mxu0
        %6375 = vmatprep.mubr.bf16.mxu0 0
        %6376 = vmatmul.mubr.bf16.gmra.mrb[0].mxu0 %v6213
        %v6377 = vpop.f32.mrb[0].mxu0
        %v6378 = vadd.f32 0.0, %v6377
        %v6379 = vpop.f32.mrb[0].mxu0
        %v6380 = vpop.f32.mrb[0].mxu0
        %v6381 = vadd.f32 0.0, %v6380
        %v6382 = vpop.f32.mrb[0].mxu0
        %6383 = vmatprep.mubr.bf16.mxu0 0
        %6384 = vmatmul.mubr.bf16.gmra.mrb[0].mxu0 %v6214
        %v6385 = vpop.f32.mrb[0].mxu0
        %v6386 = vadd.f32 0.0, %v6385
        %v6387 = vpop.f32.mrb[0].mxu0
        %v6388 = vpop.f32.mrb[0].mxu0
        %v6389 = vadd.f32 0.0, %v6388
        %v6390 = vpop.f32.mrb[0].mxu0
        %6391 = vmatprep.mubr.bf16.mxu0 0
        %6392 = vmatmul.mubr.bf16.gmra.mrb[0].mxu0 %v6215
        %v6393 = vpop.f32.mrb[0].mxu0
        %v6394 = vadd.f32 0.0, %v6393
        %v6395 = vpop.f32.mrb[0].mxu0
        %v6396 = vpop.f32.mrb[0].mxu0
        %v6397 = vadd.f32 0.0, %v6396
        %v6398 = vpop.f32.mrb[0].mxu0
        %6399 = vmatprep.mubr.bf16.mxu0 0
        %6400 = vmatmul.mubr.bf16.gmra.mrb[0].mxu0 %v6216
        %v6401 = vpop.f32.mrb[0].mxu0
        %v6402 = vadd.f32 0.0, %v6401
        %v6403 = vpop.f32.mrb[0].mxu0
        %v6404 = vpop.f32.mrb[0].mxu0
        %v6405 = vadd.f32 0.0, %v6404
        %v6406 = vpop.f32.mrb[0].mxu0
        %6407 = vmatprep.mubr.bf16.mxu0 0
        %6408 = vmatmul.mubr.bf16.gmra.mrb[0].mxu0 %v6217
        %v6409 = vpop.f32.mrb[0].mxu0
        %v6410 = vadd.f32 0.0, %v6409
        %v6411 = vpop.f32.mrb[0].mxu0
        %v6412 = vpop.f32.mrb[0].mxu0
        %v6413 = vadd.f32 0.0, %v6412
        %v6414 = vpop.f32.mrb[0].mxu0
        %6415 = vmatprep.mubr.bf16.mxu0 0
        %6416 = vmatmul.mubr.bf16.gmra.mrb[0].mxu0 %v6218
        %v6417 = vpop.f32.mrb[0].mxu0
        %v6418 = vadd.f32 0.0, %v6417
        %v6419 = vpop.f32.mrb[0].mxu0
        %v6420 = vpop.f32.mrb[0].mxu0
        %v6421 = vadd.f32 0.0, %v6420
        %v6422 = vpop.f32.mrb[0].mxu0
        %6423 = vmatprep.mubr.bf16.mxu0 0
        %6424 = vmatmul.mubr.bf16.gmra.mrb[0].mxu0 %v6219
        %v6425 = vpop.f32.mrb[0].mxu0
        %v6426 = vadd.f32 0.0, %v6425
        %v6427 = vpop.f32.mrb[0].mxu0
        %v6428 = vpop.f32.mrb[0].mxu0
        %v6429 = vadd.f32 0.0, %v6428
        %v6430 = vpop.f32.mrb[0].mxu0
        %6431 = vmatprep.mubr.bf16.mxu0 0
        %6432 = vmatmul.mubr.bf16.gmra.mrb[0].mxu0 %v6220
        %v6433 = vpop.f32.mrb[0].mxu0
        %v6434 = vadd.f32 0.0, %v6433
        %v6435 = vpop.f32.mrb[0].mxu0
        %v6436 = vpop.f32.mrb[0].mxu0
        %v6437 = vadd.f32 0.0, %v6436
        %v6438 = vpop.f32.mrb[0].mxu0
        %6439 = vmatprep.mubr.bf16.mxu0 0
        %6440 = vmatmul.mubr.bf16.gmra.mrb[0].mxu0 %v6221
        %v6441 = vpop.f32.mrb[0].mxu0
        %v6442 = vadd.f32 0.0, %v6441
        %v6443 = vpop.f32.mrb[0].mxu0
        %v6444 = vpop.f32.mrb[0].mxu0
        %v6445 = vadd.f32 0.0, %v6444
        %v6446 = vpop.f32.mrb[0].mxu0
        %6447 = vdwg.mxu0
        %v6448 = vadd.f32 %v6142, %v6322
        %v6449 = vadd.f32 %v6143, %v6325
        %v6450 = vadd.f32 %v6144, %v6330
        %v6451 = vadd.f32 %v6145, %v6333
        %v6452 = vadd.f32 %v6146, %v6338
        %v6453 = vadd.f32 %v6147, %v6341
        %v6454 = vadd.f32 %v6148, %v6346
        %v6455 = vadd.f32 %v6149, %v6349
        %v6456 = vadd.f32 %v6150, %v6354
        %v6457 = vadd.f32 %v6151, %v6357
        %v6458 = vadd.f32 %v6152, %v6362
        %v6459 = vadd.f32 %v6153, %v6365
        %v6460 = vadd.f32 %v6154, %v6370
        %v6461 = vadd.f32 %v6155, %v6373
        %v6462 = vadd.f32 %v6156, %v6378
        %v6463 = vadd.f32 %v6157, %v6381
        %v6464 = vadd.f32 %v6158, %v6386
        %v6465 = vadd.f32 %v6159, %v6389
        %v6466 = vadd.f32 %v6160, %v6394
        %v6467 = vadd.f32 %v6161, %v6397
        %v6468 = vadd.f32 %v6162, %v6402
        %v6469 = vadd.f32 %v6163, %v6405
        %v6470 = vadd.f32 %v6164, %v6410
        %v6471 = vadd.f32 %v6165, %v6413
        %v6472 = vadd.f32 %v6166, %v6418
        %v6473 = vadd.f32 %v6167, %v6421
        %v6474 = vadd.f32 %v6168, %v6426
        %v6475 = vadd.f32 %v6169, %v6429
        %v6476 = vadd.f32 %v6170, %v6434
        %v6477 = vadd.f32 %v6171, %v6437
        %v6478 = vadd.f32 %v6172, %v6442
        %v6479 = vadd.f32 %v6173, %v6445
        %v6480 = vld [vmem:[#allocation3 + $0x29] sm:$0xff]
        %v6481 = vld [vmem:[#allocation3 + $0x31] sm:$0xff]
        %v6482 = vld [vmem:[#allocation3 + $0x39] sm:$0xff]
        %v6483 = vld [vmem:[#allocation3 + $0x41] sm:$0xff]
        %v6484 = vld [vmem:[#allocation3 + $0x49] sm:$0xff]
        %v6485 = vld [vmem:[#allocation3 + $0x51] sm:$0xff]
        %v6486 = vld [vmem:[#allocation3 + $0x59] sm:$0xff]
        %v6487 = vld [vmem:[#allocation3 + $0x61] sm:$0xff]
        %v6488 = vld [vmem:[#allocation3 + $0x69] sm:$0xff]
        %v6489 = vld [vmem:[#allocation3 + $0x71] sm:$0xff]
        %v6490 = vld [vmem:[#allocation3 + $0x79] sm:$0xff]
        %v6491 = vld [vmem:[#allocation3 + $0x81] sm:$0xff]
        %v6492 = vld [vmem:[#allocation3 + $0x89] sm:$0xff]
        %v6493 = vld [vmem:[#allocation3 + $0x91] sm:$0xff]
        %v6494 = vld [vmem:[#allocation3 + $0x99] sm:$0xff]
        %v6495 = vld [vmem:[#allocation3 + $0xa1] sm:$0xff]
        %v6496 = vld [vmem:[#allocation3 + $0xa9] sm:$0xff]
        %v6497 = vld [vmem:[#allocation3 + $0xb1] sm:$0xff]
        %v6498 = vld [vmem:[#allocation3 + $0xb9] sm:$0xff]
        %v6499 = vld [vmem:[#allocation3 + $0xc1] sm:$0xff]
        %v6500 = vld [vmem:[#allocation3 + $0xc9] sm:$0xff]
        %v6501 = vld [vmem:[#allocation3 + $0xd1] sm:$0xff]
        %v6502 = vld [vmem:[#allocation3 + $0xd9] sm:$0xff]
        %v6503 = vld [vmem:[#allocation3 + $0xe1] sm:$0xff]
        %v6504 = vld [vmem:[#allocation3 + $0xe9] sm:$0xff]
        %v6505 = vld [vmem:[#allocation3 + $0xf1] sm:$0xff]
        %v6506 = vld [vmem:[#allocation3 + $0xf9] sm:$0xff]
        %v6507 = vld [vmem:[#allocation3 + $0x101] sm:$0xff]
        %v6508 = vld [vmem:[#allocation3 + $0x109] sm:$0xff]
        %v6509 = vld [vmem:[#allocation3 + $0x111] sm:$0xff]
        %v6510 = vld [vmem:[#allocation3 + $0x119] sm:$0xff]
        %v6511 = vld [vmem:[#allocation3 + $0x121] sm:$0xff]
        %v6512 = vmul.f32 %v6480, %v887
        %v6513 = vmul.f32 %v6481, %v888
        %v6514 = vmul.f32 %v6482, %v889
        %v6515 = vmul.f32 %v6483, %v890
        %v6516 = vmul.f32 %v6484, %v891
        %v6517 = vmul.f32 %v6485, %v892
        %v6518 = vmul.f32 %v6486, %v893
        %v6519 = vmul.f32 %v6487, %v894
        %v6520 = vmul.f32 %v6488, %v895
        %v6521 = vmul.f32 %v6489, %v896
        %v6522 = vmul.f32 %v6490, %v897
        %v6523 = vmul.f32 %v6491, %v898
        %v6524 = vmul.f32 %v6492, %v899
        %v6525 = vmul.f32 %v6493, %v900
        %v6526 = vmul.f32 %v6494, %v901
        %v6527 = vmul.f32 %v6495, %v902
        %v6528 = vmul.f32 %v6496, %v903
        %v6529 = vmul.f32 %v6497, %v904
        %v6530 = vmul.f32 %v6498, %v905
        %v6531 = vmul.f32 %v6499, %v906
        %v6532 = vmul.f32 %v6500, %v907
        %v6533 = vmul.f32 %v6501, %v908
        %v6534 = vmul.f32 %v6502, %v909
        %v6535 = vmul.f32 %v6503, %v910
        %v6536 = vmul.f32 %v6504, %v911
        %v6537 = vmul.f32 %v6505, %v912
        %v6538 = vmul.f32 %v6506, %v913
        %v6539 = vmul.f32 %v6507, %v914
        %v6540 = vmul.f32 %v6508, %v915
        %v6541 = vmul.f32 %v6509, %v916
        %v6542 = vmul.f32 %v6510, %v917
        %v6543 = vmul.f32 %v6511, %v918
        %v6544 = vpack.c.bf16 %v6513, %v6512
        %v6545 = vpack.c.bf16 %v6515, %v6514
        %v6546 = vpack.c.bf16 %v6517, %v6516
        %v6547 = vpack.c.bf16 %v6519, %v6518
        %v6548 = vpack.c.bf16 %v6521, %v6520
        %v6549 = vpack.c.bf16 %v6523, %v6522
        %v6550 = vpack.c.bf16 %v6525, %v6524
        %v6551 = vpack.c.bf16 %v6527, %v6526
        %v6552 = vpack.c.bf16 %v6529, %v6528
        %v6553 = vpack.c.bf16 %v6531, %v6530
        %v6554 = vpack.c.bf16 %v6533, %v6532
        %v6555 = vpack.c.bf16 %v6535, %v6534
        %v6556 = vpack.c.bf16 %v6537, %v6536
        %v6557 = vpack.c.bf16 %v6539, %v6538
        %v6558 = vpack.c.bf16 %v6541, %v6540
        %v6559 = vpack.c.bf16 %v6543, %v6542
        %s6560 = scalar_lea.vmem %s3, 512
        %v6561 = vld [vmem:[%s6560] sm:$0xf]
        %v6562 = vld [vmem:[%s6560 + $0x4] sm:$0xf]
        %v6563 = vld [vmem:[%s6560 + $0x8] sm:$0xf]
        %v6564 = vld [vmem:[%s6560 + $0xc] sm:$0xf]
        %v6565 = vld [vmem:[%s6560 + $0x10] sm:$0xf]
        %v6566 = vld [vmem:[%s6560 + $0x14] sm:$0xf]
        %v6567 = vld [vmem:[%s6560 + $0x18] sm:$0xf]
        %v6568 = vld [vmem:[%s6560 + $0x1c] sm:$0xf]
        %v6569 = vld [vmem:[%s6560 + $0x20] sm:$0xf]
        %v6570 = vld [vmem:[%s6560 + $0x24] sm:$0xf]
        %v6571 = vld [vmem:[%s6560 + $0x28] sm:$0xf]
        %v6572 = vld [vmem:[%s6560 + $0x2c] sm:$0xf]
        %v6573 = vld [vmem:[%s6560 + $0x30] sm:$0xf]
        %v6574 = vld [vmem:[%s6560 + $0x34] sm:$0xf]
        %v6575 = vld [vmem:[%s6560 + $0x38] sm:$0xf]
        %v6576 = vld [vmem:[%s6560 + $0x3c] sm:$0xf]
        %v6593 = vunpack.c.l.b16 %v6561
        %v6594 = vunpack.c.l.b16 %v6562
        %v6595 = vunpack.c.l.b16 %v6563
        %v6596 = vunpack.c.l.b16 %v6564
        %v6597 = vunpack.c.l.b16 %v6565
        %v6598 = vunpack.c.l.b16 %v6566
        %v6599 = vunpack.c.l.b16 %v6567
        %v6600 = vunpack.c.l.b16 %v6568
        %v6601 = vunpack.c.l.b16 %v6569
        %v6602 = vunpack.c.l.b16 %v6570
        %v6603 = vunpack.c.l.b16 %v6571
        %v6604 = vunpack.c.l.b16 %v6572
        %v6605 = vunpack.c.l.b16 %v6573
        %v6606 = vunpack.c.l.b16 %v6574
        %v6607 = vunpack.c.l.b16 %v6575
        %v6608 = vunpack.c.l.b16 %v6576
        %v6609 = vpack.c.b16 %v6594, %v6593
        %v6610 = vpack.c.b16 %v6596, %v6595
        %v6611 = vpack.c.b16 %v6598, %v6597
        %v6612 = vpack.c.b16 %v6600, %v6599
        %v6613 = vpack.c.b16 %v6602, %v6601
        %v6614 = vpack.c.b16 %v6604, %v6603
        %v6615 = vpack.c.b16 %v6606, %v6605
        %v6616 = vpack.c.b16 %v6608, %v6607
        %6625 = vmatprep.subr.bf16.mxu0 0
        %6626 = vmatpush1.bf16.msra.mxu0 %v6609
        %6627 = vmatprep.subr.bf16.mxu0 0
        %6628 = vmatpush1.bf16.msra.mxu0 %v6610
        %6629 = vmatprep.subr.bf16.mxu0 0
        %6630 = vmatpush1.bf16.msra.mxu0 %v6611
        %6631 = vmatprep.subr.bf16.mxu0 0
        %6632 = vmatpush1.bf16.msra.mxu0 %v6612
        %6633 = vmatprep.subr.bf16.mxu0 0
        %6634 = vmatpush1.bf16.msra.mxu0 %v6613
        %6635 = vmatprep.subr.bf16.mxu0 0
        %6636 = vmatpush1.bf16.msra.mxu0 %v6614
        %6637 = vmatprep.subr.bf16.mxu0 0
        %6638 = vmatpush1.bf16.msra.mxu0 %v6615
        %6639 = vmatprep.subr.bf16.mxu0 0
        %6640 = vmatpush1.bf16.msra.mxu0 %v6616
        %6641 = vmatprep.subr.bf16.mxu0 0
        %6642 = vmatpush1.bf16.msra.mxu0 0
        %6643 = vmatprep.subr.bf16.mxu0 0
        %6644 = vmatpush1.bf16.msra.mxu0 0
        %6645 = vmatprep.subr.bf16.mxu0 0
        %6646 = vmatpush1.bf16.msra.mxu0 0
        %6647 = vmatprep.subr.bf16.mxu0 0
        %6648 = vmatpush1.bf16.msra.mxu0 0
        %6649 = vmatprep.subr.bf16.mxu0 0
        %6650 = vmatpush1.bf16.msra.mxu0 0
        %6651 = vmatprep.subr.bf16.mxu0 0
        %6652 = vmatpush1.bf16.msra.mxu0 0
        %6653 = vmatprep.subr.bf16.mxu0 0
        %6654 = vmatpush1.bf16.msra.mxu0 0
        %6655 = vmatprep.subr.bf16.mxu0 0
        %6656 = vmatpush1.bf16.msra.mxu0 0
        %6657 = vmatprep.mubr.bf16.mxu0 0
        %6658 = vmatmul.mubr.bf16.gmra.mrb[0].mxu0 %v6544
        %v6659 = vpop.f32.mrb[0].mxu0
        %v6660 = vadd.f32 0.0, %v6659
        %v6661 = vpop.f32.mrb[0].mxu0
        %v6662 = vpop.f32.mrb[0].mxu0
        %v6663 = vadd.f32 0.0, %v6662
        %v6664 = vpop.f32.mrb[0].mxu0
        %6665 = vmatprep.mubr.bf16.mxu0 0
        %6666 = vmatmul.mubr.bf16.gmra.mrb[0].mxu0 %v6545
        %v6667 = vpop.f32.mrb[0].mxu0
        %v6668 = vadd.f32 0.0, %v6667
        %v6669 = vpop.f32.mrb[0].mxu0
        %v6670 = vpop.f32.mrb[0].mxu0
        %v6671 = vadd.f32 0.0, %v6670
        %v6672 = vpop.f32.mrb[0].mxu0
        %6673 = vmatprep.mubr.bf16.mxu0 0
        %6674 = vmatmul.mubr.bf16.gmra.mrb[0].mxu0 %v6546
        %v6675 = vpop.f32.mrb[0].mxu0
        %v6676 = vadd.f32 0.0, %v6675
        %v6677 = vpop.f32.mrb[0].mxu0
        %v6678 = vpop.f32.mrb[0].mxu0
        %v6679 = vadd.f32 0.0, %v6678
        %v6680 = vpop.f32.mrb[0].mxu0
        %6681 = vmatprep.mubr.bf16.mxu0 0
        %6682 = vmatmul.mubr.bf16.gmra.mrb[0].mxu0 %v6547
        %v6683 = vpop.f32.mrb[0].mxu0
        %v6684 = vadd.f32 0.0, %v6683
        %v6685 = vpop.f32.mrb[0].mxu0
        %v6686 = vpop.f32.mrb[0].mxu0
        %v6687 = vadd.f32 0.0, %v6686
        %v6688 = vpop.f32.mrb[0].mxu0
        %6689 = vmatprep.mubr.bf16.mxu0 0
        %6690 = vmatmul.mubr.bf16.gmra.mrb[0].mxu0 %v6548
        %v6691 = vpop.f32.mrb[0].mxu0
        %v6692 = vadd.f32 0.0, %v6691
        %v6693 = vpop.f32.mrb[0].mxu0
        %v6694 = vpop.f32.mrb[0].mxu0
        %v6695 = vadd.f32 0.0, %v6694
        %v6696 = vpop.f32.mrb[0].mxu0
        %6697 = vmatprep.mubr.bf16.mxu0 0
        %6698 = vmatmul.mubr.bf16.gmra.mrb[0].mxu0 %v6549
        %v6699 = vpop.f32.mrb[0].mxu0
        %v6700 = vadd.f32 0.0, %v6699
        %v6701 = vpop.f32.mrb[0].mxu0
        %v6702 = vpop.f32.mrb[0].mxu0
        %v6703 = vadd.f32 0.0, %v6702
        %v6704 = vpop.f32.mrb[0].mxu0
        %6705 = vmatprep.mubr.bf16.mxu0 0
        %6706 = vmatmul.mubr.bf16.gmra.mrb[0].mxu0 %v6550
        %v6707 = vpop.f32.mrb[0].mxu0
        %v6708 = vadd.f32 0.0, %v6707
        %v6709 = vpop.f32.mrb[0].mxu0
        %v6710 = vpop.f32.mrb[0].mxu0
        %v6711 = vadd.f32 0.0, %v6710
        %v6712 = vpop.f32.mrb[0].mxu0
        %6713 = vmatprep.mubr.bf16.mxu0 0
        %6714 = vmatmul.mubr.bf16.gmra.mrb[0].mxu0 %v6551
        %v6715 = vpop.f32.mrb[0].mxu0
        %v6716 = vadd.f32 0.0, %v6715
        %v6717 = vpop.f32.mrb[0].mxu0
        %v6718 = vpop.f32.mrb[0].mxu0
        %v6719 = vadd.f32 0.0, %v6718
        %v6720 = vpop.f32.mrb[0].mxu0
        %6721 = vmatprep.mubr.bf16.mxu0 0
        %6722 = vmatmul.mubr.bf16.gmra.mrb[0].mxu0 %v6552
        %v6723 = vpop.f32.mrb[0].mxu0
        %v6724 = vadd.f32 0.0, %v6723
        %v6725 = vpop.f32.mrb[0].mxu0
        %v6726 = vpop.f32.mrb[0].mxu0
        %v6727 = vadd.f32 0.0, %v6726
        %v6728 = vpop.f32.mrb[0].mxu0
        %6729 = vmatprep.mubr.bf16.mxu0 0
        %6730 = vmatmul.mubr.bf16.gmra.mrb[0].mxu0 %v6553
        %v6731 = vpop.f32.mrb[0].mxu0
        %v6732 = vadd.f32 0.0, %v6731
        %v6733 = vpop.f32.mrb[0].mxu0
        %v6734 = vpop.f32.mrb[0].mxu0
        %v6735 = vadd.f32 0.0, %v6734
        %v6736 = vpop.f32.mrb[0].mxu0
        %6737 = vmatprep.mubr.bf16.mxu0 0
        %6738 = vmatmul.mubr.bf16.gmra.mrb[0].mxu0 %v6554
        %v6739 = vpop.f32.mrb[0].mxu0
        %v6740 = vadd.f32 0.0, %v6739
        %v6741 = vpop.f32.mrb[0].mxu0
        %v6742 = vpop.f32.mrb[0].mxu0
        %v6743 = vadd.f32 0.0, %v6742
        %v6744 = vpop.f32.mrb[0].mxu0
        %6745 = vmatprep.mubr.bf16.mxu0 0
        %6746 = vmatmul.mubr.bf16.gmra.mrb[0].mxu0 %v6555
        %v6747 = vpop.f32.mrb[0].mxu0
        %v6748 = vadd.f32 0.0, %v6747
        %v6749 = vpop.f32.mrb[0].mxu0
        %v6750 = vpop.f32.mrb[0].mxu0
        %v6751 = vadd.f32 0.0, %v6750
        %v6752 = vpop.f32.mrb[0].mxu0
        %6753 = vmatprep.mubr.bf16.mxu0 0
        %6754 = vmatmul.mubr.bf16.gmra.mrb[0].mxu0 %v6556
        %v6755 = vpop.f32.mrb[0].mxu0
        %v6756 = vadd.f32 0.0, %v6755
        %v6757 = vpop.f32.mrb[0].mxu0
        %v6758 = vpop.f32.mrb[0].mxu0
        %v6759 = vadd.f32 0.0, %v6758
        %v6760 = vpop.f32.mrb[0].mxu0
        %6761 = vmatprep.mubr.bf16.mxu0 0
        %6762 = vmatmul.mubr.bf16.gmra.mrb[0].mxu0 %v6557
        %v6763 = vpop.f32.mrb[0].mxu0
        %v6764 = vadd.f32 0.0, %v6763
        %v6765 = vpop.f32.mrb[0].mxu0
        %v6766 = vpop.f32.mrb[0].mxu0
        %v6767 = vadd.f32 0.0, %v6766
        %v6768 = vpop.f32.mrb[0].mxu0
        %6769 = vmatprep.mubr.bf16.mxu0 0
        %6770 = vmatmul.mubr.bf16.gmra.mrb[0].mxu0 %v6558
        %v6771 = vpop.f32.mrb[0].mxu0
        %v6772 = vadd.f32 0.0, %v6771
        %v6773 = vpop.f32.mrb[0].mxu0
        %v6774 = vpop.f32.mrb[0].mxu0
        %v6775 = vadd.f32 0.0, %v6774
        %v6776 = vpop.f32.mrb[0].mxu0
        %6777 = vmatprep.mubr.bf16.mxu0 0
        %6778 = vmatmul.mubr.bf16.gmra.mrb[0].mxu0 %v6559
        %v6779 = vpop.f32.mrb[0].mxu0
        %v6780 = vadd.f32 0.0, %v6779
        %v6781 = vpop.f32.mrb[0].mxu0
        %v6782 = vpop.f32.mrb[0].mxu0
        %v6783 = vadd.f32 0.0, %v6782
        %v6784 = vpop.f32.mrb[0].mxu0
        %6785 = vdwg.mxu0
        %v6786 = vadd.f32 %v6448, %v6660
        %v6787 = vadd.f32 %v6449, %v6663
        %v6788 = vadd.f32 %v6450, %v6668
        %v6789 = vadd.f32 %v6451, %v6671
        %v6790 = vadd.f32 %v6452, %v6676
        %v6791 = vadd.f32 %v6453, %v6679
        %v6792 = vadd.f32 %v6454, %v6684
        %v6793 = vadd.f32 %v6455, %v6687
        %v6794 = vadd.f32 %v6456, %v6692
        %v6795 = vadd.f32 %v6457, %v6695
        %v6796 = vadd.f32 %v6458, %v6700
        %v6797 = vadd.f32 %v6459, %v6703
        %v6798 = vadd.f32 %v6460, %v6708
        %v6799 = vadd.f32 %v6461, %v6711
        %v6800 = vadd.f32 %v6462, %v6716
        %v6801 = vadd.f32 %v6463, %v6719
        %v6802 = vadd.f32 %v6464, %v6724
        %v6803 = vadd.f32 %v6465, %v6727
        %v6804 = vadd.f32 %v6466, %v6732
        %v6805 = vadd.f32 %v6467, %v6735
        %v6806 = vadd.f32 %v6468, %v6740
        %v6807 = vadd.f32 %v6469, %v6743
        %v6808 = vadd.f32 %v6470, %v6748
        %v6809 = vadd.f32 %v6471, %v6751
        %v6810 = vadd.f32 %v6472, %v6756
        %v6811 = vadd.f32 %v6473, %v6759
        %v6812 = vadd.f32 %v6474, %v6764
        %v6813 = vadd.f32 %v6475, %v6767
        %v6814 = vadd.f32 %v6476, %v6772
        %v6815 = vadd.f32 %v6477, %v6775
        %v6816 = vadd.f32 %v6478, %v6780
        %v6817 = vadd.f32 %v6479, %v6783
        %v6818 = vld [vmem:[%s4] sm:$0x1]
        %v6820 = vlaneseq
        %v6821 = vshrl.u32 %v6820, 7
        %v6822 = vsub.s32 0, %v6821
        %v6823 = vrot.slane %v6818, %v6822
        %v6825 = vadd.f32 %v6786, %v6823
        %v6826 = vadd.f32 %v6787, %v6823
        %v6827 = vadd.f32 %v6788, %v6823
        %v6828 = vadd.f32 %v6789, %v6823
        %v6829 = vadd.f32 %v6790, %v6823
        %v6830 = vadd.f32 %v6791, %v6823
        %v6831 = vadd.f32 %v6792, %v6823
        %v6832 = vadd.f32 %v6793, %v6823
        %v6833 = vadd.f32 %v6794, %v6823
        %v6834 = vadd.f32 %v6795, %v6823
        %v6835 = vadd.f32 %v6796, %v6823
        %v6836 = vadd.f32 %v6797, %v6823
        %v6837 = vadd.f32 %v6798, %v6823
        %v6838 = vadd.f32 %v6799, %v6823
        %v6839 = vadd.f32 %v6800, %v6823
        %v6840 = vadd.f32 %v6801, %v6823
        %v6841 = vadd.f32 %v6802, %v6823
        %v6842 = vadd.f32 %v6803, %v6823
        %v6843 = vadd.f32 %v6804, %v6823
        %v6844 = vadd.f32 %v6805, %v6823
        %v6845 = vadd.f32 %v6806, %v6823
        %v6846 = vadd.f32 %v6807, %v6823
        %v6847 = vadd.f32 %v6808, %v6823
        %v6848 = vadd.f32 %v6809, %v6823
        %v6849 = vadd.f32 %v6810, %v6823
        %v6850 = vadd.f32 %v6811, %v6823
        %v6851 = vadd.f32 %v6812, %v6823
        %v6852 = vadd.f32 %v6813, %v6823
        %v6853 = vadd.f32 %v6814, %v6823
        %v6854 = vadd.f32 %v6815, %v6823
        %v6855 = vadd.f32 %v6816, %v6823
        %v6856 = vadd.f32 %v6817, %v6823
        %v6857 = vpack.c.bf16 %v279, %v278
        %v6858 = vpack.c.bf16 %v281, %v280
        %v6859 = vpack.c.bf16 %v283, %v282
        %v6860 = vpack.c.bf16 %v285, %v284
        %v6861 = vpack.c.bf16 %v287, %v286
        %v6862 = vpack.c.bf16 %v289, %v288
        %v6863 = vpack.c.bf16 %v291, %v290
        %v6864 = vpack.c.bf16 %v293, %v292
        %v6865 = vpack.c.bf16 %v295, %v294
        %v6866 = vpack.c.bf16 %v297, %v296
        %v6867 = vpack.c.bf16 %v299, %v298
        %v6868 = vpack.c.bf16 %v301, %v300
        %v6869 = vpack.c.bf16 %v303, %v302
        %v6870 = vpack.c.bf16 %v305, %v304
        %v6871 = vpack.c.bf16 %v307, %v306
        %v6872 = vpack.c.bf16 %v309, %v308
        %v6873 = vld [vmem:[%s5] sm:$0xf]
        %v6874 = vld [vmem:[%s6] sm:$0x1]
        %v6876 = vlaneseq
        %v6877 = vshrl.u32 %v6876, 7
        %v6878 = vsub.s32 0, %v6877
        %v6879 = vrot.slane %v6874, %v6878
        %v6882 = vsel %vm919, %v6857, 0
        %v6885 = vsel %vm919, %v6858, 0
        %v6888 = vsel %vm919, %v6859, 0
        %v6891 = vsel %vm919, %v6860, 0
        %v6894 = vsel %vm919, %v6861, 0
        %v6897 = vsel %vm919, %v6862, 0
        %v6900 = vsel %vm919, %v6863, 0
        %v6903 = vsel %vm919, %v6864, 0
        %v6906 = vsel %vm919, %v6865, 0
        %v6909 = vsel %vm919, %v6866, 0
        %v6912 = vsel %vm919, %v6867, 0
        %v6915 = vsel %vm919, %v6868, 0
        %v6918 = vsel %vm919, %v6869, 0
        %v6921 = vsel %vm919, %v6870, 0
        %v6924 = vsel %vm919, %v6871, 0
        %v6927 = vsel %vm919, %v6872, 0
        %v6930 = vsel %vm1201, %v6873, 0
        %6932 = vmatprep.subr.bf16.mxu0 0
        %6933 = vmatpush1.bf16.msra.mxu0 %v6930
        %6934 = vmatprep.subr.bf16.mxu0 0
        %6935 = vmatpush1.bf16.msra.mxu0 0
        %6936 = vmatprep.subr.bf16.mxu0 0
        %6937 = vmatpush1.bf16.msra.mxu0 0
        %6938 = vmatprep.subr.bf16.mxu0 0
        %6939 = vmatpush1.bf16.msra.mxu0 0
        %6940 = vmatprep.subr.bf16.mxu0 0
        %6941 = vmatpush1.bf16.msra.mxu0 0
        %6942 = vmatprep.subr.bf16.mxu0 0
        %6943 = vmatpush1.bf16.msra.mxu0 0
        %6944 = vmatprep.subr.bf16.mxu0 0
        %6945 = vmatpush1.bf16.msra.mxu0 0
        %6946 = vmatprep.subr.bf16.mxu0 0
        %6947 = vmatpush1.bf16.msra.mxu0 0
        %6948 = vmatprep.subr.bf16.mxu0 0
        %6949 = vmatpush1.bf16.msra.mxu0 0
        %6950 = vmatprep.subr.bf16.mxu0 0
        %6951 = vmatpush1.bf16.msra.mxu0 0
        %6952 = vmatprep.subr.bf16.mxu0 0
        %6953 = vmatpush1.bf16.msra.mxu0 0
        %6954 = vmatprep.subr.bf16.mxu0 0
        %6955 = vmatpush1.bf16.msra.mxu0 0
        %6956 = vmatprep.subr.bf16.mxu0 0
        %6957 = vmatpush1.bf16.msra.mxu0 0
        %6958 = vmatprep.subr.bf16.mxu0 0
        %6959 = vmatpush1.bf16.msra.mxu0 0
        %6960 = vmatprep.subr.bf16.mxu0 0
        %6961 = vmatpush1.bf16.msra.mxu0 0
        %6962 = vmatprep.subr.bf16.mxu0 0
        %6963 = vmatpush1.bf16.msra.mxu0 0
        %6964 = vmatprep.mubr.bf16.mxu0 0
        %6965 = vmatmul.mubr.bf16.gmra.mrb[0].mxu0 %v6882
        %v6966 = vpop.f32.mrb[0].mxu0
        %v6967 = vadd.f32 %v6879, %v6966
        %v6968 = vpop.f32.mrb[0].mxu0
        %v6969 = vpop.f32.mrb[0].mxu0
        %v6970 = vadd.f32 %v6879, %v6969
        %v6971 = vpop.f32.mrb[0].mxu0
        %6972 = vmatprep.mubr.bf16.mxu0 0
        %6973 = vmatmul.mubr.bf16.gmra.mrb[0].mxu0 %v6885
        %v6974 = vpop.f32.mrb[0].mxu0
        %v6975 = vadd.f32 %v6879, %v6974
        %v6976 = vpop.f32.mrb[0].mxu0
        %v6977 = vpop.f32.mrb[0].mxu0
        %v6978 = vadd.f32 %v6879, %v6977
        %v6979 = vpop.f32.mrb[0].mxu0
        %6980 = vmatprep.mubr.bf16.mxu0 0
        %6981 = vmatmul.mubr.bf16.gmra.mrb[0].mxu0 %v6888
        %v6982 = vpop.f32.mrb[0].mxu0
        %v6983 = vadd.f32 %v6879, %v6982
        %v6984 = vpop.f32.mrb[0].mxu0
        %v6985 = vpop.f32.mrb[0].mxu0
        %v6986 = vadd.f32 %v6879, %v6985
        %v6987 = vpop.f32.mrb[0].mxu0
        %6988 = vmatprep.mubr.bf16.mxu0 0
        %6989 = vmatmul.mubr.bf16.gmra.mrb[0].mxu0 %v6891
        %v6990 = vpop.f32.mrb[0].mxu0
        %v6991 = vadd.f32 %v6879, %v6990
        %v6992 = vpop.f32.mrb[0].mxu0
        %v6993 = vpop.f32.mrb[0].mxu0
        %v6994 = vadd.f32 %v6879, %v6993
        %v6995 = vpop.f32.mrb[0].mxu0
        %6996 = vmatprep.mubr.bf16.mxu0 0
        %6997 = vmatmul.mubr.bf16.gmra.mrb[0].mxu0 %v6894
        %v6998 = vpop.f32.mrb[0].mxu0
        %v6999 = vadd.f32 %v6879, %v6998
        %v7000 = vpop.f32.mrb[0].mxu0
        %v7001 = vpop.f32.mrb[0].mxu0
        %v7002 = vadd.f32 %v6879, %v7001
        %v7003 = vpop.f32.mrb[0].mxu0
        %7004 = vmatprep.mubr.bf16.mxu0 0
        %7005 = vmatmul.mubr.bf16.gmra.mrb[0].mxu0 %v6897
        %v7006 = vpop.f32.mrb[0].mxu0
        %v7007 = vadd.f32 %v6879, %v7006
        %v7008 = vpop.f32.mrb[0].mxu0
        %v7009 = vpop.f32.mrb[0].mxu0
        %v7010 = vadd.f32 %v6879, %v7009
        %v7011 = vpop.f32.mrb[0].mxu0
        %7012 = vmatprep.mubr.bf16.mxu0 0
        %7013 = vmatmul.mubr.bf16.gmra.mrb[0].mxu0 %v6900
        %v7014 = vpop.f32.mrb[0].mxu0
        %v7015 = vadd.f32 %v6879, %v7014
        %v7016 = vpop.f32.mrb[0].mxu0
        %v7017 = vpop.f32.mrb[0].mxu0
        %v7018 = vadd.f32 %v6879, %v7017
        %v7019 = vpop.f32.mrb[0].mxu0
        %7020 = vmatprep.mubr.bf16.mxu0 0
        %7021 = vmatmul.mubr.bf16.gmra.mrb[0].mxu0 %v6903
        %v7022 = vpop.f32.mrb[0].mxu0
        %v7023 = vadd.f32 %v6879, %v7022
        %v7024 = vpop.f32.mrb[0].mxu0
        %v7025 = vpop.f32.mrb[0].mxu0
        %v7026 = vadd.f32 %v6879, %v7025
        %v7027 = vpop.f32.mrb[0].mxu0
        %7028 = vmatprep.mubr.bf16.mxu0 0
        %7029 = vmatmul.mubr.bf16.gmra.mrb[0].mxu0 %v6906
        %v7030 = vpop.f32.mrb[0].mxu0
        %v7031 = vadd.f32 %v6879, %v7030
        %v7032 = vpop.f32.mrb[0].mxu0
        %v7033 = vpop.f32.mrb[0].mxu0
        %v7034 = vadd.f32 %v6879, %v7033
        %v7035 = vpop.f32.mrb[0].mxu0
        %7036 = vmatprep.mubr.bf16.mxu0 0
        %7037 = vmatmul.mubr.bf16.gmra.mrb[0].mxu0 %v6909
        %v7038 = vpop.f32.mrb[0].mxu0
        %v7039 = vadd.f32 %v6879, %v7038
        %v7040 = vpop.f32.mrb[0].mxu0
        %v7041 = vpop.f32.mrb[0].mxu0
        %v7042 = vadd.f32 %v6879, %v7041
        %v7043 = vpop.f32.mrb[0].mxu0
        %7044 = vmatprep.mubr.bf16.mxu0 0
        %7045 = vmatmul.mubr.bf16.gmra.mrb[0].mxu0 %v6912
        %v7046 = vpop.f32.mrb[0].mxu0
        %v7047 = vadd.f32 %v6879, %v7046
        %v7048 = vpop.f32.mrb[0].mxu0
        %v7049 = vpop.f32.mrb[0].mxu0
        %v7050 = vadd.f32 %v6879, %v7049
        %v7051 = vpop.f32.mrb[0].mxu0
        %7052 = vmatprep.mubr.bf16.mxu0 0
        %7053 = vmatmul.mubr.bf16.gmra.mrb[0].mxu0 %v6915
        %v7054 = vpop.f32.mrb[0].mxu0
        %v7055 = vadd.f32 %v6879, %v7054
        %v7056 = vpop.f32.mrb[0].mxu0
        %v7057 = vpop.f32.mrb[0].mxu0
        %v7058 = vadd.f32 %v6879, %v7057
        %v7059 = vpop.f32.mrb[0].mxu0
        %7060 = vmatprep.mubr.bf16.mxu0 0
        %7061 = vmatmul.mubr.bf16.gmra.mrb[0].mxu0 %v6918
        %v7062 = vpop.f32.mrb[0].mxu0
        %v7063 = vadd.f32 %v6879, %v7062
        %v7064 = vpop.f32.mrb[0].mxu0
        %v7065 = vpop.f32.mrb[0].mxu0
        %v7066 = vadd.f32 %v6879, %v7065
        %v7067 = vpop.f32.mrb[0].mxu0
        %7068 = vmatprep.mubr.bf16.mxu0 0
        %7069 = vmatmul.mubr.bf16.gmra.mrb[0].mxu0 %v6921
        %v7070 = vpop.f32.mrb[0].mxu0
        %v7071 = vadd.f32 %v6879, %v7070
        %v7072 = vpop.f32.mrb[0].mxu0
        %v7073 = vpop.f32.mrb[0].mxu0
        %v7074 = vadd.f32 %v6879, %v7073
        %v7075 = vpop.f32.mrb[0].mxu0
        %7076 = vmatprep.mubr.bf16.mxu0 0
        %7077 = vmatmul.mubr.bf16.gmra.mrb[0].mxu0 %v6924
        %v7078 = vpop.f32.mrb[0].mxu0
        %v7079 = vadd.f32 %v6879, %v7078
        %v7080 = vpop.f32.mrb[0].mxu0
        %v7081 = vpop.f32.mrb[0].mxu0
        %v7082 = vadd.f32 %v6879, %v7081
        %v7083 = vpop.f32.mrb[0].mxu0
        %7084 = vmatprep.mubr.bf16.mxu0 0
        %7085 = vmatmul.mubr.bf16.gmra.mrb[0].mxu0 %v6927
        %v7086 = vpop.f32.mrb[0].mxu0
        %v7087 = vadd.f32 %v6879, %v7086
        %v7088 = vpop.f32.mrb[0].mxu0
        %v7089 = vpop.f32.mrb[0].mxu0
        %v7090 = vadd.f32 %v6879, %v7089
        %v7091 = vpop.f32.mrb[0].mxu0
        %7092 = vdwg.mxu0
        %v7093 = vadd.f32 %v6825, %v6967
        %v7094 = vadd.f32 %v6826, %v6970
        %v7095 = vadd.f32 %v6827, %v6975
        %v7096 = vadd.f32 %v6828, %v6978
        %v7097 = vadd.f32 %v6829, %v6983
        %v7098 = vadd.f32 %v6830, %v6986
        %v7099 = vadd.f32 %v6831, %v6991
        %v7100 = vadd.f32 %v6832, %v6994
        %v7101 = vadd.f32 %v6833, %v6999
        %v7102 = vadd.f32 %v6834, %v7002
        %v7103 = vadd.f32 %v6835, %v7007
        %v7104 = vadd.f32 %v6836, %v7010
        %v7105 = vadd.f32 %v6837, %v7015
        %v7106 = vadd.f32 %v6838, %v7018
        %v7107 = vadd.f32 %v6839, %v7023
        %v7108 = vadd.f32 %v6840, %v7026
        %v7109 = vadd.f32 %v6841, %v7031
        %v7110 = vadd.f32 %v6842, %v7034
        %v7111 = vadd.f32 %v6843, %v7039
        %v7112 = vadd.f32 %v6844, %v7042
        %v7113 = vadd.f32 %v6845, %v7047
        %v7114 = vadd.f32 %v6846, %v7050
        %v7115 = vadd.f32 %v6847, %v7055
        %v7116 = vadd.f32 %v6848, %v7058
        %v7117 = vadd.f32 %v6849, %v7063
        %v7118 = vadd.f32 %v6850, %v7066
        %v7119 = vadd.f32 %v6851, %v7071
        %v7120 = vadd.f32 %v6852, %v7074
        %v7121 = vadd.f32 %v6853, %v7079
        %v7122 = vadd.f32 %v6854, %v7082
        %v7123 = vadd.f32 %v6855, %v7087
        %v7124 = vadd.f32 %v6856, %v7090
        %7125 = vst [vmem:[%s271] sm:$0xff] %v7093
        %7126 = vst [vmem:[%s271 + $0x8] sm:$0xff] %v7094
        %7127 = vst [vmem:[%s271 + $0x10] sm:$0xff] %v7095
        %7128 = vst [vmem:[%s271 + $0x18] sm:$0xff] %v7096
        %7129 = vst [vmem:[%s271 + $0x20] sm:$0xff] %v7097
        %7130 = vst [vmem:[%s271 + $0x28] sm:$0xff] %v7098
        %7131 = vst [vmem:[%s271 + $0x30] sm:$0xff] %v7099
        %7132 = vst [vmem:[%s271 + $0x38] sm:$0xff] %v7100
        %7133 = vst [vmem:[%s271 + $0x40] sm:$0xff] %v7101
        %7134 = vst [vmem:[%s271 + $0x48] sm:$0xff] %v7102
        %7135 = vst [vmem:[%s271 + $0x50] sm:$0xff] %v7103
        %7136 = vst [vmem:[%s271 + $0x58] sm:$0xff] %v7104
        %7137 = vst [vmem:[%s271 + $0x60] sm:$0xff] %v7105
        %7138 = vst [vmem:[%s271 + $0x68] sm:$0xff] %v7106
        %7139 = vst [vmem:[%s271 + $0x70] sm:$0xff] %v7107
        %7140 = vst [vmem:[%s271 + $0x78] sm:$0xff] %v7108
        %7141 = vst [vmem:[%s271 + $0x80] sm:$0xff] %v7109
        %7142 = vst [vmem:[%s271 + $0x88] sm:$0xff] %v7110
        %7143 = vst [vmem:[%s271 + $0x90] sm:$0xff] %v7111
        %7144 = vst [vmem:[%s271 + $0x98] sm:$0xff] %v7112
        %7145 = vst [vmem:[%s271 + $0xa0] sm:$0xff] %v7113
        %7146 = vst [vmem:[%s271 + $0xa8] sm:$0xff] %v7114
        %7147 = vst [vmem:[%s271 + $0xb0] sm:$0xff] %v7115
        %7148 = vst [vmem:[%s271 + $0xb8] sm:$0xff] %v7116
        %7149 = vst [vmem:[%s271 + $0xc0] sm:$0xff] %v7117
        %7150 = vst [vmem:[%s271 + $0xc8] sm:$0xff] %v7118
        %7151 = vst [vmem:[%s271 + $0xd0] sm:$0xff] %v7119
        %7152 = vst [vmem:[%s271 + $0xd8] sm:$0xff] %v7120
        %7153 = vst [vmem:[%s271 + $0xe0] sm:$0xff] %v7121
        %7154 = vst [vmem:[%s271 + $0xe8] sm:$0xff] %v7122
        %7155 = vst [vmem:[%s271 + $0xf0] sm:$0xff] %v7123
        %7156 = vst [vmem:[%s271 + $0xf8] sm:$0xff] %v7124
        %s7157 = sand.u32 %s181, 1
        %s7158 = scalar_lea.sflag [#allocation5], %s7157
        %s7159 = sand.u32 %s181, 1
        %s7160 = smul.addr %s7159, 256
        %s7161 = scalar_lea.vmem [#allocation4], %s7160
        // Predicated region
        $region49: #{_lambda_.1} parent=47 // pred_check
          %p7162 = pneg %p191
        $region50: #{_lambda_.1} parent=47 // pred_check_branch
          %7164 = sbr.rel (%p7162) target = $region52
        $region51: #{_lambda_.1} parent=47 // pred_region
          %s7166 = ssub.s32 4096, 4096
          %7167 = vsyncadd %s7158, %s7166
          %s7168 = smul.addr %s21, 32
          %s7169 = smul.addr %s7168, 128
          %s7170 = scalar_lea.hbm %s7, %s7169
          %s7171 = sshll.u32 %s7161, 4
          %s7172 = int_to_ptr.vmem [resolvable:$true] %s7171
          %7177 = dma.vmem_to_hbm [thread:$0]  %s7172, 4096, %s7170, %s7158, 128, 128, 8
        $region52: #{_lambda_.1} parent=47 // pred_fallthru
          _
      $region48: #{_lambda_.1} parent=5 // pred_fallthru
        _
      %p7178 = scmp.le.s32.totalorder 2, %s16
      // Predicated region
      $region53: #{_lambda_.1} parent=5 // pred_check
        %p7179 = pneg %p7178
      $region54: #{_lambda_.1} parent=5 // pred_check_branch
        %7181 = sbr.rel (%p7179) target = $region56
      $region55: #{_lambda_.1} parent=5 // pred_region
        %s7182 = ssub.s32 %s16, 2
        // Predicated region
        $region57: #{_lambda_.1} parent=55 // pred_check
          %p7183 = pneg %p197
        $region58: #{_lambda_.1} parent=55 // pred_check_branch
          %7185 = sbr.rel (%p7183) target = $region60
        $region59: #{_lambda_.1} parent=55 // pred_region
          %s7186 = sand.u32 %s182, 1
          %s7187 = scalar_lea.sflag [#allocation5], %s7186
          %s7188 = sand.u32 %s182, 1
          %s7189 = smul.addr %s7188, 256
          %s7190 = scalar_lea.vmem [#allocation4], %s7189
          %7191 = dma.done %s7187, 4096
        $region60: #{_lambda_.1} parent=55 // pred_fallthru
          _
      $region56: #{_lambda_.1} parent=5 // pred_fallthru
        _
    $region6: #{_lambda_.1} parent=1 // loop_footer
      %s20 = sadd.s32 1, %s16
    $region7: #{_lambda_.1} parent=1 // loop_footer_branch
      %15 = sbr.rel target = $region3
    $region8: #{_lambda_.1} parent=1 // loop_exit
      _
    %7192 = vsyncpa [#allocation5], 1
    %s7193 = scalar_lea.sflag [#allocation5], 1
    %7194 = vsyncpa %s7193, 1

</llo_original>
